<compile_context>
chip_gen: v6e
topology: v6e:2x2x1
jax: 0.10.0
libtpu: 0.0.40
codegen_flags: <defaults>
</compile_context>

<pallas_src>
import jax
import jax.numpy as jnp
from jax.experimental import pallas as pl
from jax.experimental.pallas import tpu as pltpu


def lora_qkv_kernel(x_ref, w_ref, b_ref, wa_ref, wbq_ref, wbv_ref, out_ref):
    # x_ref  : (TM, dim)        token tile of one modality (compute dtype)
    # w_ref  : (3*dim, dim)     fused qkv weight (torch layout: out_feat x in_feat)
    # b_ref  : (1, 3*dim)       fused qkv bias (f32)
    # wa_ref : (4r, dim)        [OA_q_shared; OA_q_spec; OA_v_shared; OA_v_spec]
    # wbq_ref: (dim, 2r)        [B_q_shared, B_q_spec]
    # wbv_ref: (dim, 2r)        [B_v_shared, B_v_spec]
    # out_ref: (TM, 3*dim)
    ct = (((1,), (1,)), ((), ()))          # y = x @ rhs^T, no .T materialized
    x = x_ref[...]
    dim = x.shape[1]
    r2 = wbq_ref.shape[1]                  # 2 * rank
    f32 = jnp.float32
    dt = out_ref.dtype

    # ---- fused LoRA A-side: one skinny GEMM + one GELU for Q and V together
    h = jax.lax.dot_general(x, wa_ref[...], ct, preferred_element_type=f32)
    h = jax.nn.gelu(h, approximate=True)   # f32 elementwise (VPU/EUP)
    hq = h[:, :r2].astype(wbq_ref.dtype)
    hv = h[:, r2:].astype(wbv_ref.dtype)
    dq = jax.lax.dot_general(hq, wbq_ref[...], ct, preferred_element_type=f32)
    dv = jax.lax.dot_general(hv, wbv_ref[...], ct, preferred_element_type=f32)

    # ---- base qkv: per-slice dots with fused +bias / +delta / cast epilogue
    q = jax.lax.dot_general(x, w_ref[0:dim, :], ct, preferred_element_type=f32)
    out_ref[:, 0:dim] = (q + b_ref[:, 0:dim] + dq).astype(dt)

    k = jax.lax.dot_general(x, w_ref[dim:2 * dim, :], ct,
                            preferred_element_type=f32)
    out_ref[:, dim:2 * dim] = (k + b_ref[:, dim:2 * dim]).astype(dt)

    v = jax.lax.dot_general(x, w_ref[2 * dim:3 * dim, :], ct,
                            preferred_element_type=f32)
    out_ref[:, 2 * dim:3 * dim] = (v + b_ref[:, 2 * dim:3 * dim] + dv).astype(dt)


def _choose_tm(M, tm_req, sub):
    """Largest tile <= tm_req that is a multiple of `sub` and divides M;
    otherwise return (tile, pad) so that (M + pad) % tile == 0."""
    tm_req = max(sub, (min(tm_req, M) // sub) * sub)
    for t in range(tm_req, sub - 1, -sub):
        if M % t == 0:
            return t, 0
    pad = (-M) % tm_req
    return tm_req, pad


def multimodal_lora_v3(x, qkv_w, qkv_b, a_q, o_q, b_q, a_v, o_v, b_v,
                       num_modals, tm=512, compute_dtype=jnp.bfloat16):
    """x: (bs_m, n, c); qkv_w: (3c, c); qkv_b: (3c,);
    a_*: (num_modals, r, c); o_*: (num_modals, r, r); b_*: (num_modals, c, r).
    LoRA linears are assumed bias-free (standard LoRA); qkv carries the bias."""
    bs_m, n, c = x.shape
    assert bs_m % num_modals == 0
    assert num_modals == 4          # module hard-codes 4 modalities, shared = idx 3
    dim = c
    r = a_q.shape[1]
    r2, r4 = 2 * r, 4 * r
    M = (bs_m // num_modals) * n
    out_dtype = x.dtype
    cbytes = jnp.dtype(compute_dtype).itemsize
    obytes = jnp.dtype(out_dtype).itemsize

    # ---- wrapper-side precompute (tiny, once) ------------------------------
    # linear_o(linear_a(x)) == x @ (O @ A)^T; fuse shared(idx 3) + specific(i)
    # into a rank-2r path per Q/V, then stack Q and V A-sides -> one (4r, dim)
    # weight so the kernel does a single skinny GEMM + single GELU.
    shared = 3
    oa_q = jnp.einsum('mij,mjk->mik', o_q, a_q)                 # (nm, r, dim)
    oa_v = jnp.einsum('mij,mjk->mik', o_v, a_v)
    wa_q = jnp.concatenate(
        [jnp.broadcast_to(oa_q[shared][None], oa_q.shape), oa_q], axis=1)
    wa_v = jnp.concatenate(
        [jnp.broadcast_to(oa_v[shared][None], oa_v.shape), oa_v], axis=1)
    wa = jnp.concatenate([wa_q, wa_v], axis=1).astype(compute_dtype)  # (nm,4r,dim)
    wb_q = jnp.concatenate(
        [jnp.broadcast_to(b_q[shared][None], b_q.shape), b_q],
        axis=2).astype(compute_dtype)                                  # (nm,dim,2r)
    wb_v = jnp.concatenate(
        [jnp.broadcast_to(b_v[shared][None], b_v.shape), b_v],
        axis=2).astype(compute_dtype)

    w = qkv_w.astype(compute_dtype)                                    # (3dim, dim)
    bias2d = qkv_b.astype(jnp.float32).reshape(1, 3 * dim)             # f32 bias

    x_flat = x.reshape(num_modals, M, dim).astype(compute_dtype)

    # ---- tiling: divisor of M if possible, else pad to a tile multiple -----
    sub = 16 if cbytes < 4 else 8
    tm_eff, pad = _choose_tm(M, tm, sub)
    Mp = M + pad
    if pad:
        x_flat = jnp.pad(x_flat, ((0, 0), (0, pad), (0, 0)))

    itemsize_in = cbytes
    cost = pl.CostEstimate(
        flops=int(num_modals * (6 * M * dim * dim + 16 * M * dim * r)),
        transcendentals=int(num_modals * M * r4),
        bytes_accessed=int(
            itemsize_in * (x_flat.size + w.size + wa.size + wb_q.size + wb_v.size)
            + 4 * bias2d.size
            + obytes * num_modals * Mp * 3 * dim),
    )

    def _call(buffer_weights):
        # Single-buffer the grid-invariant / slowly-varying weight blocks.
        wmode = {"pipeline_mode": pl.Buffered(1)} if buffer_weights else {}
        w_bufs = 1 if buffer_weights else 2
        vmem_needed = (
            2 * tm_eff * dim * cbytes                   # x tile (double buffered)
            + 2 * tm_eff * 3 * dim * obytes             # out tile (double buffered)
            + w_bufs * (3 * dim * dim * cbytes          # resident W_qkv
                        + 3 * dim * 4                   # bias (f32)
                        + (r4 * dim + 2 * dim * r2) * cbytes))  # LoRA factors
        vmem_limit = int(min(max(int(vmem_needed * 1.5) + (2 << 20), 16 << 20),
                             100 << 20))

        in_specs = [
            pl.BlockSpec((None, tm_eff, dim), lambda i, j: (i, j, 0)),     # x tile
            pl.BlockSpec((3 * dim, dim), lambda i, j: (0, 0), **wmode),    # W (resident)
            pl.BlockSpec((1, 3 * dim), lambda i, j: (0, 0), **wmode),      # bias
            pl.BlockSpec((None, r4, dim), lambda i, j: (i, 0, 0), **wmode),  # WA[i]
            pl.BlockSpec((None, dim, r2), lambda i, j: (i, 0, 0), **wmode),  # WB_q[i]
            pl.BlockSpec((None, dim, r2), lambda i, j: (i, 0, 0), **wmode),  # WB_v[i]
        ]
        out_specs = pl.BlockSpec((None, tm_eff, 3 * dim), lambda i, j: (i, j, 0))

        return pl.pallas_call(
            lora_qkv_kernel,
            out_shape=jax.ShapeDtypeStruct((num_modals, Mp, 3 * dim), out_dtype),
            grid=(num_modals, Mp // tm_eff),
            in_specs=in_specs,
            out_specs=out_specs,
            compiler_params=pltpu.CompilerParams(
                dimension_semantics=("parallel", "parallel"),
                vmem_limit_bytes=vmem_limit),
            cost_estimate=cost,
        )(x_flat, w, bias2d, wa, wb_q, wb_v)

    # Prefer single-buffered resident weights; fall back to default buffering
    # if this JAX/Mosaic build rejects pl.Buffered(1).  (Eager execution here,
    # so lowering/runtime errors surface at block_until_ready.)
    try:
        out = jax.block_until_ready(_call(True))
    except Exception:
        out = jax.block_until_ready(_call(False))

    if pad:
        out = out[:, :M]
    return out.reshape(bs_m, n, 3 * dim)


def reference(x, qkv_w, qkv_b, a_q, o_q, b_q, a_v, o_v, b_v, num_modals):
    """Plain-JAX transcription of the PyTorch forward for verification."""
    bs_m, n, c = x.shape
    dim = c
    xs = x.reshape(num_modals, bs_m // num_modals, n, c)

    def lora_path(xi, a, o, b):
        h = xi @ a.T
        h = h @ o.T
        h = jax.nn.gelu(h, approximate=True)
        return h @ b.T

    outs = []
    for i in range(num_modals):
        base = xs[i] @ qkv_w.T + qkv_b
        dq = (lora_path(xs[i], a_q[3], o_q[3], b_q[3])
              + lora_path(xs[i], a_q[i], o_q[i], b_q[i]))
        dv = (lora_path(xs[i], a_v[3], o_v[3], b_v[3])
              + lora_path(xs[i], a_v[i], o_v[i], b_v[i]))
        base = base.at[..., :dim].add(dq)
        base = base.at[..., 2 * dim:].add(dv)
        outs.append(base)
    return jnp.stack(outs).reshape(bs_m, n, 3 * dim)


if __name__ == "__main__":
    # Match the kernel's f32 MXU accumulation in the XLA-side reference.
    jax.config.update("jax_default_matmul_precision", "highest")

    num_modals = 4
    batch = 2          # per-modality batch
    n = 16             # tokens
    dim = 32           # qkv.in_features
    rank = 4           # LoRA rank
    bs_m = num_modals * batch

    key = jax.random.PRNGKey(0)
    k = jax.random.split(key, 9)

    x = jax.random.normal(k[0], (bs_m, n, dim), dtype=jnp.float32)
    qkv_w = jax.random.normal(k[1], (3 * dim, dim), dtype=jnp.float32) * 0.05
    qkv_b = jax.random.normal(k[2], (3 * dim,), dtype=jnp.float32) * 0.05
    # Stacked per-modality LoRA factors (i, d, e, l modalities; idx 3 = shared 'l').
    a_q = jax.random.normal(k[3], (num_modals, rank, dim), dtype=jnp.float32) * 0.2
    o_q = jax.random.normal(k[4], (num_modals, rank, rank), dtype=jnp.float32) * 0.2
    b_q = jax.random.normal(k[5], (num_modals, dim, rank), dtype=jnp.float32) * 0.2
    a_v = jax.random.normal(k[6], (num_modals, rank, dim), dtype=jnp.float32) * 0.2
    o_v = jax.random.normal(k[7], (num_modals, rank, rank), dtype=jnp.float32) * 0.2
    b_v = jax.random.normal(k[8], (num_modals, dim, rank), dtype=jnp.float32) * 0.2

    ref = reference(x, qkv_w, qkv_b, a_q, o_q, b_q, a_v, o_v, b_v, num_modals)

    # 1) Logic check: f32 datapath, tight tolerance.
    out_f32 = multimodal_lora_v3(x, qkv_w, qkv_b, a_q, o_q, b_q, a_v, o_v, b_v,
                                 num_modals, tm=16, compute_dtype=jnp.float32)
    out_f32 = jax.block_until_ready(out_f32)
    assert out_f32.shape == (bs_m, n, 3 * dim), out_f32.shape
    assert jnp.allclose(out_f32, ref, atol=1e-4, rtol=1e-4), "f32 mismatch vs reference"

    # 2) Performance config: bf16 MXU operands, f32 accumulation -> looser tol.
    out_bf16 = multimodal_lora_v3(x, qkv_w, qkv_b, a_q, o_q, b_q, a_v, o_v, b_v,
                                  num_modals, tm=16, compute_dtype=jnp.bfloat16)
    out_bf16 = jax.block_until_ready(out_bf16)
    assert out_bf16.shape == (bs_m, n, 3 * dim), out_bf16.shape
    assert jnp.allclose(out_bf16, ref, atol=3e-2, rtol=3e-2), "bf16 mismatch vs reference"

    print("KERNEL_OK")
</pallas_src>

<mosaic_0001>
module attributes {stable_mosaic.version = 11 : i64} {
  func.func @lora_qkv_kernel(%arg0: i32, %arg1: i32, %arg2: memref<1x16x32xf32, #tpu.memory_space<vmem>>, %arg3: memref<96x32xf32, #tpu.memory_space<vmem>>, %arg4: memref<1x96xf32, #tpu.memory_space<vmem>>, %arg5: memref<1x16x32xf32, #tpu.memory_space<vmem>>, %arg6: memref<1x32x8xf32, #tpu.memory_space<vmem>>, %arg7: memref<1x32x8xf32, #tpu.memory_space<vmem>>, %arg8: memref<1x16x96xf32, #tpu.memory_space<vmem>>) attributes {dimension_semantics = [#tpu.dimension_semantics<parallel>, #tpu.dimension_semantics<parallel>], iteration_bounds = array<i64: 4, 2>, scalar_prefetch = 0 : i64, scratch_operands = 0 : i64, tpu.core_type = #tpu.core_type<tc>, window_params = [{transform_indices = @transform_0, window_bounds = array<i64: 1, 16, 32>}, {pipeline_mode = #tpu.pipeline_mode<synchronous>, transform_indices = @transform_1, window_bounds = array<i64: 96, 32>}, {pipeline_mode = #tpu.pipeline_mode<synchronous>, transform_indices = @transform_2, window_bounds = array<i64: 1, 96>}, {pipeline_mode = #tpu.pipeline_mode<synchronous>, transform_indices = @transform_3, window_bounds = array<i64: 1, 16, 32>}, {pipeline_mode = #tpu.pipeline_mode<synchronous>, transform_indices = @transform_4, window_bounds = array<i64: 1, 32, 8>}, {pipeline_mode = #tpu.pipeline_mode<synchronous>, transform_indices = @transform_5, window_bounds = array<i64: 1, 32, 8>}, {transform_indices = @transform_6, window_bounds = array<i64: 1, 16, 96>}]} {
    %c0 = arith.constant 0 : index
    %c0_0 = arith.constant 0 : index
    %c0_1 = arith.constant 0 : index
    %0 = vector.load %arg2[%c0, %c0_0, %c0_1] : memref<1x16x32xf32, #tpu.memory_space<vmem>>, vector<1x16x32xf32>
    %1 = vector.shape_cast %0 : vector<1x16x32xf32> to vector<16x32xf32>
    %c0_2 = arith.constant 0 : index
    %c0_3 = arith.constant 0 : index
    %c0_4 = arith.constant 0 : index
    %2 = vector.load %arg5[%c0_2, %c0_3, %c0_4] : memref<1x16x32xf32, #tpu.memory_space<vmem>>, vector<1x16x32xf32>
    %3 = vector.shape_cast %2 : vector<1x16x32xf32> to vector<16x32xf32>
    %cst = arith.constant dense<0.000000e+00> : vector<16x16xf32>
    %4 = tpu.matmul %1, %3, %cst {dimension_numbers = #tpu.dot_dimension_numbers<[1], [1], [0], [0], [0, 0, 1, 0], [], []>, precision = #tpu.contract_precision<fp32>} : vector<16x32xf32>, vector<16x32xf32>, vector<16x16xf32> -> vector<16x16xf32>
    %5 = arith.mulf %4, %4 : vector<16x16xf32>
    %6 = arith.mulf %4, %5 : vector<16x16xf32>
    %cst_5 = arith.constant 4.471500e-02 : f32
    %7 = vector.broadcast %cst_5 : f32 to vector<16x16xf32>
    %8 = arith.mulf %7, %6 : vector<16x16xf32>
    %9 = arith.addf %4, %8 : vector<16x16xf32>
    %cst_6 = arith.constant 0.797884583 : f32
    %10 = vector.broadcast %cst_6 : f32 to vector<16x16xf32>
    %11 = arith.mulf %10, %9 : vector<16x16xf32>
    %12 = math.tanh %11 : vector<16x16xf32>
    %cst_7 = arith.constant 1.000000e+00 : f32
    %13 = vector.broadcast %cst_7 : f32 to vector<16x16xf32>
    %14 = arith.addf %13, %12 : vector<16x16xf32>
    %cst_8 = arith.constant 5.000000e-01 : f32
    %15 = vector.broadcast %cst_8 : f32 to vector<16x16xf32>
    %16 = arith.mulf %15, %14 : vector<16x16xf32>
    %17 = arith.mulf %4, %16 : vector<16x16xf32>
    %18 = vector.extract_strided_slice %17 {offsets = [0, 0], sizes = [16, 8], strides = [1, 1]} : vector<16x16xf32> to vector<16x8xf32>
    %19 = vector.extract_strided_slice %17 {offsets = [0, 8], sizes = [16, 8], strides = [1, 1]} : vector<16x16xf32> to vector<16x8xf32>
    %c0_9 = arith.constant 0 : index
    %c0_10 = arith.constant 0 : index
    %c0_11 = arith.constant 0 : index
    %20 = vector.load %arg6[%c0_9, %c0_10, %c0_11] : memref<1x32x8xf32, #tpu.memory_space<vmem>>, vector<1x32x8xf32>
    %21 = vector.shape_cast %20 : vector<1x32x8xf32> to vector<32x8xf32>
    %cst_12 = arith.constant dense<0.000000e+00> : vector<16x32xf32>
    %22 = tpu.matmul %18, %21, %cst_12 {dimension_numbers = #tpu.dot_dimension_numbers<[1], [1], [0], [0], [0, 0, 1, 0], [], []>, precision = #tpu.contract_precision<fp32>} : vector<16x8xf32>, vector<32x8xf32>, vector<16x32xf32> -> vector<16x32xf32>
    %c0_13 = arith.constant 0 : index
    %c0_14 = arith.constant 0 : index
    %c0_15 = arith.constant 0 : index
    %23 = vector.load %arg7[%c0_13, %c0_14, %c0_15] : memref<1x32x8xf32, #tpu.memory_space<vmem>>, vector<1x32x8xf32>
    %24 = vector.shape_cast %23 : vector<1x32x8xf32> to vector<32x8xf32>
    %cst_16 = arith.constant dense<0.000000e+00> : vector<16x32xf32>
    %25 = tpu.matmul %19, %24, %cst_16 {dimension_numbers = #tpu.dot_dimension_numbers<[1], [1], [0], [0], [0, 0, 1, 0], [], []>, precision = #tpu.contract_precision<fp32>} : vector<16x8xf32>, vector<32x8xf32>, vector<16x32xf32> -> vector<16x32xf32>
    %c0_17 = arith.constant 0 : index
    %c0_18 = arith.constant 0 : index
    %26 = vector.load %arg3[%c0_17, %c0_18] : memref<96x32xf32, #tpu.memory_space<vmem>>, vector<32x32xf32>
    %cst_19 = arith.constant dense<0.000000e+00> : vector<16x32xf32>
    %27 = tpu.matmul %1, %26, %cst_19 {dimension_numbers = #tpu.dot_dimension_numbers<[1], [1], [0], [0], [0, 0, 1, 0], [], []>, precision = #tpu.contract_precision<fp32>} : vector<16x32xf32>, vector<32x32xf32>, vector<16x32xf32> -> vector<16x32xf32>
    %c0_20 = arith.constant 0 : index
    %c0_21 = arith.constant 0 : index
    %28 = vector.load %arg4[%c0_20, %c0_21] : memref<1x96xf32, #tpu.memory_space<vmem>>, vector<1x32xf32>
    %29 = vector.broadcast %28 : vector<1x32xf32> to vector<16x32xf32>
    %30 = arith.addf %27, %29 : vector<16x32xf32>
    %31 = arith.addf %30, %22 : vector<16x32xf32>
    %c0_22 = arith.constant 0 : index
    %c0_23 = arith.constant 0 : index
    %c0_24 = arith.constant 0 : index
    %32 = vector.load %arg8[%c0_22, %c0_23, %c0_24] : memref<1x16x96xf32, #tpu.memory_space<vmem>>, vector<1x16x32xf32>
    %33 = vector.shape_cast %32 : vector<1x16x32xf32> to vector<16x32xf32>
    %34 = vector.shape_cast %31 : vector<16x32xf32> to vector<1x16x32xf32>
    tpu.vector_store %arg8[%c0_22, %c0_23, %c0_24], %34 {strides = array<i32>} : memref<1x16x96xf32, #tpu.memory_space<vmem>>, vector<1x16x32xf32>,
    %c32 = arith.constant 32 : index
    %c0_25 = arith.constant 0 : index
    %35 = vector.load %arg3[%c32, %c0_25] : memref<96x32xf32, #tpu.memory_space<vmem>>, vector<32x32xf32>
    %cst_26 = arith.constant dense<0.000000e+00> : vector<16x32xf32>
    %36 = tpu.matmul %1, %35, %cst_26 {dimension_numbers = #tpu.dot_dimension_numbers<[1], [1], [0], [0], [0, 0, 1, 0], [], []>, precision = #tpu.contract_precision<fp32>} : vector<16x32xf32>, vector<32x32xf32>, vector<16x32xf32> -> vector<16x32xf32>
    %c0_27 = arith.constant 0 : index
    %c32_28 = arith.constant 32 : index
    %37 = vector.load %arg4[%c0_27, %c32_28] : memref<1x96xf32, #tpu.memory_space<vmem>>, vector<1x32xf32>
    %38 = vector.broadcast %37 : vector<1x32xf32> to vector<16x32xf32>
    %39 = arith.addf %36, %38 : vector<16x32xf32>
    %c0_29 = arith.constant 0 : index
    %c0_30 = arith.constant 0 : index
    %c32_31 = arith.constant 32 : index
    %40 = vector.load %arg8[%c0_29, %c0_30, %c32_31] : memref<1x16x96xf32, #tpu.memory_space<vmem>>, vector<1x16x32xf32>
    %41 = vector.shape_cast %40 : vector<1x16x32xf32> to vector<16x32xf32>
    %42 = vector.shape_cast %39 : vector<16x32xf32> to vector<1x16x32xf32>
    tpu.vector_store %arg8[%c0_29, %c0_30, %c32_31], %42 {strides = array<i32>} : memref<1x16x96xf32, #tpu.memory_space<vmem>>, vector<1x16x32xf32>,
    %c64 = arith.constant 64 : index
    %c0_32 = arith.constant 0 : index
    %43 = vector.load %arg3[%c64, %c0_32] : memref<96x32xf32, #tpu.memory_space<vmem>>, vector<32x32xf32>
    %cst_33 = arith.constant dense<0.000000e+00> : vector<16x32xf32>
    %44 = tpu.matmul %1, %43, %cst_33 {dimension_numbers = #tpu.dot_dimension_numbers<[1], [1], [0], [0], [0, 0, 1, 0], [], []>, precision = #tpu.contract_precision<fp32>} : vector<16x32xf32>, vector<32x32xf32>, vector<16x32xf32> -> vector<16x32xf32>
    %c0_34 = arith.constant 0 : index
    %c64_35 = arith.constant 64 : index
    %45 = vector.load %arg4[%c0_34, %c64_35] : memref<1x96xf32, #tpu.memory_space<vmem>>, vector<1x32xf32>
    %46 = vector.broadcast %45 : vector<1x32xf32> to vector<16x32xf32>
    %47 = arith.addf %44, %46 : vector<16x32xf32>
    %48 = arith.addf %47, %25 : vector<16x32xf32>
    %c0_36 = arith.constant 0 : index
    %c0_37 = arith.constant 0 : index
    %c64_38 = arith.constant 64 : index
    %49 = vector.load %arg8[%c0_36, %c0_37, %c64_38] : memref<1x16x96xf32, #tpu.memory_space<vmem>>, vector<1x16x32xf32>
    %50 = vector.shape_cast %49 : vector<1x16x32xf32> to vector<16x32xf32>
    %51 = vector.shape_cast %48 : vector<16x32xf32> to vector<1x16x32xf32>
    tpu.vector_store %arg8[%c0_36, %c0_37, %c64_38], %51 {strides = array<i32>} : memref<1x16x96xf32, #tpu.memory_space<vmem>>, vector<1x16x32xf32>,
    return
  }
  func.func @transform_0(%arg0: i32, %arg1: i32) -> (i32, i32, i32) {
    %c0_i32 = arith.constant 0 : i32
    %c0_i32_0 = arith.constant 0 : i32
    return %arg0, %arg1, %c0_i32 : i32, i32, i32
  }
  func.func @transform_1(%arg0: i32, %arg1: i32) -> (i32, i32) {
    %c0_i32 = arith.constant 0 : i32
    %c0_i32_0 = arith.constant 0 : i32
    %c0_i32_1 = arith.constant 0 : i32
    return %c0_i32, %c0_i32_0 : i32, i32
  }
  func.func @transform_2(%arg0: i32, %arg1: i32) -> (i32, i32) {
    %c0_i32 = arith.constant 0 : i32
    %c0_i32_0 = arith.constant 0 : i32
    %c0_i32_1 = arith.constant 0 : i32
    return %c0_i32, %c0_i32_0 : i32, i32
  }
  func.func @transform_3(%arg0: i32, %arg1: i32) -> (i32, i32, i32) {
    %c0_i32 = arith.constant 0 : i32
    %c0_i32_0 = arith.constant 0 : i32
    %c0_i32_1 = arith.constant 0 : i32
    return %arg0, %c0_i32, %c0_i32_0 : i32, i32, i32
  }
  func.func @transform_4(%arg0: i32, %arg1: i32) -> (i32, i32, i32) {
    %c0_i32 = arith.constant 0 : i32
    %c0_i32_0 = arith.constant 0 : i32
    %c0_i32_1 = arith.constant 0 : i32
    return %arg0, %c0_i32, %c0_i32_0 : i32, i32, i32
  }
  func.func @transform_5(%arg0: i32, %arg1: i32) -> (i32, i32, i32) {
    %c0_i32 = arith.constant 0 : i32
    %c0_i32_0 = arith.constant 0 : i32
    %c0_i32_1 = arith.constant 0 : i32
    return %arg0, %c0_i32, %c0_i32_0 : i32, i32, i32
  }
  func.func @transform_6(%arg0: i32, %arg1: i32) -> (i32, i32, i32) {
    %c0_i32 = arith.constant 0 : i32
    %c0_i32_0 = arith.constant 0 : i32
    return %arg0, %arg1, %c0_i32 : i32, i32, i32
  }
}

module attributes {stable_mosaic.version = 11 : i64} {
  func.func @lora_qkv_kernel(%arg0: i32, %arg1: i32, %arg2: memref<1x16x32xf32, #tpu.memory_space<vmem>>, %arg3: memref<96x32xf32, #tpu.memory_space<vmem>>, %arg4: memref<1x96xf32, #tpu.memory_space<vmem>>, %arg5: memref<1x16x32xf32, #tpu.memory_space<vmem>>, %arg6: memref<1x32x8xf32, #tpu.memory_space<vmem>>, %arg7: memref<1x32x8xf32, #tpu.memory_space<vmem>>, %arg8: memref<1x16x96xf32, #tpu.memory_space<vmem>>) attributes {dimension_semantics = [#tpu.dimension_semantics<parallel>, #tpu.dimension_semantics<parallel>], iteration_bounds = array<i64: 4, 2>, scalar_prefetch = 0 : i64, scratch_operands = 0 : i64, tpu.core_type = #tpu.core_type<tc>, window_params = [{transform_indices = @transform_0, window_bounds = array<i64: 1, 16, 32>}, {pipeline_mode = #tpu.pipeline_mode<synchronous>, transform_indices = @transform_1, window_bounds = array<i64: 96, 32>}, {pipeline_mode = #tpu.pipeline_mode<synchronous>, transform_indices = @transform_2, window_bounds = array<i64: 1, 96>}, {transform_indices = @transform_3, window_bounds = array<i64: 1, 16, 32>}, {transform_indices = @transform_4, window_bounds = array<i64: 1, 32, 8>}, {transform_indices = @transform_5, window_bounds = array<i64: 1, 32, 8>}, {transform_indices = @transform_6, window_bounds = array<i64: 1, 16, 96>}]} {
    %c0 = arith.constant 0 : index
    %c0_0 = arith.constant 0 : index
    %c0_1 = arith.constant 0 : index
    %0 = vector.load %arg2[%c0, %c0_0, %c0_1] : memref<1x16x32xf32, #tpu.memory_space<vmem>>, vector<1x16x32xf32>
    %1 = vector.shape_cast %0 : vector<1x16x32xf32> to vector<16x32xf32>
    %c0_2 = arith.constant 0 : index
    %c0_3 = arith.constant 0 : index
    %c0_4 = arith.constant 0 : index
    %2 = vector.load %arg5[%c0_2, %c0_3, %c0_4] : memref<1x16x32xf32, #tpu.memory_space<vmem>>, vector<1x16x32xf32>
    %3 = vector.shape_cast %2 : vector<1x16x32xf32> to vector<16x32xf32>
    %cst = arith.constant dense<0.000000e+00> : vector<16x16xf32>
    %4 = tpu.matmul %1, %3, %cst {dimension_numbers = #tpu.dot_dimension_numbers<[1], [1], [0], [0], [0, 0, 1, 0], [], []>, precision = #tpu.contract_precision<fp32>} : vector<16x32xf32>, vector<16x32xf32>, vector<16x16xf32> -> vector<16x16xf32>
    %5 = arith.mulf %4, %4 : vector<16x16xf32>
    %6 = arith.mulf %4, %5 : vector<16x16xf32>
    %cst_5 = arith.constant 4.471500e-02 : f32
    %7 = vector.broadcast %cst_5 : f32 to vector<16x16xf32>
    %8 = arith.mulf %7, %6 : vector<16x16xf32>
    %9 = arith.addf %4, %8 : vector<16x16xf32>
    %cst_6 = arith.constant 0.797884583 : f32
    %10 = vector.broadcast %cst_6 : f32 to vector<16x16xf32>
    %11 = arith.mulf %10, %9 : vector<16x16xf32>
    %12 = math.tanh %11 : vector<16x16xf32>
    %cst_7 = arith.constant 1.000000e+00 : f32
    %13 = vector.broadcast %cst_7 : f32 to vector<16x16xf32>
    %14 = arith.addf %13, %12 : vector<16x16xf32>
    %cst_8 = arith.constant 5.000000e-01 : f32
    %15 = vector.broadcast %cst_8 : f32 to vector<16x16xf32>
    %16 = arith.mulf %15, %14 : vector<16x16xf32>
    %17 = arith.mulf %4, %16 : vector<16x16xf32>
    %18 = vector.extract_strided_slice %17 {offsets = [0, 0], sizes = [16, 8], strides = [1, 1]} : vector<16x16xf32> to vector<16x8xf32>
    %19 = vector.extract_strided_slice %17 {offsets = [0, 8], sizes = [16, 8], strides = [1, 1]} : vector<16x16xf32> to vector<16x8xf32>
    %c0_9 = arith.constant 0 : index
    %c0_10 = arith.constant 0 : index
    %c0_11 = arith.constant 0 : index
    %20 = vector.load %arg6[%c0_9, %c0_10, %c0_11] : memref<1x32x8xf32, #tpu.memory_space<vmem>>, vector<1x32x8xf32>
    %21 = vector.shape_cast %20 : vector<1x32x8xf32> to vector<32x8xf32>
    %cst_12 = arith.constant dense<0.000000e+00> : vector<16x32xf32>
    %22 = tpu.matmul %18, %21, %cst_12 {dimension_numbers = #tpu.dot_dimension_numbers<[1], [1], [0], [0], [0, 0, 1, 0], [], []>, precision = #tpu.contract_precision<fp32>} : vector<16x8xf32>, vector<32x8xf32>, vector<16x32xf32> -> vector<16x32xf32>
    %c0_13 = arith.constant 0 : index
    %c0_14 = arith.constant 0 : index
    %c0_15 = arith.constant 0 : index
    %23 = vector.load %arg7[%c0_13, %c0_14, %c0_15] : memref<1x32x8xf32, #tpu.memory_space<vmem>>, vector<1x32x8xf32>
    %24 = vector.shape_cast %23 : vector<1x32x8xf32> to vector<32x8xf32>
    %cst_16 = arith.constant dense<0.000000e+00> : vector<16x32xf32>
    %25 = tpu.matmul %19, %24, %cst_16 {dimension_numbers = #tpu.dot_dimension_numbers<[1], [1], [0], [0], [0, 0, 1, 0], [], []>, precision = #tpu.contract_precision<fp32>} : vector<16x8xf32>, vector<32x8xf32>, vector<16x32xf32> -> vector<16x32xf32>
    %c0_17 = arith.constant 0 : index
    %c0_18 = arith.constant 0 : index
    %26 = vector.load %arg3[%c0_17, %c0_18] : memref<96x32xf32, #tpu.memory_space<vmem>>, vector<32x32xf32>
    %cst_19 = arith.constant dense<0.000000e+00> : vector<16x32xf32>
    %27 = tpu.matmul %1, %26, %cst_19 {dimension_numbers = #tpu.dot_dimension_numbers<[1], [1], [0], [0], [0, 0, 1, 0], [], []>, precision = #tpu.contract_precision<fp32>} : vector<16x32xf32>, vector<32x32xf32>, vector<16x32xf32> -> vector<16x32xf32>
    %c0_20 = arith.constant 0 : index
    %c0_21 = arith.constant 0 : index
    %28 = vector.load %arg4[%c0_20, %c0_21] : memref<1x96xf32, #tpu.memory_space<vmem>>, vector<1x32xf32>
    %29 = vector.broadcast %28 : vector<1x32xf32> to vector<16x32xf32>
    %30 = arith.addf %27, %29 : vector<16x32xf32>
    %31 = arith.addf %30, %22 : vector<16x32xf32>
    %c0_22 = arith.constant 0 : index
    %c0_23 = arith.constant 0 : index
    %c0_24 = arith.constant 0 : index
    %32 = vector.load %arg8[%c0_22, %c0_23, %c0_24] : memref<1x16x96xf32, #tpu.memory_space<vmem>>, vector<1x16x32xf32>
    %33 = vector.shape_cast %32 : vector<1x16x32xf32> to vector<16x32xf32>
    %34 = vector.shape_cast %31 : vector<16x32xf32> to vector<1x16x32xf32>
    tpu.vector_store %arg8[%c0_22, %c0_23, %c0_24], %34 {strides = array<i32>} : memref<1x16x96xf32, #tpu.memory_space<vmem>>, vector<1x16x32xf32>,
    %c32 = arith.constant 32 : index
    %c0_25 = arith.constant 0 : index
    %35 = vector.load %arg3[%c32, %c0_25] : memref<96x32xf32, #tpu.memory_space<vmem>>, vector<32x32xf32>
    %cst_26 = arith.constant dense<0.000000e+00> : vector<16x32xf32>
    %36 = tpu.matmul %1, %35, %cst_26 {dimension_numbers = #tpu.dot_dimension_numbers<[1], [1], [0], [0], [0, 0, 1, 0], [], []>, precision = #tpu.contract_precision<fp32>} : vector<16x32xf32>, vector<32x32xf32>, vector<16x32xf32> -> vector<16x32xf32>
    %c0_27 = arith.constant 0 : index
    %c32_28 = arith.constant 32 : index
    %37 = vector.load %arg4[%c0_27, %c32_28] : memref<1x96xf32, #tpu.memory_space<vmem>>, vector<1x32xf32>
    %38 = vector.broadcast %37 : vector<1x32xf32> to vector<16x32xf32>
    %39 = arith.addf %36, %38 : vector<16x32xf32>
    %c0_29 = arith.constant 0 : index
    %c0_30 = arith.constant 0 : index
    %c32_31 = arith.constant 32 : index
    %40 = vector.load %arg8[%c0_29, %c0_30, %c32_31] : memref<1x16x96xf32, #tpu.memory_space<vmem>>, vector<1x16x32xf32>
    %41 = vector.shape_cast %40 : vector<1x16x32xf32> to vector<16x32xf32>
    %42 = vector.shape_cast %39 : vector<16x32xf32> to vector<1x16x32xf32>
    tpu.vector_store %arg8[%c0_29, %c0_30, %c32_31], %42 {strides = array<i32>} : memref<1x16x96xf32, #tpu.memory_space<vmem>>, vector<1x16x32xf32>,
    %c64 = arith.constant 64 : index
    %c0_32 = arith.constant 0 : index
    %43 = vector.load %arg3[%c64, %c0_32] : memref<96x32xf32, #tpu.memory_space<vmem>>, vector<32x32xf32>
    %cst_33 = arith.constant dense<0.000000e+00> : vector<16x32xf32>
    %44 = tpu.matmul %1, %43, %cst_33 {dimension_numbers = #tpu.dot_dimension_numbers<[1], [1], [0], [0], [0, 0, 1, 0], [], []>, precision = #tpu.contract_precision<fp32>} : vector<16x32xf32>, vector<32x32xf32>, vector<16x32xf32> -> vector<16x32xf32>
    %c0_34 = arith.constant 0 : index
    %c64_35 = arith.constant 64 : index
    %45 = vector.load %arg4[%c0_34, %c64_35] : memref<1x96xf32, #tpu.memory_space<vmem>>, vector<1x32xf32>
    %46 = vector.broadcast %45 : vector<1x32xf32> to vector<16x32xf32>
    %47 = arith.addf %44, %46 : vector<16x32xf32>
    %48 = arith.addf %47, %25 : vector<16x32xf32>
    %c0_36 = arith.constant 0 : index
    %c0_37 = arith.constant 0 : index
    %c64_38 = arith.constant 64 : index
    %49 = vector.load %arg8[%c0_36, %c0_37, %c64_38] : memref<1x16x96xf32, #tpu.memory_space<vmem>>, vector<1x16x32xf32>
    %50 = vector.shape_cast %49 : vector<1x16x32xf32> to vector<16x32xf32>
    %51 = vector.shape_cast %48 : vector<16x32xf32> to vector<1x16x32xf32>
    tpu.vector_store %arg8[%c0_36, %c0_37, %c64_38], %51 {strides = array<i32>} : memref<1x16x96xf32, #tpu.memory_space<vmem>>, vector<1x16x32xf32>,
    return
  }
  func.func @transform_0(%arg0: i32, %arg1: i32) -> (i32, i32, i32) {
    %c0_i32 = arith.constant 0 : i32
    %c0_i32_0 = arith.constant 0 : i32
    return %arg0, %arg1, %c0_i32 : i32, i32, i32
  }
  func.func @transform_1(%arg0: i32, %arg1: i32) -> (i32, i32) {
    %c0_i32 = arith.constant 0 : i32
    %c0_i32_0 = arith.constant 0 : i32
    %c0_i32_1 = arith.constant 0 : i32
    return %c0_i32, %c0_i32_0 : i32, i32
  }
  func.func @transform_2(%arg0: i32, %arg1: i32) -> (i32, i32) {
    %c0_i32 = arith.constant 0 : i32
    %c0_i32_0 = arith.constant 0 : i32
    %c0_i32_1 = arith.constant 0 : i32
    return %c0_i32, %c0_i32_0 : i32, i32
  }
  func.func @transform_3(%arg0: i32, %arg1: i32) -> (i32, i32, i32) {
    %c0_i32 = arith.constant 0 : i32
    %c0_i32_0 = arith.constant 0 : i32
    %c0_i32_1 = arith.constant 0 : i32
    return %arg0, %c0_i32, %c0_i32_0 : i32, i32, i32
  }
  func.func @transform_4(%arg0: i32, %arg1: i32) -> (i32, i32, i32) {
    %c0_i32 = arith.constant 0 : i32
    %c0_i32_0 = arith.constant 0 : i32
    %c0_i32_1 = arith.constant 0 : i32
    return %arg0, %c0_i32, %c0_i32_0 : i32, i32, i32
  }
  func.func @transform_5(%arg0: i32, %arg1: i32) -> (i32, i32, i32) {
    %c0_i32 = arith.constant 0 : i32
    %c0_i32_0 = arith.constant 0 : i32
    %c0_i32_1 = arith.constant 0 : i32
    return %arg0, %c0_i32, %c0_i32_0 : i32, i32, i32
  }
  func.func @transform_6(%arg0: i32, %arg1: i32) -> (i32, i32, i32) {
    %c0_i32 = arith.constant 0 : i32
    %c0_i32_0 = arith.constant 0 : i32
    return %arg0, %arg1, %c0_i32 : i32, i32, i32
  }
}

</mosaic_0001>

<llo_original>
// kernel: tpu_custom_call.1
$region0: #{tpu_custom_call.1}
  #allocation0 [shape = 'u32[]', space=smem, size = 0x4, offset = 0x4, fixed_abs, tag = 'smem constant byte address 0x4 - core index']
  #allocation1 [shape = 'u32[144,128]{1,0:T(1,128)}', space=vmem, size = 0x12000, scoped, tag = 'internal scratch']
  %s0 = inlined_call_operand.vmem [shape: f32[4,32,32], index: 0, kind: input, shape index: {}]
  %s1 = inlined_call_operand.vmem [shape: f32[96,32], index: 1, kind: input, shape index: {}]
  %s2 = inlined_call_operand.vmem [shape: f32[1,96], index: 2, kind: input, shape index: {}]
  %s3 = inlined_call_operand.vmem [shape: f32[4,16,32], index: 3, kind: input, shape index: {}]
  %s4 = inlined_call_operand.vmem [shape: f32[4,32,8], index: 4, kind: input, shape index: {}]
  %s5 = inlined_call_operand.vmem [shape: f32[4,32,8], index: 5, kind: input, shape index: {}]
  %s6 = inlined_call_operand.hbm [shape: f32[4,32,96], index: 6, kind: output, shape index: {}]
  %s7 = sld [smem:[#allocation0]]
  $region57: #{tpu_custom_call.1} parent=0
    _
  %s9 = ssub.s32 1, %s7
  %s10 = scalar_select 0, %s9, %s7
  $region1: #{tpu_custom_call.1} parent=0
    #allocation2 [shape = 'u8[16384]{0}', space=vmem, size = 0x4000, scoped, tag = 'output window, operand 0']
    #allocation3 [shape = 's32[2]{0}', space=sflag, size = 0x8, scoped, tag = 'scoped memory for tpu_custom_call.1']
    %11 = vsyncpa [#allocation3], 0
    %s12 = scalar_lea.sflag [#allocation3], 1
    %13 = vsyncpa %s12, 0
    loop: start=0, step=1, limit=10
    $region2: #{tpu_custom_call.1} parent=1 // loop_pre_header
      _
    $region3: #{tpu_custom_call.1} parent=1 // loop_header
      %s15 = sphi 0, %s19
      %p16 = scmp.ge.s32.totalorder %s15, 10
      %s22 = sphi 0, %s34
      %s23 = sphi 0, %s30
      %s24 = sphi 0, %s22
      %s25 = sphi 0, %s23
      %s26 = sphi 0, %s24
      %s27 = sphi 0, %s25
      %s39 = sphi 0, %s41
      %s42 = sphi 0, %s39
      %s43 = sphi 0, %s42
      %s59 = sphi 0, %s43
      %s63 = sphi 0, %s63
      %s65 = sphi 0, %s63
      %s66 = sphi 0, %s65
      %s80 = sphi 0, %s66
      %s84 = sphi 0, %s84
      %s86 = sphi 0, %s84
      %s87 = sphi 0, %s86
      %s101 = sphi 0, %s87
      %s107 = sphi 0, %s109
      %s110 = sphi 0, %s107
      %s111 = sphi 0, %s110
      %s127 = sphi 0, %s111
      %s133 = sphi 0, %s135
      %s136 = sphi 0, %s133
      %s137 = sphi 0, %s136
      %s153 = sphi 0, %s137
      %s159 = sphi 0, %s161
      %s162 = sphi 0, %s159
      %s163 = sphi 0, %s162
      %s179 = sphi 0, %s163
      %s187 = sphi 0, %s189
      %s190 = sphi 0, %s187
      %s191 = sphi 0, %s190
      %s207 = sphi 0, %s191
    $region4: #{tpu_custom_call.1} parent=1 // loop_header_branch
      %18 = sbr.rel (%p16) target = $region8
    $region5: #{tpu_custom_call.1} parent=1 // loop_body
      %s20 = ssub.s32 %s15, 1
      %s21 = ssub.s32 %s15, 2
      %s28 = sadd.s32 1, %s23
      %p29 = scmp.ge.s32.totalorder %s28, 2
      %s30 = scalar_select %p29, 0, %s28
      %s31 = sadd.s32 1, %s22
      %s32 = scalar_select %p29, %s31, %s22
      %p33 = scmp.ge.s32.totalorder %s32, 4
      %s34 = scalar_select %p33, 0, %s32
      %s35 = ssub.s32 %s22, %s34
      %s36 = ssub.s32 %s23, %s30
      %s37 = sor.u32 %s35, %s36
      %p38 = scmp.eq.s32.totalorder %s37, 0
      %s40 = sadd.s32 %s39, 1
      %s41 = scalar_select %p38, %s39, %s40
      %p44 = pneg %p38
      %p45 = scmp.eq.s32.totalorder %s15, 7
      %p46 = por %p44, %p45
      %p47 = scmp.ne.s32.totalorder %s39, %s42
      %p48 = scmp.eq.s32.totalorder %s15, 0
      %p49 = por %p47, %p48
      %p50 = scmp.ne.s32.totalorder %s39, %s42
      %p51 = scmp.eq.s32.totalorder %s20, 7
      %p52 = por %p50, %p51
      %p53 = scmp.ne.s32.totalorder %s42, %s43
      %p54 = scmp.eq.s32.totalorder %s20, 0
      %p55 = por %p53, %p54
      %p56 = scmp.ne.s32.totalorder %s42, %s43
      %p57 = scmp.eq.s32.totalorder %s21, 7
      %p58 = por %p56, %p57
      %p60 = scmp.ne.s32.totalorder %s43, %s59
      %p61 = scmp.eq.s32.totalorder %s21, 0
      %p62 = por %p60, %p61
      %s64 = sadd.s32 %s63, 1
      %p67 = scmp.eq.s32.totalorder %s15, 7
      %p68 = scmp.ne.s32.totalorder %s63, %s65
      %p69 = scmp.eq.s32.totalorder %s15, 0
      %p70 = por %p68, %p69
      %p71 = scmp.ne.s32.totalorder %s63, %s65
      %p72 = scmp.eq.s32.totalorder %s20, 7
      %p73 = por %p71, %p72
      %p74 = scmp.ne.s32.totalorder %s65, %s66
      %p75 = scmp.eq.s32.totalorder %s20, 0
      %p76 = por %p74, %p75
      %p77 = scmp.ne.s32.totalorder %s65, %s66
      %p78 = scmp.eq.s32.totalorder %s21, 7
      %p79 = por %p77, %p78
      %p81 = scmp.ne.s32.totalorder %s66, %s80
      %p82 = scmp.eq.s32.totalorder %s21, 0
      %p83 = por %p81, %p82
      %s85 = sadd.s32 %s84, 1
      %p88 = scmp.eq.s32.totalorder %s15, 7
      %p89 = scmp.ne.s32.totalorder %s84, %s86
      %p90 = scmp.eq.s32.totalorder %s15, 0
      %p91 = por %p89, %p90
      %p92 = scmp.ne.s32.totalorder %s84, %s86
      %p93 = scmp.eq.s32.totalorder %s20, 7
      %p94 = por %p92, %p93
      %p95 = scmp.ne.s32.totalorder %s86, %s87
      %p96 = scmp.eq.s32.totalorder %s20, 0
      %p97 = por %p95, %p96
      %p98 = scmp.ne.s32.totalorder %s86, %s87
      %p99 = scmp.eq.s32.totalorder %s21, 7
      %p100 = por %p98, %p99
      %p102 = scmp.ne.s32.totalorder %s87, %s101
      %p103 = scmp.eq.s32.totalorder %s21, 0
      %p104 = por %p102, %p103
      %s105 = ssub.s32 %s22, %s34
      %p106 = scmp.eq.s32.totalorder %s105, 0
      %s108 = sadd.s32 %s107, 1
      %s109 = scalar_select %p106, %s107, %s108
      %p112 = pneg %p106
      %p113 = scmp.eq.s32.totalorder %s15, 7
      %p114 = por %p112, %p113
      %p115 = scmp.ne.s32.totalorder %s107, %s110
      %p116 = scmp.eq.s32.totalorder %s15, 0
      %p117 = por %p115, %p116
      %p118 = scmp.ne.s32.totalorder %s107, %s110
      %p119 = scmp.eq.s32.totalorder %s20, 7
      %p120 = por %p118, %p119
      %p121 = scmp.ne.s32.totalorder %s110, %s111
      %p122 = scmp.eq.s32.totalorder %s20, 0
      %p123 = por %p121, %p122
      %p124 = scmp.ne.s32.totalorder %s110, %s111
      %p125 = scmp.eq.s32.totalorder %s21, 7
      %p126 = por %p124, %p125
      %p128 = scmp.ne.s32.totalorder %s111, %s127
      %p129 = scmp.eq.s32.totalorder %s21, 0
      %p130 = por %p128, %p129
      %s131 = ssub.s32 %s22, %s34
      %p132 = scmp.eq.s32.totalorder %s131, 0
      %s134 = sadd.s32 %s133, 1
      %s135 = scalar_select %p132, %s133, %s134
      %p138 = pneg %p132
      %p139 = scmp.eq.s32.totalorder %s15, 7
      %p140 = por %p138, %p139
      %p141 = scmp.ne.s32.totalorder %s133, %s136
      %p142 = scmp.eq.s32.totalorder %s15, 0
      %p143 = por %p141, %p142
      %p144 = scmp.ne.s32.totalorder %s133, %s136
      %p145 = scmp.eq.s32.totalorder %s20, 7
      %p146 = por %p144, %p145
      %p147 = scmp.ne.s32.totalorder %s136, %s137
      %p148 = scmp.eq.s32.totalorder %s20, 0
      %p149 = por %p147, %p148
      %p150 = scmp.ne.s32.totalorder %s136, %s137
      %p151 = scmp.eq.s32.totalorder %s21, 7
      %p152 = por %p150, %p151
      %p154 = scmp.ne.s32.totalorder %s137, %s153
      %p155 = scmp.eq.s32.totalorder %s21, 0
      %p156 = por %p154, %p155
      %s157 = ssub.s32 %s22, %s34
      %p158 = scmp.eq.s32.totalorder %s157, 0
      %s160 = sadd.s32 %s159, 1
      %s161 = scalar_select %p158, %s159, %s160
      %p164 = pneg %p158
      %p165 = scmp.eq.s32.totalorder %s15, 7
      %p166 = por %p164, %p165
      %p167 = scmp.ne.s32.totalorder %s159, %s162
      %p168 = scmp.eq.s32.totalorder %s15, 0
      %p169 = por %p167, %p168
      %p170 = scmp.ne.s32.totalorder %s159, %s162
      %p171 = scmp.eq.s32.totalorder %s20, 7
      %p172 = por %p170, %p171
      %p173 = scmp.ne.s32.totalorder %s162, %s163
      %p174 = scmp.eq.s32.totalorder %s20, 0
      %p175 = por %p173, %p174
      %p176 = scmp.ne.s32.totalorder %s162, %s163
      %p177 = scmp.eq.s32.totalorder %s21, 7
      %p178 = por %p176, %p177
      %p180 = scmp.ne.s32.totalorder %s163, %s179
      %p181 = scmp.eq.s32.totalorder %s21, 0
      %p182 = por %p180, %p181
      %s183 = ssub.s32 %s22, %s34
      %s184 = ssub.s32 %s23, %s30
      %s185 = sor.u32 %s183, %s184
      %p186 = scmp.eq.s32.totalorder %s185, 0
      %s188 = sadd.s32 %s187, 1
      %s189 = scalar_select %p186, %s187, %s188
      %p192 = pneg %p186
      %p193 = scmp.eq.s32.totalorder %s15, 7
      %p194 = por %p192, %p193
      %p195 = scmp.ne.s32.totalorder %s187, %s190
      %p196 = scmp.eq.s32.totalorder %s15, 0
      %p197 = por %p195, %p196
      %p198 = scmp.ne.s32.totalorder %s187, %s190
      %p199 = scmp.eq.s32.totalorder %s20, 7
      %p200 = por %p198, %p199
      %p201 = scmp.ne.s32.totalorder %s190, %s191
      %p202 = scmp.eq.s32.totalorder %s20, 0
      %p203 = por %p201, %p202
      %p204 = scmp.ne.s32.totalorder %s190, %s191
      %p205 = scmp.eq.s32.totalorder %s21, 7
      %p206 = por %p204, %p205
      %p208 = scmp.ne.s32.totalorder %s191, %s207
      %p209 = scmp.eq.s32.totalorder %s21, 0
      %p210 = por %p208, %p209
      %p211 = scmp.le.s32.totalorder 1, %s15
      %p212 = scmp.lt.s32.totalorder %s15, 9
      %p213 = pnand %p211, %p212
      %p214 = pneg %p213
      // Predicated region
      $region9: #{tpu_custom_call.1} parent=5 // pred_check
        _
      $region10: #{tpu_custom_call.1} parent=5 // pred_check_branch
        %216 = sbr.rel (%p213) target = $region12
      $region11: #{tpu_custom_call.1} parent=5 // pred_region
        %s217 = ssub.s32 %s15, 1
        // Predicated region
        $region13: #{tpu_custom_call.1} parent=11 // pred_check
          %p218 = pneg %p76
        $region14: #{tpu_custom_call.1} parent=11 // pred_check_branch
          %220 = sbr.rel (%p218) target = $region16
        $region15: #{tpu_custom_call.1} parent=11 // pred_region
          _
        $region16: #{tpu_custom_call.1} parent=11 // pred_fallthru
          _
        // Predicated region
        $region17: #{tpu_custom_call.1} parent=11 // pred_check
          %p221 = pneg %p97
        $region18: #{tpu_custom_call.1} parent=11 // pred_check_branch
          %223 = sbr.rel (%p221) target = $region20
        $region19: #{tpu_custom_call.1} parent=11 // pred_region
          _
        $region20: #{tpu_custom_call.1} parent=11 // pred_fallthru
          _
        // Predicated region
        $region21: #{tpu_custom_call.1} parent=11 // pred_check
          %p224 = pneg %p123
        $region22: #{tpu_custom_call.1} parent=11 // pred_check_branch
          %226 = sbr.rel (%p224) target = $region24
        $region23: #{tpu_custom_call.1} parent=11 // pred_region
          %p227 = scmp.lt.s32.totalorder %s24, 3
          %s228 = scalar_select %p227, %s24, 3
          %s229 = smul.addr %s228, 2
          %s230 = smul.addr %s229, 8
          %s231 = scalar_lea.vmem %s3, %s230
        $region24: #{tpu_custom_call.1} parent=11 // pred_fallthru
          _
        // Predicated region
        $region25: #{tpu_custom_call.1} parent=11 // pred_check
          %p232 = pneg %p149
        $region26: #{tpu_custom_call.1} parent=11 // pred_check_branch
          %234 = sbr.rel (%p232) target = $region28
        $region27: #{tpu_custom_call.1} parent=11 // pred_region
          %p235 = scmp.lt.s32.totalorder %s24, 3
          %s236 = scalar_select %p235, %s24, 3
          %s237 = smul.addr %s236, 4
          %s238 = smul.addr %s237, 8
          %s239 = scalar_lea.vmem %s4, %s238
        $region28: #{tpu_custom_call.1} parent=11 // pred_fallthru
          _
        // Predicated region
        $region29: #{tpu_custom_call.1} parent=11 // pred_check
          %p240 = pneg %p175
        $region30: #{tpu_custom_call.1} parent=11 // pred_check_branch
          %242 = sbr.rel (%p240) target = $region32
        $region31: #{tpu_custom_call.1} parent=11 // pred_region
          %p243 = scmp.lt.s32.totalorder %s24, 3
          %s244 = scalar_select %p243, %s24, 3
          %s245 = smul.addr %s244, 4
          %s246 = smul.addr %s245, 8
          %s247 = scalar_lea.vmem %s5, %s246
        $region32: #{tpu_custom_call.1} parent=11 // pred_fallthru
          _
      $region12: #{tpu_custom_call.1} parent=5 // pred_fallthru
        _
      %p248 = scmp.lt.s32.totalorder %s15, 8
      // Predicated region
      $region33: #{tpu_custom_call.1} parent=5 // pred_check
        %p249 = pneg %p248
      $region34: #{tpu_custom_call.1} parent=5 // pred_check_branch
        %251 = sbr.rel (%p249) target = $region36
      $region35: #{tpu_custom_call.1} parent=5 // pred_region
        // Predicated region
        $region37: #{tpu_custom_call.1} parent=35 // pred_check
          %p252 = pneg %p49
        $region38: #{tpu_custom_call.1} parent=35 // pred_check_branch
          %254 = sbr.rel (%p252) target = $region40
        $region39: #{tpu_custom_call.1} parent=35 // pred_region
          %s255 = smul.u32 2, %s23
          %p256 = scmp.lt.s32.totalorder %s22, 3
          %s257 = scalar_select %p256, %s22, 3
          %p258 = scmp.lt.s32.totalorder %s255, 3
          %s259 = scalar_select %p258, %s255, 3
          %s260 = smul.addr %s257, 4
          %s261 = sadd.s32 %s259, %s260
          %s262 = smul.addr %s261, 8
          %s263 = scalar_lea.vmem %s0, %s262
          %s264 = smul.u32 2, %s23
        $region40: #{tpu_custom_call.1} parent=35 // pred_fallthru
          _
      $region36: #{tpu_custom_call.1} parent=5 // pred_fallthru
        _
      %p265 = scmp.le.s32.totalorder 1, %s15
      %p266 = scmp.lt.s32.totalorder %s15, 9
      %p267 = pnand %p265, %p266
      %p268 = pneg %p267
      // Predicated region
      $region41: #{tpu_custom_call.1} parent=5 // pred_check
        _
      $region42: #{tpu_custom_call.1} parent=5 // pred_check_branch
        %270 = sbr.rel (%p267) target = $region44
      $region43: #{tpu_custom_call.1} parent=5 // pred_region
        %s271 = ssub.s32 %s15, 1
        %s272 = smul.u32 2, %s25
        %p273 = scmp.lt.s32.totalorder %s24, 3
        %s274 = scalar_select %p273, %s24, 3
        %p275 = scmp.lt.s32.totalorder %s272, 3
        %s276 = scalar_select %p275, %s272, 3
        %s277 = smul.addr %s274, 4
        %s278 = sadd.s32 %s276, %s277
        %s279 = smul.addr %s278, 8
        %s280 = scalar_lea.vmem %s0, %s279
        %p281 = pneg %p55
        %p282 = pneg %p52
        %p283 = pneg %p76
        %p284 = pneg %p73
        %p285 = pneg %p97
        %p286 = pneg %p94
        %p287 = scmp.lt.s32.totalorder %s24, 3
        %s288 = scalar_select %p287, %s24, 3
        %s289 = smul.addr %s288, 2
        %s290 = smul.addr %s289, 8
        %s291 = scalar_lea.vmem %s3, %s290
        %p292 = pneg %p123
        %p293 = pneg %p120
        %p294 = scmp.lt.s32.totalorder %s24, 3
        %s295 = scalar_select %p294, %s24, 3
        %s296 = smul.addr %s295, 4
        %s297 = smul.addr %s296, 8
        %s298 = scalar_lea.vmem %s4, %s297
        %p299 = pneg %p149
        %p300 = pneg %p146
        %p301 = scmp.lt.s32.totalorder %s24, 3
        %s302 = scalar_select %p301, %s24, 3
        %s303 = smul.addr %s302, 4
        %s304 = smul.addr %s303, 8
        %s305 = scalar_lea.vmem %s5, %s304
        %p306 = pneg %p175
        %p307 = pneg %p172
        %p308 = pneg %p203
        %p309 = pneg %p200
        %s310 = sand.u32 %s190, 1
        %s311 = scalar_lea.sflag [#allocation3], %s310
        %s312 = sand.u32 %s190, 1
        %s313 = smul.addr %s312, 16
        %s314 = scalar_lea.vmem [#allocation2], %s313
        %s315 = smul.u32 2, %s25
        %p316 = scmp.lt.s32.totalorder %s24, 3
        %s317 = scalar_select %p316, %s24, 3
        %p318 = scmp.lt.s32.totalorder %s315, 3
        %s319 = scalar_select %p318, %s315, 3
        %s320 = smul.addr %s317, 4
        %s321 = sadd.s32 %s319, %s320
        %s322 = smul.addr %s321, 8
        %s323 = scalar_lea.vmem %s0, %s322
        %s324 = smul.u32 2, %s25
        %p325 = scmp.lt.s32.totalorder %s24, 3
        %s326 = scalar_select %p325, %s24, 3
        %s327 = smul.addr %s326, 2
        %s328 = smul.addr %s327, 8
        %s329 = scalar_lea.vmem %s3, %s328
        %p330 = scmp.lt.s32.totalorder %s24, 3
        %s331 = scalar_select %p330, %s24, 3
        %s332 = smul.addr %s331, 4
        %s333 = smul.addr %s332, 8
        %s334 = scalar_lea.vmem %s4, %s333
        %p335 = scmp.lt.s32.totalorder %s24, 3
        %s336 = scalar_select %p335, %s24, 3
        %s337 = smul.addr %s336, 4
        %s338 = smul.addr %s337, 8
        %s339 = scalar_lea.vmem %s5, %s338
        %s340 = smul.u32 2, %s25
        %v341 = vld [vmem:[%s323] sm:$0xff]
        %v342 = vld [vmem:[%s323 + $0x8] sm:$0xff]
        %v343 = vld [vmem:[%s329] sm:$0xff]
        %v344 = vld [vmem:[%s329 + $0x8] sm:$0xff]
        %vm345 = vcmask 261120
        %v347 = vsel %vm345, %v341, 0
        %v350 = vsel %vm345, %v342, 0
        %v353 = vsel %vm345, %v343, 0
        %v356 = vsel %vm345, %v344, 0
        %358 = vmatprep.subr.mxu0 0.0
        %359 = vmatpush1.xpose.msra.mxu0 0.0
        %360 = vmatprep.subr.mxu0 0.0
        %361 = vmatpush1.xpose.msra.mxu0 0.0
        %362 = vmatprep.subr.mxu0 0.0
        %363 = vmatpush1.xpose.msra.mxu0 0.0
        %364 = vmatprep.subr.mxu0 0.0
        %365 = vmatpush1.xpose.msra.mxu0 0.0
        %366 = vmatprep.subr.mxu0 0.0
        %367 = vmatpush1.xpose.msra.mxu0 0.0
        %368 = vmatprep.subr.mxu0 0.0
        %369 = vmatpush1.xpose.msra.mxu0 0.0
        %370 = vmatprep.subr.mxu0 0.0
        %371 = vmatpush1.xpose.msra.mxu0 0.0
        %372 = vmatprep.subr.mxu0 0.0
        %373 = vmatpush1.xpose.msra.mxu0 0.0
        %374 = vmatprep.subr.mxu0 0.0
        %375 = vmatpush1.xpose.msra.mxu0 0.0
        %376 = vmatprep.subr.mxu0 0.0
        %377 = vmatpush1.xpose.msra.mxu0 0.0
        %378 = vmatprep.subr.mxu0 0.0
        %379 = vmatpush1.xpose.msra.mxu0 0.0
        %380 = vmatprep.subr.mxu0 0.0
        %381 = vmatpush1.xpose.msra.mxu0 0.0
        %382 = vmatprep.subr.mxu0 0.0
        %383 = vmatpush1.xpose.msra.mxu0 0.0
        %384 = vmatprep.subr.mxu0 0.0
        %385 = vmatpush1.xpose.msra.mxu0 0.0
        %386 = vmatprep.subr.mxu0 0.0
        %v387 = vand.u32 %v356, 4294901760
        %388 = vmatpush1.xpose.msra.mxu0 %v387
        %389 = vmatprep.subr.mxu0 0.0
        %v390 = vand.u32 %v353, 4294901760
        %391 = vmatpush1.xpose.msra.mxu0 %v390
        %392 = vmatprep.subr.mxu0 0.0
        %393 = vmatpush2.xpose.msra.mxu0 0.0
        %394 = vmatprep.subr.mxu0 0.0
        %395 = vmatpush2.xpose.msra.mxu0 0.0
        %396 = vmatprep.subr.mxu0 0.0
        %397 = vmatpush2.xpose.msra.mxu0 0.0
        %398 = vmatprep.subr.mxu0 0.0
        %399 = vmatpush2.xpose.msra.mxu0 0.0
        %400 = vmatprep.subr.mxu0 0.0
        %401 = vmatpush2.xpose.msra.mxu0 0.0
        %402 = vmatprep.subr.mxu0 0.0
        %403 = vmatpush2.xpose.msra.mxu0 0.0
        %404 = vmatprep.subr.mxu0 0.0
        %405 = vmatpush2.xpose.msra.mxu0 0.0
        %406 = vmatprep.subr.mxu0 0.0
        %407 = vmatpush2.xpose.msra.mxu0 0.0
        %408 = vmatprep.subr.mxu0 0.0
        %409 = vmatpush2.xpose.msra.mxu0 0.0
        %410 = vmatprep.subr.mxu0 0.0
        %411 = vmatpush2.xpose.msra.mxu0 0.0
        %412 = vmatprep.subr.mxu0 0.0
        %413 = vmatpush2.xpose.msra.mxu0 0.0
        %414 = vmatprep.subr.mxu0 0.0
        %415 = vmatpush2.xpose.msra.mxu0 0.0
        %416 = vmatprep.subr.mxu0 0.0
        %417 = vmatpush2.xpose.msra.mxu0 0.0
        %418 = vmatprep.subr.mxu0 0.0
        %419 = vmatpush2.xpose.msra.mxu0 0.0
        %420 = vmatprep.subr.mxu0 0.0
        %421 = vmatpush2.xpose.msra.mxu0 0.0
        %422 = vmatprep.subr.mxu0 0.0
        %423 = vmatpush2.xpose.msra.mxu0 0.0
        %424 = vmatprep.mubr.f32.mxu0 0.0
        %v425 = vand.u32 %v347, 4294901760
        %v426 = vsub.f32 %v347, %v425
        %v427 = vand.u32 %v426, 4294901760
        %v428 = vsub.f32 %v426, %v427
        %v429 = vand.u32 %v428, 4294901760
        %430 = vmatmul.mubr.f32.gmra.mxu0 %v429
        %v431 = vpop.f32.mrf.mxu0
        %v432 = vadd.f32 0.0, %v431
        %v433 = vpop.f32.mrf.mxu0
        %434 = vmatprep.mubr.f32.mxu0 0.0
        %v435 = vand.u32 %v350, 4294901760
        %v436 = vsub.f32 %v350, %v435
        %v437 = vand.u32 %v436, 4294901760
        %v438 = vsub.f32 %v436, %v437
        %v439 = vand.u32 %v438, 4294901760
        %440 = vmatmul.mubr.f32.gmra.mxu0 %v439
        %v441 = vpop.f32.mrf.mxu0
        %v442 = vadd.f32 0.0, %v441
        %v443 = vpop.f32.mrf.mxu0
        %444 = vdwg.mxu0
        %445 = vmatprep.subr.mxu0 0.0
        %446 = vmatpush1.xpose.msra.mxu0 0.0
        %447 = vmatprep.subr.mxu0 0.0
        %448 = vmatpush1.xpose.msra.mxu0 0.0
        %449 = vmatprep.subr.mxu0 0.0
        %450 = vmatpush1.xpose.msra.mxu0 0.0
        %451 = vmatprep.subr.mxu0 0.0
        %452 = vmatpush1.xpose.msra.mxu0 0.0
        %453 = vmatprep.subr.mxu0 0.0
        %454 = vmatpush1.xpose.msra.mxu0 0.0
        %455 = vmatprep.subr.mxu0 0.0
        %456 = vmatpush1.xpose.msra.mxu0 0.0
        %457 = vmatprep.subr.mxu0 0.0
        %458 = vmatpush1.xpose.msra.mxu0 0.0
        %459 = vmatprep.subr.mxu0 0.0
        %460 = vmatpush1.xpose.msra.mxu0 0.0
        %461 = vmatprep.subr.mxu0 0.0
        %462 = vmatpush1.xpose.msra.mxu0 0.0
        %463 = vmatprep.subr.mxu0 0.0
        %464 = vmatpush1.xpose.msra.mxu0 0.0
        %465 = vmatprep.subr.mxu0 0.0
        %466 = vmatpush1.xpose.msra.mxu0 0.0
        %467 = vmatprep.subr.mxu0 0.0
        %468 = vmatpush1.xpose.msra.mxu0 0.0
        %469 = vmatprep.subr.mxu0 0.0
        %470 = vmatpush1.xpose.msra.mxu0 0.0
        %471 = vmatprep.subr.mxu0 0.0
        %472 = vmatpush1.xpose.msra.mxu0 0.0
        %473 = vmatprep.subr.mxu0 0.0
        %v474 = vand.u32 %v356, 4294901760
        %v475 = vsub.f32 %v356, %v474
        %v476 = vand.u32 %v475, 4294901760
        %v477 = vsub.f32 %v475, %v476
        %v478 = vand.u32 %v477, 4294901760
        %479 = vmatpush1.xpose.msra.mxu0 %v478
        %480 = vmatprep.subr.mxu0 0.0
        %v481 = vand.u32 %v353, 4294901760
        %v482 = vsub.f32 %v353, %v481
        %v483 = vand.u32 %v482, 4294901760
        %v484 = vsub.f32 %v482, %v483
        %v485 = vand.u32 %v484, 4294901760
        %486 = vmatpush1.xpose.msra.mxu0 %v485
        %487 = vmatprep.subr.mxu0 0.0
        %488 = vmatpush2.xpose.msra.mxu0 0.0
        %489 = vmatprep.subr.mxu0 0.0
        %490 = vmatpush2.xpose.msra.mxu0 0.0
        %491 = vmatprep.subr.mxu0 0.0
        %492 = vmatpush2.xpose.msra.mxu0 0.0
        %493 = vmatprep.subr.mxu0 0.0
        %494 = vmatpush2.xpose.msra.mxu0 0.0
        %495 = vmatprep.subr.mxu0 0.0
        %496 = vmatpush2.xpose.msra.mxu0 0.0
        %497 = vmatprep.subr.mxu0 0.0
        %498 = vmatpush2.xpose.msra.mxu0 0.0
        %499 = vmatprep.subr.mxu0 0.0
        %500 = vmatpush2.xpose.msra.mxu0 0.0
        %501 = vmatprep.subr.mxu0 0.0
        %502 = vmatpush2.xpose.msra.mxu0 0.0
        %503 = vmatprep.subr.mxu0 0.0
        %504 = vmatpush2.xpose.msra.mxu0 0.0
        %505 = vmatprep.subr.mxu0 0.0
        %506 = vmatpush2.xpose.msra.mxu0 0.0
        %507 = vmatprep.subr.mxu0 0.0
        %508 = vmatpush2.xpose.msra.mxu0 0.0
        %509 = vmatprep.subr.mxu0 0.0
        %510 = vmatpush2.xpose.msra.mxu0 0.0
        %511 = vmatprep.subr.mxu0 0.0
        %512 = vmatpush2.xpose.msra.mxu0 0.0
        %513 = vmatprep.subr.mxu0 0.0
        %514 = vmatpush2.xpose.msra.mxu0 0.0
        %515 = vmatprep.subr.mxu0 0.0
        %516 = vmatpush2.xpose.msra.mxu0 0.0
        %517 = vmatprep.subr.mxu0 0.0
        %518 = vmatpush2.xpose.msra.mxu0 0.0
        %519 = vmatprep.mubr.f32.mxu0 0.0
        %v520 = vand.u32 %v347, 4294901760
        %521 = vmatmul.mubr.f32.gmra.mxu0 %v520
        %v522 = vpop.f32.mrf.mxu0
        %v523 = vadd.f32 %v432, %v522
        %v524 = vpop.f32.mrf.mxu0
        %525 = vmatprep.mubr.f32.mxu0 0.0
        %v526 = vand.u32 %v350, 4294901760
        %527 = vmatmul.mubr.f32.gmra.mxu0 %v526
        %v528 = vpop.f32.mrf.mxu0
        %v529 = vadd.f32 %v442, %v528
        %v530 = vpop.f32.mrf.mxu0
        %531 = vdwg.mxu0
        %532 = vmatprep.subr.mxu0 0.0
        %533 = vmatpush1.xpose.msra.mxu0 0.0
        %534 = vmatprep.subr.mxu0 0.0
        %535 = vmatpush1.xpose.msra.mxu0 0.0
        %536 = vmatprep.subr.mxu0 0.0
        %537 = vmatpush1.xpose.msra.mxu0 0.0
        %538 = vmatprep.subr.mxu0 0.0
        %539 = vmatpush1.xpose.msra.mxu0 0.0
        %540 = vmatprep.subr.mxu0 0.0
        %541 = vmatpush1.xpose.msra.mxu0 0.0
        %542 = vmatprep.subr.mxu0 0.0
        %543 = vmatpush1.xpose.msra.mxu0 0.0
        %544 = vmatprep.subr.mxu0 0.0
        %545 = vmatpush1.xpose.msra.mxu0 0.0
        %546 = vmatprep.subr.mxu0 0.0
        %547 = vmatpush1.xpose.msra.mxu0 0.0
        %548 = vmatprep.subr.mxu0 0.0
        %549 = vmatpush1.xpose.msra.mxu0 0.0
        %550 = vmatprep.subr.mxu0 0.0
        %551 = vmatpush1.xpose.msra.mxu0 0.0
        %552 = vmatprep.subr.mxu0 0.0
        %553 = vmatpush1.xpose.msra.mxu0 0.0
        %554 = vmatprep.subr.mxu0 0.0
        %555 = vmatpush1.xpose.msra.mxu0 0.0
        %556 = vmatprep.subr.mxu0 0.0
        %557 = vmatpush1.xpose.msra.mxu0 0.0
        %558 = vmatprep.subr.mxu0 0.0
        %559 = vmatpush1.xpose.msra.mxu0 0.0
        %560 = vmatprep.subr.mxu0 0.0
        %v561 = vand.u32 %v356, 4294901760
        %v562 = vsub.f32 %v356, %v561
        %563 = vmatpush1.xpose.msra.mxu0 %v562
        %564 = vmatprep.subr.mxu0 0.0
        %v565 = vand.u32 %v353, 4294901760
        %v566 = vsub.f32 %v353, %v565
        %567 = vmatpush1.xpose.msra.mxu0 %v566
        %568 = vmatprep.subr.mxu0 0.0
        %569 = vmatpush2.xpose.msra.mxu0 0.0
        %570 = vmatprep.subr.mxu0 0.0
        %571 = vmatpush2.xpose.msra.mxu0 0.0
        %572 = vmatprep.subr.mxu0 0.0
        %573 = vmatpush2.xpose.msra.mxu0 0.0
        %574 = vmatprep.subr.mxu0 0.0
        %575 = vmatpush2.xpose.msra.mxu0 0.0
        %576 = vmatprep.subr.mxu0 0.0
        %577 = vmatpush2.xpose.msra.mxu0 0.0
        %578 = vmatprep.subr.mxu0 0.0
        %579 = vmatpush2.xpose.msra.mxu0 0.0
        %580 = vmatprep.subr.mxu0 0.0
        %581 = vmatpush2.xpose.msra.mxu0 0.0
        %582 = vmatprep.subr.mxu0 0.0
        %583 = vmatpush2.xpose.msra.mxu0 0.0
        %584 = vmatprep.subr.mxu0 0.0
        %585 = vmatpush2.xpose.msra.mxu0 0.0
        %586 = vmatprep.subr.mxu0 0.0
        %587 = vmatpush2.xpose.msra.mxu0 0.0
        %588 = vmatprep.subr.mxu0 0.0
        %589 = vmatpush2.xpose.msra.mxu0 0.0
        %590 = vmatprep.subr.mxu0 0.0
        %591 = vmatpush2.xpose.msra.mxu0 0.0
        %592 = vmatprep.subr.mxu0 0.0
        %593 = vmatpush2.xpose.msra.mxu0 0.0
        %594 = vmatprep.subr.mxu0 0.0
        %595 = vmatpush2.xpose.msra.mxu0 0.0
        %596 = vmatprep.subr.mxu0 0.0
        %597 = vmatpush2.xpose.msra.mxu0 0.0
        %598 = vmatprep.subr.mxu0 0.0
        %599 = vmatpush2.xpose.msra.mxu0 0.0
        %600 = vmatprep.mubr.f32.mxu0 0.0
        %v601 = vand.u32 %v347, 4294901760
        %v602 = vsub.f32 %v347, %v601
        %603 = vmatmul.mubr.f32.gmra.mxu0 %v602
        %v604 = vpop.f32.mrf.mxu0
        %v605 = vadd.f32 %v523, %v604
        %v606 = vpop.f32.mrf.mxu0
        %607 = vmatprep.mubr.f32.mxu0 0.0
        %v608 = vand.u32 %v350, 4294901760
        %v609 = vsub.f32 %v350, %v608
        %610 = vmatmul.mubr.f32.gmra.mxu0 %v609
        %v611 = vpop.f32.mrf.mxu0
        %v612 = vadd.f32 %v529, %v611
        %v613 = vpop.f32.mrf.mxu0
        %614 = vdwg.mxu0
        %615 = vmatprep.subr.mxu0 0.0
        %616 = vmatpush1.xpose.msra.mxu0 0.0
        %617 = vmatprep.subr.mxu0 0.0
        %618 = vmatpush1.xpose.msra.mxu0 0.0
        %619 = vmatprep.subr.mxu0 0.0
        %620 = vmatpush1.xpose.msra.mxu0 0.0
        %621 = vmatprep.subr.mxu0 0.0
        %622 = vmatpush1.xpose.msra.mxu0 0.0
        %623 = vmatprep.subr.mxu0 0.0
        %624 = vmatpush1.xpose.msra.mxu0 0.0
        %625 = vmatprep.subr.mxu0 0.0
        %626 = vmatpush1.xpose.msra.mxu0 0.0
        %627 = vmatprep.subr.mxu0 0.0
        %628 = vmatpush1.xpose.msra.mxu0 0.0
        %629 = vmatprep.subr.mxu0 0.0
        %630 = vmatpush1.xpose.msra.mxu0 0.0
        %631 = vmatprep.subr.mxu0 0.0
        %632 = vmatpush1.xpose.msra.mxu0 0.0
        %633 = vmatprep.subr.mxu0 0.0
        %634 = vmatpush1.xpose.msra.mxu0 0.0
        %635 = vmatprep.subr.mxu0 0.0
        %636 = vmatpush1.xpose.msra.mxu0 0.0
        %637 = vmatprep.subr.mxu0 0.0
        %638 = vmatpush1.xpose.msra.mxu0 0.0
        %639 = vmatprep.subr.mxu0 0.0
        %640 = vmatpush1.xpose.msra.mxu0 0.0
        %641 = vmatprep.subr.mxu0 0.0
        %642 = vmatpush1.xpose.msra.mxu0 0.0
        %643 = vmatprep.subr.mxu0 0.0
        %v644 = vand.u32 %v356, 4294901760
        %645 = vmatpush1.xpose.msra.mxu0 %v644
        %646 = vmatprep.subr.mxu0 0.0
        %v647 = vand.u32 %v353, 4294901760
        %648 = vmatpush1.xpose.msra.mxu0 %v647
        %649 = vmatprep.subr.mxu0 0.0
        %650 = vmatpush2.xpose.msra.mxu0 0.0
        %651 = vmatprep.subr.mxu0 0.0
        %652 = vmatpush2.xpose.msra.mxu0 0.0
        %653 = vmatprep.subr.mxu0 0.0
        %654 = vmatpush2.xpose.msra.mxu0 0.0
        %655 = vmatprep.subr.mxu0 0.0
        %656 = vmatpush2.xpose.msra.mxu0 0.0
        %657 = vmatprep.subr.mxu0 0.0
        %658 = vmatpush2.xpose.msra.mxu0 0.0
        %659 = vmatprep.subr.mxu0 0.0
        %660 = vmatpush2.xpose.msra.mxu0 0.0
        %661 = vmatprep.subr.mxu0 0.0
        %662 = vmatpush2.xpose.msra.mxu0 0.0
        %663 = vmatprep.subr.mxu0 0.0
        %664 = vmatpush2.xpose.msra.mxu0 0.0
        %665 = vmatprep.subr.mxu0 0.0
        %666 = vmatpush2.xpose.msra.mxu0 0.0
        %667 = vmatprep.subr.mxu0 0.0
        %668 = vmatpush2.xpose.msra.mxu0 0.0
        %669 = vmatprep.subr.mxu0 0.0
        %670 = vmatpush2.xpose.msra.mxu0 0.0
        %671 = vmatprep.subr.mxu0 0.0
        %672 = vmatpush2.xpose.msra.mxu0 0.0
        %673 = vmatprep.subr.mxu0 0.0
        %674 = vmatpush2.xpose.msra.mxu0 0.0
        %675 = vmatprep.subr.mxu0 0.0
        %676 = vmatpush2.xpose.msra.mxu0 0.0
        %677 = vmatprep.subr.mxu0 0.0
        %678 = vmatpush2.xpose.msra.mxu0 0.0
        %679 = vmatprep.subr.mxu0 0.0
        %680 = vmatpush2.xpose.msra.mxu0 0.0
        %681 = vmatprep.mubr.f32.mxu0 0.0
        %v682 = vand.u32 %v347, 4294901760
        %v683 = vsub.f32 %v347, %v682
        %v684 = vand.u32 %v683, 4294901760
        %685 = vmatmul.mubr.f32.gmra.mxu0 %v684
        %v686 = vpop.f32.mrf.mxu0
        %v687 = vadd.f32 %v605, %v686
        %v688 = vpop.f32.mrf.mxu0
        %689 = vmatprep.mubr.f32.mxu0 0.0
        %v690 = vand.u32 %v350, 4294901760
        %v691 = vsub.f32 %v350, %v690
        %v692 = vand.u32 %v691, 4294901760
        %693 = vmatmul.mubr.f32.gmra.mxu0 %v692
        %v694 = vpop.f32.mrf.mxu0
        %v695 = vadd.f32 %v612, %v694
        %v696 = vpop.f32.mrf.mxu0
        %697 = vdwg.mxu0
        %698 = vmatprep.subr.mxu0 0.0
        %699 = vmatpush1.xpose.msra.mxu0 0.0
        %700 = vmatprep.subr.mxu0 0.0
        %701 = vmatpush1.xpose.msra.mxu0 0.0
        %702 = vmatprep.subr.mxu0 0.0
        %703 = vmatpush1.xpose.msra.mxu0 0.0
        %704 = vmatprep.subr.mxu0 0.0
        %705 = vmatpush1.xpose.msra.mxu0 0.0
        %706 = vmatprep.subr.mxu0 0.0
        %707 = vmatpush1.xpose.msra.mxu0 0.0
        %708 = vmatprep.subr.mxu0 0.0
        %709 = vmatpush1.xpose.msra.mxu0 0.0
        %710 = vmatprep.subr.mxu0 0.0
        %711 = vmatpush1.xpose.msra.mxu0 0.0
        %712 = vmatprep.subr.mxu0 0.0
        %713 = vmatpush1.xpose.msra.mxu0 0.0
        %714 = vmatprep.subr.mxu0 0.0
        %715 = vmatpush1.xpose.msra.mxu0 0.0
        %716 = vmatprep.subr.mxu0 0.0
        %717 = vmatpush1.xpose.msra.mxu0 0.0
        %718 = vmatprep.subr.mxu0 0.0
        %719 = vmatpush1.xpose.msra.mxu0 0.0
        %720 = vmatprep.subr.mxu0 0.0
        %721 = vmatpush1.xpose.msra.mxu0 0.0
        %722 = vmatprep.subr.mxu0 0.0
        %723 = vmatpush1.xpose.msra.mxu0 0.0
        %724 = vmatprep.subr.mxu0 0.0
        %725 = vmatpush1.xpose.msra.mxu0 0.0
        %726 = vmatprep.subr.mxu0 0.0
        %v727 = vand.u32 %v356, 4294901760
        %v728 = vsub.f32 %v356, %v727
        %v729 = vand.u32 %v728, 4294901760
        %730 = vmatpush1.xpose.msra.mxu0 %v729
        %731 = vmatprep.subr.mxu0 0.0
        %v732 = vand.u32 %v353, 4294901760
        %v733 = vsub.f32 %v353, %v732
        %v734 = vand.u32 %v733, 4294901760
        %735 = vmatpush1.xpose.msra.mxu0 %v734
        %736 = vmatprep.subr.mxu0 0.0
        %737 = vmatpush2.xpose.msra.mxu0 0.0
        %738 = vmatprep.subr.mxu0 0.0
        %739 = vmatpush2.xpose.msra.mxu0 0.0
        %740 = vmatprep.subr.mxu0 0.0
        %741 = vmatpush2.xpose.msra.mxu0 0.0
        %742 = vmatprep.subr.mxu0 0.0
        %743 = vmatpush2.xpose.msra.mxu0 0.0
        %744 = vmatprep.subr.mxu0 0.0
        %745 = vmatpush2.xpose.msra.mxu0 0.0
        %746 = vmatprep.subr.mxu0 0.0
        %747 = vmatpush2.xpose.msra.mxu0 0.0
        %748 = vmatprep.subr.mxu0 0.0
        %749 = vmatpush2.xpose.msra.mxu0 0.0
        %750 = vmatprep.subr.mxu0 0.0
        %751 = vmatpush2.xpose.msra.mxu0 0.0
        %752 = vmatprep.subr.mxu0 0.0
        %753 = vmatpush2.xpose.msra.mxu0 0.0
        %754 = vmatprep.subr.mxu0 0.0
        %755 = vmatpush2.xpose.msra.mxu0 0.0
        %756 = vmatprep.subr.mxu0 0.0
        %757 = vmatpush2.xpose.msra.mxu0 0.0
        %758 = vmatprep.subr.mxu0 0.0
        %759 = vmatpush2.xpose.msra.mxu0 0.0
        %760 = vmatprep.subr.mxu0 0.0
        %761 = vmatpush2.xpose.msra.mxu0 0.0
        %762 = vmatprep.subr.mxu0 0.0
        %763 = vmatpush2.xpose.msra.mxu0 0.0
        %764 = vmatprep.subr.mxu0 0.0
        %765 = vmatpush2.xpose.msra.mxu0 0.0
        %766 = vmatprep.subr.mxu0 0.0
        %767 = vmatpush2.xpose.msra.mxu0 0.0
        %768 = vmatprep.mubr.f32.mxu0 0.0
        %v769 = vand.u32 %v347, 4294901760
        %770 = vmatmul.mubr.f32.gmra.mxu0 %v769
        %v771 = vpop.f32.mrf.mxu0
        %v772 = vadd.f32 %v687, %v771
        %v773 = vpop.f32.mrf.mxu0
        %774 = vmatprep.mubr.f32.mxu0 0.0
        %v775 = vand.u32 %v350, 4294901760
        %776 = vmatmul.mubr.f32.gmra.mxu0 %v775
        %v777 = vpop.f32.mrf.mxu0
        %v778 = vadd.f32 %v695, %v777
        %v779 = vpop.f32.mrf.mxu0
        %780 = vdwg.mxu0
        %781 = vmatprep.subr.mxu0 0.0
        %782 = vmatpush1.xpose.msra.mxu0 0.0
        %783 = vmatprep.subr.mxu0 0.0
        %784 = vmatpush1.xpose.msra.mxu0 0.0
        %785 = vmatprep.subr.mxu0 0.0
        %786 = vmatpush1.xpose.msra.mxu0 0.0
        %787 = vmatprep.subr.mxu0 0.0
        %788 = vmatpush1.xpose.msra.mxu0 0.0
        %789 = vmatprep.subr.mxu0 0.0
        %790 = vmatpush1.xpose.msra.mxu0 0.0
        %791 = vmatprep.subr.mxu0 0.0
        %792 = vmatpush1.xpose.msra.mxu0 0.0
        %793 = vmatprep.subr.mxu0 0.0
        %794 = vmatpush1.xpose.msra.mxu0 0.0
        %795 = vmatprep.subr.mxu0 0.0
        %796 = vmatpush1.xpose.msra.mxu0 0.0
        %797 = vmatprep.subr.mxu0 0.0
        %798 = vmatpush1.xpose.msra.mxu0 0.0
        %799 = vmatprep.subr.mxu0 0.0
        %800 = vmatpush1.xpose.msra.mxu0 0.0
        %801 = vmatprep.subr.mxu0 0.0
        %802 = vmatpush1.xpose.msra.mxu0 0.0
        %803 = vmatprep.subr.mxu0 0.0
        %804 = vmatpush1.xpose.msra.mxu0 0.0
        %805 = vmatprep.subr.mxu0 0.0
        %806 = vmatpush1.xpose.msra.mxu0 0.0
        %807 = vmatprep.subr.mxu0 0.0
        %808 = vmatpush1.xpose.msra.mxu0 0.0
        %809 = vmatprep.subr.mxu0 0.0
        %v810 = vand.u32 %v356, 4294901760
        %811 = vmatpush1.xpose.msra.mxu0 %v810
        %812 = vmatprep.subr.mxu0 0.0
        %v813 = vand.u32 %v353, 4294901760
        %814 = vmatpush1.xpose.msra.mxu0 %v813
        %815 = vmatprep.subr.mxu0 0.0
        %816 = vmatpush2.xpose.msra.mxu0 0.0
        %817 = vmatprep.subr.mxu0 0.0
        %818 = vmatpush2.xpose.msra.mxu0 0.0
        %819 = vmatprep.subr.mxu0 0.0
        %820 = vmatpush2.xpose.msra.mxu0 0.0
        %821 = vmatprep.subr.mxu0 0.0
        %822 = vmatpush2.xpose.msra.mxu0 0.0
        %823 = vmatprep.subr.mxu0 0.0
        %824 = vmatpush2.xpose.msra.mxu0 0.0
        %825 = vmatprep.subr.mxu0 0.0
        %826 = vmatpush2.xpose.msra.mxu0 0.0
        %827 = vmatprep.subr.mxu0 0.0
        %828 = vmatpush2.xpose.msra.mxu0 0.0
        %829 = vmatprep.subr.mxu0 0.0
        %830 = vmatpush2.xpose.msra.mxu0 0.0
        %831 = vmatprep.subr.mxu0 0.0
        %832 = vmatpush2.xpose.msra.mxu0 0.0
        %833 = vmatprep.subr.mxu0 0.0
        %834 = vmatpush2.xpose.msra.mxu0 0.0
        %835 = vmatprep.subr.mxu0 0.0
        %836 = vmatpush2.xpose.msra.mxu0 0.0
        %837 = vmatprep.subr.mxu0 0.0
        %838 = vmatpush2.xpose.msra.mxu0 0.0
        %839 = vmatprep.subr.mxu0 0.0
        %840 = vmatpush2.xpose.msra.mxu0 0.0
        %841 = vmatprep.subr.mxu0 0.0
        %842 = vmatpush2.xpose.msra.mxu0 0.0
        %843 = vmatprep.subr.mxu0 0.0
        %844 = vmatpush2.xpose.msra.mxu0 0.0
        %845 = vmatprep.subr.mxu0 0.0
        %846 = vmatpush2.xpose.msra.mxu0 0.0
        %847 = vmatprep.mubr.f32.mxu0 0.0
        %v848 = vand.u32 %v347, 4294901760
        %849 = vmatmul.mubr.f32.gmra.mxu0 %v848
        %v850 = vpop.f32.mrf.mxu0
        %v851 = vadd.f32 %v772, %v850
        %v852 = vpop.f32.mrf.mxu0
        %853 = vmatprep.mubr.f32.mxu0 0.0
        %v854 = vand.u32 %v350, 4294901760
        %855 = vmatmul.mubr.f32.gmra.mxu0 %v854
        %v856 = vpop.f32.mrf.mxu0
        %v857 = vadd.f32 %v778, %v856
        %v858 = vpop.f32.mrf.mxu0
        %859 = vdwg.mxu0
        %v860 = vmul.f32 %v851, %v851
        %v861 = vmul.f32 %v857, %v857
        %v862 = vmul.f32 %v851, %v860
        %v863 = vmul.f32 %v857, %v861
        %v864 = vmul.f32 %v862, 0.044715
        %v865 = vmul.f32 %v863, 0.044715
        %v866 = vadd.f32 %v851, %v864
        %v867 = vadd.f32 %v857, %v865
        %v868 = vmul.f32 %v866, 0.7978846
        %v869 = vmul.f32 %v867, 0.7978846
        %v870 = vtanh.pop %v868
        %v871 = vtanh.pop %v869
        %v872 = vadd.f32 %v870, 1.0
        %v873 = vadd.f32 %v871, 1.0
        %v874 = vmul.f32 %v872, 0.5
        %v875 = vmul.f32 %v873, 0.5
        %v876 = vmul.f32 %v851, %v874
        %v877 = vmul.f32 %v857, %v875
        %v878 = vld [vmem:[%s334] sm:$0xff]
        %v879 = vld [vmem:[%s334 + $0x8] sm:$0xff]
        %v880 = vld [vmem:[%s334 + $0x10] sm:$0xff]
        %v881 = vld [vmem:[%s334 + $0x18] sm:$0xff]
        %vm882 = vcmask 64512
        %v884 = vsel %vm882, %v876, 0
        %v887 = vsel %vm882, %v877, 0
        %v890 = vsel %vm882, %v878, 0
        %v893 = vsel %vm882, %v879, 0
        %v896 = vsel %vm882, %v880, 0
        %v899 = vsel %vm882, %v881, 0
        %901 = vmatprep.subr.mxu0 0.0
        %902 = vmatpush1.xpose.msra.mxu0 0.0
        %903 = vmatprep.subr.mxu0 0.0
        %904 = vmatpush1.xpose.msra.mxu0 0.0
        %905 = vmatprep.subr.mxu0 0.0
        %906 = vmatpush1.xpose.msra.mxu0 0.0
        %907 = vmatprep.subr.mxu0 0.0
        %908 = vmatpush1.xpose.msra.mxu0 0.0
        %909 = vmatprep.subr.mxu0 0.0
        %910 = vmatpush1.xpose.msra.mxu0 0.0
        %911 = vmatprep.subr.mxu0 0.0
        %912 = vmatpush1.xpose.msra.mxu0 0.0
        %913 = vmatprep.subr.mxu0 0.0
        %914 = vmatpush1.xpose.msra.mxu0 0.0
        %915 = vmatprep.subr.mxu0 0.0
        %916 = vmatpush1.xpose.msra.mxu0 0.0
        %917 = vmatprep.subr.mxu0 0.0
        %918 = vmatpush1.xpose.msra.mxu0 0.0
        %919 = vmatprep.subr.mxu0 0.0
        %920 = vmatpush1.xpose.msra.mxu0 0.0
        %921 = vmatprep.subr.mxu0 0.0
        %922 = vmatpush1.xpose.msra.mxu0 0.0
        %923 = vmatprep.subr.mxu0 0.0
        %924 = vmatpush1.xpose.msra.mxu0 0.0
        %925 = vmatprep.subr.mxu0 0.0
        %v926 = vand.u32 %v899, 4294901760
        %927 = vmatpush1.xpose.msra.mxu0 %v926
        %928 = vmatprep.subr.mxu0 0.0
        %v929 = vand.u32 %v896, 4294901760
        %930 = vmatpush1.xpose.msra.mxu0 %v929
        %931 = vmatprep.subr.mxu0 0.0
        %v932 = vand.u32 %v893, 4294901760
        %933 = vmatpush1.xpose.msra.mxu0 %v932
        %934 = vmatprep.subr.mxu0 0.0
        %v935 = vand.u32 %v890, 4294901760
        %936 = vmatpush1.xpose.msra.mxu0 %v935
        %937 = vmatprep.subr.mxu0 0.0
        %938 = vmatpush2.xpose.msra.mxu0 0.0
        %939 = vmatprep.subr.mxu0 0.0
        %940 = vmatpush2.xpose.msra.mxu0 0.0
        %941 = vmatprep.subr.mxu0 0.0
        %942 = vmatpush2.xpose.msra.mxu0 0.0
        %943 = vmatprep.subr.mxu0 0.0
        %944 = vmatpush2.xpose.msra.mxu0 0.0
        %945 = vmatprep.subr.mxu0 0.0
        %946 = vmatpush2.xpose.msra.mxu0 0.0
        %947 = vmatprep.subr.mxu0 0.0
        %948 = vmatpush2.xpose.msra.mxu0 0.0
        %949 = vmatprep.subr.mxu0 0.0
        %950 = vmatpush2.xpose.msra.mxu0 0.0
        %951 = vmatprep.subr.mxu0 0.0
        %952 = vmatpush2.xpose.msra.mxu0 0.0
        %953 = vmatprep.subr.mxu0 0.0
        %954 = vmatpush2.xpose.msra.mxu0 0.0
        %955 = vmatprep.subr.mxu0 0.0
        %956 = vmatpush2.xpose.msra.mxu0 0.0
        %957 = vmatprep.subr.mxu0 0.0
        %958 = vmatpush2.xpose.msra.mxu0 0.0
        %959 = vmatprep.subr.mxu0 0.0
        %960 = vmatpush2.xpose.msra.mxu0 0.0
        %961 = vmatprep.subr.mxu0 0.0
        %962 = vmatpush2.xpose.msra.mxu0 0.0
        %963 = vmatprep.subr.mxu0 0.0
        %964 = vmatpush2.xpose.msra.mxu0 0.0
        %965 = vmatprep.subr.mxu0 0.0
        %966 = vmatpush2.xpose.msra.mxu0 0.0
        %967 = vmatprep.subr.mxu0 0.0
        %968 = vmatpush2.xpose.msra.mxu0 0.0
        %969 = vmatprep.mubr.f32.mxu0 0.0
        %v970 = vand.u32 %v884, 4294901760
        %v971 = vsub.f32 %v884, %v970
        %v972 = vand.u32 %v971, 4294901760
        %v973 = vsub.f32 %v971, %v972
        %v974 = vand.u32 %v973, 4294901760
        %975 = vmatmul.mubr.f32.gmra.mxu0 %v974
        %v976 = vpop.f32.mrf.mxu0
        %v977 = vadd.f32 0.0, %v976
        %v978 = vpop.f32.mrf.mxu0
        %979 = vmatprep.mubr.f32.mxu0 0.0
        %v980 = vand.u32 %v887, 4294901760
        %v981 = vsub.f32 %v887, %v980
        %v982 = vand.u32 %v981, 4294901760
        %v983 = vsub.f32 %v981, %v982
        %v984 = vand.u32 %v983, 4294901760
        %985 = vmatmul.mubr.f32.gmra.mxu0 %v984
        %v986 = vpop.f32.mrf.mxu0
        %v987 = vadd.f32 0.0, %v986
        %v988 = vpop.f32.mrf.mxu0
        %989 = vdwg.mxu0
        %990 = vmatprep.subr.mxu0 0.0
        %991 = vmatpush1.xpose.msra.mxu0 0.0
        %992 = vmatprep.subr.mxu0 0.0
        %993 = vmatpush1.xpose.msra.mxu0 0.0
        %994 = vmatprep.subr.mxu0 0.0
        %995 = vmatpush1.xpose.msra.mxu0 0.0
        %996 = vmatprep.subr.mxu0 0.0
        %997 = vmatpush1.xpose.msra.mxu0 0.0
        %998 = vmatprep.subr.mxu0 0.0
        %999 = vmatpush1.xpose.msra.mxu0 0.0
        %1000 = vmatprep.subr.mxu0 0.0
        %1001 = vmatpush1.xpose.msra.mxu0 0.0
        %1002 = vmatprep.subr.mxu0 0.0
        %1003 = vmatpush1.xpose.msra.mxu0 0.0
        %1004 = vmatprep.subr.mxu0 0.0
        %1005 = vmatpush1.xpose.msra.mxu0 0.0
        %1006 = vmatprep.subr.mxu0 0.0
        %1007 = vmatpush1.xpose.msra.mxu0 0.0
        %1008 = vmatprep.subr.mxu0 0.0
        %1009 = vmatpush1.xpose.msra.mxu0 0.0
        %1010 = vmatprep.subr.mxu0 0.0
        %1011 = vmatpush1.xpose.msra.mxu0 0.0
        %1012 = vmatprep.subr.mxu0 0.0
        %1013 = vmatpush1.xpose.msra.mxu0 0.0
        %1014 = vmatprep.subr.mxu0 0.0
        %v1015 = vand.u32 %v899, 4294901760
        %v1016 = vsub.f32 %v899, %v1015
        %v1017 = vand.u32 %v1016, 4294901760
        %v1018 = vsub.f32 %v1016, %v1017
        %v1019 = vand.u32 %v1018, 4294901760
        %1020 = vmatpush1.xpose.msra.mxu0 %v1019
        %1021 = vmatprep.subr.mxu0 0.0
        %v1022 = vand.u32 %v896, 4294901760
        %v1023 = vsub.f32 %v896, %v1022
        %v1024 = vand.u32 %v1023, 4294901760
        %v1025 = vsub.f32 %v1023, %v1024
        %v1026 = vand.u32 %v1025, 4294901760
        %1027 = vmatpush1.xpose.msra.mxu0 %v1026
        %1028 = vmatprep.subr.mxu0 0.0
        %v1029 = vand.u32 %v893, 4294901760
        %v1030 = vsub.f32 %v893, %v1029
        %v1031 = vand.u32 %v1030, 4294901760
        %v1032 = vsub.f32 %v1030, %v1031
        %v1033 = vand.u32 %v1032, 4294901760
        %1034 = vmatpush1.xpose.msra.mxu0 %v1033
        %1035 = vmatprep.subr.mxu0 0.0
        %v1036 = vand.u32 %v890, 4294901760
        %v1037 = vsub.f32 %v890, %v1036
        %v1038 = vand.u32 %v1037, 4294901760
        %v1039 = vsub.f32 %v1037, %v1038
        %v1040 = vand.u32 %v1039, 4294901760
        %1041 = vmatpush1.xpose.msra.mxu0 %v1040
        %1042 = vmatprep.subr.mxu0 0.0
        %1043 = vmatpush2.xpose.msra.mxu0 0.0
        %1044 = vmatprep.subr.mxu0 0.0
        %1045 = vmatpush2.xpose.msra.mxu0 0.0
        %1046 = vmatprep.subr.mxu0 0.0
        %1047 = vmatpush2.xpose.msra.mxu0 0.0
        %1048 = vmatprep.subr.mxu0 0.0
        %1049 = vmatpush2.xpose.msra.mxu0 0.0
        %1050 = vmatprep.subr.mxu0 0.0
        %1051 = vmatpush2.xpose.msra.mxu0 0.0
        %1052 = vmatprep.subr.mxu0 0.0
        %1053 = vmatpush2.xpose.msra.mxu0 0.0
        %1054 = vmatprep.subr.mxu0 0.0
        %1055 = vmatpush2.xpose.msra.mxu0 0.0
        %1056 = vmatprep.subr.mxu0 0.0
        %1057 = vmatpush2.xpose.msra.mxu0 0.0
        %1058 = vmatprep.subr.mxu0 0.0
        %1059 = vmatpush2.xpose.msra.mxu0 0.0
        %1060 = vmatprep.subr.mxu0 0.0
        %1061 = vmatpush2.xpose.msra.mxu0 0.0
        %1062 = vmatprep.subr.mxu0 0.0
        %1063 = vmatpush2.xpose.msra.mxu0 0.0
        %1064 = vmatprep.subr.mxu0 0.0
        %1065 = vmatpush2.xpose.msra.mxu0 0.0
        %1066 = vmatprep.subr.mxu0 0.0
        %1067 = vmatpush2.xpose.msra.mxu0 0.0
        %1068 = vmatprep.subr.mxu0 0.0
        %1069 = vmatpush2.xpose.msra.mxu0 0.0
        %1070 = vmatprep.subr.mxu0 0.0
        %1071 = vmatpush2.xpose.msra.mxu0 0.0
        %1072 = vmatprep.subr.mxu0 0.0
        %1073 = vmatpush2.xpose.msra.mxu0 0.0
        %1074 = vmatprep.mubr.f32.mxu0 0.0
        %v1075 = vand.u32 %v884, 4294901760
        %1076 = vmatmul.mubr.f32.gmra.mxu0 %v1075
        %v1077 = vpop.f32.mrf.mxu0
        %v1078 = vadd.f32 %v977, %v1077
        %v1079 = vpop.f32.mrf.mxu0
        %1080 = vmatprep.mubr.f32.mxu0 0.0
        %v1081 = vand.u32 %v887, 4294901760
        %1082 = vmatmul.mubr.f32.gmra.mxu0 %v1081
        %v1083 = vpop.f32.mrf.mxu0
        %v1084 = vadd.f32 %v987, %v1083
        %v1085 = vpop.f32.mrf.mxu0
        %1086 = vdwg.mxu0
        %1087 = vmatprep.subr.mxu0 0.0
        %1088 = vmatpush1.xpose.msra.mxu0 0.0
        %1089 = vmatprep.subr.mxu0 0.0
        %1090 = vmatpush1.xpose.msra.mxu0 0.0
        %1091 = vmatprep.subr.mxu0 0.0
        %1092 = vmatpush1.xpose.msra.mxu0 0.0
        %1093 = vmatprep.subr.mxu0 0.0
        %1094 = vmatpush1.xpose.msra.mxu0 0.0
        %1095 = vmatprep.subr.mxu0 0.0
        %1096 = vmatpush1.xpose.msra.mxu0 0.0
        %1097 = vmatprep.subr.mxu0 0.0
        %1098 = vmatpush1.xpose.msra.mxu0 0.0
        %1099 = vmatprep.subr.mxu0 0.0
        %1100 = vmatpush1.xpose.msra.mxu0 0.0
        %1101 = vmatprep.subr.mxu0 0.0
        %1102 = vmatpush1.xpose.msra.mxu0 0.0
        %1103 = vmatprep.subr.mxu0 0.0
        %1104 = vmatpush1.xpose.msra.mxu0 0.0
        %1105 = vmatprep.subr.mxu0 0.0
        %1106 = vmatpush1.xpose.msra.mxu0 0.0
        %1107 = vmatprep.subr.mxu0 0.0
        %1108 = vmatpush1.xpose.msra.mxu0 0.0
        %1109 = vmatprep.subr.mxu0 0.0
        %1110 = vmatpush1.xpose.msra.mxu0 0.0
        %1111 = vmatprep.subr.mxu0 0.0
        %v1112 = vand.u32 %v899, 4294901760
        %v1113 = vsub.f32 %v899, %v1112
        %1114 = vmatpush1.xpose.msra.mxu0 %v1113
        %1115 = vmatprep.subr.mxu0 0.0
        %v1116 = vand.u32 %v896, 4294901760
        %v1117 = vsub.f32 %v896, %v1116
        %1118 = vmatpush1.xpose.msra.mxu0 %v1117
        %1119 = vmatprep.subr.mxu0 0.0
        %v1120 = vand.u32 %v893, 4294901760
        %v1121 = vsub.f32 %v893, %v1120
        %1122 = vmatpush1.xpose.msra.mxu0 %v1121
        %1123 = vmatprep.subr.mxu0 0.0
        %v1124 = vand.u32 %v890, 4294901760
        %v1125 = vsub.f32 %v890, %v1124
        %1126 = vmatpush1.xpose.msra.mxu0 %v1125
        %1127 = vmatprep.subr.mxu0 0.0
        %1128 = vmatpush2.xpose.msra.mxu0 0.0
        %1129 = vmatprep.subr.mxu0 0.0
        %1130 = vmatpush2.xpose.msra.mxu0 0.0
        %1131 = vmatprep.subr.mxu0 0.0
        %1132 = vmatpush2.xpose.msra.mxu0 0.0
        %1133 = vmatprep.subr.mxu0 0.0
        %1134 = vmatpush2.xpose.msra.mxu0 0.0
        %1135 = vmatprep.subr.mxu0 0.0
        %1136 = vmatpush2.xpose.msra.mxu0 0.0
        %1137 = vmatprep.subr.mxu0 0.0
        %1138 = vmatpush2.xpose.msra.mxu0 0.0
        %1139 = vmatprep.subr.mxu0 0.0
        %1140 = vmatpush2.xpose.msra.mxu0 0.0
        %1141 = vmatprep.subr.mxu0 0.0
        %1142 = vmatpush2.xpose.msra.mxu0 0.0
        %1143 = vmatprep.subr.mxu0 0.0
        %1144 = vmatpush2.xpose.msra.mxu0 0.0
        %1145 = vmatprep.subr.mxu0 0.0
        %1146 = vmatpush2.xpose.msra.mxu0 0.0
        %1147 = vmatprep.subr.mxu0 0.0
        %1148 = vmatpush2.xpose.msra.mxu0 0.0
        %1149 = vmatprep.subr.mxu0 0.0
        %1150 = vmatpush2.xpose.msra.mxu0 0.0
        %1151 = vmatprep.subr.mxu0 0.0
        %1152 = vmatpush2.xpose.msra.mxu0 0.0
        %1153 = vmatprep.subr.mxu0 0.0
        %1154 = vmatpush2.xpose.msra.mxu0 0.0
        %1155 = vmatprep.subr.mxu0 0.0
        %1156 = vmatpush2.xpose.msra.mxu0 0.0
        %1157 = vmatprep.subr.mxu0 0.0
        %1158 = vmatpush2.xpose.msra.mxu0 0.0
        %1159 = vmatprep.mubr.f32.mxu0 0.0
        %v1160 = vand.u32 %v884, 4294901760
        %v1161 = vsub.f32 %v884, %v1160
        %1162 = vmatmul.mubr.f32.gmra.mxu0 %v1161
        %v1163 = vpop.f32.mrf.mxu0
        %v1164 = vadd.f32 %v1078, %v1163
        %v1165 = vpop.f32.mrf.mxu0
        %1166 = vmatprep.mubr.f32.mxu0 0.0
        %v1167 = vand.u32 %v887, 4294901760
        %v1168 = vsub.f32 %v887, %v1167
        %1169 = vmatmul.mubr.f32.gmra.mxu0 %v1168
        %v1170 = vpop.f32.mrf.mxu0
        %v1171 = vadd.f32 %v1084, %v1170
        %v1172 = vpop.f32.mrf.mxu0
        %1173 = vdwg.mxu0
        %1174 = vmatprep.subr.mxu0 0.0
        %1175 = vmatpush1.xpose.msra.mxu0 0.0
        %1176 = vmatprep.subr.mxu0 0.0
        %1177 = vmatpush1.xpose.msra.mxu0 0.0
        %1178 = vmatprep.subr.mxu0 0.0
        %1179 = vmatpush1.xpose.msra.mxu0 0.0
        %1180 = vmatprep.subr.mxu0 0.0
        %1181 = vmatpush1.xpose.msra.mxu0 0.0
        %1182 = vmatprep.subr.mxu0 0.0
        %1183 = vmatpush1.xpose.msra.mxu0 0.0
        %1184 = vmatprep.subr.mxu0 0.0
        %1185 = vmatpush1.xpose.msra.mxu0 0.0
        %1186 = vmatprep.subr.mxu0 0.0
        %1187 = vmatpush1.xpose.msra.mxu0 0.0
        %1188 = vmatprep.subr.mxu0 0.0
        %1189 = vmatpush1.xpose.msra.mxu0 0.0
        %1190 = vmatprep.subr.mxu0 0.0
        %1191 = vmatpush1.xpose.msra.mxu0 0.0
        %1192 = vmatprep.subr.mxu0 0.0
        %1193 = vmatpush1.xpose.msra.mxu0 0.0
        %1194 = vmatprep.subr.mxu0 0.0
        %1195 = vmatpush1.xpose.msra.mxu0 0.0
        %1196 = vmatprep.subr.mxu0 0.0
        %1197 = vmatpush1.xpose.msra.mxu0 0.0
        %1198 = vmatprep.subr.mxu0 0.0
        %v1199 = vand.u32 %v899, 4294901760
        %1200 = vmatpush1.xpose.msra.mxu0 %v1199
        %1201 = vmatprep.subr.mxu0 0.0
        %v1202 = vand.u32 %v896, 4294901760
        %1203 = vmatpush1.xpose.msra.mxu0 %v1202
        %1204 = vmatprep.subr.mxu0 0.0
        %v1205 = vand.u32 %v893, 4294901760
        %1206 = vmatpush1.xpose.msra.mxu0 %v1205
        %1207 = vmatprep.subr.mxu0 0.0
        %v1208 = vand.u32 %v890, 4294901760
        %1209 = vmatpush1.xpose.msra.mxu0 %v1208
        %1210 = vmatprep.subr.mxu0 0.0
        %1211 = vmatpush2.xpose.msra.mxu0 0.0
        %1212 = vmatprep.subr.mxu0 0.0
        %1213 = vmatpush2.xpose.msra.mxu0 0.0
        %1214 = vmatprep.subr.mxu0 0.0
        %1215 = vmatpush2.xpose.msra.mxu0 0.0
        %1216 = vmatprep.subr.mxu0 0.0
        %1217 = vmatpush2.xpose.msra.mxu0 0.0
        %1218 = vmatprep.subr.mxu0 0.0
        %1219 = vmatpush2.xpose.msra.mxu0 0.0
        %1220 = vmatprep.subr.mxu0 0.0
        %1221 = vmatpush2.xpose.msra.mxu0 0.0
        %1222 = vmatprep.subr.mxu0 0.0
        %1223 = vmatpush2.xpose.msra.mxu0 0.0
        %1224 = vmatprep.subr.mxu0 0.0
        %1225 = vmatpush2.xpose.msra.mxu0 0.0
        %1226 = vmatprep.subr.mxu0 0.0
        %1227 = vmatpush2.xpose.msra.mxu0 0.0
        %1228 = vmatprep.subr.mxu0 0.0
        %1229 = vmatpush2.xpose.msra.mxu0 0.0
        %1230 = vmatprep.subr.mxu0 0.0
        %1231 = vmatpush2.xpose.msra.mxu0 0.0
        %1232 = vmatprep.subr.mxu0 0.0
        %1233 = vmatpush2.xpose.msra.mxu0 0.0
        %1234 = vmatprep.subr.mxu0 0.0
        %1235 = vmatpush2.xpose.msra.mxu0 0.0
        %1236 = vmatprep.subr.mxu0 0.0
        %1237 = vmatpush2.xpose.msra.mxu0 0.0
        %1238 = vmatprep.subr.mxu0 0.0
        %1239 = vmatpush2.xpose.msra.mxu0 0.0
        %1240 = vmatprep.subr.mxu0 0.0
        %1241 = vmatpush2.xpose.msra.mxu0 0.0
        %1242 = vmatprep.mubr.f32.mxu0 0.0
        %v1243 = vand.u32 %v884, 4294901760
        %v1244 = vsub.f32 %v884, %v1243
        %v1245 = vand.u32 %v1244, 4294901760
        %1246 = vmatmul.mubr.f32.gmra.mxu0 %v1245
        %v1247 = vpop.f32.mrf.mxu0
        %v1248 = vadd.f32 %v1164, %v1247
        %v1249 = vpop.f32.mrf.mxu0
        %1250 = vmatprep.mubr.f32.mxu0 0.0
        %v1251 = vand.u32 %v887, 4294901760
        %v1252 = vsub.f32 %v887, %v1251
        %v1253 = vand.u32 %v1252, 4294901760
        %1254 = vmatmul.mubr.f32.gmra.mxu0 %v1253
        %v1255 = vpop.f32.mrf.mxu0
        %v1256 = vadd.f32 %v1171, %v1255
        %v1257 = vpop.f32.mrf.mxu0
        %1258 = vdwg.mxu0
        %1259 = vmatprep.subr.mxu0 0.0
        %1260 = vmatpush1.xpose.msra.mxu0 0.0
        %1261 = vmatprep.subr.mxu0 0.0
        %1262 = vmatpush1.xpose.msra.mxu0 0.0
        %1263 = vmatprep.subr.mxu0 0.0
        %1264 = vmatpush1.xpose.msra.mxu0 0.0
        %1265 = vmatprep.subr.mxu0 0.0
        %1266 = vmatpush1.xpose.msra.mxu0 0.0
        %1267 = vmatprep.subr.mxu0 0.0
        %1268 = vmatpush1.xpose.msra.mxu0 0.0
        %1269 = vmatprep.subr.mxu0 0.0
        %1270 = vmatpush1.xpose.msra.mxu0 0.0
        %1271 = vmatprep.subr.mxu0 0.0
        %1272 = vmatpush1.xpose.msra.mxu0 0.0
        %1273 = vmatprep.subr.mxu0 0.0
        %1274 = vmatpush1.xpose.msra.mxu0 0.0
        %1275 = vmatprep.subr.mxu0 0.0
        %1276 = vmatpush1.xpose.msra.mxu0 0.0
        %1277 = vmatprep.subr.mxu0 0.0
        %1278 = vmatpush1.xpose.msra.mxu0 0.0
        %1279 = vmatprep.subr.mxu0 0.0
        %1280 = vmatpush1.xpose.msra.mxu0 0.0
        %1281 = vmatprep.subr.mxu0 0.0
        %1282 = vmatpush1.xpose.msra.mxu0 0.0
        %1283 = vmatprep.subr.mxu0 0.0
        %v1284 = vand.u32 %v899, 4294901760
        %v1285 = vsub.f32 %v899, %v1284
        %v1286 = vand.u32 %v1285, 4294901760
        %1287 = vmatpush1.xpose.msra.mxu0 %v1286
        %1288 = vmatprep.subr.mxu0 0.0
        %v1289 = vand.u32 %v896, 4294901760
        %v1290 = vsub.f32 %v896, %v1289
        %v1291 = vand.u32 %v1290, 4294901760
        %1292 = vmatpush1.xpose.msra.mxu0 %v1291
        %1293 = vmatprep.subr.mxu0 0.0
        %v1294 = vand.u32 %v893, 4294901760
        %v1295 = vsub.f32 %v893, %v1294
        %v1296 = vand.u32 %v1295, 4294901760
        %1297 = vmatpush1.xpose.msra.mxu0 %v1296
        %1298 = vmatprep.subr.mxu0 0.0
        %v1299 = vand.u32 %v890, 4294901760
        %v1300 = vsub.f32 %v890, %v1299
        %v1301 = vand.u32 %v1300, 4294901760
        %1302 = vmatpush1.xpose.msra.mxu0 %v1301
        %1303 = vmatprep.subr.mxu0 0.0
        %1304 = vmatpush2.xpose.msra.mxu0 0.0
        %1305 = vmatprep.subr.mxu0 0.0
        %1306 = vmatpush2.xpose.msra.mxu0 0.0
        %1307 = vmatprep.subr.mxu0 0.0
        %1308 = vmatpush2.xpose.msra.mxu0 0.0
        %1309 = vmatprep.subr.mxu0 0.0
        %1310 = vmatpush2.xpose.msra.mxu0 0.0
        %1311 = vmatprep.subr.mxu0 0.0
        %1312 = vmatpush2.xpose.msra.mxu0 0.0
        %1313 = vmatprep.subr.mxu0 0.0
        %1314 = vmatpush2.xpose.msra.mxu0 0.0
        %1315 = vmatprep.subr.mxu0 0.0
        %1316 = vmatpush2.xpose.msra.mxu0 0.0
        %1317 = vmatprep.subr.mxu0 0.0
        %1318 = vmatpush2.xpose.msra.mxu0 0.0
        %1319 = vmatprep.subr.mxu0 0.0
        %1320 = vmatpush2.xpose.msra.mxu0 0.0
        %1321 = vmatprep.subr.mxu0 0.0
        %1322 = vmatpush2.xpose.msra.mxu0 0.0
        %1323 = vmatprep.subr.mxu0 0.0
        %1324 = vmatpush2.xpose.msra.mxu0 0.0
        %1325 = vmatprep.subr.mxu0 0.0
        %1326 = vmatpush2.xpose.msra.mxu0 0.0
        %1327 = vmatprep.subr.mxu0 0.0
        %1328 = vmatpush2.xpose.msra.mxu0 0.0
        %1329 = vmatprep.subr.mxu0 0.0
        %1330 = vmatpush2.xpose.msra.mxu0 0.0
        %1331 = vmatprep.subr.mxu0 0.0
        %1332 = vmatpush2.xpose.msra.mxu0 0.0
        %1333 = vmatprep.subr.mxu0 0.0
        %1334 = vmatpush2.xpose.msra.mxu0 0.0
        %1335 = vmatprep.mubr.f32.mxu0 0.0
        %v1336 = vand.u32 %v884, 4294901760
        %1337 = vmatmul.mubr.f32.gmra.mxu0 %v1336
        %v1338 = vpop.f32.mrf.mxu0
        %v1339 = vadd.f32 %v1248, %v1338
        %v1340 = vpop.f32.mrf.mxu0
        %1341 = vmatprep.mubr.f32.mxu0 0.0
        %v1342 = vand.u32 %v887, 4294901760
        %1343 = vmatmul.mubr.f32.gmra.mxu0 %v1342
        %v1344 = vpop.f32.mrf.mxu0
        %v1345 = vadd.f32 %v1256, %v1344
        %v1346 = vpop.f32.mrf.mxu0
        %1347 = vdwg.mxu0
        %1348 = vmatprep.subr.mxu0 0.0
        %1349 = vmatpush1.xpose.msra.mxu0 0.0
        %1350 = vmatprep.subr.mxu0 0.0
        %1351 = vmatpush1.xpose.msra.mxu0 0.0
        %1352 = vmatprep.subr.mxu0 0.0
        %1353 = vmatpush1.xpose.msra.mxu0 0.0
        %1354 = vmatprep.subr.mxu0 0.0
        %1355 = vmatpush1.xpose.msra.mxu0 0.0
        %1356 = vmatprep.subr.mxu0 0.0
        %1357 = vmatpush1.xpose.msra.mxu0 0.0
        %1358 = vmatprep.subr.mxu0 0.0
        %1359 = vmatpush1.xpose.msra.mxu0 0.0
        %1360 = vmatprep.subr.mxu0 0.0
        %1361 = vmatpush1.xpose.msra.mxu0 0.0
        %1362 = vmatprep.subr.mxu0 0.0
        %1363 = vmatpush1.xpose.msra.mxu0 0.0
        %1364 = vmatprep.subr.mxu0 0.0
        %1365 = vmatpush1.xpose.msra.mxu0 0.0
        %1366 = vmatprep.subr.mxu0 0.0
        %1367 = vmatpush1.xpose.msra.mxu0 0.0
        %1368 = vmatprep.subr.mxu0 0.0
        %1369 = vmatpush1.xpose.msra.mxu0 0.0
        %1370 = vmatprep.subr.mxu0 0.0
        %1371 = vmatpush1.xpose.msra.mxu0 0.0
        %1372 = vmatprep.subr.mxu0 0.0
        %v1373 = vand.u32 %v899, 4294901760
        %1374 = vmatpush1.xpose.msra.mxu0 %v1373
        %1375 = vmatprep.subr.mxu0 0.0
        %v1376 = vand.u32 %v896, 4294901760
        %1377 = vmatpush1.xpose.msra.mxu0 %v1376
        %1378 = vmatprep.subr.mxu0 0.0
        %v1379 = vand.u32 %v893, 4294901760
        %1380 = vmatpush1.xpose.msra.mxu0 %v1379
        %1381 = vmatprep.subr.mxu0 0.0
        %v1382 = vand.u32 %v890, 4294901760
        %1383 = vmatpush1.xpose.msra.mxu0 %v1382
        %1384 = vmatprep.subr.mxu0 0.0
        %1385 = vmatpush2.xpose.msra.mxu0 0.0
        %1386 = vmatprep.subr.mxu0 0.0
        %1387 = vmatpush2.xpose.msra.mxu0 0.0
        %1388 = vmatprep.subr.mxu0 0.0
        %1389 = vmatpush2.xpose.msra.mxu0 0.0
        %1390 = vmatprep.subr.mxu0 0.0
        %1391 = vmatpush2.xpose.msra.mxu0 0.0
        %1392 = vmatprep.subr.mxu0 0.0
        %1393 = vmatpush2.xpose.msra.mxu0 0.0
        %1394 = vmatprep.subr.mxu0 0.0
        %1395 = vmatpush2.xpose.msra.mxu0 0.0
        %1396 = vmatprep.subr.mxu0 0.0
        %1397 = vmatpush2.xpose.msra.mxu0 0.0
        %1398 = vmatprep.subr.mxu0 0.0
        %1399 = vmatpush2.xpose.msra.mxu0 0.0
        %1400 = vmatprep.subr.mxu0 0.0
        %1401 = vmatpush2.xpose.msra.mxu0 0.0
        %1402 = vmatprep.subr.mxu0 0.0
        %1403 = vmatpush2.xpose.msra.mxu0 0.0
        %1404 = vmatprep.subr.mxu0 0.0
        %1405 = vmatpush2.xpose.msra.mxu0 0.0
        %1406 = vmatprep.subr.mxu0 0.0
        %1407 = vmatpush2.xpose.msra.mxu0 0.0
        %1408 = vmatprep.subr.mxu0 0.0
        %1409 = vmatpush2.xpose.msra.mxu0 0.0
        %1410 = vmatprep.subr.mxu0 0.0
        %1411 = vmatpush2.xpose.msra.mxu0 0.0
        %1412 = vmatprep.subr.mxu0 0.0
        %1413 = vmatpush2.xpose.msra.mxu0 0.0
        %1414 = vmatprep.subr.mxu0 0.0
        %1415 = vmatpush2.xpose.msra.mxu0 0.0
        %1416 = vmatprep.mubr.f32.mxu0 0.0
        %v1417 = vand.u32 %v884, 4294901760
        %1418 = vmatmul.mubr.f32.gmra.mxu0 %v1417
        %v1419 = vpop.f32.mrf.mxu0
        %v1420 = vadd.f32 %v1339, %v1419
        %v1421 = vpop.f32.mrf.mxu0
        %1422 = vmatprep.mubr.f32.mxu0 0.0
        %v1423 = vand.u32 %v887, 4294901760
        %1424 = vmatmul.mubr.f32.gmra.mxu0 %v1423
        %v1425 = vpop.f32.mrf.mxu0
        %v1426 = vadd.f32 %v1345, %v1425
        %v1427 = vpop.f32.mrf.mxu0
        %1428 = vdwg.mxu0
        %v1429 = vld [vmem:[%s339] sm:$0xff]
        %v1430 = vld [vmem:[%s339 + $0x8] sm:$0xff]
        %v1431 = vld [vmem:[%s339 + $0x10] sm:$0xff]
        %v1432 = vld [vmem:[%s339 + $0x18] sm:$0xff]
        %1433 = vrot.lane.b32.xlu0 %v876, 120
        %v1434 = vpop.permute.xlu0 %1433
        %1435 = vrot.lane.b32.xlu0 %v877, 120
        %v1436 = vpop.permute.xlu0 %1435
        %v1437 = vsel %vm882, %v1434, 0
        %v1439 = vsel %vm882, %v1436, 0
        %v1442 = vsel %vm882, %v1429, 0
        %v1445 = vsel %vm882, %v1430, 0
        %v1448 = vsel %vm882, %v1431, 0
        %v1451 = vsel %vm882, %v1432, 0
        %1453 = vmatprep.subr.mxu0 0.0
        %1454 = vmatpush1.xpose.msra.mxu0 0.0
        %1455 = vmatprep.subr.mxu0 0.0
        %1456 = vmatpush1.xpose.msra.mxu0 0.0
        %1457 = vmatprep.subr.mxu0 0.0
        %1458 = vmatpush1.xpose.msra.mxu0 0.0
        %1459 = vmatprep.subr.mxu0 0.0
        %1460 = vmatpush1.xpose.msra.mxu0 0.0
        %1461 = vmatprep.subr.mxu0 0.0
        %1462 = vmatpush1.xpose.msra.mxu0 0.0
        %1463 = vmatprep.subr.mxu0 0.0
        %1464 = vmatpush1.xpose.msra.mxu0 0.0
        %1465 = vmatprep.subr.mxu0 0.0
        %1466 = vmatpush1.xpose.msra.mxu0 0.0
        %1467 = vmatprep.subr.mxu0 0.0
        %1468 = vmatpush1.xpose.msra.mxu0 0.0
        %1469 = vmatprep.subr.mxu0 0.0
        %1470 = vmatpush1.xpose.msra.mxu0 0.0
        %1471 = vmatprep.subr.mxu0 0.0
        %1472 = vmatpush1.xpose.msra.mxu0 0.0
        %1473 = vmatprep.subr.mxu0 0.0
        %1474 = vmatpush1.xpose.msra.mxu0 0.0
        %1475 = vmatprep.subr.mxu0 0.0
        %1476 = vmatpush1.xpose.msra.mxu0 0.0
        %1477 = vmatprep.subr.mxu0 0.0
        %v1478 = vand.u32 %v1451, 4294901760
        %1479 = vmatpush1.xpose.msra.mxu0 %v1478
        %1480 = vmatprep.subr.mxu0 0.0
        %v1481 = vand.u32 %v1448, 4294901760
        %1482 = vmatpush1.xpose.msra.mxu0 %v1481
        %1483 = vmatprep.subr.mxu0 0.0
        %v1484 = vand.u32 %v1445, 4294901760
        %1485 = vmatpush1.xpose.msra.mxu0 %v1484
        %1486 = vmatprep.subr.mxu0 0.0
        %v1487 = vand.u32 %v1442, 4294901760
        %1488 = vmatpush1.xpose.msra.mxu0 %v1487
        %1489 = vmatprep.subr.mxu0 0.0
        %1490 = vmatpush2.xpose.msra.mxu0 0.0
        %1491 = vmatprep.subr.mxu0 0.0
        %1492 = vmatpush2.xpose.msra.mxu0 0.0
        %1493 = vmatprep.subr.mxu0 0.0
        %1494 = vmatpush2.xpose.msra.mxu0 0.0
        %1495 = vmatprep.subr.mxu0 0.0
        %1496 = vmatpush2.xpose.msra.mxu0 0.0
        %1497 = vmatprep.subr.mxu0 0.0
        %1498 = vmatpush2.xpose.msra.mxu0 0.0
        %1499 = vmatprep.subr.mxu0 0.0
        %1500 = vmatpush2.xpose.msra.mxu0 0.0
        %1501 = vmatprep.subr.mxu0 0.0
        %1502 = vmatpush2.xpose.msra.mxu0 0.0
        %1503 = vmatprep.subr.mxu0 0.0
        %1504 = vmatpush2.xpose.msra.mxu0 0.0
        %1505 = vmatprep.subr.mxu0 0.0
        %1506 = vmatpush2.xpose.msra.mxu0 0.0
        %1507 = vmatprep.subr.mxu0 0.0
        %1508 = vmatpush2.xpose.msra.mxu0 0.0
        %1509 = vmatprep.subr.mxu0 0.0
        %1510 = vmatpush2.xpose.msra.mxu0 0.0
        %1511 = vmatprep.subr.mxu0 0.0
        %1512 = vmatpush2.xpose.msra.mxu0 0.0
        %1513 = vmatprep.subr.mxu0 0.0
        %1514 = vmatpush2.xpose.msra.mxu0 0.0
        %1515 = vmatprep.subr.mxu0 0.0
        %1516 = vmatpush2.xpose.msra.mxu0 0.0
        %1517 = vmatprep.subr.mxu0 0.0
        %1518 = vmatpush2.xpose.msra.mxu0 0.0
        %1519 = vmatprep.subr.mxu0 0.0
        %1520 = vmatpush2.xpose.msra.mxu0 0.0
        %1521 = vmatprep.mubr.f32.mxu0 0.0
        %v1522 = vand.u32 %v1437, 4294901760
        %v1523 = vsub.f32 %v1437, %v1522
        %v1524 = vand.u32 %v1523, 4294901760
        %v1525 = vsub.f32 %v1523, %v1524
        %v1526 = vand.u32 %v1525, 4294901760
        %1527 = vmatmul.mubr.f32.gmra.mxu0 %v1526
        %v1528 = vpop.f32.mrf.mxu0
        %v1529 = vadd.f32 0.0, %v1528
        %v1530 = vpop.f32.mrf.mxu0
        %1531 = vmatprep.mubr.f32.mxu0 0.0
        %v1532 = vand.u32 %v1439, 4294901760
        %v1533 = vsub.f32 %v1439, %v1532
        %v1534 = vand.u32 %v1533, 4294901760
        %v1535 = vsub.f32 %v1533, %v1534
        %v1536 = vand.u32 %v1535, 4294901760
        %1537 = vmatmul.mubr.f32.gmra.mxu0 %v1536
        %v1538 = vpop.f32.mrf.mxu0
        %v1539 = vadd.f32 0.0, %v1538
        %v1540 = vpop.f32.mrf.mxu0
        %1541 = vdwg.mxu0
        %1542 = vmatprep.subr.mxu0 0.0
        %1543 = vmatpush1.xpose.msra.mxu0 0.0
        %1544 = vmatprep.subr.mxu0 0.0
        %1545 = vmatpush1.xpose.msra.mxu0 0.0
        %1546 = vmatprep.subr.mxu0 0.0
        %1547 = vmatpush1.xpose.msra.mxu0 0.0
        %1548 = vmatprep.subr.mxu0 0.0
        %1549 = vmatpush1.xpose.msra.mxu0 0.0
        %1550 = vmatprep.subr.mxu0 0.0
        %1551 = vmatpush1.xpose.msra.mxu0 0.0
        %1552 = vmatprep.subr.mxu0 0.0
        %1553 = vmatpush1.xpose.msra.mxu0 0.0
        %1554 = vmatprep.subr.mxu0 0.0
        %1555 = vmatpush1.xpose.msra.mxu0 0.0
        %1556 = vmatprep.subr.mxu0 0.0
        %1557 = vmatpush1.xpose.msra.mxu0 0.0
        %1558 = vmatprep.subr.mxu0 0.0
        %1559 = vmatpush1.xpose.msra.mxu0 0.0
        %1560 = vmatprep.subr.mxu0 0.0
        %1561 = vmatpush1.xpose.msra.mxu0 0.0
        %1562 = vmatprep.subr.mxu0 0.0
        %1563 = vmatpush1.xpose.msra.mxu0 0.0
        %1564 = vmatprep.subr.mxu0 0.0
        %1565 = vmatpush1.xpose.msra.mxu0 0.0
        %1566 = vmatprep.subr.mxu0 0.0
        %v1567 = vand.u32 %v1451, 4294901760
        %v1568 = vsub.f32 %v1451, %v1567
        %v1569 = vand.u32 %v1568, 4294901760
        %v1570 = vsub.f32 %v1568, %v1569
        %v1571 = vand.u32 %v1570, 4294901760
        %1572 = vmatpush1.xpose.msra.mxu0 %v1571
        %1573 = vmatprep.subr.mxu0 0.0
        %v1574 = vand.u32 %v1448, 4294901760
        %v1575 = vsub.f32 %v1448, %v1574
        %v1576 = vand.u32 %v1575, 4294901760
        %v1577 = vsub.f32 %v1575, %v1576
        %v1578 = vand.u32 %v1577, 4294901760
        %1579 = vmatpush1.xpose.msra.mxu0 %v1578
        %1580 = vmatprep.subr.mxu0 0.0
        %v1581 = vand.u32 %v1445, 4294901760
        %v1582 = vsub.f32 %v1445, %v1581
        %v1583 = vand.u32 %v1582, 4294901760
        %v1584 = vsub.f32 %v1582, %v1583
        %v1585 = vand.u32 %v1584, 4294901760
        %1586 = vmatpush1.xpose.msra.mxu0 %v1585
        %1587 = vmatprep.subr.mxu0 0.0
        %v1588 = vand.u32 %v1442, 4294901760
        %v1589 = vsub.f32 %v1442, %v1588
        %v1590 = vand.u32 %v1589, 4294901760
        %v1591 = vsub.f32 %v1589, %v1590
        %v1592 = vand.u32 %v1591, 4294901760
        %1593 = vmatpush1.xpose.msra.mxu0 %v1592
        %1594 = vmatprep.subr.mxu0 0.0
        %1595 = vmatpush2.xpose.msra.mxu0 0.0
        %1596 = vmatprep.subr.mxu0 0.0
        %1597 = vmatpush2.xpose.msra.mxu0 0.0
        %1598 = vmatprep.subr.mxu0 0.0
        %1599 = vmatpush2.xpose.msra.mxu0 0.0
        %1600 = vmatprep.subr.mxu0 0.0
        %1601 = vmatpush2.xpose.msra.mxu0 0.0
        %1602 = vmatprep.subr.mxu0 0.0
        %1603 = vmatpush2.xpose.msra.mxu0 0.0
        %1604 = vmatprep.subr.mxu0 0.0
        %1605 = vmatpush2.xpose.msra.mxu0 0.0
        %1606 = vmatprep.subr.mxu0 0.0
        %1607 = vmatpush2.xpose.msra.mxu0 0.0
        %1608 = vmatprep.subr.mxu0 0.0
        %1609 = vmatpush2.xpose.msra.mxu0 0.0
        %1610 = vmatprep.subr.mxu0 0.0
        %1611 = vmatpush2.xpose.msra.mxu0 0.0
        %1612 = vmatprep.subr.mxu0 0.0
        %1613 = vmatpush2.xpose.msra.mxu0 0.0
        %1614 = vmatprep.subr.mxu0 0.0
        %1615 = vmatpush2.xpose.msra.mxu0 0.0
        %1616 = vmatprep.subr.mxu0 0.0
        %1617 = vmatpush2.xpose.msra.mxu0 0.0
        %1618 = vmatprep.subr.mxu0 0.0
        %1619 = vmatpush2.xpose.msra.mxu0 0.0
        %1620 = vmatprep.subr.mxu0 0.0
        %1621 = vmatpush2.xpose.msra.mxu0 0.0
        %1622 = vmatprep.subr.mxu0 0.0
        %1623 = vmatpush2.xpose.msra.mxu0 0.0
        %1624 = vmatprep.subr.mxu0 0.0
        %1625 = vmatpush2.xpose.msra.mxu0 0.0
        %1626 = vmatprep.mubr.f32.mxu0 0.0
        %v1627 = vand.u32 %v1437, 4294901760
        %1628 = vmatmul.mubr.f32.gmra.mxu0 %v1627
        %v1629 = vpop.f32.mrf.mxu0
        %v1630 = vadd.f32 %v1529, %v1629
        %v1631 = vpop.f32.mrf.mxu0
        %1632 = vmatprep.mubr.f32.mxu0 0.0
        %v1633 = vand.u32 %v1439, 4294901760
        %1634 = vmatmul.mubr.f32.gmra.mxu0 %v1633
        %v1635 = vpop.f32.mrf.mxu0
        %v1636 = vadd.f32 %v1539, %v1635
        %v1637 = vpop.f32.mrf.mxu0
        %1638 = vdwg.mxu0
        %1639 = vmatprep.subr.mxu0 0.0
        %1640 = vmatpush1.xpose.msra.mxu0 0.0
        %1641 = vmatprep.subr.mxu0 0.0
        %1642 = vmatpush1.xpose.msra.mxu0 0.0
        %1643 = vmatprep.subr.mxu0 0.0
        %1644 = vmatpush1.xpose.msra.mxu0 0.0
        %1645 = vmatprep.subr.mxu0 0.0
        %1646 = vmatpush1.xpose.msra.mxu0 0.0
        %1647 = vmatprep.subr.mxu0 0.0
        %1648 = vmatpush1.xpose.msra.mxu0 0.0
        %1649 = vmatprep.subr.mxu0 0.0
        %1650 = vmatpush1.xpose.msra.mxu0 0.0
        %1651 = vmatprep.subr.mxu0 0.0
        %1652 = vmatpush1.xpose.msra.mxu0 0.0
        %1653 = vmatprep.subr.mxu0 0.0
        %1654 = vmatpush1.xpose.msra.mxu0 0.0
        %1655 = vmatprep.subr.mxu0 0.0
        %1656 = vmatpush1.xpose.msra.mxu0 0.0
        %1657 = vmatprep.subr.mxu0 0.0
        %1658 = vmatpush1.xpose.msra.mxu0 0.0
        %1659 = vmatprep.subr.mxu0 0.0
        %1660 = vmatpush1.xpose.msra.mxu0 0.0
        %1661 = vmatprep.subr.mxu0 0.0
        %1662 = vmatpush1.xpose.msra.mxu0 0.0
        %1663 = vmatprep.subr.mxu0 0.0
        %v1664 = vand.u32 %v1451, 4294901760
        %v1665 = vsub.f32 %v1451, %v1664
        %1666 = vmatpush1.xpose.msra.mxu0 %v1665
        %1667 = vmatprep.subr.mxu0 0.0
        %v1668 = vand.u32 %v1448, 4294901760
        %v1669 = vsub.f32 %v1448, %v1668
        %1670 = vmatpush1.xpose.msra.mxu0 %v1669
        %1671 = vmatprep.subr.mxu0 0.0
        %v1672 = vand.u32 %v1445, 4294901760
        %v1673 = vsub.f32 %v1445, %v1672
        %1674 = vmatpush1.xpose.msra.mxu0 %v1673
        %1675 = vmatprep.subr.mxu0 0.0
        %v1676 = vand.u32 %v1442, 4294901760
        %v1677 = vsub.f32 %v1442, %v1676
        %1678 = vmatpush1.xpose.msra.mxu0 %v1677
        %1679 = vmatprep.subr.mxu0 0.0
        %1680 = vmatpush2.xpose.msra.mxu0 0.0
        %1681 = vmatprep.subr.mxu0 0.0
        %1682 = vmatpush2.xpose.msra.mxu0 0.0
        %1683 = vmatprep.subr.mxu0 0.0
        %1684 = vmatpush2.xpose.msra.mxu0 0.0
        %1685 = vmatprep.subr.mxu0 0.0
        %1686 = vmatpush2.xpose.msra.mxu0 0.0
        %1687 = vmatprep.subr.mxu0 0.0
        %1688 = vmatpush2.xpose.msra.mxu0 0.0
        %1689 = vmatprep.subr.mxu0 0.0
        %1690 = vmatpush2.xpose.msra.mxu0 0.0
        %1691 = vmatprep.subr.mxu0 0.0
        %1692 = vmatpush2.xpose.msra.mxu0 0.0
        %1693 = vmatprep.subr.mxu0 0.0
        %1694 = vmatpush2.xpose.msra.mxu0 0.0
        %1695 = vmatprep.subr.mxu0 0.0
        %1696 = vmatpush2.xpose.msra.mxu0 0.0
        %1697 = vmatprep.subr.mxu0 0.0
        %1698 = vmatpush2.xpose.msra.mxu0 0.0
        %1699 = vmatprep.subr.mxu0 0.0
        %1700 = vmatpush2.xpose.msra.mxu0 0.0
        %1701 = vmatprep.subr.mxu0 0.0
        %1702 = vmatpush2.xpose.msra.mxu0 0.0
        %1703 = vmatprep.subr.mxu0 0.0
        %1704 = vmatpush2.xpose.msra.mxu0 0.0
        %1705 = vmatprep.subr.mxu0 0.0
        %1706 = vmatpush2.xpose.msra.mxu0 0.0
        %1707 = vmatprep.subr.mxu0 0.0
        %1708 = vmatpush2.xpose.msra.mxu0 0.0
        %1709 = vmatprep.subr.mxu0 0.0
        %1710 = vmatpush2.xpose.msra.mxu0 0.0
        %1711 = vmatprep.mubr.f32.mxu0 0.0
        %v1712 = vand.u32 %v1437, 4294901760
        %v1713 = vsub.f32 %v1437, %v1712
        %1714 = vmatmul.mubr.f32.gmra.mxu0 %v1713
        %v1715 = vpop.f32.mrf.mxu0
        %v1716 = vadd.f32 %v1630, %v1715
        %v1717 = vpop.f32.mrf.mxu0
        %1718 = vmatprep.mubr.f32.mxu0 0.0
        %v1719 = vand.u32 %v1439, 4294901760
        %v1720 = vsub.f32 %v1439, %v1719
        %1721 = vmatmul.mubr.f32.gmra.mxu0 %v1720
        %v1722 = vpop.f32.mrf.mxu0
        %v1723 = vadd.f32 %v1636, %v1722
        %v1724 = vpop.f32.mrf.mxu0
        %1725 = vdwg.mxu0
        %1726 = vmatprep.subr.mxu0 0.0
        %1727 = vmatpush1.xpose.msra.mxu0 0.0
        %1728 = vmatprep.subr.mxu0 0.0
        %1729 = vmatpush1.xpose.msra.mxu0 0.0
        %1730 = vmatprep.subr.mxu0 0.0
        %1731 = vmatpush1.xpose.msra.mxu0 0.0
        %1732 = vmatprep.subr.mxu0 0.0
        %1733 = vmatpush1.xpose.msra.mxu0 0.0
        %1734 = vmatprep.subr.mxu0 0.0
        %1735 = vmatpush1.xpose.msra.mxu0 0.0
        %1736 = vmatprep.subr.mxu0 0.0
        %1737 = vmatpush1.xpose.msra.mxu0 0.0
        %1738 = vmatprep.subr.mxu0 0.0
        %1739 = vmatpush1.xpose.msra.mxu0 0.0
        %1740 = vmatprep.subr.mxu0 0.0
        %1741 = vmatpush1.xpose.msra.mxu0 0.0
        %1742 = vmatprep.subr.mxu0 0.0
        %1743 = vmatpush1.xpose.msra.mxu0 0.0
        %1744 = vmatprep.subr.mxu0 0.0
        %1745 = vmatpush1.xpose.msra.mxu0 0.0
        %1746 = vmatprep.subr.mxu0 0.0
        %1747 = vmatpush1.xpose.msra.mxu0 0.0
        %1748 = vmatprep.subr.mxu0 0.0
        %1749 = vmatpush1.xpose.msra.mxu0 0.0
        %1750 = vmatprep.subr.mxu0 0.0
        %v1751 = vand.u32 %v1451, 4294901760
        %1752 = vmatpush1.xpose.msra.mxu0 %v1751
        %1753 = vmatprep.subr.mxu0 0.0
        %v1754 = vand.u32 %v1448, 4294901760
        %1755 = vmatpush1.xpose.msra.mxu0 %v1754
        %1756 = vmatprep.subr.mxu0 0.0
        %v1757 = vand.u32 %v1445, 4294901760
        %1758 = vmatpush1.xpose.msra.mxu0 %v1757
        %1759 = vmatprep.subr.mxu0 0.0
        %v1760 = vand.u32 %v1442, 4294901760
        %1761 = vmatpush1.xpose.msra.mxu0 %v1760
        %1762 = vmatprep.subr.mxu0 0.0
        %1763 = vmatpush2.xpose.msra.mxu0 0.0
        %1764 = vmatprep.subr.mxu0 0.0
        %1765 = vmatpush2.xpose.msra.mxu0 0.0
        %1766 = vmatprep.subr.mxu0 0.0
        %1767 = vmatpush2.xpose.msra.mxu0 0.0
        %1768 = vmatprep.subr.mxu0 0.0
        %1769 = vmatpush2.xpose.msra.mxu0 0.0
        %1770 = vmatprep.subr.mxu0 0.0
        %1771 = vmatpush2.xpose.msra.mxu0 0.0
        %1772 = vmatprep.subr.mxu0 0.0
        %1773 = vmatpush2.xpose.msra.mxu0 0.0
        %1774 = vmatprep.subr.mxu0 0.0
        %1775 = vmatpush2.xpose.msra.mxu0 0.0
        %1776 = vmatprep.subr.mxu0 0.0
        %1777 = vmatpush2.xpose.msra.mxu0 0.0
        %1778 = vmatprep.subr.mxu0 0.0
        %1779 = vmatpush2.xpose.msra.mxu0 0.0
        %1780 = vmatprep.subr.mxu0 0.0
        %1781 = vmatpush2.xpose.msra.mxu0 0.0
        %1782 = vmatprep.subr.mxu0 0.0
        %1783 = vmatpush2.xpose.msra.mxu0 0.0
        %1784 = vmatprep.subr.mxu0 0.0
        %1785 = vmatpush2.xpose.msra.mxu0 0.0
        %1786 = vmatprep.subr.mxu0 0.0
        %1787 = vmatpush2.xpose.msra.mxu0 0.0
        %1788 = vmatprep.subr.mxu0 0.0
        %1789 = vmatpush2.xpose.msra.mxu0 0.0
        %1790 = vmatprep.subr.mxu0 0.0
        %1791 = vmatpush2.xpose.msra.mxu0 0.0
        %1792 = vmatprep.subr.mxu0 0.0
        %1793 = vmatpush2.xpose.msra.mxu0 0.0
        %1794 = vmatprep.mubr.f32.mxu0 0.0
        %v1795 = vand.u32 %v1437, 4294901760
        %v1796 = vsub.f32 %v1437, %v1795
        %v1797 = vand.u32 %v1796, 4294901760
        %1798 = vmatmul.mubr.f32.gmra.mxu0 %v1797
        %v1799 = vpop.f32.mrf.mxu0
        %v1800 = vadd.f32 %v1716, %v1799
        %v1801 = vpop.f32.mrf.mxu0
        %1802 = vmatprep.mubr.f32.mxu0 0.0
        %v1803 = vand.u32 %v1439, 4294901760
        %v1804 = vsub.f32 %v1439, %v1803
        %v1805 = vand.u32 %v1804, 4294901760
        %1806 = vmatmul.mubr.f32.gmra.mxu0 %v1805
        %v1807 = vpop.f32.mrf.mxu0
        %v1808 = vadd.f32 %v1723, %v1807
        %v1809 = vpop.f32.mrf.mxu0
        %1810 = vdwg.mxu0
        %1811 = vmatprep.subr.mxu0 0.0
        %1812 = vmatpush1.xpose.msra.mxu0 0.0
        %1813 = vmatprep.subr.mxu0 0.0
        %1814 = vmatpush1.xpose.msra.mxu0 0.0
        %1815 = vmatprep.subr.mxu0 0.0
        %1816 = vmatpush1.xpose.msra.mxu0 0.0
        %1817 = vmatprep.subr.mxu0 0.0
        %1818 = vmatpush1.xpose.msra.mxu0 0.0
        %1819 = vmatprep.subr.mxu0 0.0
        %1820 = vmatpush1.xpose.msra.mxu0 0.0
        %1821 = vmatprep.subr.mxu0 0.0
        %1822 = vmatpush1.xpose.msra.mxu0 0.0
        %1823 = vmatprep.subr.mxu0 0.0
        %1824 = vmatpush1.xpose.msra.mxu0 0.0
        %1825 = vmatprep.subr.mxu0 0.0
        %1826 = vmatpush1.xpose.msra.mxu0 0.0
        %1827 = vmatprep.subr.mxu0 0.0
        %1828 = vmatpush1.xpose.msra.mxu0 0.0
        %1829 = vmatprep.subr.mxu0 0.0
        %1830 = vmatpush1.xpose.msra.mxu0 0.0
        %1831 = vmatprep.subr.mxu0 0.0
        %1832 = vmatpush1.xpose.msra.mxu0 0.0
        %1833 = vmatprep.subr.mxu0 0.0
        %1834 = vmatpush1.xpose.msra.mxu0 0.0
        %1835 = vmatprep.subr.mxu0 0.0
        %v1836 = vand.u32 %v1451, 4294901760
        %v1837 = vsub.f32 %v1451, %v1836
        %v1838 = vand.u32 %v1837, 4294901760
        %1839 = vmatpush1.xpose.msra.mxu0 %v1838
        %1840 = vmatprep.subr.mxu0 0.0
        %v1841 = vand.u32 %v1448, 4294901760
        %v1842 = vsub.f32 %v1448, %v1841
        %v1843 = vand.u32 %v1842, 4294901760
        %1844 = vmatpush1.xpose.msra.mxu0 %v1843
        %1845 = vmatprep.subr.mxu0 0.0
        %v1846 = vand.u32 %v1445, 4294901760
        %v1847 = vsub.f32 %v1445, %v1846
        %v1848 = vand.u32 %v1847, 4294901760
        %1849 = vmatpush1.xpose.msra.mxu0 %v1848
        %1850 = vmatprep.subr.mxu0 0.0
        %v1851 = vand.u32 %v1442, 4294901760
        %v1852 = vsub.f32 %v1442, %v1851
        %v1853 = vand.u32 %v1852, 4294901760
        %1854 = vmatpush1.xpose.msra.mxu0 %v1853
        %1855 = vmatprep.subr.mxu0 0.0
        %1856 = vmatpush2.xpose.msra.mxu0 0.0
        %1857 = vmatprep.subr.mxu0 0.0
        %1858 = vmatpush2.xpose.msra.mxu0 0.0
        %1859 = vmatprep.subr.mxu0 0.0
        %1860 = vmatpush2.xpose.msra.mxu0 0.0
        %1861 = vmatprep.subr.mxu0 0.0
        %1862 = vmatpush2.xpose.msra.mxu0 0.0
        %1863 = vmatprep.subr.mxu0 0.0
        %1864 = vmatpush2.xpose.msra.mxu0 0.0
        %1865 = vmatprep.subr.mxu0 0.0
        %1866 = vmatpush2.xpose.msra.mxu0 0.0
        %1867 = vmatprep.subr.mxu0 0.0
        %1868 = vmatpush2.xpose.msra.mxu0 0.0
        %1869 = vmatprep.subr.mxu0 0.0
        %1870 = vmatpush2.xpose.msra.mxu0 0.0
        %1871 = vmatprep.subr.mxu0 0.0
        %1872 = vmatpush2.xpose.msra.mxu0 0.0
        %1873 = vmatprep.subr.mxu0 0.0
        %1874 = vmatpush2.xpose.msra.mxu0 0.0
        %1875 = vmatprep.subr.mxu0 0.0
        %1876 = vmatpush2.xpose.msra.mxu0 0.0
        %1877 = vmatprep.subr.mxu0 0.0
        %1878 = vmatpush2.xpose.msra.mxu0 0.0
        %1879 = vmatprep.subr.mxu0 0.0
        %1880 = vmatpush2.xpose.msra.mxu0 0.0
        %1881 = vmatprep.subr.mxu0 0.0
        %1882 = vmatpush2.xpose.msra.mxu0 0.0
        %1883 = vmatprep.subr.mxu0 0.0
        %1884 = vmatpush2.xpose.msra.mxu0 0.0
        %1885 = vmatprep.subr.mxu0 0.0
        %1886 = vmatpush2.xpose.msra.mxu0 0.0
        %1887 = vmatprep.mubr.f32.mxu0 0.0
        %v1888 = vand.u32 %v1437, 4294901760
        %1889 = vmatmul.mubr.f32.gmra.mxu0 %v1888
        %v1890 = vpop.f32.mrf.mxu0
        %v1891 = vadd.f32 %v1800, %v1890
        %v1892 = vpop.f32.mrf.mxu0
        %1893 = vmatprep.mubr.f32.mxu0 0.0
        %v1894 = vand.u32 %v1439, 4294901760
        %1895 = vmatmul.mubr.f32.gmra.mxu0 %v1894
        %v1896 = vpop.f32.mrf.mxu0
        %v1897 = vadd.f32 %v1808, %v1896
        %v1898 = vpop.f32.mrf.mxu0
        %1899 = vdwg.mxu0
        %1900 = vmatprep.subr.mxu0 0.0
        %1901 = vmatpush1.xpose.msra.mxu0 0.0
        %1902 = vmatprep.subr.mxu0 0.0
        %1903 = vmatpush1.xpose.msra.mxu0 0.0
        %1904 = vmatprep.subr.mxu0 0.0
        %1905 = vmatpush1.xpose.msra.mxu0 0.0
        %1906 = vmatprep.subr.mxu0 0.0
        %1907 = vmatpush1.xpose.msra.mxu0 0.0
        %1908 = vmatprep.subr.mxu0 0.0
        %1909 = vmatpush1.xpose.msra.mxu0 0.0
        %1910 = vmatprep.subr.mxu0 0.0
        %1911 = vmatpush1.xpose.msra.mxu0 0.0
        %1912 = vmatprep.subr.mxu0 0.0
        %1913 = vmatpush1.xpose.msra.mxu0 0.0
        %1914 = vmatprep.subr.mxu0 0.0
        %1915 = vmatpush1.xpose.msra.mxu0 0.0
        %1916 = vmatprep.subr.mxu0 0.0
        %1917 = vmatpush1.xpose.msra.mxu0 0.0
        %1918 = vmatprep.subr.mxu0 0.0
        %1919 = vmatpush1.xpose.msra.mxu0 0.0
        %1920 = vmatprep.subr.mxu0 0.0
        %1921 = vmatpush1.xpose.msra.mxu0 0.0
        %1922 = vmatprep.subr.mxu0 0.0
        %1923 = vmatpush1.xpose.msra.mxu0 0.0
        %1924 = vmatprep.subr.mxu0 0.0
        %v1925 = vand.u32 %v1451, 4294901760
        %1926 = vmatpush1.xpose.msra.mxu0 %v1925
        %1927 = vmatprep.subr.mxu0 0.0
        %v1928 = vand.u32 %v1448, 4294901760
        %1929 = vmatpush1.xpose.msra.mxu0 %v1928
        %1930 = vmatprep.subr.mxu0 0.0
        %v1931 = vand.u32 %v1445, 4294901760
        %1932 = vmatpush1.xpose.msra.mxu0 %v1931
        %1933 = vmatprep.subr.mxu0 0.0
        %v1934 = vand.u32 %v1442, 4294901760
        %1935 = vmatpush1.xpose.msra.mxu0 %v1934
        %1936 = vmatprep.subr.mxu0 0.0
        %1937 = vmatpush2.xpose.msra.mxu0 0.0
        %1938 = vmatprep.subr.mxu0 0.0
        %1939 = vmatpush2.xpose.msra.mxu0 0.0
        %1940 = vmatprep.subr.mxu0 0.0
        %1941 = vmatpush2.xpose.msra.mxu0 0.0
        %1942 = vmatprep.subr.mxu0 0.0
        %1943 = vmatpush2.xpose.msra.mxu0 0.0
        %1944 = vmatprep.subr.mxu0 0.0
        %1945 = vmatpush2.xpose.msra.mxu0 0.0
        %1946 = vmatprep.subr.mxu0 0.0
        %1947 = vmatpush2.xpose.msra.mxu0 0.0
        %1948 = vmatprep.subr.mxu0 0.0
        %1949 = vmatpush2.xpose.msra.mxu0 0.0
        %1950 = vmatprep.subr.mxu0 0.0
        %1951 = vmatpush2.xpose.msra.mxu0 0.0
        %1952 = vmatprep.subr.mxu0 0.0
        %1953 = vmatpush2.xpose.msra.mxu0 0.0
        %1954 = vmatprep.subr.mxu0 0.0
        %1955 = vmatpush2.xpose.msra.mxu0 0.0
        %1956 = vmatprep.subr.mxu0 0.0
        %1957 = vmatpush2.xpose.msra.mxu0 0.0
        %1958 = vmatprep.subr.mxu0 0.0
        %1959 = vmatpush2.xpose.msra.mxu0 0.0
        %1960 = vmatprep.subr.mxu0 0.0
        %1961 = vmatpush2.xpose.msra.mxu0 0.0
        %1962 = vmatprep.subr.mxu0 0.0
        %1963 = vmatpush2.xpose.msra.mxu0 0.0
        %1964 = vmatprep.subr.mxu0 0.0
        %1965 = vmatpush2.xpose.msra.mxu0 0.0
        %1966 = vmatprep.subr.mxu0 0.0
        %1967 = vmatpush2.xpose.msra.mxu0 0.0
        %1968 = vmatprep.mubr.f32.mxu0 0.0
        %v1969 = vand.u32 %v1437, 4294901760
        %1970 = vmatmul.mubr.f32.gmra.mxu0 %v1969
        %v1971 = vpop.f32.mrf.mxu0
        %v1972 = vadd.f32 %v1891, %v1971
        %v1973 = vpop.f32.mrf.mxu0
        %1974 = vmatprep.mubr.f32.mxu0 0.0
        %v1975 = vand.u32 %v1439, 4294901760
        %1976 = vmatmul.mubr.f32.gmra.mxu0 %v1975
        %v1977 = vpop.f32.mrf.mxu0
        %v1978 = vadd.f32 %v1897, %v1977
        %v1979 = vpop.f32.mrf.mxu0
        %1980 = vdwg.mxu0
        %v1981 = vld [vmem:[%s1] sm:$0xff]
        %v1982 = vld [vmem:[%s1 + $0x8] sm:$0xff]
        %v1983 = vld [vmem:[%s1 + $0x10] sm:$0xff]
        %v1984 = vld [vmem:[%s1 + $0x18] sm:$0xff]
        %v1985 = vld [vmem:[%s2] sm:$0x1]
        %v1987 = vlaneseq
        %v1988 = vshrl.u32 %v1987, 7
        %v1989 = vsub.s32 0, %v1988
        %v1990 = vrot.slane %v1985, %v1989
        %v1993 = vsel %vm345, %v1981, 0
        %v1996 = vsel %vm345, %v1982, 0
        %v1999 = vsel %vm345, %v1983, 0
        %v2002 = vsel %vm345, %v1984, 0
        %2004 = vmatprep.subr.mxu0 0.0
        %2005 = vmatpush1.xpose.msra.mxu0 0.0
        %2006 = vmatprep.subr.mxu0 0.0
        %2007 = vmatpush1.xpose.msra.mxu0 0.0
        %2008 = vmatprep.subr.mxu0 0.0
        %2009 = vmatpush1.xpose.msra.mxu0 0.0
        %2010 = vmatprep.subr.mxu0 0.0
        %2011 = vmatpush1.xpose.msra.mxu0 0.0
        %2012 = vmatprep.subr.mxu0 0.0
        %2013 = vmatpush1.xpose.msra.mxu0 0.0
        %2014 = vmatprep.subr.mxu0 0.0
        %2015 = vmatpush1.xpose.msra.mxu0 0.0
        %2016 = vmatprep.subr.mxu0 0.0
        %2017 = vmatpush1.xpose.msra.mxu0 0.0
        %2018 = vmatprep.subr.mxu0 0.0
        %2019 = vmatpush1.xpose.msra.mxu0 0.0
        %2020 = vmatprep.subr.mxu0 0.0
        %2021 = vmatpush1.xpose.msra.mxu0 0.0
        %2022 = vmatprep.subr.mxu0 0.0
        %2023 = vmatpush1.xpose.msra.mxu0 0.0
        %2024 = vmatprep.subr.mxu0 0.0
        %2025 = vmatpush1.xpose.msra.mxu0 0.0
        %2026 = vmatprep.subr.mxu0 0.0
        %2027 = vmatpush1.xpose.msra.mxu0 0.0
        %2028 = vmatprep.subr.mxu0 0.0
        %v2029 = vand.u32 %v2002, 4294901760
        %2030 = vmatpush1.xpose.msra.mxu0 %v2029
        %2031 = vmatprep.subr.mxu0 0.0
        %v2032 = vand.u32 %v1999, 4294901760
        %2033 = vmatpush1.xpose.msra.mxu0 %v2032
        %2034 = vmatprep.subr.mxu0 0.0
        %v2035 = vand.u32 %v1996, 4294901760
        %2036 = vmatpush1.xpose.msra.mxu0 %v2035
        %2037 = vmatprep.subr.mxu0 0.0
        %v2038 = vand.u32 %v1993, 4294901760
        %2039 = vmatpush1.xpose.msra.mxu0 %v2038
        %2040 = vmatprep.subr.mxu0 0.0
        %2041 = vmatpush2.xpose.msra.mxu0 0.0
        %2042 = vmatprep.subr.mxu0 0.0
        %2043 = vmatpush2.xpose.msra.mxu0 0.0
        %2044 = vmatprep.subr.mxu0 0.0
        %2045 = vmatpush2.xpose.msra.mxu0 0.0
        %2046 = vmatprep.subr.mxu0 0.0
        %2047 = vmatpush2.xpose.msra.mxu0 0.0
        %2048 = vmatprep.subr.mxu0 0.0
        %2049 = vmatpush2.xpose.msra.mxu0 0.0
        %2050 = vmatprep.subr.mxu0 0.0
        %2051 = vmatpush2.xpose.msra.mxu0 0.0
        %2052 = vmatprep.subr.mxu0 0.0
        %2053 = vmatpush2.xpose.msra.mxu0 0.0
        %2054 = vmatprep.subr.mxu0 0.0
        %2055 = vmatpush2.xpose.msra.mxu0 0.0
        %2056 = vmatprep.subr.mxu0 0.0
        %2057 = vmatpush2.xpose.msra.mxu0 0.0
        %2058 = vmatprep.subr.mxu0 0.0
        %2059 = vmatpush2.xpose.msra.mxu0 0.0
        %2060 = vmatprep.subr.mxu0 0.0
        %2061 = vmatpush2.xpose.msra.mxu0 0.0
        %2062 = vmatprep.subr.mxu0 0.0
        %2063 = vmatpush2.xpose.msra.mxu0 0.0
        %2064 = vmatprep.subr.mxu0 0.0
        %2065 = vmatpush2.xpose.msra.mxu0 0.0
        %2066 = vmatprep.subr.mxu0 0.0
        %2067 = vmatpush2.xpose.msra.mxu0 0.0
        %2068 = vmatprep.subr.mxu0 0.0
        %2069 = vmatpush2.xpose.msra.mxu0 0.0
        %2070 = vmatprep.subr.mxu0 0.0
        %2071 = vmatpush2.xpose.msra.mxu0 0.0
        %2072 = vmatprep.mubr.f32.mxu0 0.0
        %v2073 = vand.u32 %v347, 4294901760
        %v2074 = vsub.f32 %v347, %v2073
        %v2075 = vand.u32 %v2074, 4294901760
        %v2076 = vsub.f32 %v2074, %v2075
        %v2077 = vand.u32 %v2076, 4294901760
        %2078 = vmatmul.mubr.f32.gmra.mxu0 %v2077
        %v2079 = vpop.f32.mrf.mxu0
        %v2080 = vadd.f32 %v1990, %v2079
        %v2081 = vpop.f32.mrf.mxu0
        %2082 = vmatprep.mubr.f32.mxu0 0.0
        %v2083 = vand.u32 %v350, 4294901760
        %v2084 = vsub.f32 %v350, %v2083
        %v2085 = vand.u32 %v2084, 4294901760
        %v2086 = vsub.f32 %v2084, %v2085
        %v2087 = vand.u32 %v2086, 4294901760
        %2088 = vmatmul.mubr.f32.gmra.mxu0 %v2087
        %v2089 = vpop.f32.mrf.mxu0
        %v2090 = vadd.f32 %v1990, %v2089
        %v2091 = vpop.f32.mrf.mxu0
        %2092 = vdwg.mxu0
        %2093 = vmatprep.subr.mxu0 0.0
        %2094 = vmatpush1.xpose.msra.mxu0 0.0
        %2095 = vmatprep.subr.mxu0 0.0
        %2096 = vmatpush1.xpose.msra.mxu0 0.0
        %2097 = vmatprep.subr.mxu0 0.0
        %2098 = vmatpush1.xpose.msra.mxu0 0.0
        %2099 = vmatprep.subr.mxu0 0.0
        %2100 = vmatpush1.xpose.msra.mxu0 0.0
        %2101 = vmatprep.subr.mxu0 0.0
        %2102 = vmatpush1.xpose.msra.mxu0 0.0
        %2103 = vmatprep.subr.mxu0 0.0
        %2104 = vmatpush1.xpose.msra.mxu0 0.0
        %2105 = vmatprep.subr.mxu0 0.0
        %2106 = vmatpush1.xpose.msra.mxu0 0.0
        %2107 = vmatprep.subr.mxu0 0.0
        %2108 = vmatpush1.xpose.msra.mxu0 0.0
        %2109 = vmatprep.subr.mxu0 0.0
        %2110 = vmatpush1.xpose.msra.mxu0 0.0
        %2111 = vmatprep.subr.mxu0 0.0
        %2112 = vmatpush1.xpose.msra.mxu0 0.0
        %2113 = vmatprep.subr.mxu0 0.0
        %2114 = vmatpush1.xpose.msra.mxu0 0.0
        %2115 = vmatprep.subr.mxu0 0.0
        %2116 = vmatpush1.xpose.msra.mxu0 0.0
        %2117 = vmatprep.subr.mxu0 0.0
        %v2118 = vand.u32 %v2002, 4294901760
        %v2119 = vsub.f32 %v2002, %v2118
        %v2120 = vand.u32 %v2119, 4294901760
        %v2121 = vsub.f32 %v2119, %v2120
        %v2122 = vand.u32 %v2121, 4294901760
        %2123 = vmatpush1.xpose.msra.mxu0 %v2122
        %2124 = vmatprep.subr.mxu0 0.0
        %v2125 = vand.u32 %v1999, 4294901760
        %v2126 = vsub.f32 %v1999, %v2125
        %v2127 = vand.u32 %v2126, 4294901760
        %v2128 = vsub.f32 %v2126, %v2127
        %v2129 = vand.u32 %v2128, 4294901760
        %2130 = vmatpush1.xpose.msra.mxu0 %v2129
        %2131 = vmatprep.subr.mxu0 0.0
        %v2132 = vand.u32 %v1996, 4294901760
        %v2133 = vsub.f32 %v1996, %v2132
        %v2134 = vand.u32 %v2133, 4294901760
        %v2135 = vsub.f32 %v2133, %v2134
        %v2136 = vand.u32 %v2135, 4294901760
        %2137 = vmatpush1.xpose.msra.mxu0 %v2136
        %2138 = vmatprep.subr.mxu0 0.0
        %v2139 = vand.u32 %v1993, 4294901760
        %v2140 = vsub.f32 %v1993, %v2139
        %v2141 = vand.u32 %v2140, 4294901760
        %v2142 = vsub.f32 %v2140, %v2141
        %v2143 = vand.u32 %v2142, 4294901760
        %2144 = vmatpush1.xpose.msra.mxu0 %v2143
        %2145 = vmatprep.subr.mxu0 0.0
        %2146 = vmatpush2.xpose.msra.mxu0 0.0
        %2147 = vmatprep.subr.mxu0 0.0
        %2148 = vmatpush2.xpose.msra.mxu0 0.0
        %2149 = vmatprep.subr.mxu0 0.0
        %2150 = vmatpush2.xpose.msra.mxu0 0.0
        %2151 = vmatprep.subr.mxu0 0.0
        %2152 = vmatpush2.xpose.msra.mxu0 0.0
        %2153 = vmatprep.subr.mxu0 0.0
        %2154 = vmatpush2.xpose.msra.mxu0 0.0
        %2155 = vmatprep.subr.mxu0 0.0
        %2156 = vmatpush2.xpose.msra.mxu0 0.0
        %2157 = vmatprep.subr.mxu0 0.0
        %2158 = vmatpush2.xpose.msra.mxu0 0.0
        %2159 = vmatprep.subr.mxu0 0.0
        %2160 = vmatpush2.xpose.msra.mxu0 0.0
        %2161 = vmatprep.subr.mxu0 0.0
        %2162 = vmatpush2.xpose.msra.mxu0 0.0
        %2163 = vmatprep.subr.mxu0 0.0
        %2164 = vmatpush2.xpose.msra.mxu0 0.0
        %2165 = vmatprep.subr.mxu0 0.0
        %2166 = vmatpush2.xpose.msra.mxu0 0.0
        %2167 = vmatprep.subr.mxu0 0.0
        %2168 = vmatpush2.xpose.msra.mxu0 0.0
        %2169 = vmatprep.subr.mxu0 0.0
        %2170 = vmatpush2.xpose.msra.mxu0 0.0
        %2171 = vmatprep.subr.mxu0 0.0
        %2172 = vmatpush2.xpose.msra.mxu0 0.0
        %2173 = vmatprep.subr.mxu0 0.0
        %2174 = vmatpush2.xpose.msra.mxu0 0.0
        %2175 = vmatprep.subr.mxu0 0.0
        %2176 = vmatpush2.xpose.msra.mxu0 0.0
        %2177 = vmatprep.mubr.f32.mxu0 0.0
        %v2178 = vand.u32 %v347, 4294901760
        %2179 = vmatmul.mubr.f32.gmra.mxu0 %v2178
        %v2180 = vpop.f32.mrf.mxu0
        %v2181 = vadd.f32 %v2080, %v2180
        %v2182 = vpop.f32.mrf.mxu0
        %2183 = vmatprep.mubr.f32.mxu0 0.0
        %v2184 = vand.u32 %v350, 4294901760
        %2185 = vmatmul.mubr.f32.gmra.mxu0 %v2184
        %v2186 = vpop.f32.mrf.mxu0
        %v2187 = vadd.f32 %v2090, %v2186
        %v2188 = vpop.f32.mrf.mxu0
        %2189 = vdwg.mxu0
        %2190 = vmatprep.subr.mxu0 0.0
        %2191 = vmatpush1.xpose.msra.mxu0 0.0
        %2192 = vmatprep.subr.mxu0 0.0
        %2193 = vmatpush1.xpose.msra.mxu0 0.0
        %2194 = vmatprep.subr.mxu0 0.0
        %2195 = vmatpush1.xpose.msra.mxu0 0.0
        %2196 = vmatprep.subr.mxu0 0.0
        %2197 = vmatpush1.xpose.msra.mxu0 0.0
        %2198 = vmatprep.subr.mxu0 0.0
        %2199 = vmatpush1.xpose.msra.mxu0 0.0
        %2200 = vmatprep.subr.mxu0 0.0
        %2201 = vmatpush1.xpose.msra.mxu0 0.0
        %2202 = vmatprep.subr.mxu0 0.0
        %2203 = vmatpush1.xpose.msra.mxu0 0.0
        %2204 = vmatprep.subr.mxu0 0.0
        %2205 = vmatpush1.xpose.msra.mxu0 0.0
        %2206 = vmatprep.subr.mxu0 0.0
        %2207 = vmatpush1.xpose.msra.mxu0 0.0
        %2208 = vmatprep.subr.mxu0 0.0
        %2209 = vmatpush1.xpose.msra.mxu0 0.0
        %2210 = vmatprep.subr.mxu0 0.0
        %2211 = vmatpush1.xpose.msra.mxu0 0.0
        %2212 = vmatprep.subr.mxu0 0.0
        %2213 = vmatpush1.xpose.msra.mxu0 0.0
        %2214 = vmatprep.subr.mxu0 0.0
        %v2215 = vand.u32 %v2002, 4294901760
        %v2216 = vsub.f32 %v2002, %v2215
        %2217 = vmatpush1.xpose.msra.mxu0 %v2216
        %2218 = vmatprep.subr.mxu0 0.0
        %v2219 = vand.u32 %v1999, 4294901760
        %v2220 = vsub.f32 %v1999, %v2219
        %2221 = vmatpush1.xpose.msra.mxu0 %v2220
        %2222 = vmatprep.subr.mxu0 0.0
        %v2223 = vand.u32 %v1996, 4294901760
        %v2224 = vsub.f32 %v1996, %v2223
        %2225 = vmatpush1.xpose.msra.mxu0 %v2224
        %2226 = vmatprep.subr.mxu0 0.0
        %v2227 = vand.u32 %v1993, 4294901760
        %v2228 = vsub.f32 %v1993, %v2227
        %2229 = vmatpush1.xpose.msra.mxu0 %v2228
        %2230 = vmatprep.subr.mxu0 0.0
        %2231 = vmatpush2.xpose.msra.mxu0 0.0
        %2232 = vmatprep.subr.mxu0 0.0
        %2233 = vmatpush2.xpose.msra.mxu0 0.0
        %2234 = vmatprep.subr.mxu0 0.0
        %2235 = vmatpush2.xpose.msra.mxu0 0.0
        %2236 = vmatprep.subr.mxu0 0.0
        %2237 = vmatpush2.xpose.msra.mxu0 0.0
        %2238 = vmatprep.subr.mxu0 0.0
        %2239 = vmatpush2.xpose.msra.mxu0 0.0
        %2240 = vmatprep.subr.mxu0 0.0
        %2241 = vmatpush2.xpose.msra.mxu0 0.0
        %2242 = vmatprep.subr.mxu0 0.0
        %2243 = vmatpush2.xpose.msra.mxu0 0.0
        %2244 = vmatprep.subr.mxu0 0.0
        %2245 = vmatpush2.xpose.msra.mxu0 0.0
        %2246 = vmatprep.subr.mxu0 0.0
        %2247 = vmatpush2.xpose.msra.mxu0 0.0
        %2248 = vmatprep.subr.mxu0 0.0
        %2249 = vmatpush2.xpose.msra.mxu0 0.0
        %2250 = vmatprep.subr.mxu0 0.0
        %2251 = vmatpush2.xpose.msra.mxu0 0.0
        %2252 = vmatprep.subr.mxu0 0.0
        %2253 = vmatpush2.xpose.msra.mxu0 0.0
        %2254 = vmatprep.subr.mxu0 0.0
        %2255 = vmatpush2.xpose.msra.mxu0 0.0
        %2256 = vmatprep.subr.mxu0 0.0
        %2257 = vmatpush2.xpose.msra.mxu0 0.0
        %2258 = vmatprep.subr.mxu0 0.0
        %2259 = vmatpush2.xpose.msra.mxu0 0.0
        %2260 = vmatprep.subr.mxu0 0.0
        %2261 = vmatpush2.xpose.msra.mxu0 0.0
        %2262 = vmatprep.mubr.f32.mxu0 0.0
        %v2263 = vand.u32 %v347, 4294901760
        %v2264 = vsub.f32 %v347, %v2263
        %2265 = vmatmul.mubr.f32.gmra.mxu0 %v2264
        %v2266 = vpop.f32.mrf.mxu0
        %v2267 = vadd.f32 %v2181, %v2266
        %v2268 = vpop.f32.mrf.mxu0
        %2269 = vmatprep.mubr.f32.mxu0 0.0
        %v2270 = vand.u32 %v350, 4294901760
        %v2271 = vsub.f32 %v350, %v2270
        %2272 = vmatmul.mubr.f32.gmra.mxu0 %v2271
        %v2273 = vpop.f32.mrf.mxu0
        %v2274 = vadd.f32 %v2187, %v2273
        %v2275 = vpop.f32.mrf.mxu0
        %2276 = vdwg.mxu0
        %2277 = vmatprep.subr.mxu0 0.0
        %2278 = vmatpush1.xpose.msra.mxu0 0.0
        %2279 = vmatprep.subr.mxu0 0.0
        %2280 = vmatpush1.xpose.msra.mxu0 0.0
        %2281 = vmatprep.subr.mxu0 0.0
        %2282 = vmatpush1.xpose.msra.mxu0 0.0
        %2283 = vmatprep.subr.mxu0 0.0
        %2284 = vmatpush1.xpose.msra.mxu0 0.0
        %2285 = vmatprep.subr.mxu0 0.0
        %2286 = vmatpush1.xpose.msra.mxu0 0.0
        %2287 = vmatprep.subr.mxu0 0.0
        %2288 = vmatpush1.xpose.msra.mxu0 0.0
        %2289 = vmatprep.subr.mxu0 0.0
        %2290 = vmatpush1.xpose.msra.mxu0 0.0
        %2291 = vmatprep.subr.mxu0 0.0
        %2292 = vmatpush1.xpose.msra.mxu0 0.0
        %2293 = vmatprep.subr.mxu0 0.0
        %2294 = vmatpush1.xpose.msra.mxu0 0.0
        %2295 = vmatprep.subr.mxu0 0.0
        %2296 = vmatpush1.xpose.msra.mxu0 0.0
        %2297 = vmatprep.subr.mxu0 0.0
        %2298 = vmatpush1.xpose.msra.mxu0 0.0
        %2299 = vmatprep.subr.mxu0 0.0
        %2300 = vmatpush1.xpose.msra.mxu0 0.0
        %2301 = vmatprep.subr.mxu0 0.0
        %v2302 = vand.u32 %v2002, 4294901760
        %2303 = vmatpush1.xpose.msra.mxu0 %v2302
        %2304 = vmatprep.subr.mxu0 0.0
        %v2305 = vand.u32 %v1999, 4294901760
        %2306 = vmatpush1.xpose.msra.mxu0 %v2305
        %2307 = vmatprep.subr.mxu0 0.0
        %v2308 = vand.u32 %v1996, 4294901760
        %2309 = vmatpush1.xpose.msra.mxu0 %v2308
        %2310 = vmatprep.subr.mxu0 0.0
        %v2311 = vand.u32 %v1993, 4294901760
        %2312 = vmatpush1.xpose.msra.mxu0 %v2311
        %2313 = vmatprep.subr.mxu0 0.0
        %2314 = vmatpush2.xpose.msra.mxu0 0.0
        %2315 = vmatprep.subr.mxu0 0.0
        %2316 = vmatpush2.xpose.msra.mxu0 0.0
        %2317 = vmatprep.subr.mxu0 0.0
        %2318 = vmatpush2.xpose.msra.mxu0 0.0
        %2319 = vmatprep.subr.mxu0 0.0
        %2320 = vmatpush2.xpose.msra.mxu0 0.0
        %2321 = vmatprep.subr.mxu0 0.0
        %2322 = vmatpush2.xpose.msra.mxu0 0.0
        %2323 = vmatprep.subr.mxu0 0.0
        %2324 = vmatpush2.xpose.msra.mxu0 0.0
        %2325 = vmatprep.subr.mxu0 0.0
        %2326 = vmatpush2.xpose.msra.mxu0 0.0
        %2327 = vmatprep.subr.mxu0 0.0
        %2328 = vmatpush2.xpose.msra.mxu0 0.0
        %2329 = vmatprep.subr.mxu0 0.0
        %2330 = vmatpush2.xpose.msra.mxu0 0.0
        %2331 = vmatprep.subr.mxu0 0.0
        %2332 = vmatpush2.xpose.msra.mxu0 0.0
        %2333 = vmatprep.subr.mxu0 0.0
        %2334 = vmatpush2.xpose.msra.mxu0 0.0
        %2335 = vmatprep.subr.mxu0 0.0
        %2336 = vmatpush2.xpose.msra.mxu0 0.0
        %2337 = vmatprep.subr.mxu0 0.0
        %2338 = vmatpush2.xpose.msra.mxu0 0.0
        %2339 = vmatprep.subr.mxu0 0.0
        %2340 = vmatpush2.xpose.msra.mxu0 0.0
        %2341 = vmatprep.subr.mxu0 0.0
        %2342 = vmatpush2.xpose.msra.mxu0 0.0
        %2343 = vmatprep.subr.mxu0 0.0
        %2344 = vmatpush2.xpose.msra.mxu0 0.0
        %2345 = vmatprep.mubr.f32.mxu0 0.0
        %v2346 = vand.u32 %v347, 4294901760
        %v2347 = vsub.f32 %v347, %v2346
        %v2348 = vand.u32 %v2347, 4294901760
        %2349 = vmatmul.mubr.f32.gmra.mxu0 %v2348
        %v2350 = vpop.f32.mrf.mxu0
        %v2351 = vadd.f32 %v2267, %v2350
        %v2352 = vpop.f32.mrf.mxu0
        %2353 = vmatprep.mubr.f32.mxu0 0.0
        %v2354 = vand.u32 %v350, 4294901760
        %v2355 = vsub.f32 %v350, %v2354
        %v2356 = vand.u32 %v2355, 4294901760
        %2357 = vmatmul.mubr.f32.gmra.mxu0 %v2356
        %v2358 = vpop.f32.mrf.mxu0
        %v2359 = vadd.f32 %v2274, %v2358
        %v2360 = vpop.f32.mrf.mxu0
        %2361 = vdwg.mxu0
        %2362 = vmatprep.subr.mxu0 0.0
        %2363 = vmatpush1.xpose.msra.mxu0 0.0
        %2364 = vmatprep.subr.mxu0 0.0
        %2365 = vmatpush1.xpose.msra.mxu0 0.0
        %2366 = vmatprep.subr.mxu0 0.0
        %2367 = vmatpush1.xpose.msra.mxu0 0.0
        %2368 = vmatprep.subr.mxu0 0.0
        %2369 = vmatpush1.xpose.msra.mxu0 0.0
        %2370 = vmatprep.subr.mxu0 0.0
        %2371 = vmatpush1.xpose.msra.mxu0 0.0
        %2372 = vmatprep.subr.mxu0 0.0
        %2373 = vmatpush1.xpose.msra.mxu0 0.0
        %2374 = vmatprep.subr.mxu0 0.0
        %2375 = vmatpush1.xpose.msra.mxu0 0.0
        %2376 = vmatprep.subr.mxu0 0.0
        %2377 = vmatpush1.xpose.msra.mxu0 0.0
        %2378 = vmatprep.subr.mxu0 0.0
        %2379 = vmatpush1.xpose.msra.mxu0 0.0
        %2380 = vmatprep.subr.mxu0 0.0
        %2381 = vmatpush1.xpose.msra.mxu0 0.0
        %2382 = vmatprep.subr.mxu0 0.0
        %2383 = vmatpush1.xpose.msra.mxu0 0.0
        %2384 = vmatprep.subr.mxu0 0.0
        %2385 = vmatpush1.xpose.msra.mxu0 0.0
        %2386 = vmatprep.subr.mxu0 0.0
        %v2387 = vand.u32 %v2002, 4294901760
        %v2388 = vsub.f32 %v2002, %v2387
        %v2389 = vand.u32 %v2388, 4294901760
        %2390 = vmatpush1.xpose.msra.mxu0 %v2389
        %2391 = vmatprep.subr.mxu0 0.0
        %v2392 = vand.u32 %v1999, 4294901760
        %v2393 = vsub.f32 %v1999, %v2392
        %v2394 = vand.u32 %v2393, 4294901760
        %2395 = vmatpush1.xpose.msra.mxu0 %v2394
        %2396 = vmatprep.subr.mxu0 0.0
        %v2397 = vand.u32 %v1996, 4294901760
        %v2398 = vsub.f32 %v1996, %v2397
        %v2399 = vand.u32 %v2398, 4294901760
        %2400 = vmatpush1.xpose.msra.mxu0 %v2399
        %2401 = vmatprep.subr.mxu0 0.0
        %v2402 = vand.u32 %v1993, 4294901760
        %v2403 = vsub.f32 %v1993, %v2402
        %v2404 = vand.u32 %v2403, 4294901760
        %2405 = vmatpush1.xpose.msra.mxu0 %v2404
        %2406 = vmatprep.subr.mxu0 0.0
        %2407 = vmatpush2.xpose.msra.mxu0 0.0
        %2408 = vmatprep.subr.mxu0 0.0
        %2409 = vmatpush2.xpose.msra.mxu0 0.0
        %2410 = vmatprep.subr.mxu0 0.0
        %2411 = vmatpush2.xpose.msra.mxu0 0.0
        %2412 = vmatprep.subr.mxu0 0.0
        %2413 = vmatpush2.xpose.msra.mxu0 0.0
        %2414 = vmatprep.subr.mxu0 0.0
        %2415 = vmatpush2.xpose.msra.mxu0 0.0
        %2416 = vmatprep.subr.mxu0 0.0
        %2417 = vmatpush2.xpose.msra.mxu0 0.0
        %2418 = vmatprep.subr.mxu0 0.0
        %2419 = vmatpush2.xpose.msra.mxu0 0.0
        %2420 = vmatprep.subr.mxu0 0.0
        %2421 = vmatpush2.xpose.msra.mxu0 0.0
        %2422 = vmatprep.subr.mxu0 0.0
        %2423 = vmatpush2.xpose.msra.mxu0 0.0
        %2424 = vmatprep.subr.mxu0 0.0
        %2425 = vmatpush2.xpose.msra.mxu0 0.0
        %2426 = vmatprep.subr.mxu0 0.0
        %2427 = vmatpush2.xpose.msra.mxu0 0.0
        %2428 = vmatprep.subr.mxu0 0.0
        %2429 = vmatpush2.xpose.msra.mxu0 0.0
        %2430 = vmatprep.subr.mxu0 0.0
        %2431 = vmatpush2.xpose.msra.mxu0 0.0
        %2432 = vmatprep.subr.mxu0 0.0
        %2433 = vmatpush2.xpose.msra.mxu0 0.0
        %2434 = vmatprep.subr.mxu0 0.0
        %2435 = vmatpush2.xpose.msra.mxu0 0.0
        %2436 = vmatprep.subr.mxu0 0.0
        %2437 = vmatpush2.xpose.msra.mxu0 0.0
        %2438 = vmatprep.mubr.f32.mxu0 0.0
        %v2439 = vand.u32 %v347, 4294901760
        %2440 = vmatmul.mubr.f32.gmra.mxu0 %v2439
        %v2441 = vpop.f32.mrf.mxu0
        %v2442 = vadd.f32 %v2351, %v2441
        %v2443 = vpop.f32.mrf.mxu0
        %2444 = vmatprep.mubr.f32.mxu0 0.0
        %v2445 = vand.u32 %v350, 4294901760
        %2446 = vmatmul.mubr.f32.gmra.mxu0 %v2445
        %v2447 = vpop.f32.mrf.mxu0
        %v2448 = vadd.f32 %v2359, %v2447
        %v2449 = vpop.f32.mrf.mxu0
        %2450 = vdwg.mxu0
        %2451 = vmatprep.subr.mxu0 0.0
        %2452 = vmatpush1.xpose.msra.mxu0 0.0
        %2453 = vmatprep.subr.mxu0 0.0
        %2454 = vmatpush1.xpose.msra.mxu0 0.0
        %2455 = vmatprep.subr.mxu0 0.0
        %2456 = vmatpush1.xpose.msra.mxu0 0.0
        %2457 = vmatprep.subr.mxu0 0.0
        %2458 = vmatpush1.xpose.msra.mxu0 0.0
        %2459 = vmatprep.subr.mxu0 0.0
        %2460 = vmatpush1.xpose.msra.mxu0 0.0
        %2461 = vmatprep.subr.mxu0 0.0
        %2462 = vmatpush1.xpose.msra.mxu0 0.0
        %2463 = vmatprep.subr.mxu0 0.0
        %2464 = vmatpush1.xpose.msra.mxu0 0.0
        %2465 = vmatprep.subr.mxu0 0.0
        %2466 = vmatpush1.xpose.msra.mxu0 0.0
        %2467 = vmatprep.subr.mxu0 0.0
        %2468 = vmatpush1.xpose.msra.mxu0 0.0
        %2469 = vmatprep.subr.mxu0 0.0
        %2470 = vmatpush1.xpose.msra.mxu0 0.0
        %2471 = vmatprep.subr.mxu0 0.0
        %2472 = vmatpush1.xpose.msra.mxu0 0.0
        %2473 = vmatprep.subr.mxu0 0.0
        %2474 = vmatpush1.xpose.msra.mxu0 0.0
        %2475 = vmatprep.subr.mxu0 0.0
        %v2476 = vand.u32 %v2002, 4294901760
        %2477 = vmatpush1.xpose.msra.mxu0 %v2476
        %2478 = vmatprep.subr.mxu0 0.0
        %v2479 = vand.u32 %v1999, 4294901760
        %2480 = vmatpush1.xpose.msra.mxu0 %v2479
        %2481 = vmatprep.subr.mxu0 0.0
        %v2482 = vand.u32 %v1996, 4294901760
        %2483 = vmatpush1.xpose.msra.mxu0 %v2482
        %2484 = vmatprep.subr.mxu0 0.0
        %v2485 = vand.u32 %v1993, 4294901760
        %2486 = vmatpush1.xpose.msra.mxu0 %v2485
        %2487 = vmatprep.subr.mxu0 0.0
        %2488 = vmatpush2.xpose.msra.mxu0 0.0
        %2489 = vmatprep.subr.mxu0 0.0
        %2490 = vmatpush2.xpose.msra.mxu0 0.0
        %2491 = vmatprep.subr.mxu0 0.0
        %2492 = vmatpush2.xpose.msra.mxu0 0.0
        %2493 = vmatprep.subr.mxu0 0.0
        %2494 = vmatpush2.xpose.msra.mxu0 0.0
        %2495 = vmatprep.subr.mxu0 0.0
        %2496 = vmatpush2.xpose.msra.mxu0 0.0
        %2497 = vmatprep.subr.mxu0 0.0
        %2498 = vmatpush2.xpose.msra.mxu0 0.0
        %2499 = vmatprep.subr.mxu0 0.0
        %2500 = vmatpush2.xpose.msra.mxu0 0.0
        %2501 = vmatprep.subr.mxu0 0.0
        %2502 = vmatpush2.xpose.msra.mxu0 0.0
        %2503 = vmatprep.subr.mxu0 0.0
        %2504 = vmatpush2.xpose.msra.mxu0 0.0
        %2505 = vmatprep.subr.mxu0 0.0
        %2506 = vmatpush2.xpose.msra.mxu0 0.0
        %2507 = vmatprep.subr.mxu0 0.0
        %2508 = vmatpush2.xpose.msra.mxu0 0.0
        %2509 = vmatprep.subr.mxu0 0.0
        %2510 = vmatpush2.xpose.msra.mxu0 0.0
        %2511 = vmatprep.subr.mxu0 0.0
        %2512 = vmatpush2.xpose.msra.mxu0 0.0
        %2513 = vmatprep.subr.mxu0 0.0
        %2514 = vmatpush2.xpose.msra.mxu0 0.0
        %2515 = vmatprep.subr.mxu0 0.0
        %2516 = vmatpush2.xpose.msra.mxu0 0.0
        %2517 = vmatprep.subr.mxu0 0.0
        %2518 = vmatpush2.xpose.msra.mxu0 0.0
        %2519 = vmatprep.mubr.f32.mxu0 0.0
        %v2520 = vand.u32 %v347, 4294901760
        %2521 = vmatmul.mubr.f32.gmra.mxu0 %v2520
        %v2522 = vpop.f32.mrf.mxu0
        %v2523 = vadd.f32 %v2442, %v2522
        %v2524 = vpop.f32.mrf.mxu0
        %2525 = vmatprep.mubr.f32.mxu0 0.0
        %v2526 = vand.u32 %v350, 4294901760
        %2527 = vmatmul.mubr.f32.gmra.mxu0 %v2526
        %v2528 = vpop.f32.mrf.mxu0
        %v2529 = vadd.f32 %v2448, %v2528
        %v2530 = vpop.f32.mrf.mxu0
        %2531 = vdwg.mxu0
        %v2532 = vadd.f32 %v2523, %v1420
        %v2533 = vadd.f32 %v2529, %v1426
        %2534 = vst.msk [vmem:[%s314] sm:$0xff] %vm345, %v2532
        %2535 = vst.msk [vmem:[%s314 + $0x8] sm:$0xff] %vm345, %v2533
        %v2536 = vld [vmem:[%s1 + $0x20] sm:$0xff]
        %v2537 = vld [vmem:[%s1 + $0x28] sm:$0xff]
        %v2538 = vld [vmem:[%s1 + $0x30] sm:$0xff]
        %v2539 = vld [vmem:[%s1 + $0x38] sm:$0xff]
        %v2540 = vld [vmem:[%s2] sm:$0x1]
        %v2542 = vlaneseq
        %v2543 = vshrl.u32 %v2542, 7
        %v2544 = vsub.s32 0, %v2543
        %v2545 = vrot.slane %v2540, %v2544
        %2546 = vrot.lane.b32.xlu0 %v2545, 96
        %v2547 = vpop.permute.xlu0 %2546
        %v2550 = vsel %vm345, %v2536, 0
        %v2553 = vsel %vm345, %v2537, 0
        %v2556 = vsel %vm345, %v2538, 0
        %v2559 = vsel %vm345, %v2539, 0
        %2561 = vmatprep.subr.mxu0 0.0
        %2562 = vmatpush1.xpose.msra.mxu0 0.0
        %2563 = vmatprep.subr.mxu0 0.0
        %2564 = vmatpush1.xpose.msra.mxu0 0.0
        %2565 = vmatprep.subr.mxu0 0.0
        %2566 = vmatpush1.xpose.msra.mxu0 0.0
        %2567 = vmatprep.subr.mxu0 0.0
        %2568 = vmatpush1.xpose.msra.mxu0 0.0
        %2569 = vmatprep.subr.mxu0 0.0
        %2570 = vmatpush1.xpose.msra.mxu0 0.0
        %2571 = vmatprep.subr.mxu0 0.0
        %2572 = vmatpush1.xpose.msra.mxu0 0.0
        %2573 = vmatprep.subr.mxu0 0.0
        %2574 = vmatpush1.xpose.msra.mxu0 0.0
        %2575 = vmatprep.subr.mxu0 0.0
        %2576 = vmatpush1.xpose.msra.mxu0 0.0
        %2577 = vmatprep.subr.mxu0 0.0
        %2578 = vmatpush1.xpose.msra.mxu0 0.0
        %2579 = vmatprep.subr.mxu0 0.0
        %2580 = vmatpush1.xpose.msra.mxu0 0.0
        %2581 = vmatprep.subr.mxu0 0.0
        %2582 = vmatpush1.xpose.msra.mxu0 0.0
        %2583 = vmatprep.subr.mxu0 0.0
        %2584 = vmatpush1.xpose.msra.mxu0 0.0
        %2585 = vmatprep.subr.mxu0 0.0
        %v2586 = vand.u32 %v2559, 4294901760
        %2587 = vmatpush1.xpose.msra.mxu0 %v2586
        %2588 = vmatprep.subr.mxu0 0.0
        %v2589 = vand.u32 %v2556, 4294901760
        %2590 = vmatpush1.xpose.msra.mxu0 %v2589
        %2591 = vmatprep.subr.mxu0 0.0
        %v2592 = vand.u32 %v2553, 4294901760
        %2593 = vmatpush1.xpose.msra.mxu0 %v2592
        %2594 = vmatprep.subr.mxu0 0.0
        %v2595 = vand.u32 %v2550, 4294901760
        %2596 = vmatpush1.xpose.msra.mxu0 %v2595
        %2597 = vmatprep.subr.mxu0 0.0
        %2598 = vmatpush2.xpose.msra.mxu0 0.0
        %2599 = vmatprep.subr.mxu0 0.0
        %2600 = vmatpush2.xpose.msra.mxu0 0.0
        %2601 = vmatprep.subr.mxu0 0.0
        %2602 = vmatpush2.xpose.msra.mxu0 0.0
        %2603 = vmatprep.subr.mxu0 0.0
        %2604 = vmatpush2.xpose.msra.mxu0 0.0
        %2605 = vmatprep.subr.mxu0 0.0
        %2606 = vmatpush2.xpose.msra.mxu0 0.0
        %2607 = vmatprep.subr.mxu0 0.0
        %2608 = vmatpush2.xpose.msra.mxu0 0.0
        %2609 = vmatprep.subr.mxu0 0.0
        %2610 = vmatpush2.xpose.msra.mxu0 0.0
        %2611 = vmatprep.subr.mxu0 0.0
        %2612 = vmatpush2.xpose.msra.mxu0 0.0
        %2613 = vmatprep.subr.mxu0 0.0
        %2614 = vmatpush2.xpose.msra.mxu0 0.0
        %2615 = vmatprep.subr.mxu0 0.0
        %2616 = vmatpush2.xpose.msra.mxu0 0.0
        %2617 = vmatprep.subr.mxu0 0.0
        %2618 = vmatpush2.xpose.msra.mxu0 0.0
        %2619 = vmatprep.subr.mxu0 0.0
        %2620 = vmatpush2.xpose.msra.mxu0 0.0
        %2621 = vmatprep.subr.mxu0 0.0
        %2622 = vmatpush2.xpose.msra.mxu0 0.0
        %2623 = vmatprep.subr.mxu0 0.0
        %2624 = vmatpush2.xpose.msra.mxu0 0.0
        %2625 = vmatprep.subr.mxu0 0.0
        %2626 = vmatpush2.xpose.msra.mxu0 0.0
        %2627 = vmatprep.subr.mxu0 0.0
        %2628 = vmatpush2.xpose.msra.mxu0 0.0
        %2629 = vmatprep.mubr.f32.mxu0 0.0
        %v2630 = vand.u32 %v347, 4294901760
        %v2631 = vsub.f32 %v347, %v2630
        %v2632 = vand.u32 %v2631, 4294901760
        %v2633 = vsub.f32 %v2631, %v2632
        %v2634 = vand.u32 %v2633, 4294901760
        %2635 = vmatmul.mubr.f32.gmra.mxu0 %v2634
        %v2636 = vpop.f32.mrf.mxu0
        %v2637 = vadd.f32 %v2547, %v2636
        %v2638 = vpop.f32.mrf.mxu0
        %2639 = vmatprep.mubr.f32.mxu0 0.0
        %v2640 = vand.u32 %v350, 4294901760
        %v2641 = vsub.f32 %v350, %v2640
        %v2642 = vand.u32 %v2641, 4294901760
        %v2643 = vsub.f32 %v2641, %v2642
        %v2644 = vand.u32 %v2643, 4294901760
        %2645 = vmatmul.mubr.f32.gmra.mxu0 %v2644
        %v2646 = vpop.f32.mrf.mxu0
        %v2647 = vadd.f32 %v2547, %v2646
        %v2648 = vpop.f32.mrf.mxu0
        %2649 = vdwg.mxu0
        %2650 = vmatprep.subr.mxu0 0.0
        %2651 = vmatpush1.xpose.msra.mxu0 0.0
        %2652 = vmatprep.subr.mxu0 0.0
        %2653 = vmatpush1.xpose.msra.mxu0 0.0
        %2654 = vmatprep.subr.mxu0 0.0
        %2655 = vmatpush1.xpose.msra.mxu0 0.0
        %2656 = vmatprep.subr.mxu0 0.0
        %2657 = vmatpush1.xpose.msra.mxu0 0.0
        %2658 = vmatprep.subr.mxu0 0.0
        %2659 = vmatpush1.xpose.msra.mxu0 0.0
        %2660 = vmatprep.subr.mxu0 0.0
        %2661 = vmatpush1.xpose.msra.mxu0 0.0
        %2662 = vmatprep.subr.mxu0 0.0
        %2663 = vmatpush1.xpose.msra.mxu0 0.0
        %2664 = vmatprep.subr.mxu0 0.0
        %2665 = vmatpush1.xpose.msra.mxu0 0.0
        %2666 = vmatprep.subr.mxu0 0.0
        %2667 = vmatpush1.xpose.msra.mxu0 0.0
        %2668 = vmatprep.subr.mxu0 0.0
        %2669 = vmatpush1.xpose.msra.mxu0 0.0
        %2670 = vmatprep.subr.mxu0 0.0
        %2671 = vmatpush1.xpose.msra.mxu0 0.0
        %2672 = vmatprep.subr.mxu0 0.0
        %2673 = vmatpush1.xpose.msra.mxu0 0.0
        %2674 = vmatprep.subr.mxu0 0.0
        %v2675 = vand.u32 %v2559, 4294901760
        %v2676 = vsub.f32 %v2559, %v2675
        %v2677 = vand.u32 %v2676, 4294901760
        %v2678 = vsub.f32 %v2676, %v2677
        %v2679 = vand.u32 %v2678, 4294901760
        %2680 = vmatpush1.xpose.msra.mxu0 %v2679
        %2681 = vmatprep.subr.mxu0 0.0
        %v2682 = vand.u32 %v2556, 4294901760
        %v2683 = vsub.f32 %v2556, %v2682
        %v2684 = vand.u32 %v2683, 4294901760
        %v2685 = vsub.f32 %v2683, %v2684
        %v2686 = vand.u32 %v2685, 4294901760
        %2687 = vmatpush1.xpose.msra.mxu0 %v2686
        %2688 = vmatprep.subr.mxu0 0.0
        %v2689 = vand.u32 %v2553, 4294901760
        %v2690 = vsub.f32 %v2553, %v2689
        %v2691 = vand.u32 %v2690, 4294901760
        %v2692 = vsub.f32 %v2690, %v2691
        %v2693 = vand.u32 %v2692, 4294901760
        %2694 = vmatpush1.xpose.msra.mxu0 %v2693
        %2695 = vmatprep.subr.mxu0 0.0
        %v2696 = vand.u32 %v2550, 4294901760
        %v2697 = vsub.f32 %v2550, %v2696
        %v2698 = vand.u32 %v2697, 4294901760
        %v2699 = vsub.f32 %v2697, %v2698
        %v2700 = vand.u32 %v2699, 4294901760
        %2701 = vmatpush1.xpose.msra.mxu0 %v2700
        %2702 = vmatprep.subr.mxu0 0.0
        %2703 = vmatpush2.xpose.msra.mxu0 0.0
        %2704 = vmatprep.subr.mxu0 0.0
        %2705 = vmatpush2.xpose.msra.mxu0 0.0
        %2706 = vmatprep.subr.mxu0 0.0
        %2707 = vmatpush2.xpose.msra.mxu0 0.0
        %2708 = vmatprep.subr.mxu0 0.0
        %2709 = vmatpush2.xpose.msra.mxu0 0.0
        %2710 = vmatprep.subr.mxu0 0.0
        %2711 = vmatpush2.xpose.msra.mxu0 0.0
        %2712 = vmatprep.subr.mxu0 0.0
        %2713 = vmatpush2.xpose.msra.mxu0 0.0
        %2714 = vmatprep.subr.mxu0 0.0
        %2715 = vmatpush2.xpose.msra.mxu0 0.0
        %2716 = vmatprep.subr.mxu0 0.0
        %2717 = vmatpush2.xpose.msra.mxu0 0.0
        %2718 = vmatprep.subr.mxu0 0.0
        %2719 = vmatpush2.xpose.msra.mxu0 0.0
        %2720 = vmatprep.subr.mxu0 0.0
        %2721 = vmatpush2.xpose.msra.mxu0 0.0
        %2722 = vmatprep.subr.mxu0 0.0
        %2723 = vmatpush2.xpose.msra.mxu0 0.0
        %2724 = vmatprep.subr.mxu0 0.0
        %2725 = vmatpush2.xpose.msra.mxu0 0.0
        %2726 = vmatprep.subr.mxu0 0.0
        %2727 = vmatpush2.xpose.msra.mxu0 0.0
        %2728 = vmatprep.subr.mxu0 0.0
        %2729 = vmatpush2.xpose.msra.mxu0 0.0
        %2730 = vmatprep.subr.mxu0 0.0
        %2731 = vmatpush2.xpose.msra.mxu0 0.0
        %2732 = vmatprep.subr.mxu0 0.0
        %2733 = vmatpush2.xpose.msra.mxu0 0.0
        %2734 = vmatprep.mubr.f32.mxu0 0.0
        %v2735 = vand.u32 %v347, 4294901760
        %2736 = vmatmul.mubr.f32.gmra.mxu0 %v2735
        %v2737 = vpop.f32.mrf.mxu0
        %v2738 = vadd.f32 %v2637, %v2737
        %v2739 = vpop.f32.mrf.mxu0
        %2740 = vmatprep.mubr.f32.mxu0 0.0
        %v2741 = vand.u32 %v350, 4294901760
        %2742 = vmatmul.mubr.f32.gmra.mxu0 %v2741
        %v2743 = vpop.f32.mrf.mxu0
        %v2744 = vadd.f32 %v2647, %v2743
        %v2745 = vpop.f32.mrf.mxu0
        %2746 = vdwg.mxu0
        %2747 = vmatprep.subr.mxu0 0.0
        %2748 = vmatpush1.xpose.msra.mxu0 0.0
        %2749 = vmatprep.subr.mxu0 0.0
        %2750 = vmatpush1.xpose.msra.mxu0 0.0
        %2751 = vmatprep.subr.mxu0 0.0
        %2752 = vmatpush1.xpose.msra.mxu0 0.0
        %2753 = vmatprep.subr.mxu0 0.0
        %2754 = vmatpush1.xpose.msra.mxu0 0.0
        %2755 = vmatprep.subr.mxu0 0.0
        %2756 = vmatpush1.xpose.msra.mxu0 0.0
        %2757 = vmatprep.subr.mxu0 0.0
        %2758 = vmatpush1.xpose.msra.mxu0 0.0
        %2759 = vmatprep.subr.mxu0 0.0
        %2760 = vmatpush1.xpose.msra.mxu0 0.0
        %2761 = vmatprep.subr.mxu0 0.0
        %2762 = vmatpush1.xpose.msra.mxu0 0.0
        %2763 = vmatprep.subr.mxu0 0.0
        %2764 = vmatpush1.xpose.msra.mxu0 0.0
        %2765 = vmatprep.subr.mxu0 0.0
        %2766 = vmatpush1.xpose.msra.mxu0 0.0
        %2767 = vmatprep.subr.mxu0 0.0
        %2768 = vmatpush1.xpose.msra.mxu0 0.0
        %2769 = vmatprep.subr.mxu0 0.0
        %2770 = vmatpush1.xpose.msra.mxu0 0.0
        %2771 = vmatprep.subr.mxu0 0.0
        %v2772 = vand.u32 %v2559, 4294901760
        %v2773 = vsub.f32 %v2559, %v2772
        %2774 = vmatpush1.xpose.msra.mxu0 %v2773
        %2775 = vmatprep.subr.mxu0 0.0
        %v2776 = vand.u32 %v2556, 4294901760
        %v2777 = vsub.f32 %v2556, %v2776
        %2778 = vmatpush1.xpose.msra.mxu0 %v2777
        %2779 = vmatprep.subr.mxu0 0.0
        %v2780 = vand.u32 %v2553, 4294901760
        %v2781 = vsub.f32 %v2553, %v2780
        %2782 = vmatpush1.xpose.msra.mxu0 %v2781
        %2783 = vmatprep.subr.mxu0 0.0
        %v2784 = vand.u32 %v2550, 4294901760
        %v2785 = vsub.f32 %v2550, %v2784
        %2786 = vmatpush1.xpose.msra.mxu0 %v2785
        %2787 = vmatprep.subr.mxu0 0.0
        %2788 = vmatpush2.xpose.msra.mxu0 0.0
        %2789 = vmatprep.subr.mxu0 0.0
        %2790 = vmatpush2.xpose.msra.mxu0 0.0
        %2791 = vmatprep.subr.mxu0 0.0
        %2792 = vmatpush2.xpose.msra.mxu0 0.0
        %2793 = vmatprep.subr.mxu0 0.0
        %2794 = vmatpush2.xpose.msra.mxu0 0.0
        %2795 = vmatprep.subr.mxu0 0.0
        %2796 = vmatpush2.xpose.msra.mxu0 0.0
        %2797 = vmatprep.subr.mxu0 0.0
        %2798 = vmatpush2.xpose.msra.mxu0 0.0
        %2799 = vmatprep.subr.mxu0 0.0
        %2800 = vmatpush2.xpose.msra.mxu0 0.0
        %2801 = vmatprep.subr.mxu0 0.0
        %2802 = vmatpush2.xpose.msra.mxu0 0.0
        %2803 = vmatprep.subr.mxu0 0.0
        %2804 = vmatpush2.xpose.msra.mxu0 0.0
        %2805 = vmatprep.subr.mxu0 0.0
        %2806 = vmatpush2.xpose.msra.mxu0 0.0
        %2807 = vmatprep.subr.mxu0 0.0
        %2808 = vmatpush2.xpose.msra.mxu0 0.0
        %2809 = vmatprep.subr.mxu0 0.0
        %2810 = vmatpush2.xpose.msra.mxu0 0.0
        %2811 = vmatprep.subr.mxu0 0.0
        %2812 = vmatpush2.xpose.msra.mxu0 0.0
        %2813 = vmatprep.subr.mxu0 0.0
        %2814 = vmatpush2.xpose.msra.mxu0 0.0
        %2815 = vmatprep.subr.mxu0 0.0
        %2816 = vmatpush2.xpose.msra.mxu0 0.0
        %2817 = vmatprep.subr.mxu0 0.0
        %2818 = vmatpush2.xpose.msra.mxu0 0.0
        %2819 = vmatprep.mubr.f32.mxu0 0.0
        %v2820 = vand.u32 %v347, 4294901760
        %v2821 = vsub.f32 %v347, %v2820
        %2822 = vmatmul.mubr.f32.gmra.mxu0 %v2821
        %v2823 = vpop.f32.mrf.mxu0
        %v2824 = vadd.f32 %v2738, %v2823
        %v2825 = vpop.f32.mrf.mxu0
        %2826 = vmatprep.mubr.f32.mxu0 0.0
        %v2827 = vand.u32 %v350, 4294901760
        %v2828 = vsub.f32 %v350, %v2827
        %2829 = vmatmul.mubr.f32.gmra.mxu0 %v2828
        %v2830 = vpop.f32.mrf.mxu0
        %v2831 = vadd.f32 %v2744, %v2830
        %v2832 = vpop.f32.mrf.mxu0
        %2833 = vdwg.mxu0
        %2834 = vmatprep.subr.mxu0 0.0
        %2835 = vmatpush1.xpose.msra.mxu0 0.0
        %2836 = vmatprep.subr.mxu0 0.0
        %2837 = vmatpush1.xpose.msra.mxu0 0.0
        %2838 = vmatprep.subr.mxu0 0.0
        %2839 = vmatpush1.xpose.msra.mxu0 0.0
        %2840 = vmatprep.subr.mxu0 0.0
        %2841 = vmatpush1.xpose.msra.mxu0 0.0
        %2842 = vmatprep.subr.mxu0 0.0
        %2843 = vmatpush1.xpose.msra.mxu0 0.0
        %2844 = vmatprep.subr.mxu0 0.0
        %2845 = vmatpush1.xpose.msra.mxu0 0.0
        %2846 = vmatprep.subr.mxu0 0.0
        %2847 = vmatpush1.xpose.msra.mxu0 0.0
        %2848 = vmatprep.subr.mxu0 0.0
        %2849 = vmatpush1.xpose.msra.mxu0 0.0
        %2850 = vmatprep.subr.mxu0 0.0
        %2851 = vmatpush1.xpose.msra.mxu0 0.0
        %2852 = vmatprep.subr.mxu0 0.0
        %2853 = vmatpush1.xpose.msra.mxu0 0.0
        %2854 = vmatprep.subr.mxu0 0.0
        %2855 = vmatpush1.xpose.msra.mxu0 0.0
        %2856 = vmatprep.subr.mxu0 0.0
        %2857 = vmatpush1.xpose.msra.mxu0 0.0
        %2858 = vmatprep.subr.mxu0 0.0
        %v2859 = vand.u32 %v2559, 4294901760
        %2860 = vmatpush1.xpose.msra.mxu0 %v2859
        %2861 = vmatprep.subr.mxu0 0.0
        %v2862 = vand.u32 %v2556, 4294901760
        %2863 = vmatpush1.xpose.msra.mxu0 %v2862
        %2864 = vmatprep.subr.mxu0 0.0
        %v2865 = vand.u32 %v2553, 4294901760
        %2866 = vmatpush1.xpose.msra.mxu0 %v2865
        %2867 = vmatprep.subr.mxu0 0.0
        %v2868 = vand.u32 %v2550, 4294901760
        %2869 = vmatpush1.xpose.msra.mxu0 %v2868
        %2870 = vmatprep.subr.mxu0 0.0
        %2871 = vmatpush2.xpose.msra.mxu0 0.0
        %2872 = vmatprep.subr.mxu0 0.0
        %2873 = vmatpush2.xpose.msra.mxu0 0.0
        %2874 = vmatprep.subr.mxu0 0.0
        %2875 = vmatpush2.xpose.msra.mxu0 0.0
        %2876 = vmatprep.subr.mxu0 0.0
        %2877 = vmatpush2.xpose.msra.mxu0 0.0
        %2878 = vmatprep.subr.mxu0 0.0
        %2879 = vmatpush2.xpose.msra.mxu0 0.0
        %2880 = vmatprep.subr.mxu0 0.0
        %2881 = vmatpush2.xpose.msra.mxu0 0.0
        %2882 = vmatprep.subr.mxu0 0.0
        %2883 = vmatpush2.xpose.msra.mxu0 0.0
        %2884 = vmatprep.subr.mxu0 0.0
        %2885 = vmatpush2.xpose.msra.mxu0 0.0
        %2886 = vmatprep.subr.mxu0 0.0
        %2887 = vmatpush2.xpose.msra.mxu0 0.0
        %2888 = vmatprep.subr.mxu0 0.0
        %2889 = vmatpush2.xpose.msra.mxu0 0.0
        %2890 = vmatprep.subr.mxu0 0.0
        %2891 = vmatpush2.xpose.msra.mxu0 0.0
        %2892 = vmatprep.subr.mxu0 0.0
        %2893 = vmatpush2.xpose.msra.mxu0 0.0
        %2894 = vmatprep.subr.mxu0 0.0
        %2895 = vmatpush2.xpose.msra.mxu0 0.0
        %2896 = vmatprep.subr.mxu0 0.0
        %2897 = vmatpush2.xpose.msra.mxu0 0.0
        %2898 = vmatprep.subr.mxu0 0.0
        %2899 = vmatpush2.xpose.msra.mxu0 0.0
        %2900 = vmatprep.subr.mxu0 0.0
        %2901 = vmatpush2.xpose.msra.mxu0 0.0
        %2902 = vmatprep.mubr.f32.mxu0 0.0
        %v2903 = vand.u32 %v347, 4294901760
        %v2904 = vsub.f32 %v347, %v2903
        %v2905 = vand.u32 %v2904, 4294901760
        %2906 = vmatmul.mubr.f32.gmra.mxu0 %v2905
        %v2907 = vpop.f32.mrf.mxu0
        %v2908 = vadd.f32 %v2824, %v2907
        %v2909 = vpop.f32.mrf.mxu0
        %2910 = vmatprep.mubr.f32.mxu0 0.0
        %v2911 = vand.u32 %v350, 4294901760
        %v2912 = vsub.f32 %v350, %v2911
        %v2913 = vand.u32 %v2912, 4294901760
        %2914 = vmatmul.mubr.f32.gmra.mxu0 %v2913
        %v2915 = vpop.f32.mrf.mxu0
        %v2916 = vadd.f32 %v2831, %v2915
        %v2917 = vpop.f32.mrf.mxu0
        %2918 = vdwg.mxu0
        %2919 = vmatprep.subr.mxu0 0.0
        %2920 = vmatpush1.xpose.msra.mxu0 0.0
        %2921 = vmatprep.subr.mxu0 0.0
        %2922 = vmatpush1.xpose.msra.mxu0 0.0
        %2923 = vmatprep.subr.mxu0 0.0
        %2924 = vmatpush1.xpose.msra.mxu0 0.0
        %2925 = vmatprep.subr.mxu0 0.0
        %2926 = vmatpush1.xpose.msra.mxu0 0.0
        %2927 = vmatprep.subr.mxu0 0.0
        %2928 = vmatpush1.xpose.msra.mxu0 0.0
        %2929 = vmatprep.subr.mxu0 0.0
        %2930 = vmatpush1.xpose.msra.mxu0 0.0
        %2931 = vmatprep.subr.mxu0 0.0
        %2932 = vmatpush1.xpose.msra.mxu0 0.0
        %2933 = vmatprep.subr.mxu0 0.0
        %2934 = vmatpush1.xpose.msra.mxu0 0.0
        %2935 = vmatprep.subr.mxu0 0.0
        %2936 = vmatpush1.xpose.msra.mxu0 0.0
        %2937 = vmatprep.subr.mxu0 0.0
        %2938 = vmatpush1.xpose.msra.mxu0 0.0
        %2939 = vmatprep.subr.mxu0 0.0
        %2940 = vmatpush1.xpose.msra.mxu0 0.0
        %2941 = vmatprep.subr.mxu0 0.0
        %2942 = vmatpush1.xpose.msra.mxu0 0.0
        %2943 = vmatprep.subr.mxu0 0.0
        %v2944 = vand.u32 %v2559, 4294901760
        %v2945 = vsub.f32 %v2559, %v2944
        %v2946 = vand.u32 %v2945, 4294901760
        %2947 = vmatpush1.xpose.msra.mxu0 %v2946
        %2948 = vmatprep.subr.mxu0 0.0
        %v2949 = vand.u32 %v2556, 4294901760
        %v2950 = vsub.f32 %v2556, %v2949
        %v2951 = vand.u32 %v2950, 4294901760
        %2952 = vmatpush1.xpose.msra.mxu0 %v2951
        %2953 = vmatprep.subr.mxu0 0.0
        %v2954 = vand.u32 %v2553, 4294901760
        %v2955 = vsub.f32 %v2553, %v2954
        %v2956 = vand.u32 %v2955, 4294901760
        %2957 = vmatpush1.xpose.msra.mxu0 %v2956
        %2958 = vmatprep.subr.mxu0 0.0
        %v2959 = vand.u32 %v2550, 4294901760
        %v2960 = vsub.f32 %v2550, %v2959
        %v2961 = vand.u32 %v2960, 4294901760
        %2962 = vmatpush1.xpose.msra.mxu0 %v2961
        %2963 = vmatprep.subr.mxu0 0.0
        %2964 = vmatpush2.xpose.msra.mxu0 0.0
        %2965 = vmatprep.subr.mxu0 0.0
        %2966 = vmatpush2.xpose.msra.mxu0 0.0
        %2967 = vmatprep.subr.mxu0 0.0
        %2968 = vmatpush2.xpose.msra.mxu0 0.0
        %2969 = vmatprep.subr.mxu0 0.0
        %2970 = vmatpush2.xpose.msra.mxu0 0.0
        %2971 = vmatprep.subr.mxu0 0.0
        %2972 = vmatpush2.xpose.msra.mxu0 0.0
        %2973 = vmatprep.subr.mxu0 0.0
        %2974 = vmatpush2.xpose.msra.mxu0 0.0
        %2975 = vmatprep.subr.mxu0 0.0
        %2976 = vmatpush2.xpose.msra.mxu0 0.0
        %2977 = vmatprep.subr.mxu0 0.0
        %2978 = vmatpush2.xpose.msra.mxu0 0.0
        %2979 = vmatprep.subr.mxu0 0.0
        %2980 = vmatpush2.xpose.msra.mxu0 0.0
        %2981 = vmatprep.subr.mxu0 0.0
        %2982 = vmatpush2.xpose.msra.mxu0 0.0
        %2983 = vmatprep.subr.mxu0 0.0
        %2984 = vmatpush2.xpose.msra.mxu0 0.0
        %2985 = vmatprep.subr.mxu0 0.0
        %2986 = vmatpush2.xpose.msra.mxu0 0.0
        %2987 = vmatprep.subr.mxu0 0.0
        %2988 = vmatpush2.xpose.msra.mxu0 0.0
        %2989 = vmatprep.subr.mxu0 0.0
        %2990 = vmatpush2.xpose.msra.mxu0 0.0
        %2991 = vmatprep.subr.mxu0 0.0
        %2992 = vmatpush2.xpose.msra.mxu0 0.0
        %2993 = vmatprep.subr.mxu0 0.0
        %2994 = vmatpush2.xpose.msra.mxu0 0.0
        %2995 = vmatprep.mubr.f32.mxu0 0.0
        %v2996 = vand.u32 %v347, 4294901760
        %2997 = vmatmul.mubr.f32.gmra.mxu0 %v2996
        %v2998 = vpop.f32.mrf.mxu0
        %v2999 = vadd.f32 %v2908, %v2998
        %v3000 = vpop.f32.mrf.mxu0
        %3001 = vmatprep.mubr.f32.mxu0 0.0
        %v3002 = vand.u32 %v350, 4294901760
        %3003 = vmatmul.mubr.f32.gmra.mxu0 %v3002
        %v3004 = vpop.f32.mrf.mxu0
        %v3005 = vadd.f32 %v2916, %v3004
        %v3006 = vpop.f32.mrf.mxu0
        %3007 = vdwg.mxu0
        %3008 = vmatprep.subr.mxu0 0.0
        %3009 = vmatpush1.xpose.msra.mxu0 0.0
        %3010 = vmatprep.subr.mxu0 0.0
        %3011 = vmatpush1.xpose.msra.mxu0 0.0
        %3012 = vmatprep.subr.mxu0 0.0
        %3013 = vmatpush1.xpose.msra.mxu0 0.0
        %3014 = vmatprep.subr.mxu0 0.0
        %3015 = vmatpush1.xpose.msra.mxu0 0.0
        %3016 = vmatprep.subr.mxu0 0.0
        %3017 = vmatpush1.xpose.msra.mxu0 0.0
        %3018 = vmatprep.subr.mxu0 0.0
        %3019 = vmatpush1.xpose.msra.mxu0 0.0
        %3020 = vmatprep.subr.mxu0 0.0
        %3021 = vmatpush1.xpose.msra.mxu0 0.0
        %3022 = vmatprep.subr.mxu0 0.0
        %3023 = vmatpush1.xpose.msra.mxu0 0.0
        %3024 = vmatprep.subr.mxu0 0.0
        %3025 = vmatpush1.xpose.msra.mxu0 0.0
        %3026 = vmatprep.subr.mxu0 0.0
        %3027 = vmatpush1.xpose.msra.mxu0 0.0
        %3028 = vmatprep.subr.mxu0 0.0
        %3029 = vmatpush1.xpose.msra.mxu0 0.0
        %3030 = vmatprep.subr.mxu0 0.0
        %3031 = vmatpush1.xpose.msra.mxu0 0.0
        %3032 = vmatprep.subr.mxu0 0.0
        %v3033 = vand.u32 %v2559, 4294901760
        %3034 = vmatpush1.xpose.msra.mxu0 %v3033
        %3035 = vmatprep.subr.mxu0 0.0
        %v3036 = vand.u32 %v2556, 4294901760
        %3037 = vmatpush1.xpose.msra.mxu0 %v3036
        %3038 = vmatprep.subr.mxu0 0.0
        %v3039 = vand.u32 %v2553, 4294901760
        %3040 = vmatpush1.xpose.msra.mxu0 %v3039
        %3041 = vmatprep.subr.mxu0 0.0
        %v3042 = vand.u32 %v2550, 4294901760
        %3043 = vmatpush1.xpose.msra.mxu0 %v3042
        %3044 = vmatprep.subr.mxu0 0.0
        %3045 = vmatpush2.xpose.msra.mxu0 0.0
        %3046 = vmatprep.subr.mxu0 0.0
        %3047 = vmatpush2.xpose.msra.mxu0 0.0
        %3048 = vmatprep.subr.mxu0 0.0
        %3049 = vmatpush2.xpose.msra.mxu0 0.0
        %3050 = vmatprep.subr.mxu0 0.0
        %3051 = vmatpush2.xpose.msra.mxu0 0.0
        %3052 = vmatprep.subr.mxu0 0.0
        %3053 = vmatpush2.xpose.msra.mxu0 0.0
        %3054 = vmatprep.subr.mxu0 0.0
        %3055 = vmatpush2.xpose.msra.mxu0 0.0
        %3056 = vmatprep.subr.mxu0 0.0
        %3057 = vmatpush2.xpose.msra.mxu0 0.0
        %3058 = vmatprep.subr.mxu0 0.0
        %3059 = vmatpush2.xpose.msra.mxu0 0.0
        %3060 = vmatprep.subr.mxu0 0.0
        %3061 = vmatpush2.xpose.msra.mxu0 0.0
        %3062 = vmatprep.subr.mxu0 0.0
        %3063 = vmatpush2.xpose.msra.mxu0 0.0
        %3064 = vmatprep.subr.mxu0 0.0
        %3065 = vmatpush2.xpose.msra.mxu0 0.0
        %3066 = vmatprep.subr.mxu0 0.0
        %3067 = vmatpush2.xpose.msra.mxu0 0.0
        %3068 = vmatprep.subr.mxu0 0.0
        %3069 = vmatpush2.xpose.msra.mxu0 0.0
        %3070 = vmatprep.subr.mxu0 0.0
        %3071 = vmatpush2.xpose.msra.mxu0 0.0
        %3072 = vmatprep.subr.mxu0 0.0
        %3073 = vmatpush2.xpose.msra.mxu0 0.0
        %3074 = vmatprep.subr.mxu0 0.0
        %3075 = vmatpush2.xpose.msra.mxu0 0.0
        %3076 = vmatprep.mubr.f32.mxu0 0.0
        %v3077 = vand.u32 %v347, 4294901760
        %3078 = vmatmul.mubr.f32.gmra.mxu0 %v3077
        %v3079 = vpop.f32.mrf.mxu0
        %v3080 = vadd.f32 %v2999, %v3079
        %v3081 = vpop.f32.mrf.mxu0
        %3082 = vmatprep.mubr.f32.mxu0 0.0
        %v3083 = vand.u32 %v350, 4294901760
        %3084 = vmatmul.mubr.f32.gmra.mxu0 %v3083
        %v3085 = vpop.f32.mrf.mxu0
        %v3086 = vadd.f32 %v3005, %v3085
        %v3087 = vpop.f32.mrf.mxu0
        %3088 = vdwg.mxu0
        %3091 = vrot.lane.b32.xlu0 %v3080, 32
        %v3092 = vpop.permute.xlu0 %3091
        %3093 = vrot.lane.b32.xlu0 %v3086, 32
        %v3094 = vpop.permute.xlu0 %3093
        %vm3097 = vcmask 523520
        %3098 = vst.msk [vmem:[%s314] sm:$0xff] %vm3097, %v3092
        %3099 = vst.msk [vmem:[%s314 + $0x8] sm:$0xff] %vm3097, %v3094
        %v3100 = vld [vmem:[%s1 + $0x40] sm:$0xff]
        %v3101 = vld [vmem:[%s1 + $0x48] sm:$0xff]
        %v3102 = vld [vmem:[%s1 + $0x50] sm:$0xff]
        %v3103 = vld [vmem:[%s1 + $0x58] sm:$0xff]
        %v3104 = vld [vmem:[%s2] sm:$0x1]
        %v3106 = vlaneseq
        %v3107 = vshrl.u32 %v3106, 7
        %v3108 = vsub.s32 0, %v3107
        %v3109 = vrot.slane %v3104, %v3108
        %3110 = vrot.lane.b32.xlu0 %v3109, 64
        %v3111 = vpop.permute.xlu0 %3110
        %v3114 = vsel %vm345, %v3100, 0
        %v3117 = vsel %vm345, %v3101, 0
        %v3120 = vsel %vm345, %v3102, 0
        %v3123 = vsel %vm345, %v3103, 0
        %3125 = vmatprep.subr.mxu0 0.0
        %3126 = vmatpush1.xpose.msra.mxu0 0.0
        %3127 = vmatprep.subr.mxu0 0.0
        %3128 = vmatpush1.xpose.msra.mxu0 0.0
        %3129 = vmatprep.subr.mxu0 0.0
        %3130 = vmatpush1.xpose.msra.mxu0 0.0
        %3131 = vmatprep.subr.mxu0 0.0
        %3132 = vmatpush1.xpose.msra.mxu0 0.0
        %3133 = vmatprep.subr.mxu0 0.0
        %3134 = vmatpush1.xpose.msra.mxu0 0.0
        %3135 = vmatprep.subr.mxu0 0.0
        %3136 = vmatpush1.xpose.msra.mxu0 0.0
        %3137 = vmatprep.subr.mxu0 0.0
        %3138 = vmatpush1.xpose.msra.mxu0 0.0
        %3139 = vmatprep.subr.mxu0 0.0
        %3140 = vmatpush1.xpose.msra.mxu0 0.0
        %3141 = vmatprep.subr.mxu0 0.0
        %3142 = vmatpush1.xpose.msra.mxu0 0.0
        %3143 = vmatprep.subr.mxu0 0.0
        %3144 = vmatpush1.xpose.msra.mxu0 0.0
        %3145 = vmatprep.subr.mxu0 0.0
        %3146 = vmatpush1.xpose.msra.mxu0 0.0
        %3147 = vmatprep.subr.mxu0 0.0
        %3148 = vmatpush1.xpose.msra.mxu0 0.0
        %3149 = vmatprep.subr.mxu0 0.0
        %v3150 = vand.u32 %v3123, 4294901760
        %3151 = vmatpush1.xpose.msra.mxu0 %v3150
        %3152 = vmatprep.subr.mxu0 0.0
        %v3153 = vand.u32 %v3120, 4294901760
        %3154 = vmatpush1.xpose.msra.mxu0 %v3153
        %3155 = vmatprep.subr.mxu0 0.0
        %v3156 = vand.u32 %v3117, 4294901760
        %3157 = vmatpush1.xpose.msra.mxu0 %v3156
        %3158 = vmatprep.subr.mxu0 0.0
        %v3159 = vand.u32 %v3114, 4294901760
        %3160 = vmatpush1.xpose.msra.mxu0 %v3159
        %3161 = vmatprep.subr.mxu0 0.0
        %3162 = vmatpush2.xpose.msra.mxu0 0.0
        %3163 = vmatprep.subr.mxu0 0.0
        %3164 = vmatpush2.xpose.msra.mxu0 0.0
        %3165 = vmatprep.subr.mxu0 0.0
        %3166 = vmatpush2.xpose.msra.mxu0 0.0
        %3167 = vmatprep.subr.mxu0 0.0
        %3168 = vmatpush2.xpose.msra.mxu0 0.0
        %3169 = vmatprep.subr.mxu0 0.0
        %3170 = vmatpush2.xpose.msra.mxu0 0.0
        %3171 = vmatprep.subr.mxu0 0.0
        %3172 = vmatpush2.xpose.msra.mxu0 0.0
        %3173 = vmatprep.subr.mxu0 0.0
        %3174 = vmatpush2.xpose.msra.mxu0 0.0
        %3175 = vmatprep.subr.mxu0 0.0
        %3176 = vmatpush2.xpose.msra.mxu0 0.0
        %3177 = vmatprep.subr.mxu0 0.0
        %3178 = vmatpush2.xpose.msra.mxu0 0.0
        %3179 = vmatprep.subr.mxu0 0.0
        %3180 = vmatpush2.xpose.msra.mxu0 0.0
        %3181 = vmatprep.subr.mxu0 0.0
        %3182 = vmatpush2.xpose.msra.mxu0 0.0
        %3183 = vmatprep.subr.mxu0 0.0
        %3184 = vmatpush2.xpose.msra.mxu0 0.0
        %3185 = vmatprep.subr.mxu0 0.0
        %3186 = vmatpush2.xpose.msra.mxu0 0.0
        %3187 = vmatprep.subr.mxu0 0.0
        %3188 = vmatpush2.xpose.msra.mxu0 0.0
        %3189 = vmatprep.subr.mxu0 0.0
        %3190 = vmatpush2.xpose.msra.mxu0 0.0
        %3191 = vmatprep.subr.mxu0 0.0
        %3192 = vmatpush2.xpose.msra.mxu0 0.0
        %3193 = vmatprep.mubr.f32.mxu0 0.0
        %v3194 = vand.u32 %v347, 4294901760
        %v3195 = vsub.f32 %v347, %v3194
        %v3196 = vand.u32 %v3195, 4294901760
        %v3197 = vsub.f32 %v3195, %v3196
        %v3198 = vand.u32 %v3197, 4294901760
        %3199 = vmatmul.mubr.f32.gmra.mxu0 %v3198
        %v3200 = vpop.f32.mrf.mxu0
        %v3201 = vadd.f32 %v3111, %v3200
        %v3202 = vpop.f32.mrf.mxu0
        %3203 = vmatprep.mubr.f32.mxu0 0.0
        %v3204 = vand.u32 %v350, 4294901760
        %v3205 = vsub.f32 %v350, %v3204
        %v3206 = vand.u32 %v3205, 4294901760
        %v3207 = vsub.f32 %v3205, %v3206
        %v3208 = vand.u32 %v3207, 4294901760
        %3209 = vmatmul.mubr.f32.gmra.mxu0 %v3208
        %v3210 = vpop.f32.mrf.mxu0
        %v3211 = vadd.f32 %v3111, %v3210
        %v3212 = vpop.f32.mrf.mxu0
        %3213 = vdwg.mxu0
        %3214 = vmatprep.subr.mxu0 0.0
        %3215 = vmatpush1.xpose.msra.mxu0 0.0
        %3216 = vmatprep.subr.mxu0 0.0
        %3217 = vmatpush1.xpose.msra.mxu0 0.0
        %3218 = vmatprep.subr.mxu0 0.0
        %3219 = vmatpush1.xpose.msra.mxu0 0.0
        %3220 = vmatprep.subr.mxu0 0.0
        %3221 = vmatpush1.xpose.msra.mxu0 0.0
        %3222 = vmatprep.subr.mxu0 0.0
        %3223 = vmatpush1.xpose.msra.mxu0 0.0
        %3224 = vmatprep.subr.mxu0 0.0
        %3225 = vmatpush1.xpose.msra.mxu0 0.0
        %3226 = vmatprep.subr.mxu0 0.0
        %3227 = vmatpush1.xpose.msra.mxu0 0.0
        %3228 = vmatprep.subr.mxu0 0.0
        %3229 = vmatpush1.xpose.msra.mxu0 0.0
        %3230 = vmatprep.subr.mxu0 0.0
        %3231 = vmatpush1.xpose.msra.mxu0 0.0
        %3232 = vmatprep.subr.mxu0 0.0
        %3233 = vmatpush1.xpose.msra.mxu0 0.0
        %3234 = vmatprep.subr.mxu0 0.0
        %3235 = vmatpush1.xpose.msra.mxu0 0.0
        %3236 = vmatprep.subr.mxu0 0.0
        %3237 = vmatpush1.xpose.msra.mxu0 0.0
        %3238 = vmatprep.subr.mxu0 0.0
        %v3239 = vand.u32 %v3123, 4294901760
        %v3240 = vsub.f32 %v3123, %v3239
        %v3241 = vand.u32 %v3240, 4294901760
        %v3242 = vsub.f32 %v3240, %v3241
        %v3243 = vand.u32 %v3242, 4294901760
        %3244 = vmatpush1.xpose.msra.mxu0 %v3243
        %3245 = vmatprep.subr.mxu0 0.0
        %v3246 = vand.u32 %v3120, 4294901760
        %v3247 = vsub.f32 %v3120, %v3246
        %v3248 = vand.u32 %v3247, 4294901760
        %v3249 = vsub.f32 %v3247, %v3248
        %v3250 = vand.u32 %v3249, 4294901760
        %3251 = vmatpush1.xpose.msra.mxu0 %v3250
        %3252 = vmatprep.subr.mxu0 0.0
        %v3253 = vand.u32 %v3117, 4294901760
        %v3254 = vsub.f32 %v3117, %v3253
        %v3255 = vand.u32 %v3254, 4294901760
        %v3256 = vsub.f32 %v3254, %v3255
        %v3257 = vand.u32 %v3256, 4294901760
        %3258 = vmatpush1.xpose.msra.mxu0 %v3257
        %3259 = vmatprep.subr.mxu0 0.0
        %v3260 = vand.u32 %v3114, 4294901760
        %v3261 = vsub.f32 %v3114, %v3260
        %v3262 = vand.u32 %v3261, 4294901760
        %v3263 = vsub.f32 %v3261, %v3262
        %v3264 = vand.u32 %v3263, 4294901760
        %3265 = vmatpush1.xpose.msra.mxu0 %v3264
        %3266 = vmatprep.subr.mxu0 0.0
        %3267 = vmatpush2.xpose.msra.mxu0 0.0
        %3268 = vmatprep.subr.mxu0 0.0
        %3269 = vmatpush2.xpose.msra.mxu0 0.0
        %3270 = vmatprep.subr.mxu0 0.0
        %3271 = vmatpush2.xpose.msra.mxu0 0.0
        %3272 = vmatprep.subr.mxu0 0.0
        %3273 = vmatpush2.xpose.msra.mxu0 0.0
        %3274 = vmatprep.subr.mxu0 0.0
        %3275 = vmatpush2.xpose.msra.mxu0 0.0
        %3276 = vmatprep.subr.mxu0 0.0
        %3277 = vmatpush2.xpose.msra.mxu0 0.0
        %3278 = vmatprep.subr.mxu0 0.0
        %3279 = vmatpush2.xpose.msra.mxu0 0.0
        %3280 = vmatprep.subr.mxu0 0.0
        %3281 = vmatpush2.xpose.msra.mxu0 0.0
        %3282 = vmatprep.subr.mxu0 0.0
        %3283 = vmatpush2.xpose.msra.mxu0 0.0
        %3284 = vmatprep.subr.mxu0 0.0
        %3285 = vmatpush2.xpose.msra.mxu0 0.0
        %3286 = vmatprep.subr.mxu0 0.0
        %3287 = vmatpush2.xpose.msra.mxu0 0.0
        %3288 = vmatprep.subr.mxu0 0.0
        %3289 = vmatpush2.xpose.msra.mxu0 0.0
        %3290 = vmatprep.subr.mxu0 0.0
        %3291 = vmatpush2.xpose.msra.mxu0 0.0
        %3292 = vmatprep.subr.mxu0 0.0
        %3293 = vmatpush2.xpose.msra.mxu0 0.0
        %3294 = vmatprep.subr.mxu0 0.0
        %3295 = vmatpush2.xpose.msra.mxu0 0.0
        %3296 = vmatprep.subr.mxu0 0.0
        %3297 = vmatpush2.xpose.msra.mxu0 0.0
        %3298 = vmatprep.mubr.f32.mxu0 0.0
        %v3299 = vand.u32 %v347, 4294901760
        %3300 = vmatmul.mubr.f32.gmra.mxu0 %v3299
        %v3301 = vpop.f32.mrf.mxu0
        %v3302 = vadd.f32 %v3201, %v3301
        %v3303 = vpop.f32.mrf.mxu0
        %3304 = vmatprep.mubr.f32.mxu0 0.0
        %v3305 = vand.u32 %v350, 4294901760
        %3306 = vmatmul.mubr.f32.gmra.mxu0 %v3305
        %v3307 = vpop.f32.mrf.mxu0
        %v3308 = vadd.f32 %v3211, %v3307
        %v3309 = vpop.f32.mrf.mxu0
        %3310 = vdwg.mxu0
        %3311 = vmatprep.subr.mxu0 0.0
        %3312 = vmatpush1.xpose.msra.mxu0 0.0
        %3313 = vmatprep.subr.mxu0 0.0
        %3314 = vmatpush1.xpose.msra.mxu0 0.0
        %3315 = vmatprep.subr.mxu0 0.0
        %3316 = vmatpush1.xpose.msra.mxu0 0.0
        %3317 = vmatprep.subr.mxu0 0.0
        %3318 = vmatpush1.xpose.msra.mxu0 0.0
        %3319 = vmatprep.subr.mxu0 0.0
        %3320 = vmatpush1.xpose.msra.mxu0 0.0
        %3321 = vmatprep.subr.mxu0 0.0
        %3322 = vmatpush1.xpose.msra.mxu0 0.0
        %3323 = vmatprep.subr.mxu0 0.0
        %3324 = vmatpush1.xpose.msra.mxu0 0.0
        %3325 = vmatprep.subr.mxu0 0.0
        %3326 = vmatpush1.xpose.msra.mxu0 0.0
        %3327 = vmatprep.subr.mxu0 0.0
        %3328 = vmatpush1.xpose.msra.mxu0 0.0
        %3329 = vmatprep.subr.mxu0 0.0
        %3330 = vmatpush1.xpose.msra.mxu0 0.0
        %3331 = vmatprep.subr.mxu0 0.0
        %3332 = vmatpush1.xpose.msra.mxu0 0.0
        %3333 = vmatprep.subr.mxu0 0.0
        %3334 = vmatpush1.xpose.msra.mxu0 0.0
        %3335 = vmatprep.subr.mxu0 0.0
        %v3336 = vand.u32 %v3123, 4294901760
        %v3337 = vsub.f32 %v3123, %v3336
        %3338 = vmatpush1.xpose.msra.mxu0 %v3337
        %3339 = vmatprep.subr.mxu0 0.0
        %v3340 = vand.u32 %v3120, 4294901760
        %v3341 = vsub.f32 %v3120, %v3340
        %3342 = vmatpush1.xpose.msra.mxu0 %v3341
        %3343 = vmatprep.subr.mxu0 0.0
        %v3344 = vand.u32 %v3117, 4294901760
        %v3345 = vsub.f32 %v3117, %v3344
        %3346 = vmatpush1.xpose.msra.mxu0 %v3345
        %3347 = vmatprep.subr.mxu0 0.0
        %v3348 = vand.u32 %v3114, 4294901760
        %v3349 = vsub.f32 %v3114, %v3348
        %3350 = vmatpush1.xpose.msra.mxu0 %v3349
        %3351 = vmatprep.subr.mxu0 0.0
        %3352 = vmatpush2.xpose.msra.mxu0 0.0
        %3353 = vmatprep.subr.mxu0 0.0
        %3354 = vmatpush2.xpose.msra.mxu0 0.0
        %3355 = vmatprep.subr.mxu0 0.0
        %3356 = vmatpush2.xpose.msra.mxu0 0.0
        %3357 = vmatprep.subr.mxu0 0.0
        %3358 = vmatpush2.xpose.msra.mxu0 0.0
        %3359 = vmatprep.subr.mxu0 0.0
        %3360 = vmatpush2.xpose.msra.mxu0 0.0
        %3361 = vmatprep.subr.mxu0 0.0
        %3362 = vmatpush2.xpose.msra.mxu0 0.0
        %3363 = vmatprep.subr.mxu0 0.0
        %3364 = vmatpush2.xpose.msra.mxu0 0.0
        %3365 = vmatprep.subr.mxu0 0.0
        %3366 = vmatpush2.xpose.msra.mxu0 0.0
        %3367 = vmatprep.subr.mxu0 0.0
        %3368 = vmatpush2.xpose.msra.mxu0 0.0
        %3369 = vmatprep.subr.mxu0 0.0
        %3370 = vmatpush2.xpose.msra.mxu0 0.0
        %3371 = vmatprep.subr.mxu0 0.0
        %3372 = vmatpush2.xpose.msra.mxu0 0.0
        %3373 = vmatprep.subr.mxu0 0.0
        %3374 = vmatpush2.xpose.msra.mxu0 0.0
        %3375 = vmatprep.subr.mxu0 0.0
        %3376 = vmatpush2.xpose.msra.mxu0 0.0
        %3377 = vmatprep.subr.mxu0 0.0
        %3378 = vmatpush2.xpose.msra.mxu0 0.0
        %3379 = vmatprep.subr.mxu0 0.0
        %3380 = vmatpush2.xpose.msra.mxu0 0.0
        %3381 = vmatprep.subr.mxu0 0.0
        %3382 = vmatpush2.xpose.msra.mxu0 0.0
        %3383 = vmatprep.mubr.f32.mxu0 0.0
        %v3384 = vand.u32 %v347, 4294901760
        %v3385 = vsub.f32 %v347, %v3384
        %3386 = vmatmul.mubr.f32.gmra.mxu0 %v3385
        %v3387 = vpop.f32.mrf.mxu0
        %v3388 = vadd.f32 %v3302, %v3387
        %v3389 = vpop.f32.mrf.mxu0
        %3390 = vmatprep.mubr.f32.mxu0 0.0
        %v3391 = vand.u32 %v350, 4294901760
        %v3392 = vsub.f32 %v350, %v3391
        %3393 = vmatmul.mubr.f32.gmra.mxu0 %v3392
        %v3394 = vpop.f32.mrf.mxu0
        %v3395 = vadd.f32 %v3308, %v3394
        %v3396 = vpop.f32.mrf.mxu0
        %3397 = vdwg.mxu0
        %3398 = vmatprep.subr.mxu0 0.0
        %3399 = vmatpush1.xpose.msra.mxu0 0.0
        %3400 = vmatprep.subr.mxu0 0.0
        %3401 = vmatpush1.xpose.msra.mxu0 0.0
        %3402 = vmatprep.subr.mxu0 0.0
        %3403 = vmatpush1.xpose.msra.mxu0 0.0
        %3404 = vmatprep.subr.mxu0 0.0
        %3405 = vmatpush1.xpose.msra.mxu0 0.0
        %3406 = vmatprep.subr.mxu0 0.0
        %3407 = vmatpush1.xpose.msra.mxu0 0.0
        %3408 = vmatprep.subr.mxu0 0.0
        %3409 = vmatpush1.xpose.msra.mxu0 0.0
        %3410 = vmatprep.subr.mxu0 0.0
        %3411 = vmatpush1.xpose.msra.mxu0 0.0
        %3412 = vmatprep.subr.mxu0 0.0
        %3413 = vmatpush1.xpose.msra.mxu0 0.0
        %3414 = vmatprep.subr.mxu0 0.0
        %3415 = vmatpush1.xpose.msra.mxu0 0.0
        %3416 = vmatprep.subr.mxu0 0.0
        %3417 = vmatpush1.xpose.msra.mxu0 0.0
        %3418 = vmatprep.subr.mxu0 0.0
        %3419 = vmatpush1.xpose.msra.mxu0 0.0
        %3420 = vmatprep.subr.mxu0 0.0
        %3421 = vmatpush1.xpose.msra.mxu0 0.0
        %3422 = vmatprep.subr.mxu0 0.0
        %v3423 = vand.u32 %v3123, 4294901760
        %3424 = vmatpush1.xpose.msra.mxu0 %v3423
        %3425 = vmatprep.subr.mxu0 0.0
        %v3426 = vand.u32 %v3120, 4294901760
        %3427 = vmatpush1.xpose.msra.mxu0 %v3426
        %3428 = vmatprep.subr.mxu0 0.0
        %v3429 = vand.u32 %v3117, 4294901760
        %3430 = vmatpush1.xpose.msra.mxu0 %v3429
        %3431 = vmatprep.subr.mxu0 0.0
        %v3432 = vand.u32 %v3114, 4294901760
        %3433 = vmatpush1.xpose.msra.mxu0 %v3432
        %3434 = vmatprep.subr.mxu0 0.0
        %3435 = vmatpush2.xpose.msra.mxu0 0.0
        %3436 = vmatprep.subr.mxu0 0.0
        %3437 = vmatpush2.xpose.msra.mxu0 0.0
        %3438 = vmatprep.subr.mxu0 0.0
        %3439 = vmatpush2.xpose.msra.mxu0 0.0
        %3440 = vmatprep.subr.mxu0 0.0
        %3441 = vmatpush2.xpose.msra.mxu0 0.0
        %3442 = vmatprep.subr.mxu0 0.0
        %3443 = vmatpush2.xpose.msra.mxu0 0.0
        %3444 = vmatprep.subr.mxu0 0.0
        %3445 = vmatpush2.xpose.msra.mxu0 0.0
        %3446 = vmatprep.subr.mxu0 0.0
        %3447 = vmatpush2.xpose.msra.mxu0 0.0
        %3448 = vmatprep.subr.mxu0 0.0
        %3449 = vmatpush2.xpose.msra.mxu0 0.0
        %3450 = vmatprep.subr.mxu0 0.0
        %3451 = vmatpush2.xpose.msra.mxu0 0.0
        %3452 = vmatprep.subr.mxu0 0.0
        %3453 = vmatpush2.xpose.msra.mxu0 0.0
        %3454 = vmatprep.subr.mxu0 0.0
        %3455 = vmatpush2.xpose.msra.mxu0 0.0
        %3456 = vmatprep.subr.mxu0 0.0
        %3457 = vmatpush2.xpose.msra.mxu0 0.0
        %3458 = vmatprep.subr.mxu0 0.0
        %3459 = vmatpush2.xpose.msra.mxu0 0.0
        %3460 = vmatprep.subr.mxu0 0.0
        %3461 = vmatpush2.xpose.msra.mxu0 0.0
        %3462 = vmatprep.subr.mxu0 0.0
        %3463 = vmatpush2.xpose.msra.mxu0 0.0
        %3464 = vmatprep.subr.mxu0 0.0
        %3465 = vmatpush2.xpose.msra.mxu0 0.0
        %3466 = vmatprep.mubr.f32.mxu0 0.0
        %v3467 = vand.u32 %v347, 4294901760
        %v3468 = vsub.f32 %v347, %v3467
        %v3469 = vand.u32 %v3468, 4294901760
        %3470 = vmatmul.mubr.f32.gmra.mxu0 %v3469
        %v3471 = vpop.f32.mrf.mxu0
        %v3472 = vadd.f32 %v3388, %v3471
        %v3473 = vpop.f32.mrf.mxu0
        %3474 = vmatprep.mubr.f32.mxu0 0.0
        %v3475 = vand.u32 %v350, 4294901760
        %v3476 = vsub.f32 %v350, %v3475
        %v3477 = vand.u32 %v3476, 4294901760
        %3478 = vmatmul.mubr.f32.gmra.mxu0 %v3477
        %v3479 = vpop.f32.mrf.mxu0
        %v3480 = vadd.f32 %v3395, %v3479
        %v3481 = vpop.f32.mrf.mxu0
        %3482 = vdwg.mxu0
        %3483 = vmatprep.subr.mxu0 0.0
        %3484 = vmatpush1.xpose.msra.mxu0 0.0
        %3485 = vmatprep.subr.mxu0 0.0
        %3486 = vmatpush1.xpose.msra.mxu0 0.0
        %3487 = vmatprep.subr.mxu0 0.0
        %3488 = vmatpush1.xpose.msra.mxu0 0.0
        %3489 = vmatprep.subr.mxu0 0.0
        %3490 = vmatpush1.xpose.msra.mxu0 0.0
        %3491 = vmatprep.subr.mxu0 0.0
        %3492 = vmatpush1.xpose.msra.mxu0 0.0
        %3493 = vmatprep.subr.mxu0 0.0
        %3494 = vmatpush1.xpose.msra.mxu0 0.0
        %3495 = vmatprep.subr.mxu0 0.0
        %3496 = vmatpush1.xpose.msra.mxu0 0.0
        %3497 = vmatprep.subr.mxu0 0.0
        %3498 = vmatpush1.xpose.msra.mxu0 0.0
        %3499 = vmatprep.subr.mxu0 0.0
        %3500 = vmatpush1.xpose.msra.mxu0 0.0
        %3501 = vmatprep.subr.mxu0 0.0
        %3502 = vmatpush1.xpose.msra.mxu0 0.0
        %3503 = vmatprep.subr.mxu0 0.0
        %3504 = vmatpush1.xpose.msra.mxu0 0.0
        %3505 = vmatprep.subr.mxu0 0.0
        %3506 = vmatpush1.xpose.msra.mxu0 0.0
        %3507 = vmatprep.subr.mxu0 0.0
        %v3508 = vand.u32 %v3123, 4294901760
        %v3509 = vsub.f32 %v3123, %v3508
        %v3510 = vand.u32 %v3509, 4294901760
        %3511 = vmatpush1.xpose.msra.mxu0 %v3510
        %3512 = vmatprep.subr.mxu0 0.0
        %v3513 = vand.u32 %v3120, 4294901760
        %v3514 = vsub.f32 %v3120, %v3513
        %v3515 = vand.u32 %v3514, 4294901760
        %3516 = vmatpush1.xpose.msra.mxu0 %v3515
        %3517 = vmatprep.subr.mxu0 0.0
        %v3518 = vand.u32 %v3117, 4294901760
        %v3519 = vsub.f32 %v3117, %v3518
        %v3520 = vand.u32 %v3519, 4294901760
        %3521 = vmatpush1.xpose.msra.mxu0 %v3520
        %3522 = vmatprep.subr.mxu0 0.0
        %v3523 = vand.u32 %v3114, 4294901760
        %v3524 = vsub.f32 %v3114, %v3523
        %v3525 = vand.u32 %v3524, 4294901760
        %3526 = vmatpush1.xpose.msra.mxu0 %v3525
        %3527 = vmatprep.subr.mxu0 0.0
        %3528 = vmatpush2.xpose.msra.mxu0 0.0
        %3529 = vmatprep.subr.mxu0 0.0
        %3530 = vmatpush2.xpose.msra.mxu0 0.0
        %3531 = vmatprep.subr.mxu0 0.0
        %3532 = vmatpush2.xpose.msra.mxu0 0.0
        %3533 = vmatprep.subr.mxu0 0.0
        %3534 = vmatpush2.xpose.msra.mxu0 0.0
        %3535 = vmatprep.subr.mxu0 0.0
        %3536 = vmatpush2.xpose.msra.mxu0 0.0
        %3537 = vmatprep.subr.mxu0 0.0
        %3538 = vmatpush2.xpose.msra.mxu0 0.0
        %3539 = vmatprep.subr.mxu0 0.0
        %3540 = vmatpush2.xpose.msra.mxu0 0.0
        %3541 = vmatprep.subr.mxu0 0.0
        %3542 = vmatpush2.xpose.msra.mxu0 0.0
        %3543 = vmatprep.subr.mxu0 0.0
        %3544 = vmatpush2.xpose.msra.mxu0 0.0
        %3545 = vmatprep.subr.mxu0 0.0
        %3546 = vmatpush2.xpose.msra.mxu0 0.0
        %3547 = vmatprep.subr.mxu0 0.0
        %3548 = vmatpush2.xpose.msra.mxu0 0.0
        %3549 = vmatprep.subr.mxu0 0.0
        %3550 = vmatpush2.xpose.msra.mxu0 0.0
        %3551 = vmatprep.subr.mxu0 0.0
        %3552 = vmatpush2.xpose.msra.mxu0 0.0
        %3553 = vmatprep.subr.mxu0 0.0
        %3554 = vmatpush2.xpose.msra.mxu0 0.0
        %3555 = vmatprep.subr.mxu0 0.0
        %3556 = vmatpush2.xpose.msra.mxu0 0.0
        %3557 = vmatprep.subr.mxu0 0.0
        %3558 = vmatpush2.xpose.msra.mxu0 0.0
        %3559 = vmatprep.mubr.f32.mxu0 0.0
        %v3560 = vand.u32 %v347, 4294901760
        %3561 = vmatmul.mubr.f32.gmra.mxu0 %v3560
        %v3562 = vpop.f32.mrf.mxu0
        %v3563 = vadd.f32 %v3472, %v3562
        %v3564 = vpop.f32.mrf.mxu0
        %3565 = vmatprep.mubr.f32.mxu0 0.0
        %v3566 = vand.u32 %v350, 4294901760
        %3567 = vmatmul.mubr.f32.gmra.mxu0 %v3566
        %v3568 = vpop.f32.mrf.mxu0
        %v3569 = vadd.f32 %v3480, %v3568
        %v3570 = vpop.f32.mrf.mxu0
        %3571 = vdwg.mxu0
        %3572 = vmatprep.subr.mxu0 0.0
        %3573 = vmatpush1.xpose.msra.mxu0 0.0
        %3574 = vmatprep.subr.mxu0 0.0
        %3575 = vmatpush1.xpose.msra.mxu0 0.0
        %3576 = vmatprep.subr.mxu0 0.0
        %3577 = vmatpush1.xpose.msra.mxu0 0.0
        %3578 = vmatprep.subr.mxu0 0.0
        %3579 = vmatpush1.xpose.msra.mxu0 0.0
        %3580 = vmatprep.subr.mxu0 0.0
        %3581 = vmatpush1.xpose.msra.mxu0 0.0
        %3582 = vmatprep.subr.mxu0 0.0
        %3583 = vmatpush1.xpose.msra.mxu0 0.0
        %3584 = vmatprep.subr.mxu0 0.0
        %3585 = vmatpush1.xpose.msra.mxu0 0.0
        %3586 = vmatprep.subr.mxu0 0.0
        %3587 = vmatpush1.xpose.msra.mxu0 0.0
        %3588 = vmatprep.subr.mxu0 0.0
        %3589 = vmatpush1.xpose.msra.mxu0 0.0
        %3590 = vmatprep.subr.mxu0 0.0
        %3591 = vmatpush1.xpose.msra.mxu0 0.0
        %3592 = vmatprep.subr.mxu0 0.0
        %3593 = vmatpush1.xpose.msra.mxu0 0.0
        %3594 = vmatprep.subr.mxu0 0.0
        %3595 = vmatpush1.xpose.msra.mxu0 0.0
        %3596 = vmatprep.subr.mxu0 0.0
        %v3597 = vand.u32 %v3123, 4294901760
        %3598 = vmatpush1.xpose.msra.mxu0 %v3597
        %3599 = vmatprep.subr.mxu0 0.0
        %v3600 = vand.u32 %v3120, 4294901760
        %3601 = vmatpush1.xpose.msra.mxu0 %v3600
        %3602 = vmatprep.subr.mxu0 0.0
        %v3603 = vand.u32 %v3117, 4294901760
        %3604 = vmatpush1.xpose.msra.mxu0 %v3603
        %3605 = vmatprep.subr.mxu0 0.0
        %v3606 = vand.u32 %v3114, 4294901760
        %3607 = vmatpush1.xpose.msra.mxu0 %v3606
        %3608 = vmatprep.subr.mxu0 0.0
        %3609 = vmatpush2.xpose.msra.mxu0 0.0
        %3610 = vmatprep.subr.mxu0 0.0
        %3611 = vmatpush2.xpose.msra.mxu0 0.0
        %3612 = vmatprep.subr.mxu0 0.0
        %3613 = vmatpush2.xpose.msra.mxu0 0.0
        %3614 = vmatprep.subr.mxu0 0.0
        %3615 = vmatpush2.xpose.msra.mxu0 0.0
        %3616 = vmatprep.subr.mxu0 0.0
        %3617 = vmatpush2.xpose.msra.mxu0 0.0
        %3618 = vmatprep.subr.mxu0 0.0
        %3619 = vmatpush2.xpose.msra.mxu0 0.0
        %3620 = vmatprep.subr.mxu0 0.0
        %3621 = vmatpush2.xpose.msra.mxu0 0.0
        %3622 = vmatprep.subr.mxu0 0.0
        %3623 = vmatpush2.xpose.msra.mxu0 0.0
        %3624 = vmatprep.subr.mxu0 0.0
        %3625 = vmatpush2.xpose.msra.mxu0 0.0
        %3626 = vmatprep.subr.mxu0 0.0
        %3627 = vmatpush2.xpose.msra.mxu0 0.0
        %3628 = vmatprep.subr.mxu0 0.0
        %3629 = vmatpush2.xpose.msra.mxu0 0.0
        %3630 = vmatprep.subr.mxu0 0.0
        %3631 = vmatpush2.xpose.msra.mxu0 0.0
        %3632 = vmatprep.subr.mxu0 0.0
        %3633 = vmatpush2.xpose.msra.mxu0 0.0
        %3634 = vmatprep.subr.mxu0 0.0
        %3635 = vmatpush2.xpose.msra.mxu0 0.0
        %3636 = vmatprep.subr.mxu0 0.0
        %3637 = vmatpush2.xpose.msra.mxu0 0.0
        %3638 = vmatprep.subr.mxu0 0.0
        %3639 = vmatpush2.xpose.msra.mxu0 0.0
        %3640 = vmatprep.mubr.f32.mxu0 0.0
        %v3641 = vand.u32 %v347, 4294901760
        %3642 = vmatmul.mubr.f32.gmra.mxu0 %v3641
        %v3643 = vpop.f32.mrf.mxu0
        %v3644 = vadd.f32 %v3563, %v3643
        %v3645 = vpop.f32.mrf.mxu0
        %3646 = vmatprep.mubr.f32.mxu0 0.0
        %v3647 = vand.u32 %v350, 4294901760
        %3648 = vmatmul.mubr.f32.gmra.mxu0 %v3647
        %v3649 = vpop.f32.mrf.mxu0
        %v3650 = vadd.f32 %v3569, %v3649
        %v3651 = vpop.f32.mrf.mxu0
        %3652 = vdwg.mxu0
        %v3653 = vadd.f32 %v3644, %v1972
        %v3654 = vadd.f32 %v3650, %v1978
        %3657 = vrot.lane.b32.xlu0 %v3653, 64
        %v3658 = vpop.permute.xlu0 %3657
        %3659 = vrot.lane.b32.xlu0 %v3654, 64
        %v3660 = vpop.permute.xlu0 %3659
        %vm3663 = vcmask 785920
        %3664 = vst.msk [vmem:[%s314] sm:$0xff] %vm3663, %v3658
        %3665 = vst.msk [vmem:[%s314 + $0x8] sm:$0xff] %vm3663, %v3660
        %s3666 = sand.u32 %s190, 1
        %s3667 = scalar_lea.sflag [#allocation3], %s3666
        %s3668 = sand.u32 %s190, 1
        %s3669 = smul.addr %s3668, 16
        %s3670 = scalar_lea.vmem [#allocation2], %s3669
        // Predicated region
        $region45: #{tpu_custom_call.1} parent=43 // pred_check
          %p3671 = pneg %p200
        $region46: #{tpu_custom_call.1} parent=43 // pred_check_branch
          %3673 = sbr.rel (%p3671) target = $region48
        $region47: #{tpu_custom_call.1} parent=43 // pred_region
          %s3674 = smul.u32 2, %s25
          %s3676 = ssub.s32 256, 256
          %3677 = vsyncadd %s3667, %s3676
          %s3678 = smul.addr %s24, 4
          %s3679 = sadd.s32 %s3674, %s3678
          %s3680 = smul.addr %s3679, 128
          %s3681 = scalar_lea.hbm %s6, %s3680
          %s3682 = sshll.u32 %s3670, 4
          %s3683 = int_to_ptr.vmem [resolvable:$true] %s3682
          %3688 = dma.vmem_to_hbm [thread:$0]  %s3683, 256, %s3681, %s3667, 128, 128, 8
        $region48: #{tpu_custom_call.1} parent=43 // pred_fallthru
          _
      $region44: #{tpu_custom_call.1} parent=5 // pred_fallthru
        _
      %p3689 = scmp.le.s32.totalorder 2, %s15
      // Predicated region
      $region49: #{tpu_custom_call.1} parent=5 // pred_check
        %p3690 = pneg %p3689
      $region50: #{tpu_custom_call.1} parent=5 // pred_check_branch
        %3692 = sbr.rel (%p3690) target = $region52
      $region51: #{tpu_custom_call.1} parent=5 // pred_region
        %s3693 = ssub.s32 %s15, 2
        // Predicated region
        $region53: #{tpu_custom_call.1} parent=51 // pred_check
          %p3694 = pneg %p206
        $region54: #{tpu_custom_call.1} parent=51 // pred_check_branch
          %3696 = sbr.rel (%p3694) target = $region56
        $region55: #{tpu_custom_call.1} parent=51 // pred_region
          %s3697 = sand.u32 %s191, 1
          %s3698 = scalar_lea.sflag [#allocation3], %s3697
          %s3699 = sand.u32 %s191, 1
          %s3700 = smul.addr %s3699, 16
          %s3701 = scalar_lea.vmem [#allocation2], %s3700
          %3702 = dma.done %s3698, 256
        $region56: #{tpu_custom_call.1} parent=51 // pred_fallthru
          _
      $region52: #{tpu_custom_call.1} parent=5 // pred_fallthru
        _
    $region6: #{tpu_custom_call.1} parent=1 // loop_footer
      %s19 = sadd.s32 1, %s15
    $region7: #{tpu_custom_call.1} parent=1 // loop_footer_branch
      %14 = sbr.rel target = $region3
    $region8: #{tpu_custom_call.1} parent=1 // loop_exit
      _
    %3703 = vsyncpa [#allocation3], 1
    %s3704 = scalar_lea.sflag [#allocation3], 1
    %3705 = vsyncpa %s3704, 1

// kernel: tpu_custom_call.1
$region0: #{tpu_custom_call.1}
  #allocation0 [shape = 'u32[]', space=smem, size = 0x4, offset = 0x4, fixed_abs, tag = 'smem constant byte address 0x4 - core index']
  #allocation1 [shape = 'u32[144,128]{1,0:T(1,128)}', space=vmem, size = 0x12000, scoped, tag = 'internal scratch']
  %s0 = inlined_call_operand.vmem [shape: f32[4,32,32], index: 0, kind: input, shape index: {}]
  %s1 = inlined_call_operand.vmem [shape: f32[96,32], index: 1, kind: input, shape index: {}]
  %s2 = inlined_call_operand.vmem [shape: f32[1,96], index: 2, kind: input, shape index: {}]
  %s3 = inlined_call_operand.vmem [shape: f32[4,16,32], index: 3, kind: input, shape index: {}]
  %s4 = inlined_call_operand.vmem [shape: f32[4,32,8], index: 4, kind: input, shape index: {}]
  %s5 = inlined_call_operand.vmem [shape: f32[4,32,8], index: 5, kind: input, shape index: {}]
  %s6 = inlined_call_operand.hbm [shape: f32[4,32,96], index: 6, kind: output, shape index: {}]
  %s7 = sld [smem:[#allocation0]]
  $region57: #{tpu_custom_call.1} parent=0
    _
  %s9 = ssub.s32 1, %s7
  %s10 = scalar_select 0, %s9, %s7
  $region1: #{tpu_custom_call.1} parent=0
    #allocation2 [shape = 'u8[16384]{0}', space=vmem, size = 0x4000, scoped, tag = 'output window, operand 0']
    #allocation3 [shape = 's32[2]{0}', space=sflag, size = 0x8, scoped, tag = 'scoped memory for tpu_custom_call.1']
    %11 = vsyncpa [#allocation3], 0
    %s12 = scalar_lea.sflag [#allocation3], 1
    %13 = vsyncpa %s12, 0
    loop: start=0, step=1, limit=10
    $region2: #{tpu_custom_call.1} parent=1 // loop_pre_header
      _
    $region3: #{tpu_custom_call.1} parent=1 // loop_header
      %s15 = sphi 0, %s19
      %p16 = scmp.ge.s32.totalorder %s15, 10
      %s22 = sphi 0, %s34
      %s23 = sphi 0, %s30
      %s24 = sphi 0, %s22
      %s25 = sphi 0, %s23
      %s26 = sphi 0, %s24
      %s27 = sphi 0, %s25
      %s39 = sphi 0, %s41
      %s42 = sphi 0, %s39
      %s43 = sphi 0, %s42
      %s59 = sphi 0, %s43
      %s63 = sphi 0, %s63
      %s65 = sphi 0, %s63
      %s66 = sphi 0, %s65
      %s80 = sphi 0, %s66
      %s84 = sphi 0, %s84
      %s86 = sphi 0, %s84
      %s87 = sphi 0, %s86
      %s101 = sphi 0, %s87
      %s107 = sphi 0, %s109
      %s110 = sphi 0, %s107
      %s111 = sphi 0, %s110
      %s127 = sphi 0, %s111
      %s133 = sphi 0, %s135
      %s136 = sphi 0, %s133
      %s137 = sphi 0, %s136
      %s153 = sphi 0, %s137
      %s159 = sphi 0, %s161
      %s162 = sphi 0, %s159
      %s163 = sphi 0, %s162
      %s179 = sphi 0, %s163
      %s187 = sphi 0, %s189
      %s190 = sphi 0, %s187
      %s191 = sphi 0, %s190
      %s207 = sphi 0, %s191
    $region4: #{tpu_custom_call.1} parent=1 // loop_header_branch
      %18 = sbr.rel (%p16) target = $region8
    $region5: #{tpu_custom_call.1} parent=1 // loop_body
      %s20 = ssub.s32 %s15, 1
      %s21 = ssub.s32 %s15, 2
      %s28 = sadd.s32 1, %s23
      %p29 = scmp.ge.s32.totalorder %s28, 2
      %s30 = scalar_select %p29, 0, %s28
      %s31 = sadd.s32 1, %s22
      %s32 = scalar_select %p29, %s31, %s22
      %p33 = scmp.ge.s32.totalorder %s32, 4
      %s34 = scalar_select %p33, 0, %s32
      %s35 = ssub.s32 %s22, %s34
      %s36 = ssub.s32 %s23, %s30
      %s37 = sor.u32 %s35, %s36
      %p38 = scmp.eq.s32.totalorder %s37, 0
      %s40 = sadd.s32 %s39, 1
      %s41 = scalar_select %p38, %s39, %s40
      %p44 = pneg %p38
      %p45 = scmp.eq.s32.totalorder %s15, 7
      %p46 = por %p44, %p45
      %p47 = scmp.ne.s32.totalorder %s39, %s42
      %p48 = scmp.eq.s32.totalorder %s15, 0
      %p49 = por %p47, %p48
      %p50 = scmp.ne.s32.totalorder %s39, %s42
      %p51 = scmp.eq.s32.totalorder %s20, 7
      %p52 = por %p50, %p51
      %p53 = scmp.ne.s32.totalorder %s42, %s43
      %p54 = scmp.eq.s32.totalorder %s20, 0
      %p55 = por %p53, %p54
      %p56 = scmp.ne.s32.totalorder %s42, %s43
      %p57 = scmp.eq.s32.totalorder %s21, 7
      %p58 = por %p56, %p57
      %p60 = scmp.ne.s32.totalorder %s43, %s59
      %p61 = scmp.eq.s32.totalorder %s21, 0
      %p62 = por %p60, %p61
      %s64 = sadd.s32 %s63, 1
      %p67 = scmp.eq.s32.totalorder %s15, 7
      %p68 = scmp.ne.s32.totalorder %s63, %s65
      %p69 = scmp.eq.s32.totalorder %s15, 0
      %p70 = por %p68, %p69
      %p71 = scmp.ne.s32.totalorder %s63, %s65
      %p72 = scmp.eq.s32.totalorder %s20, 7
      %p73 = por %p71, %p72
      %p74 = scmp.ne.s32.totalorder %s65, %s66
      %p75 = scmp.eq.s32.totalorder %s20, 0
      %p76 = por %p74, %p75
      %p77 = scmp.ne.s32.totalorder %s65, %s66
      %p78 = scmp.eq.s32.totalorder %s21, 7
      %p79 = por %p77, %p78
      %p81 = scmp.ne.s32.totalorder %s66, %s80
      %p82 = scmp.eq.s32.totalorder %s21, 0
      %p83 = por %p81, %p82
      %s85 = sadd.s32 %s84, 1
      %p88 = scmp.eq.s32.totalorder %s15, 7
      %p89 = scmp.ne.s32.totalorder %s84, %s86
      %p90 = scmp.eq.s32.totalorder %s15, 0
      %p91 = por %p89, %p90
      %p92 = scmp.ne.s32.totalorder %s84, %s86
      %p93 = scmp.eq.s32.totalorder %s20, 7
      %p94 = por %p92, %p93
      %p95 = scmp.ne.s32.totalorder %s86, %s87
      %p96 = scmp.eq.s32.totalorder %s20, 0
      %p97 = por %p95, %p96
      %p98 = scmp.ne.s32.totalorder %s86, %s87
      %p99 = scmp.eq.s32.totalorder %s21, 7
      %p100 = por %p98, %p99
      %p102 = scmp.ne.s32.totalorder %s87, %s101
      %p103 = scmp.eq.s32.totalorder %s21, 0
      %p104 = por %p102, %p103
      %s105 = ssub.s32 %s22, %s34
      %p106 = scmp.eq.s32.totalorder %s105, 0
      %s108 = sadd.s32 %s107, 1
      %s109 = scalar_select %p106, %s107, %s108
      %p112 = pneg %p106
      %p113 = scmp.eq.s32.totalorder %s15, 7
      %p114 = por %p112, %p113
      %p115 = scmp.ne.s32.totalorder %s107, %s110
      %p116 = scmp.eq.s32.totalorder %s15, 0
      %p117 = por %p115, %p116
      %p118 = scmp.ne.s32.totalorder %s107, %s110
      %p119 = scmp.eq.s32.totalorder %s20, 7
      %p120 = por %p118, %p119
      %p121 = scmp.ne.s32.totalorder %s110, %s111
      %p122 = scmp.eq.s32.totalorder %s20, 0
      %p123 = por %p121, %p122
      %p124 = scmp.ne.s32.totalorder %s110, %s111
      %p125 = scmp.eq.s32.totalorder %s21, 7
      %p126 = por %p124, %p125
      %p128 = scmp.ne.s32.totalorder %s111, %s127
      %p129 = scmp.eq.s32.totalorder %s21, 0
      %p130 = por %p128, %p129
      %s131 = ssub.s32 %s22, %s34
      %p132 = scmp.eq.s32.totalorder %s131, 0
      %s134 = sadd.s32 %s133, 1
      %s135 = scalar_select %p132, %s133, %s134
      %p138 = pneg %p132
      %p139 = scmp.eq.s32.totalorder %s15, 7
      %p140 = por %p138, %p139
      %p141 = scmp.ne.s32.totalorder %s133, %s136
      %p142 = scmp.eq.s32.totalorder %s15, 0
      %p143 = por %p141, %p142
      %p144 = scmp.ne.s32.totalorder %s133, %s136
      %p145 = scmp.eq.s32.totalorder %s20, 7
      %p146 = por %p144, %p145
      %p147 = scmp.ne.s32.totalorder %s136, %s137
      %p148 = scmp.eq.s32.totalorder %s20, 0
      %p149 = por %p147, %p148
      %p150 = scmp.ne.s32.totalorder %s136, %s137
      %p151 = scmp.eq.s32.totalorder %s21, 7
      %p152 = por %p150, %p151
      %p154 = scmp.ne.s32.totalorder %s137, %s153
      %p155 = scmp.eq.s32.totalorder %s21, 0
      %p156 = por %p154, %p155
      %s157 = ssub.s32 %s22, %s34
      %p158 = scmp.eq.s32.totalorder %s157, 0
      %s160 = sadd.s32 %s159, 1
      %s161 = scalar_select %p158, %s159, %s160
      %p164 = pneg %p158
      %p165 = scmp.eq.s32.totalorder %s15, 7
      %p166 = por %p164, %p165
      %p167 = scmp.ne.s32.totalorder %s159, %s162
      %p168 = scmp.eq.s32.totalorder %s15, 0
      %p169 = por %p167, %p168
      %p170 = scmp.ne.s32.totalorder %s159, %s162
      %p171 = scmp.eq.s32.totalorder %s20, 7
      %p172 = por %p170, %p171
      %p173 = scmp.ne.s32.totalorder %s162, %s163
      %p174 = scmp.eq.s32.totalorder %s20, 0
      %p175 = por %p173, %p174
      %p176 = scmp.ne.s32.totalorder %s162, %s163
      %p177 = scmp.eq.s32.totalorder %s21, 7
      %p178 = por %p176, %p177
      %p180 = scmp.ne.s32.totalorder %s163, %s179
      %p181 = scmp.eq.s32.totalorder %s21, 0
      %p182 = por %p180, %p181
      %s183 = ssub.s32 %s22, %s34
      %s184 = ssub.s32 %s23, %s30
      %s185 = sor.u32 %s183, %s184
      %p186 = scmp.eq.s32.totalorder %s185, 0
      %s188 = sadd.s32 %s187, 1
      %s189 = scalar_select %p186, %s187, %s188
      %p192 = pneg %p186
      %p193 = scmp.eq.s32.totalorder %s15, 7
      %p194 = por %p192, %p193
      %p195 = scmp.ne.s32.totalorder %s187, %s190
      %p196 = scmp.eq.s32.totalorder %s15, 0
      %p197 = por %p195, %p196
      %p198 = scmp.ne.s32.totalorder %s187, %s190
      %p199 = scmp.eq.s32.totalorder %s20, 7
      %p200 = por %p198, %p199
      %p201 = scmp.ne.s32.totalorder %s190, %s191
      %p202 = scmp.eq.s32.totalorder %s20, 0
      %p203 = por %p201, %p202
      %p204 = scmp.ne.s32.totalorder %s190, %s191
      %p205 = scmp.eq.s32.totalorder %s21, 7
      %p206 = por %p204, %p205
      %p208 = scmp.ne.s32.totalorder %s191, %s207
      %p209 = scmp.eq.s32.totalorder %s21, 0
      %p210 = por %p208, %p209
      %p211 = scmp.le.s32.totalorder 1, %s15
      %p212 = scmp.lt.s32.totalorder %s15, 9
      %p213 = pnand %p211, %p212
      %p214 = pneg %p213
      // Predicated region
      $region9: #{tpu_custom_call.1} parent=5 // pred_check
        _
      $region10: #{tpu_custom_call.1} parent=5 // pred_check_branch
        %216 = sbr.rel (%p213) target = $region12
      $region11: #{tpu_custom_call.1} parent=5 // pred_region
        %s217 = ssub.s32 %s15, 1
        // Predicated region
        $region13: #{tpu_custom_call.1} parent=11 // pred_check
          %p218 = pneg %p76
        $region14: #{tpu_custom_call.1} parent=11 // pred_check_branch
          %220 = sbr.rel (%p218) target = $region16
        $region15: #{tpu_custom_call.1} parent=11 // pred_region
          _
        $region16: #{tpu_custom_call.1} parent=11 // pred_fallthru
          _
        // Predicated region
        $region17: #{tpu_custom_call.1} parent=11 // pred_check
          %p221 = pneg %p97
        $region18: #{tpu_custom_call.1} parent=11 // pred_check_branch
          %223 = sbr.rel (%p221) target = $region20
        $region19: #{tpu_custom_call.1} parent=11 // pred_region
          _
        $region20: #{tpu_custom_call.1} parent=11 // pred_fallthru
          _
      $region12: #{tpu_custom_call.1} parent=5 // pred_fallthru
        _
      %p224 = scmp.lt.s32.totalorder %s15, 8
      // Predicated region
      $region21: #{tpu_custom_call.1} parent=5 // pred_check
        %p225 = pneg %p224
      $region22: #{tpu_custom_call.1} parent=5 // pred_check_branch
        %227 = sbr.rel (%p225) target = $region24
      $region23: #{tpu_custom_call.1} parent=5 // pred_region
        // Predicated region
        $region25: #{tpu_custom_call.1} parent=23 // pred_check
          %p228 = pneg %p49
        $region26: #{tpu_custom_call.1} parent=23 // pred_check_branch
          %230 = sbr.rel (%p228) target = $region28
        $region27: #{tpu_custom_call.1} parent=23 // pred_region
          %s231 = smul.u32 2, %s23
          %p232 = scmp.lt.s32.totalorder %s22, 3
          %s233 = scalar_select %p232, %s22, 3
          %p234 = scmp.lt.s32.totalorder %s231, 3
          %s235 = scalar_select %p234, %s231, 3
          %s236 = smul.addr %s233, 4
          %s237 = sadd.s32 %s235, %s236
          %s238 = smul.addr %s237, 8
          %s239 = scalar_lea.vmem %s0, %s238
          %s240 = smul.u32 2, %s23
        $region28: #{tpu_custom_call.1} parent=23 // pred_fallthru
          _
        // Predicated region
        $region29: #{tpu_custom_call.1} parent=23 // pred_check
          %p241 = pneg %p117
        $region30: #{tpu_custom_call.1} parent=23 // pred_check_branch
          %243 = sbr.rel (%p241) target = $region32
        $region31: #{tpu_custom_call.1} parent=23 // pred_region
          %p244 = scmp.lt.s32.totalorder %s22, 3
          %s245 = scalar_select %p244, %s22, 3
          %s246 = smul.addr %s245, 2
          %s247 = smul.addr %s246, 8
          %s248 = scalar_lea.vmem %s3, %s247
        $region32: #{tpu_custom_call.1} parent=23 // pred_fallthru
          _
        // Predicated region
        $region33: #{tpu_custom_call.1} parent=23 // pred_check
          %p249 = pneg %p143
        $region34: #{tpu_custom_call.1} parent=23 // pred_check_branch
          %251 = sbr.rel (%p249) target = $region36
        $region35: #{tpu_custom_call.1} parent=23 // pred_region
          %p252 = scmp.lt.s32.totalorder %s22, 3
          %s253 = scalar_select %p252, %s22, 3
          %s254 = smul.addr %s253, 4
          %s255 = smul.addr %s254, 8
          %s256 = scalar_lea.vmem %s4, %s255
        $region36: #{tpu_custom_call.1} parent=23 // pred_fallthru
          _
        // Predicated region
        $region37: #{tpu_custom_call.1} parent=23 // pred_check
          %p257 = pneg %p169
        $region38: #{tpu_custom_call.1} parent=23 // pred_check_branch
          %259 = sbr.rel (%p257) target = $region40
        $region39: #{tpu_custom_call.1} parent=23 // pred_region
          %p260 = scmp.lt.s32.totalorder %s22, 3
          %s261 = scalar_select %p260, %s22, 3
          %s262 = smul.addr %s261, 4
          %s263 = smul.addr %s262, 8
          %s264 = scalar_lea.vmem %s5, %s263
        $region40: #{tpu_custom_call.1} parent=23 // pred_fallthru
          _
      $region24: #{tpu_custom_call.1} parent=5 // pred_fallthru
        _
      %p265 = scmp.le.s32.totalorder 1, %s15
      %p266 = scmp.lt.s32.totalorder %s15, 9
      %p267 = pnand %p265, %p266
      %p268 = pneg %p267
      // Predicated region
      $region41: #{tpu_custom_call.1} parent=5 // pred_check
        _
      $region42: #{tpu_custom_call.1} parent=5 // pred_check_branch
        %270 = sbr.rel (%p267) target = $region44
      $region43: #{tpu_custom_call.1} parent=5 // pred_region
        %s271 = ssub.s32 %s15, 1
        %s272 = smul.u32 2, %s25
        %p273 = scmp.lt.s32.totalorder %s24, 3
        %s274 = scalar_select %p273, %s24, 3
        %p275 = scmp.lt.s32.totalorder %s272, 3
        %s276 = scalar_select %p275, %s272, 3
        %s277 = smul.addr %s274, 4
        %s278 = sadd.s32 %s276, %s277
        %s279 = smul.addr %s278, 8
        %s280 = scalar_lea.vmem %s0, %s279
        %p281 = pneg %p55
        %p282 = pneg %p52
        %p283 = pneg %p76
        %p284 = pneg %p73
        %p285 = pneg %p97
        %p286 = pneg %p94
        %p287 = scmp.lt.s32.totalorder %s24, 3
        %s288 = scalar_select %p287, %s24, 3
        %s289 = smul.addr %s288, 2
        %s290 = smul.addr %s289, 8
        %s291 = scalar_lea.vmem %s3, %s290
        %p292 = pneg %p123
        %p293 = pneg %p120
        %p294 = scmp.lt.s32.totalorder %s24, 3
        %s295 = scalar_select %p294, %s24, 3
        %s296 = smul.addr %s295, 4
        %s297 = smul.addr %s296, 8
        %s298 = scalar_lea.vmem %s4, %s297
        %p299 = pneg %p149
        %p300 = pneg %p146
        %p301 = scmp.lt.s32.totalorder %s24, 3
        %s302 = scalar_select %p301, %s24, 3
        %s303 = smul.addr %s302, 4
        %s304 = smul.addr %s303, 8
        %s305 = scalar_lea.vmem %s5, %s304
        %p306 = pneg %p175
        %p307 = pneg %p172
        %p308 = pneg %p203
        %p309 = pneg %p200
        %s310 = sand.u32 %s190, 1
        %s311 = scalar_lea.sflag [#allocation3], %s310
        %s312 = sand.u32 %s190, 1
        %s313 = smul.addr %s312, 16
        %s314 = scalar_lea.vmem [#allocation2], %s313
        %s315 = smul.u32 2, %s25
        %p316 = scmp.lt.s32.totalorder %s24, 3
        %s317 = scalar_select %p316, %s24, 3
        %p318 = scmp.lt.s32.totalorder %s315, 3
        %s319 = scalar_select %p318, %s315, 3
        %s320 = smul.addr %s317, 4
        %s321 = sadd.s32 %s319, %s320
        %s322 = smul.addr %s321, 8
        %s323 = scalar_lea.vmem %s0, %s322
        %s324 = smul.u32 2, %s25
        %p325 = scmp.lt.s32.totalorder %s24, 3
        %s326 = scalar_select %p325, %s24, 3
        %s327 = smul.addr %s326, 2
        %s328 = smul.addr %s327, 8
        %s329 = scalar_lea.vmem %s3, %s328
        %p330 = scmp.lt.s32.totalorder %s24, 3
        %s331 = scalar_select %p330, %s24, 3
        %s332 = smul.addr %s331, 4
        %s333 = smul.addr %s332, 8
        %s334 = scalar_lea.vmem %s4, %s333
        %p335 = scmp.lt.s32.totalorder %s24, 3
        %s336 = scalar_select %p335, %s24, 3
        %s337 = smul.addr %s336, 4
        %s338 = smul.addr %s337, 8
        %s339 = scalar_lea.vmem %s5, %s338
        %s340 = smul.u32 2, %s25
        %v341 = vld [vmem:[%s323] sm:$0xff]
        %v342 = vld [vmem:[%s323 + $0x8] sm:$0xff]
        %v343 = vld [vmem:[%s329] sm:$0xff]
        %v344 = vld [vmem:[%s329 + $0x8] sm:$0xff]
        %vm345 = vcmask 261120
        %v347 = vsel %vm345, %v341, 0
        %v350 = vsel %vm345, %v342, 0
        %v353 = vsel %vm345, %v343, 0
        %v356 = vsel %vm345, %v344, 0
        %358 = vmatprep.subr.mxu0 0.0
        %359 = vmatpush1.xpose.msra.mxu0 0.0
        %360 = vmatprep.subr.mxu0 0.0
        %361 = vmatpush1.xpose.msra.mxu0 0.0
        %362 = vmatprep.subr.mxu0 0.0
        %363 = vmatpush1.xpose.msra.mxu0 0.0
        %364 = vmatprep.subr.mxu0 0.0
        %365 = vmatpush1.xpose.msra.mxu0 0.0
        %366 = vmatprep.subr.mxu0 0.0
        %367 = vmatpush1.xpose.msra.mxu0 0.0
        %368 = vmatprep.subr.mxu0 0.0
        %369 = vmatpush1.xpose.msra.mxu0 0.0
        %370 = vmatprep.subr.mxu0 0.0
        %371 = vmatpush1.xpose.msra.mxu0 0.0
        %372 = vmatprep.subr.mxu0 0.0
        %373 = vmatpush1.xpose.msra.mxu0 0.0
        %374 = vmatprep.subr.mxu0 0.0
        %375 = vmatpush1.xpose.msra.mxu0 0.0
        %376 = vmatprep.subr.mxu0 0.0
        %377 = vmatpush1.xpose.msra.mxu0 0.0
        %378 = vmatprep.subr.mxu0 0.0
        %379 = vmatpush1.xpose.msra.mxu0 0.0
        %380 = vmatprep.subr.mxu0 0.0
        %381 = vmatpush1.xpose.msra.mxu0 0.0
        %382 = vmatprep.subr.mxu0 0.0
        %383 = vmatpush1.xpose.msra.mxu0 0.0
        %384 = vmatprep.subr.mxu0 0.0
        %385 = vmatpush1.xpose.msra.mxu0 0.0
        %386 = vmatprep.subr.mxu0 0.0
        %v387 = vand.u32 %v356, 4294901760
        %388 = vmatpush1.xpose.msra.mxu0 %v387
        %389 = vmatprep.subr.mxu0 0.0
        %v390 = vand.u32 %v353, 4294901760
        %391 = vmatpush1.xpose.msra.mxu0 %v390
        %392 = vmatprep.subr.mxu0 0.0
        %393 = vmatpush2.xpose.msra.mxu0 0.0
        %394 = vmatprep.subr.mxu0 0.0
        %395 = vmatpush2.xpose.msra.mxu0 0.0
        %396 = vmatprep.subr.mxu0 0.0
        %397 = vmatpush2.xpose.msra.mxu0 0.0
        %398 = vmatprep.subr.mxu0 0.0
        %399 = vmatpush2.xpose.msra.mxu0 0.0
        %400 = vmatprep.subr.mxu0 0.0
        %401 = vmatpush2.xpose.msra.mxu0 0.0
        %402 = vmatprep.subr.mxu0 0.0
        %403 = vmatpush2.xpose.msra.mxu0 0.0
        %404 = vmatprep.subr.mxu0 0.0
        %405 = vmatpush2.xpose.msra.mxu0 0.0
        %406 = vmatprep.subr.mxu0 0.0
        %407 = vmatpush2.xpose.msra.mxu0 0.0
        %408 = vmatprep.subr.mxu0 0.0
        %409 = vmatpush2.xpose.msra.mxu0 0.0
        %410 = vmatprep.subr.mxu0 0.0
        %411 = vmatpush2.xpose.msra.mxu0 0.0
        %412 = vmatprep.subr.mxu0 0.0
        %413 = vmatpush2.xpose.msra.mxu0 0.0
        %414 = vmatprep.subr.mxu0 0.0
        %415 = vmatpush2.xpose.msra.mxu0 0.0
        %416 = vmatprep.subr.mxu0 0.0
        %417 = vmatpush2.xpose.msra.mxu0 0.0
        %418 = vmatprep.subr.mxu0 0.0
        %419 = vmatpush2.xpose.msra.mxu0 0.0
        %420 = vmatprep.subr.mxu0 0.0
        %421 = vmatpush2.xpose.msra.mxu0 0.0
        %422 = vmatprep.subr.mxu0 0.0
        %423 = vmatpush2.xpose.msra.mxu0 0.0
        %424 = vmatprep.mubr.f32.mxu0 0.0
        %v425 = vand.u32 %v347, 4294901760
        %v426 = vsub.f32 %v347, %v425
        %v427 = vand.u32 %v426, 4294901760
        %v428 = vsub.f32 %v426, %v427
        %v429 = vand.u32 %v428, 4294901760
        %430 = vmatmul.mubr.f32.gmra.mxu0 %v429
        %v431 = vpop.f32.mrf.mxu0
        %v432 = vadd.f32 0.0, %v431
        %v433 = vpop.f32.mrf.mxu0
        %434 = vmatprep.mubr.f32.mxu0 0.0
        %v435 = vand.u32 %v350, 4294901760
        %v436 = vsub.f32 %v350, %v435
        %v437 = vand.u32 %v436, 4294901760
        %v438 = vsub.f32 %v436, %v437
        %v439 = vand.u32 %v438, 4294901760
        %440 = vmatmul.mubr.f32.gmra.mxu0 %v439
        %v441 = vpop.f32.mrf.mxu0
        %v442 = vadd.f32 0.0, %v441
        %v443 = vpop.f32.mrf.mxu0
        %444 = vdwg.mxu0
        %445 = vmatprep.subr.mxu0 0.0
        %446 = vmatpush1.xpose.msra.mxu0 0.0
        %447 = vmatprep.subr.mxu0 0.0
        %448 = vmatpush1.xpose.msra.mxu0 0.0
        %449 = vmatprep.subr.mxu0 0.0
        %450 = vmatpush1.xpose.msra.mxu0 0.0
        %451 = vmatprep.subr.mxu0 0.0
        %452 = vmatpush1.xpose.msra.mxu0 0.0
        %453 = vmatprep.subr.mxu0 0.0
        %454 = vmatpush1.xpose.msra.mxu0 0.0
        %455 = vmatprep.subr.mxu0 0.0
        %456 = vmatpush1.xpose.msra.mxu0 0.0
        %457 = vmatprep.subr.mxu0 0.0
        %458 = vmatpush1.xpose.msra.mxu0 0.0
        %459 = vmatprep.subr.mxu0 0.0
        %460 = vmatpush1.xpose.msra.mxu0 0.0
        %461 = vmatprep.subr.mxu0 0.0
        %462 = vmatpush1.xpose.msra.mxu0 0.0
        %463 = vmatprep.subr.mxu0 0.0
        %464 = vmatpush1.xpose.msra.mxu0 0.0
        %465 = vmatprep.subr.mxu0 0.0
        %466 = vmatpush1.xpose.msra.mxu0 0.0
        %467 = vmatprep.subr.mxu0 0.0
        %468 = vmatpush1.xpose.msra.mxu0 0.0
        %469 = vmatprep.subr.mxu0 0.0
        %470 = vmatpush1.xpose.msra.mxu0 0.0
        %471 = vmatprep.subr.mxu0 0.0
        %472 = vmatpush1.xpose.msra.mxu0 0.0
        %473 = vmatprep.subr.mxu0 0.0
        %v474 = vand.u32 %v356, 4294901760
        %v475 = vsub.f32 %v356, %v474
        %v476 = vand.u32 %v475, 4294901760
        %v477 = vsub.f32 %v475, %v476
        %v478 = vand.u32 %v477, 4294901760
        %479 = vmatpush1.xpose.msra.mxu0 %v478
        %480 = vmatprep.subr.mxu0 0.0
        %v481 = vand.u32 %v353, 4294901760
        %v482 = vsub.f32 %v353, %v481
        %v483 = vand.u32 %v482, 4294901760
        %v484 = vsub.f32 %v482, %v483
        %v485 = vand.u32 %v484, 4294901760
        %486 = vmatpush1.xpose.msra.mxu0 %v485
        %487 = vmatprep.subr.mxu0 0.0
        %488 = vmatpush2.xpose.msra.mxu0 0.0
        %489 = vmatprep.subr.mxu0 0.0
        %490 = vmatpush2.xpose.msra.mxu0 0.0
        %491 = vmatprep.subr.mxu0 0.0
        %492 = vmatpush2.xpose.msra.mxu0 0.0
        %493 = vmatprep.subr.mxu0 0.0
        %494 = vmatpush2.xpose.msra.mxu0 0.0
        %495 = vmatprep.subr.mxu0 0.0
        %496 = vmatpush2.xpose.msra.mxu0 0.0
        %497 = vmatprep.subr.mxu0 0.0
        %498 = vmatpush2.xpose.msra.mxu0 0.0
        %499 = vmatprep.subr.mxu0 0.0
        %500 = vmatpush2.xpose.msra.mxu0 0.0
        %501 = vmatprep.subr.mxu0 0.0
        %502 = vmatpush2.xpose.msra.mxu0 0.0
        %503 = vmatprep.subr.mxu0 0.0
        %504 = vmatpush2.xpose.msra.mxu0 0.0
        %505 = vmatprep.subr.mxu0 0.0
        %506 = vmatpush2.xpose.msra.mxu0 0.0
        %507 = vmatprep.subr.mxu0 0.0
        %508 = vmatpush2.xpose.msra.mxu0 0.0
        %509 = vmatprep.subr.mxu0 0.0
        %510 = vmatpush2.xpose.msra.mxu0 0.0
        %511 = vmatprep.subr.mxu0 0.0
        %512 = vmatpush2.xpose.msra.mxu0 0.0
        %513 = vmatprep.subr.mxu0 0.0
        %514 = vmatpush2.xpose.msra.mxu0 0.0
        %515 = vmatprep.subr.mxu0 0.0
        %516 = vmatpush2.xpose.msra.mxu0 0.0
        %517 = vmatprep.subr.mxu0 0.0
        %518 = vmatpush2.xpose.msra.mxu0 0.0
        %519 = vmatprep.mubr.f32.mxu0 0.0
        %v520 = vand.u32 %v347, 4294901760
        %521 = vmatmul.mubr.f32.gmra.mxu0 %v520
        %v522 = vpop.f32.mrf.mxu0
        %v523 = vadd.f32 %v432, %v522
        %v524 = vpop.f32.mrf.mxu0
        %525 = vmatprep.mubr.f32.mxu0 0.0
        %v526 = vand.u32 %v350, 4294901760
        %527 = vmatmul.mubr.f32.gmra.mxu0 %v526
        %v528 = vpop.f32.mrf.mxu0
        %v529 = vadd.f32 %v442, %v528
        %v530 = vpop.f32.mrf.mxu0
        %531 = vdwg.mxu0
        %532 = vmatprep.subr.mxu0 0.0
        %533 = vmatpush1.xpose.msra.mxu0 0.0
        %534 = vmatprep.subr.mxu0 0.0
        %535 = vmatpush1.xpose.msra.mxu0 0.0
        %536 = vmatprep.subr.mxu0 0.0
        %537 = vmatpush1.xpose.msra.mxu0 0.0
        %538 = vmatprep.subr.mxu0 0.0
        %539 = vmatpush1.xpose.msra.mxu0 0.0
        %540 = vmatprep.subr.mxu0 0.0
        %541 = vmatpush1.xpose.msra.mxu0 0.0
        %542 = vmatprep.subr.mxu0 0.0
        %543 = vmatpush1.xpose.msra.mxu0 0.0
        %544 = vmatprep.subr.mxu0 0.0
        %545 = vmatpush1.xpose.msra.mxu0 0.0
        %546 = vmatprep.subr.mxu0 0.0
        %547 = vmatpush1.xpose.msra.mxu0 0.0
        %548 = vmatprep.subr.mxu0 0.0
        %549 = vmatpush1.xpose.msra.mxu0 0.0
        %550 = vmatprep.subr.mxu0 0.0
        %551 = vmatpush1.xpose.msra.mxu0 0.0
        %552 = vmatprep.subr.mxu0 0.0
        %553 = vmatpush1.xpose.msra.mxu0 0.0
        %554 = vmatprep.subr.mxu0 0.0
        %555 = vmatpush1.xpose.msra.mxu0 0.0
        %556 = vmatprep.subr.mxu0 0.0
        %557 = vmatpush1.xpose.msra.mxu0 0.0
        %558 = vmatprep.subr.mxu0 0.0
        %559 = vmatpush1.xpose.msra.mxu0 0.0
        %560 = vmatprep.subr.mxu0 0.0
        %v561 = vand.u32 %v356, 4294901760
        %v562 = vsub.f32 %v356, %v561
        %563 = vmatpush1.xpose.msra.mxu0 %v562
        %564 = vmatprep.subr.mxu0 0.0
        %v565 = vand.u32 %v353, 4294901760
        %v566 = vsub.f32 %v353, %v565
        %567 = vmatpush1.xpose.msra.mxu0 %v566
        %568 = vmatprep.subr.mxu0 0.0
        %569 = vmatpush2.xpose.msra.mxu0 0.0
        %570 = vmatprep.subr.mxu0 0.0
        %571 = vmatpush2.xpose.msra.mxu0 0.0
        %572 = vmatprep.subr.mxu0 0.0
        %573 = vmatpush2.xpose.msra.mxu0 0.0
        %574 = vmatprep.subr.mxu0 0.0
        %575 = vmatpush2.xpose.msra.mxu0 0.0
        %576 = vmatprep.subr.mxu0 0.0
        %577 = vmatpush2.xpose.msra.mxu0 0.0
        %578 = vmatprep.subr.mxu0 0.0
        %579 = vmatpush2.xpose.msra.mxu0 0.0
        %580 = vmatprep.subr.mxu0 0.0
        %581 = vmatpush2.xpose.msra.mxu0 0.0
        %582 = vmatprep.subr.mxu0 0.0
        %583 = vmatpush2.xpose.msra.mxu0 0.0
        %584 = vmatprep.subr.mxu0 0.0
        %585 = vmatpush2.xpose.msra.mxu0 0.0
        %586 = vmatprep.subr.mxu0 0.0
        %587 = vmatpush2.xpose.msra.mxu0 0.0
        %588 = vmatprep.subr.mxu0 0.0
        %589 = vmatpush2.xpose.msra.mxu0 0.0
        %590 = vmatprep.subr.mxu0 0.0
        %591 = vmatpush2.xpose.msra.mxu0 0.0
        %592 = vmatprep.subr.mxu0 0.0
        %593 = vmatpush2.xpose.msra.mxu0 0.0
        %594 = vmatprep.subr.mxu0 0.0
        %595 = vmatpush2.xpose.msra.mxu0 0.0
        %596 = vmatprep.subr.mxu0 0.0
        %597 = vmatpush2.xpose.msra.mxu0 0.0
        %598 = vmatprep.subr.mxu0 0.0
        %599 = vmatpush2.xpose.msra.mxu0 0.0
        %600 = vmatprep.mubr.f32.mxu0 0.0
        %v601 = vand.u32 %v347, 4294901760
        %v602 = vsub.f32 %v347, %v601
        %603 = vmatmul.mubr.f32.gmra.mxu0 %v602
        %v604 = vpop.f32.mrf.mxu0
        %v605 = vadd.f32 %v523, %v604
        %v606 = vpop.f32.mrf.mxu0
        %607 = vmatprep.mubr.f32.mxu0 0.0
        %v608 = vand.u32 %v350, 4294901760
        %v609 = vsub.f32 %v350, %v608
        %610 = vmatmul.mubr.f32.gmra.mxu0 %v609
        %v611 = vpop.f32.mrf.mxu0
        %v612 = vadd.f32 %v529, %v611
        %v613 = vpop.f32.mrf.mxu0
        %614 = vdwg.mxu0
        %615 = vmatprep.subr.mxu0 0.0
        %616 = vmatpush1.xpose.msra.mxu0 0.0
        %617 = vmatprep.subr.mxu0 0.0
        %618 = vmatpush1.xpose.msra.mxu0 0.0
        %619 = vmatprep.subr.mxu0 0.0
        %620 = vmatpush1.xpose.msra.mxu0 0.0
        %621 = vmatprep.subr.mxu0 0.0
        %622 = vmatpush1.xpose.msra.mxu0 0.0
        %623 = vmatprep.subr.mxu0 0.0
        %624 = vmatpush1.xpose.msra.mxu0 0.0
        %625 = vmatprep.subr.mxu0 0.0
        %626 = vmatpush1.xpose.msra.mxu0 0.0
        %627 = vmatprep.subr.mxu0 0.0
        %628 = vmatpush1.xpose.msra.mxu0 0.0
        %629 = vmatprep.subr.mxu0 0.0
        %630 = vmatpush1.xpose.msra.mxu0 0.0
        %631 = vmatprep.subr.mxu0 0.0
        %632 = vmatpush1.xpose.msra.mxu0 0.0
        %633 = vmatprep.subr.mxu0 0.0
        %634 = vmatpush1.xpose.msra.mxu0 0.0
        %635 = vmatprep.subr.mxu0 0.0
        %636 = vmatpush1.xpose.msra.mxu0 0.0
        %637 = vmatprep.subr.mxu0 0.0
        %638 = vmatpush1.xpose.msra.mxu0 0.0
        %639 = vmatprep.subr.mxu0 0.0
        %640 = vmatpush1.xpose.msra.mxu0 0.0
        %641 = vmatprep.subr.mxu0 0.0
        %642 = vmatpush1.xpose.msra.mxu0 0.0
        %643 = vmatprep.subr.mxu0 0.0
        %v644 = vand.u32 %v356, 4294901760
        %645 = vmatpush1.xpose.msra.mxu0 %v644
        %646 = vmatprep.subr.mxu0 0.0
        %v647 = vand.u32 %v353, 4294901760
        %648 = vmatpush1.xpose.msra.mxu0 %v647
        %649 = vmatprep.subr.mxu0 0.0
        %650 = vmatpush2.xpose.msra.mxu0 0.0
        %651 = vmatprep.subr.mxu0 0.0
        %652 = vmatpush2.xpose.msra.mxu0 0.0
        %653 = vmatprep.subr.mxu0 0.0
        %654 = vmatpush2.xpose.msra.mxu0 0.0
        %655 = vmatprep.subr.mxu0 0.0
        %656 = vmatpush2.xpose.msra.mxu0 0.0
        %657 = vmatprep.subr.mxu0 0.0
        %658 = vmatpush2.xpose.msra.mxu0 0.0
        %659 = vmatprep.subr.mxu0 0.0
        %660 = vmatpush2.xpose.msra.mxu0 0.0
        %661 = vmatprep.subr.mxu0 0.0
        %662 = vmatpush2.xpose.msra.mxu0 0.0
        %663 = vmatprep.subr.mxu0 0.0
        %664 = vmatpush2.xpose.msra.mxu0 0.0
        %665 = vmatprep.subr.mxu0 0.0
        %666 = vmatpush2.xpose.msra.mxu0 0.0
        %667 = vmatprep.subr.mxu0 0.0
        %668 = vmatpush2.xpose.msra.mxu0 0.0
        %669 = vmatprep.subr.mxu0 0.0
        %670 = vmatpush2.xpose.msra.mxu0 0.0
        %671 = vmatprep.subr.mxu0 0.0
        %672 = vmatpush2.xpose.msra.mxu0 0.0
        %673 = vmatprep.subr.mxu0 0.0
        %674 = vmatpush2.xpose.msra.mxu0 0.0
        %675 = vmatprep.subr.mxu0 0.0
        %676 = vmatpush2.xpose.msra.mxu0 0.0
        %677 = vmatprep.subr.mxu0 0.0
        %678 = vmatpush2.xpose.msra.mxu0 0.0
        %679 = vmatprep.subr.mxu0 0.0
        %680 = vmatpush2.xpose.msra.mxu0 0.0
        %681 = vmatprep.mubr.f32.mxu0 0.0
        %v682 = vand.u32 %v347, 4294901760
        %v683 = vsub.f32 %v347, %v682
        %v684 = vand.u32 %v683, 4294901760
        %685 = vmatmul.mubr.f32.gmra.mxu0 %v684
        %v686 = vpop.f32.mrf.mxu0
        %v687 = vadd.f32 %v605, %v686
        %v688 = vpop.f32.mrf.mxu0
        %689 = vmatprep.mubr.f32.mxu0 0.0
        %v690 = vand.u32 %v350, 4294901760
        %v691 = vsub.f32 %v350, %v690
        %v692 = vand.u32 %v691, 4294901760
        %693 = vmatmul.mubr.f32.gmra.mxu0 %v692
        %v694 = vpop.f32.mrf.mxu0
        %v695 = vadd.f32 %v612, %v694
        %v696 = vpop.f32.mrf.mxu0
        %697 = vdwg.mxu0
        %698 = vmatprep.subr.mxu0 0.0
        %699 = vmatpush1.xpose.msra.mxu0 0.0
        %700 = vmatprep.subr.mxu0 0.0
        %701 = vmatpush1.xpose.msra.mxu0 0.0
        %702 = vmatprep.subr.mxu0 0.0
        %703 = vmatpush1.xpose.msra.mxu0 0.0
        %704 = vmatprep.subr.mxu0 0.0
        %705 = vmatpush1.xpose.msra.mxu0 0.0
        %706 = vmatprep.subr.mxu0 0.0
        %707 = vmatpush1.xpose.msra.mxu0 0.0
        %708 = vmatprep.subr.mxu0 0.0
        %709 = vmatpush1.xpose.msra.mxu0 0.0
        %710 = vmatprep.subr.mxu0 0.0
        %711 = vmatpush1.xpose.msra.mxu0 0.0
        %712 = vmatprep.subr.mxu0 0.0
        %713 = vmatpush1.xpose.msra.mxu0 0.0
        %714 = vmatprep.subr.mxu0 0.0
        %715 = vmatpush1.xpose.msra.mxu0 0.0
        %716 = vmatprep.subr.mxu0 0.0
        %717 = vmatpush1.xpose.msra.mxu0 0.0
        %718 = vmatprep.subr.mxu0 0.0
        %719 = vmatpush1.xpose.msra.mxu0 0.0
        %720 = vmatprep.subr.mxu0 0.0
        %721 = vmatpush1.xpose.msra.mxu0 0.0
        %722 = vmatprep.subr.mxu0 0.0
        %723 = vmatpush1.xpose.msra.mxu0 0.0
        %724 = vmatprep.subr.mxu0 0.0
        %725 = vmatpush1.xpose.msra.mxu0 0.0
        %726 = vmatprep.subr.mxu0 0.0
        %v727 = vand.u32 %v356, 4294901760
        %v728 = vsub.f32 %v356, %v727
        %v729 = vand.u32 %v728, 4294901760
        %730 = vmatpush1.xpose.msra.mxu0 %v729
        %731 = vmatprep.subr.mxu0 0.0
        %v732 = vand.u32 %v353, 4294901760
        %v733 = vsub.f32 %v353, %v732
        %v734 = vand.u32 %v733, 4294901760
        %735 = vmatpush1.xpose.msra.mxu0 %v734
        %736 = vmatprep.subr.mxu0 0.0
        %737 = vmatpush2.xpose.msra.mxu0 0.0
        %738 = vmatprep.subr.mxu0 0.0
        %739 = vmatpush2.xpose.msra.mxu0 0.0
        %740 = vmatprep.subr.mxu0 0.0
        %741 = vmatpush2.xpose.msra.mxu0 0.0
        %742 = vmatprep.subr.mxu0 0.0
        %743 = vmatpush2.xpose.msra.mxu0 0.0
        %744 = vmatprep.subr.mxu0 0.0
        %745 = vmatpush2.xpose.msra.mxu0 0.0
        %746 = vmatprep.subr.mxu0 0.0
        %747 = vmatpush2.xpose.msra.mxu0 0.0
        %748 = vmatprep.subr.mxu0 0.0
        %749 = vmatpush2.xpose.msra.mxu0 0.0
        %750 = vmatprep.subr.mxu0 0.0
        %751 = vmatpush2.xpose.msra.mxu0 0.0
        %752 = vmatprep.subr.mxu0 0.0
        %753 = vmatpush2.xpose.msra.mxu0 0.0
        %754 = vmatprep.subr.mxu0 0.0
        %755 = vmatpush2.xpose.msra.mxu0 0.0
        %756 = vmatprep.subr.mxu0 0.0
        %757 = vmatpush2.xpose.msra.mxu0 0.0
        %758 = vmatprep.subr.mxu0 0.0
        %759 = vmatpush2.xpose.msra.mxu0 0.0
        %760 = vmatprep.subr.mxu0 0.0
        %761 = vmatpush2.xpose.msra.mxu0 0.0
        %762 = vmatprep.subr.mxu0 0.0
        %763 = vmatpush2.xpose.msra.mxu0 0.0
        %764 = vmatprep.subr.mxu0 0.0
        %765 = vmatpush2.xpose.msra.mxu0 0.0
        %766 = vmatprep.subr.mxu0 0.0
        %767 = vmatpush2.xpose.msra.mxu0 0.0
        %768 = vmatprep.mubr.f32.mxu0 0.0
        %v769 = vand.u32 %v347, 4294901760
        %770 = vmatmul.mubr.f32.gmra.mxu0 %v769
        %v771 = vpop.f32.mrf.mxu0
        %v772 = vadd.f32 %v687, %v771
        %v773 = vpop.f32.mrf.mxu0
        %774 = vmatprep.mubr.f32.mxu0 0.0
        %v775 = vand.u32 %v350, 4294901760
        %776 = vmatmul.mubr.f32.gmra.mxu0 %v775
        %v777 = vpop.f32.mrf.mxu0
        %v778 = vadd.f32 %v695, %v777
        %v779 = vpop.f32.mrf.mxu0
        %780 = vdwg.mxu0
        %781 = vmatprep.subr.mxu0 0.0
        %782 = vmatpush1.xpose.msra.mxu0 0.0
        %783 = vmatprep.subr.mxu0 0.0
        %784 = vmatpush1.xpose.msra.mxu0 0.0
        %785 = vmatprep.subr.mxu0 0.0
        %786 = vmatpush1.xpose.msra.mxu0 0.0
        %787 = vmatprep.subr.mxu0 0.0
        %788 = vmatpush1.xpose.msra.mxu0 0.0
        %789 = vmatprep.subr.mxu0 0.0
        %790 = vmatpush1.xpose.msra.mxu0 0.0
        %791 = vmatprep.subr.mxu0 0.0
        %792 = vmatpush1.xpose.msra.mxu0 0.0
        %793 = vmatprep.subr.mxu0 0.0
        %794 = vmatpush1.xpose.msra.mxu0 0.0
        %795 = vmatprep.subr.mxu0 0.0
        %796 = vmatpush1.xpose.msra.mxu0 0.0
        %797 = vmatprep.subr.mxu0 0.0
        %798 = vmatpush1.xpose.msra.mxu0 0.0
        %799 = vmatprep.subr.mxu0 0.0
        %800 = vmatpush1.xpose.msra.mxu0 0.0
        %801 = vmatprep.subr.mxu0 0.0
        %802 = vmatpush1.xpose.msra.mxu0 0.0
        %803 = vmatprep.subr.mxu0 0.0
        %804 = vmatpush1.xpose.msra.mxu0 0.0
        %805 = vmatprep.subr.mxu0 0.0
        %806 = vmatpush1.xpose.msra.mxu0 0.0
        %807 = vmatprep.subr.mxu0 0.0
        %808 = vmatpush1.xpose.msra.mxu0 0.0
        %809 = vmatprep.subr.mxu0 0.0
        %v810 = vand.u32 %v356, 4294901760
        %811 = vmatpush1.xpose.msra.mxu0 %v810
        %812 = vmatprep.subr.mxu0 0.0
        %v813 = vand.u32 %v353, 4294901760
        %814 = vmatpush1.xpose.msra.mxu0 %v813
        %815 = vmatprep.subr.mxu0 0.0
        %816 = vmatpush2.xpose.msra.mxu0 0.0
        %817 = vmatprep.subr.mxu0 0.0
        %818 = vmatpush2.xpose.msra.mxu0 0.0
        %819 = vmatprep.subr.mxu0 0.0
        %820 = vmatpush2.xpose.msra.mxu0 0.0
        %821 = vmatprep.subr.mxu0 0.0
        %822 = vmatpush2.xpose.msra.mxu0 0.0
        %823 = vmatprep.subr.mxu0 0.0
        %824 = vmatpush2.xpose.msra.mxu0 0.0
        %825 = vmatprep.subr.mxu0 0.0
        %826 = vmatpush2.xpose.msra.mxu0 0.0
        %827 = vmatprep.subr.mxu0 0.0
        %828 = vmatpush2.xpose.msra.mxu0 0.0
        %829 = vmatprep.subr.mxu0 0.0
        %830 = vmatpush2.xpose.msra.mxu0 0.0
        %831 = vmatprep.subr.mxu0 0.0
        %832 = vmatpush2.xpose.msra.mxu0 0.0
        %833 = vmatprep.subr.mxu0 0.0
        %834 = vmatpush2.xpose.msra.mxu0 0.0
        %835 = vmatprep.subr.mxu0 0.0
        %836 = vmatpush2.xpose.msra.mxu0 0.0
        %837 = vmatprep.subr.mxu0 0.0
        %838 = vmatpush2.xpose.msra.mxu0 0.0
        %839 = vmatprep.subr.mxu0 0.0
        %840 = vmatpush2.xpose.msra.mxu0 0.0
        %841 = vmatprep.subr.mxu0 0.0
        %842 = vmatpush2.xpose.msra.mxu0 0.0
        %843 = vmatprep.subr.mxu0 0.0
        %844 = vmatpush2.xpose.msra.mxu0 0.0
        %845 = vmatprep.subr.mxu0 0.0
        %846 = vmatpush2.xpose.msra.mxu0 0.0
        %847 = vmatprep.mubr.f32.mxu0 0.0
        %v848 = vand.u32 %v347, 4294901760
        %849 = vmatmul.mubr.f32.gmra.mxu0 %v848
        %v850 = vpop.f32.mrf.mxu0
        %v851 = vadd.f32 %v772, %v850
        %v852 = vpop.f32.mrf.mxu0
        %853 = vmatprep.mubr.f32.mxu0 0.0
        %v854 = vand.u32 %v350, 4294901760
        %855 = vmatmul.mubr.f32.gmra.mxu0 %v854
        %v856 = vpop.f32.mrf.mxu0
        %v857 = vadd.f32 %v778, %v856
        %v858 = vpop.f32.mrf.mxu0
        %859 = vdwg.mxu0
        %v860 = vmul.f32 %v851, %v851
        %v861 = vmul.f32 %v857, %v857
        %v862 = vmul.f32 %v851, %v860
        %v863 = vmul.f32 %v857, %v861
        %v864 = vmul.f32 %v862, 0.044715
        %v865 = vmul.f32 %v863, 0.044715
        %v866 = vadd.f32 %v851, %v864
        %v867 = vadd.f32 %v857, %v865
        %v868 = vmul.f32 %v866, 0.7978846
        %v869 = vmul.f32 %v867, 0.7978846
        %v870 = vtanh.pop %v868
        %v871 = vtanh.pop %v869
        %v872 = vadd.f32 %v870, 1.0
        %v873 = vadd.f32 %v871, 1.0
        %v874 = vmul.f32 %v872, 0.5
        %v875 = vmul.f32 %v873, 0.5
        %v876 = vmul.f32 %v851, %v874
        %v877 = vmul.f32 %v857, %v875
        %v878 = vld [vmem:[%s334] sm:$0xff]
        %v879 = vld [vmem:[%s334 + $0x8] sm:$0xff]
        %v880 = vld [vmem:[%s334 + $0x10] sm:$0xff]
        %v881 = vld [vmem:[%s334 + $0x18] sm:$0xff]
        %vm882 = vcmask 64512
        %v884 = vsel %vm882, %v876, 0
        %v887 = vsel %vm882, %v877, 0
        %v890 = vsel %vm882, %v878, 0
        %v893 = vsel %vm882, %v879, 0
        %v896 = vsel %vm882, %v880, 0
        %v899 = vsel %vm882, %v881, 0
        %901 = vmatprep.subr.mxu0 0.0
        %902 = vmatpush1.xpose.msra.mxu0 0.0
        %903 = vmatprep.subr.mxu0 0.0
        %904 = vmatpush1.xpose.msra.mxu0 0.0
        %905 = vmatprep.subr.mxu0 0.0
        %906 = vmatpush1.xpose.msra.mxu0 0.0
        %907 = vmatprep.subr.mxu0 0.0
        %908 = vmatpush1.xpose.msra.mxu0 0.0
        %909 = vmatprep.subr.mxu0 0.0
        %910 = vmatpush1.xpose.msra.mxu0 0.0
        %911 = vmatprep.subr.mxu0 0.0
        %912 = vmatpush1.xpose.msra.mxu0 0.0
        %913 = vmatprep.subr.mxu0 0.0
        %914 = vmatpush1.xpose.msra.mxu0 0.0
        %915 = vmatprep.subr.mxu0 0.0
        %916 = vmatpush1.xpose.msra.mxu0 0.0
        %917 = vmatprep.subr.mxu0 0.0
        %918 = vmatpush1.xpose.msra.mxu0 0.0
        %919 = vmatprep.subr.mxu0 0.0
        %920 = vmatpush1.xpose.msra.mxu0 0.0
        %921 = vmatprep.subr.mxu0 0.0
        %922 = vmatpush1.xpose.msra.mxu0 0.0
        %923 = vmatprep.subr.mxu0 0.0
        %924 = vmatpush1.xpose.msra.mxu0 0.0
        %925 = vmatprep.subr.mxu0 0.0
        %v926 = vand.u32 %v899, 4294901760
        %927 = vmatpush1.xpose.msra.mxu0 %v926
        %928 = vmatprep.subr.mxu0 0.0
        %v929 = vand.u32 %v896, 4294901760
        %930 = vmatpush1.xpose.msra.mxu0 %v929
        %931 = vmatprep.subr.mxu0 0.0
        %v932 = vand.u32 %v893, 4294901760
        %933 = vmatpush1.xpose.msra.mxu0 %v932
        %934 = vmatprep.subr.mxu0 0.0
        %v935 = vand.u32 %v890, 4294901760
        %936 = vmatpush1.xpose.msra.mxu0 %v935
        %937 = vmatprep.subr.mxu0 0.0
        %938 = vmatpush2.xpose.msra.mxu0 0.0
        %939 = vmatprep.subr.mxu0 0.0
        %940 = vmatpush2.xpose.msra.mxu0 0.0
        %941 = vmatprep.subr.mxu0 0.0
        %942 = vmatpush2.xpose.msra.mxu0 0.0
        %943 = vmatprep.subr.mxu0 0.0
        %944 = vmatpush2.xpose.msra.mxu0 0.0
        %945 = vmatprep.subr.mxu0 0.0
        %946 = vmatpush2.xpose.msra.mxu0 0.0
        %947 = vmatprep.subr.mxu0 0.0
        %948 = vmatpush2.xpose.msra.mxu0 0.0
        %949 = vmatprep.subr.mxu0 0.0
        %950 = vmatpush2.xpose.msra.mxu0 0.0
        %951 = vmatprep.subr.mxu0 0.0
        %952 = vmatpush2.xpose.msra.mxu0 0.0
        %953 = vmatprep.subr.mxu0 0.0
        %954 = vmatpush2.xpose.msra.mxu0 0.0
        %955 = vmatprep.subr.mxu0 0.0
        %956 = vmatpush2.xpose.msra.mxu0 0.0
        %957 = vmatprep.subr.mxu0 0.0
        %958 = vmatpush2.xpose.msra.mxu0 0.0
        %959 = vmatprep.subr.mxu0 0.0
        %960 = vmatpush2.xpose.msra.mxu0 0.0
        %961 = vmatprep.subr.mxu0 0.0
        %962 = vmatpush2.xpose.msra.mxu0 0.0
        %963 = vmatprep.subr.mxu0 0.0
        %964 = vmatpush2.xpose.msra.mxu0 0.0
        %965 = vmatprep.subr.mxu0 0.0
        %966 = vmatpush2.xpose.msra.mxu0 0.0
        %967 = vmatprep.subr.mxu0 0.0
        %968 = vmatpush2.xpose.msra.mxu0 0.0
        %969 = vmatprep.mubr.f32.mxu0 0.0
        %v970 = vand.u32 %v884, 4294901760
        %v971 = vsub.f32 %v884, %v970
        %v972 = vand.u32 %v971, 4294901760
        %v973 = vsub.f32 %v971, %v972
        %v974 = vand.u32 %v973, 4294901760
        %975 = vmatmul.mubr.f32.gmra.mxu0 %v974
        %v976 = vpop.f32.mrf.mxu0
        %v977 = vadd.f32 0.0, %v976
        %v978 = vpop.f32.mrf.mxu0
        %979 = vmatprep.mubr.f32.mxu0 0.0
        %v980 = vand.u32 %v887, 4294901760
        %v981 = vsub.f32 %v887, %v980
        %v982 = vand.u32 %v981, 4294901760
        %v983 = vsub.f32 %v981, %v982
        %v984 = vand.u32 %v983, 4294901760
        %985 = vmatmul.mubr.f32.gmra.mxu0 %v984
        %v986 = vpop.f32.mrf.mxu0
        %v987 = vadd.f32 0.0, %v986
        %v988 = vpop.f32.mrf.mxu0
        %989 = vdwg.mxu0
        %990 = vmatprep.subr.mxu0 0.0
        %991 = vmatpush1.xpose.msra.mxu0 0.0
        %992 = vmatprep.subr.mxu0 0.0
        %993 = vmatpush1.xpose.msra.mxu0 0.0
        %994 = vmatprep.subr.mxu0 0.0
        %995 = vmatpush1.xpose.msra.mxu0 0.0
        %996 = vmatprep.subr.mxu0 0.0
        %997 = vmatpush1.xpose.msra.mxu0 0.0
        %998 = vmatprep.subr.mxu0 0.0
        %999 = vmatpush1.xpose.msra.mxu0 0.0
        %1000 = vmatprep.subr.mxu0 0.0
        %1001 = vmatpush1.xpose.msra.mxu0 0.0
        %1002 = vmatprep.subr.mxu0 0.0
        %1003 = vmatpush1.xpose.msra.mxu0 0.0
        %1004 = vmatprep.subr.mxu0 0.0
        %1005 = vmatpush1.xpose.msra.mxu0 0.0
        %1006 = vmatprep.subr.mxu0 0.0
        %1007 = vmatpush1.xpose.msra.mxu0 0.0
        %1008 = vmatprep.subr.mxu0 0.0
        %1009 = vmatpush1.xpose.msra.mxu0 0.0
        %1010 = vmatprep.subr.mxu0 0.0
        %1011 = vmatpush1.xpose.msra.mxu0 0.0
        %1012 = vmatprep.subr.mxu0 0.0
        %1013 = vmatpush1.xpose.msra.mxu0 0.0
        %1014 = vmatprep.subr.mxu0 0.0
        %v1015 = vand.u32 %v899, 4294901760
        %v1016 = vsub.f32 %v899, %v1015
        %v1017 = vand.u32 %v1016, 4294901760
        %v1018 = vsub.f32 %v1016, %v1017
        %v1019 = vand.u32 %v1018, 4294901760
        %1020 = vmatpush1.xpose.msra.mxu0 %v1019
        %1021 = vmatprep.subr.mxu0 0.0
        %v1022 = vand.u32 %v896, 4294901760
        %v1023 = vsub.f32 %v896, %v1022
        %v1024 = vand.u32 %v1023, 4294901760
        %v1025 = vsub.f32 %v1023, %v1024
        %v1026 = vand.u32 %v1025, 4294901760
        %1027 = vmatpush1.xpose.msra.mxu0 %v1026
        %1028 = vmatprep.subr.mxu0 0.0
        %v1029 = vand.u32 %v893, 4294901760
        %v1030 = vsub.f32 %v893, %v1029
        %v1031 = vand.u32 %v1030, 4294901760
        %v1032 = vsub.f32 %v1030, %v1031
        %v1033 = vand.u32 %v1032, 4294901760
        %1034 = vmatpush1.xpose.msra.mxu0 %v1033
        %1035 = vmatprep.subr.mxu0 0.0
        %v1036 = vand.u32 %v890, 4294901760
        %v1037 = vsub.f32 %v890, %v1036
        %v1038 = vand.u32 %v1037, 4294901760
        %v1039 = vsub.f32 %v1037, %v1038
        %v1040 = vand.u32 %v1039, 4294901760
        %1041 = vmatpush1.xpose.msra.mxu0 %v1040
        %1042 = vmatprep.subr.mxu0 0.0
        %1043 = vmatpush2.xpose.msra.mxu0 0.0
        %1044 = vmatprep.subr.mxu0 0.0
        %1045 = vmatpush2.xpose.msra.mxu0 0.0
        %1046 = vmatprep.subr.mxu0 0.0
        %1047 = vmatpush2.xpose.msra.mxu0 0.0
        %1048 = vmatprep.subr.mxu0 0.0
        %1049 = vmatpush2.xpose.msra.mxu0 0.0
        %1050 = vmatprep.subr.mxu0 0.0
        %1051 = vmatpush2.xpose.msra.mxu0 0.0
        %1052 = vmatprep.subr.mxu0 0.0
        %1053 = vmatpush2.xpose.msra.mxu0 0.0
        %1054 = vmatprep.subr.mxu0 0.0
        %1055 = vmatpush2.xpose.msra.mxu0 0.0
        %1056 = vmatprep.subr.mxu0 0.0
        %1057 = vmatpush2.xpose.msra.mxu0 0.0
        %1058 = vmatprep.subr.mxu0 0.0
        %1059 = vmatpush2.xpose.msra.mxu0 0.0
        %1060 = vmatprep.subr.mxu0 0.0
        %1061 = vmatpush2.xpose.msra.mxu0 0.0
        %1062 = vmatprep.subr.mxu0 0.0
        %1063 = vmatpush2.xpose.msra.mxu0 0.0
        %1064 = vmatprep.subr.mxu0 0.0
        %1065 = vmatpush2.xpose.msra.mxu0 0.0
        %1066 = vmatprep.subr.mxu0 0.0
        %1067 = vmatpush2.xpose.msra.mxu0 0.0
        %1068 = vmatprep.subr.mxu0 0.0
        %1069 = vmatpush2.xpose.msra.mxu0 0.0
        %1070 = vmatprep.subr.mxu0 0.0
        %1071 = vmatpush2.xpose.msra.mxu0 0.0
        %1072 = vmatprep.subr.mxu0 0.0
        %1073 = vmatpush2.xpose.msra.mxu0 0.0
        %1074 = vmatprep.mubr.f32.mxu0 0.0
        %v1075 = vand.u32 %v884, 4294901760
        %1076 = vmatmul.mubr.f32.gmra.mxu0 %v1075
        %v1077 = vpop.f32.mrf.mxu0
        %v1078 = vadd.f32 %v977, %v1077
        %v1079 = vpop.f32.mrf.mxu0
        %1080 = vmatprep.mubr.f32.mxu0 0.0
        %v1081 = vand.u32 %v887, 4294901760
        %1082 = vmatmul.mubr.f32.gmra.mxu0 %v1081
        %v1083 = vpop.f32.mrf.mxu0
        %v1084 = vadd.f32 %v987, %v1083
        %v1085 = vpop.f32.mrf.mxu0
        %1086 = vdwg.mxu0
        %1087 = vmatprep.subr.mxu0 0.0
        %1088 = vmatpush1.xpose.msra.mxu0 0.0
        %1089 = vmatprep.subr.mxu0 0.0
        %1090 = vmatpush1.xpose.msra.mxu0 0.0
        %1091 = vmatprep.subr.mxu0 0.0
        %1092 = vmatpush1.xpose.msra.mxu0 0.0
        %1093 = vmatprep.subr.mxu0 0.0
        %1094 = vmatpush1.xpose.msra.mxu0 0.0
        %1095 = vmatprep.subr.mxu0 0.0
        %1096 = vmatpush1.xpose.msra.mxu0 0.0
        %1097 = vmatprep.subr.mxu0 0.0
        %1098 = vmatpush1.xpose.msra.mxu0 0.0
        %1099 = vmatprep.subr.mxu0 0.0
        %1100 = vmatpush1.xpose.msra.mxu0 0.0
        %1101 = vmatprep.subr.mxu0 0.0
        %1102 = vmatpush1.xpose.msra.mxu0 0.0
        %1103 = vmatprep.subr.mxu0 0.0
        %1104 = vmatpush1.xpose.msra.mxu0 0.0
        %1105 = vmatprep.subr.mxu0 0.0
        %1106 = vmatpush1.xpose.msra.mxu0 0.0
        %1107 = vmatprep.subr.mxu0 0.0
        %1108 = vmatpush1.xpose.msra.mxu0 0.0
        %1109 = vmatprep.subr.mxu0 0.0
        %1110 = vmatpush1.xpose.msra.mxu0 0.0
        %1111 = vmatprep.subr.mxu0 0.0
        %v1112 = vand.u32 %v899, 4294901760
        %v1113 = vsub.f32 %v899, %v1112
        %1114 = vmatpush1.xpose.msra.mxu0 %v1113
        %1115 = vmatprep.subr.mxu0 0.0
        %v1116 = vand.u32 %v896, 4294901760
        %v1117 = vsub.f32 %v896, %v1116
        %1118 = vmatpush1.xpose.msra.mxu0 %v1117
        %1119 = vmatprep.subr.mxu0 0.0
        %v1120 = vand.u32 %v893, 4294901760
        %v1121 = vsub.f32 %v893, %v1120
        %1122 = vmatpush1.xpose.msra.mxu0 %v1121
        %1123 = vmatprep.subr.mxu0 0.0
        %v1124 = vand.u32 %v890, 4294901760
        %v1125 = vsub.f32 %v890, %v1124
        %1126 = vmatpush1.xpose.msra.mxu0 %v1125
        %1127 = vmatprep.subr.mxu0 0.0
        %1128 = vmatpush2.xpose.msra.mxu0 0.0
        %1129 = vmatprep.subr.mxu0 0.0
        %1130 = vmatpush2.xpose.msra.mxu0 0.0
        %1131 = vmatprep.subr.mxu0 0.0
        %1132 = vmatpush2.xpose.msra.mxu0 0.0
        %1133 = vmatprep.subr.mxu0 0.0
        %1134 = vmatpush2.xpose.msra.mxu0 0.0
        %1135 = vmatprep.subr.mxu0 0.0
        %1136 = vmatpush2.xpose.msra.mxu0 0.0
        %1137 = vmatprep.subr.mxu0 0.0
        %1138 = vmatpush2.xpose.msra.mxu0 0.0
        %1139 = vmatprep.subr.mxu0 0.0
        %1140 = vmatpush2.xpose.msra.mxu0 0.0
        %1141 = vmatprep.subr.mxu0 0.0
        %1142 = vmatpush2.xpose.msra.mxu0 0.0
        %1143 = vmatprep.subr.mxu0 0.0
        %1144 = vmatpush2.xpose.msra.mxu0 0.0
        %1145 = vmatprep.subr.mxu0 0.0
        %1146 = vmatpush2.xpose.msra.mxu0 0.0
        %1147 = vmatprep.subr.mxu0 0.0
        %1148 = vmatpush2.xpose.msra.mxu0 0.0
        %1149 = vmatprep.subr.mxu0 0.0
        %1150 = vmatpush2.xpose.msra.mxu0 0.0
        %1151 = vmatprep.subr.mxu0 0.0
        %1152 = vmatpush2.xpose.msra.mxu0 0.0
        %1153 = vmatprep.subr.mxu0 0.0
        %1154 = vmatpush2.xpose.msra.mxu0 0.0
        %1155 = vmatprep.subr.mxu0 0.0
        %1156 = vmatpush2.xpose.msra.mxu0 0.0
        %1157 = vmatprep.subr.mxu0 0.0
        %1158 = vmatpush2.xpose.msra.mxu0 0.0
        %1159 = vmatprep.mubr.f32.mxu0 0.0
        %v1160 = vand.u32 %v884, 4294901760
        %v1161 = vsub.f32 %v884, %v1160
        %1162 = vmatmul.mubr.f32.gmra.mxu0 %v1161
        %v1163 = vpop.f32.mrf.mxu0
        %v1164 = vadd.f32 %v1078, %v1163
        %v1165 = vpop.f32.mrf.mxu0
        %1166 = vmatprep.mubr.f32.mxu0 0.0
        %v1167 = vand.u32 %v887, 4294901760
        %v1168 = vsub.f32 %v887, %v1167
        %1169 = vmatmul.mubr.f32.gmra.mxu0 %v1168
        %v1170 = vpop.f32.mrf.mxu0
        %v1171 = vadd.f32 %v1084, %v1170
        %v1172 = vpop.f32.mrf.mxu0
        %1173 = vdwg.mxu0
        %1174 = vmatprep.subr.mxu0 0.0
        %1175 = vmatpush1.xpose.msra.mxu0 0.0
        %1176 = vmatprep.subr.mxu0 0.0
        %1177 = vmatpush1.xpose.msra.mxu0 0.0
        %1178 = vmatprep.subr.mxu0 0.0
        %1179 = vmatpush1.xpose.msra.mxu0 0.0
        %1180 = vmatprep.subr.mxu0 0.0
        %1181 = vmatpush1.xpose.msra.mxu0 0.0
        %1182 = vmatprep.subr.mxu0 0.0
        %1183 = vmatpush1.xpose.msra.mxu0 0.0
        %1184 = vmatprep.subr.mxu0 0.0
        %1185 = vmatpush1.xpose.msra.mxu0 0.0
        %1186 = vmatprep.subr.mxu0 0.0
        %1187 = vmatpush1.xpose.msra.mxu0 0.0
        %1188 = vmatprep.subr.mxu0 0.0
        %1189 = vmatpush1.xpose.msra.mxu0 0.0
        %1190 = vmatprep.subr.mxu0 0.0
        %1191 = vmatpush1.xpose.msra.mxu0 0.0
        %1192 = vmatprep.subr.mxu0 0.0
        %1193 = vmatpush1.xpose.msra.mxu0 0.0
        %1194 = vmatprep.subr.mxu0 0.0
        %1195 = vmatpush1.xpose.msra.mxu0 0.0
        %1196 = vmatprep.subr.mxu0 0.0
        %1197 = vmatpush1.xpose.msra.mxu0 0.0
        %1198 = vmatprep.subr.mxu0 0.0
        %v1199 = vand.u32 %v899, 4294901760
        %1200 = vmatpush1.xpose.msra.mxu0 %v1199
        %1201 = vmatprep.subr.mxu0 0.0
        %v1202 = vand.u32 %v896, 4294901760
        %1203 = vmatpush1.xpose.msra.mxu0 %v1202
        %1204 = vmatprep.subr.mxu0 0.0
        %v1205 = vand.u32 %v893, 4294901760
        %1206 = vmatpush1.xpose.msra.mxu0 %v1205
        %1207 = vmatprep.subr.mxu0 0.0
        %v1208 = vand.u32 %v890, 4294901760
        %1209 = vmatpush1.xpose.msra.mxu0 %v1208
        %1210 = vmatprep.subr.mxu0 0.0
        %1211 = vmatpush2.xpose.msra.mxu0 0.0
        %1212 = vmatprep.subr.mxu0 0.0
        %1213 = vmatpush2.xpose.msra.mxu0 0.0
        %1214 = vmatprep.subr.mxu0 0.0
        %1215 = vmatpush2.xpose.msra.mxu0 0.0
        %1216 = vmatprep.subr.mxu0 0.0
        %1217 = vmatpush2.xpose.msra.mxu0 0.0
        %1218 = vmatprep.subr.mxu0 0.0
        %1219 = vmatpush2.xpose.msra.mxu0 0.0
        %1220 = vmatprep.subr.mxu0 0.0
        %1221 = vmatpush2.xpose.msra.mxu0 0.0
        %1222 = vmatprep.subr.mxu0 0.0
        %1223 = vmatpush2.xpose.msra.mxu0 0.0
        %1224 = vmatprep.subr.mxu0 0.0
        %1225 = vmatpush2.xpose.msra.mxu0 0.0
        %1226 = vmatprep.subr.mxu0 0.0
        %1227 = vmatpush2.xpose.msra.mxu0 0.0
        %1228 = vmatprep.subr.mxu0 0.0
        %1229 = vmatpush2.xpose.msra.mxu0 0.0
        %1230 = vmatprep.subr.mxu0 0.0
        %1231 = vmatpush2.xpose.msra.mxu0 0.0
        %1232 = vmatprep.subr.mxu0 0.0
        %1233 = vmatpush2.xpose.msra.mxu0 0.0
        %1234 = vmatprep.subr.mxu0 0.0
        %1235 = vmatpush2.xpose.msra.mxu0 0.0
        %1236 = vmatprep.subr.mxu0 0.0
        %1237 = vmatpush2.xpose.msra.mxu0 0.0
        %1238 = vmatprep.subr.mxu0 0.0
        %1239 = vmatpush2.xpose.msra.mxu0 0.0
        %1240 = vmatprep.subr.mxu0 0.0
        %1241 = vmatpush2.xpose.msra.mxu0 0.0
        %1242 = vmatprep.mubr.f32.mxu0 0.0
        %v1243 = vand.u32 %v884, 4294901760
        %v1244 = vsub.f32 %v884, %v1243
        %v1245 = vand.u32 %v1244, 4294901760
        %1246 = vmatmul.mubr.f32.gmra.mxu0 %v1245
        %v1247 = vpop.f32.mrf.mxu0
        %v1248 = vadd.f32 %v1164, %v1247
        %v1249 = vpop.f32.mrf.mxu0
        %1250 = vmatprep.mubr.f32.mxu0 0.0
        %v1251 = vand.u32 %v887, 4294901760
        %v1252 = vsub.f32 %v887, %v1251
        %v1253 = vand.u32 %v1252, 4294901760
        %1254 = vmatmul.mubr.f32.gmra.mxu0 %v1253
        %v1255 = vpop.f32.mrf.mxu0
        %v1256 = vadd.f32 %v1171, %v1255
        %v1257 = vpop.f32.mrf.mxu0
        %1258 = vdwg.mxu0
        %1259 = vmatprep.subr.mxu0 0.0
        %1260 = vmatpush1.xpose.msra.mxu0 0.0
        %1261 = vmatprep.subr.mxu0 0.0
        %1262 = vmatpush1.xpose.msra.mxu0 0.0
        %1263 = vmatprep.subr.mxu0 0.0
        %1264 = vmatpush1.xpose.msra.mxu0 0.0
        %1265 = vmatprep.subr.mxu0 0.0
        %1266 = vmatpush1.xpose.msra.mxu0 0.0
        %1267 = vmatprep.subr.mxu0 0.0
        %1268 = vmatpush1.xpose.msra.mxu0 0.0
        %1269 = vmatprep.subr.mxu0 0.0
        %1270 = vmatpush1.xpose.msra.mxu0 0.0
        %1271 = vmatprep.subr.mxu0 0.0
        %1272 = vmatpush1.xpose.msra.mxu0 0.0
        %1273 = vmatprep.subr.mxu0 0.0
        %1274 = vmatpush1.xpose.msra.mxu0 0.0
        %1275 = vmatprep.subr.mxu0 0.0
        %1276 = vmatpush1.xpose.msra.mxu0 0.0
        %1277 = vmatprep.subr.mxu0 0.0
        %1278 = vmatpush1.xpose.msra.mxu0 0.0
        %1279 = vmatprep.subr.mxu0 0.0
        %1280 = vmatpush1.xpose.msra.mxu0 0.0
        %1281 = vmatprep.subr.mxu0 0.0
        %1282 = vmatpush1.xpose.msra.mxu0 0.0
        %1283 = vmatprep.subr.mxu0 0.0
        %v1284 = vand.u32 %v899, 4294901760
        %v1285 = vsub.f32 %v899, %v1284
        %v1286 = vand.u32 %v1285, 4294901760
        %1287 = vmatpush1.xpose.msra.mxu0 %v1286
        %1288 = vmatprep.subr.mxu0 0.0
        %v1289 = vand.u32 %v896, 4294901760
        %v1290 = vsub.f32 %v896, %v1289
        %v1291 = vand.u32 %v1290, 4294901760
        %1292 = vmatpush1.xpose.msra.mxu0 %v1291
        %1293 = vmatprep.subr.mxu0 0.0
        %v1294 = vand.u32 %v893, 4294901760
        %v1295 = vsub.f32 %v893, %v1294
        %v1296 = vand.u32 %v1295, 4294901760
        %1297 = vmatpush1.xpose.msra.mxu0 %v1296
        %1298 = vmatprep.subr.mxu0 0.0
        %v1299 = vand.u32 %v890, 4294901760
        %v1300 = vsub.f32 %v890, %v1299
        %v1301 = vand.u32 %v1300, 4294901760
        %1302 = vmatpush1.xpose.msra.mxu0 %v1301
        %1303 = vmatprep.subr.mxu0 0.0
        %1304 = vmatpush2.xpose.msra.mxu0 0.0
        %1305 = vmatprep.subr.mxu0 0.0
        %1306 = vmatpush2.xpose.msra.mxu0 0.0
        %1307 = vmatprep.subr.mxu0 0.0
        %1308 = vmatpush2.xpose.msra.mxu0 0.0
        %1309 = vmatprep.subr.mxu0 0.0
        %1310 = vmatpush2.xpose.msra.mxu0 0.0
        %1311 = vmatprep.subr.mxu0 0.0
        %1312 = vmatpush2.xpose.msra.mxu0 0.0
        %1313 = vmatprep.subr.mxu0 0.0
        %1314 = vmatpush2.xpose.msra.mxu0 0.0
        %1315 = vmatprep.subr.mxu0 0.0
        %1316 = vmatpush2.xpose.msra.mxu0 0.0
        %1317 = vmatprep.subr.mxu0 0.0
        %1318 = vmatpush2.xpose.msra.mxu0 0.0
        %1319 = vmatprep.subr.mxu0 0.0
        %1320 = vmatpush2.xpose.msra.mxu0 0.0
        %1321 = vmatprep.subr.mxu0 0.0
        %1322 = vmatpush2.xpose.msra.mxu0 0.0
        %1323 = vmatprep.subr.mxu0 0.0
        %1324 = vmatpush2.xpose.msra.mxu0 0.0
        %1325 = vmatprep.subr.mxu0 0.0
        %1326 = vmatpush2.xpose.msra.mxu0 0.0
        %1327 = vmatprep.subr.mxu0 0.0
        %1328 = vmatpush2.xpose.msra.mxu0 0.0
        %1329 = vmatprep.subr.mxu0 0.0
        %1330 = vmatpush2.xpose.msra.mxu0 0.0
        %1331 = vmatprep.subr.mxu0 0.0
        %1332 = vmatpush2.xpose.msra.mxu0 0.0
        %1333 = vmatprep.subr.mxu0 0.0
        %1334 = vmatpush2.xpose.msra.mxu0 0.0
        %1335 = vmatprep.mubr.f32.mxu0 0.0
        %v1336 = vand.u32 %v884, 4294901760
        %1337 = vmatmul.mubr.f32.gmra.mxu0 %v1336
        %v1338 = vpop.f32.mrf.mxu0
        %v1339 = vadd.f32 %v1248, %v1338
        %v1340 = vpop.f32.mrf.mxu0
        %1341 = vmatprep.mubr.f32.mxu0 0.0
        %v1342 = vand.u32 %v887, 4294901760
        %1343 = vmatmul.mubr.f32.gmra.mxu0 %v1342
        %v1344 = vpop.f32.mrf.mxu0
        %v1345 = vadd.f32 %v1256, %v1344
        %v1346 = vpop.f32.mrf.mxu0
        %1347 = vdwg.mxu0
        %1348 = vmatprep.subr.mxu0 0.0
        %1349 = vmatpush1.xpose.msra.mxu0 0.0
        %1350 = vmatprep.subr.mxu0 0.0
        %1351 = vmatpush1.xpose.msra.mxu0 0.0
        %1352 = vmatprep.subr.mxu0 0.0
        %1353 = vmatpush1.xpose.msra.mxu0 0.0
        %1354 = vmatprep.subr.mxu0 0.0
        %1355 = vmatpush1.xpose.msra.mxu0 0.0
        %1356 = vmatprep.subr.mxu0 0.0
        %1357 = vmatpush1.xpose.msra.mxu0 0.0
        %1358 = vmatprep.subr.mxu0 0.0
        %1359 = vmatpush1.xpose.msra.mxu0 0.0
        %1360 = vmatprep.subr.mxu0 0.0
        %1361 = vmatpush1.xpose.msra.mxu0 0.0
        %1362 = vmatprep.subr.mxu0 0.0
        %1363 = vmatpush1.xpose.msra.mxu0 0.0
        %1364 = vmatprep.subr.mxu0 0.0
        %1365 = vmatpush1.xpose.msra.mxu0 0.0
        %1366 = vmatprep.subr.mxu0 0.0
        %1367 = vmatpush1.xpose.msra.mxu0 0.0
        %1368 = vmatprep.subr.mxu0 0.0
        %1369 = vmatpush1.xpose.msra.mxu0 0.0
        %1370 = vmatprep.subr.mxu0 0.0
        %1371 = vmatpush1.xpose.msra.mxu0 0.0
        %1372 = vmatprep.subr.mxu0 0.0
        %v1373 = vand.u32 %v899, 4294901760
        %1374 = vmatpush1.xpose.msra.mxu0 %v1373
        %1375 = vmatprep.subr.mxu0 0.0
        %v1376 = vand.u32 %v896, 4294901760
        %1377 = vmatpush1.xpose.msra.mxu0 %v1376
        %1378 = vmatprep.subr.mxu0 0.0
        %v1379 = vand.u32 %v893, 4294901760
        %1380 = vmatpush1.xpose.msra.mxu0 %v1379
        %1381 = vmatprep.subr.mxu0 0.0
        %v1382 = vand.u32 %v890, 4294901760
        %1383 = vmatpush1.xpose.msra.mxu0 %v1382
        %1384 = vmatprep.subr.mxu0 0.0
        %1385 = vmatpush2.xpose.msra.mxu0 0.0
        %1386 = vmatprep.subr.mxu0 0.0
        %1387 = vmatpush2.xpose.msra.mxu0 0.0
        %1388 = vmatprep.subr.mxu0 0.0
        %1389 = vmatpush2.xpose.msra.mxu0 0.0
        %1390 = vmatprep.subr.mxu0 0.0
        %1391 = vmatpush2.xpose.msra.mxu0 0.0
        %1392 = vmatprep.subr.mxu0 0.0
        %1393 = vmatpush2.xpose.msra.mxu0 0.0
        %1394 = vmatprep.subr.mxu0 0.0
        %1395 = vmatpush2.xpose.msra.mxu0 0.0
        %1396 = vmatprep.subr.mxu0 0.0
        %1397 = vmatpush2.xpose.msra.mxu0 0.0
        %1398 = vmatprep.subr.mxu0 0.0
        %1399 = vmatpush2.xpose.msra.mxu0 0.0
        %1400 = vmatprep.subr.mxu0 0.0
        %1401 = vmatpush2.xpose.msra.mxu0 0.0
        %1402 = vmatprep.subr.mxu0 0.0
        %1403 = vmatpush2.xpose.msra.mxu0 0.0
        %1404 = vmatprep.subr.mxu0 0.0
        %1405 = vmatpush2.xpose.msra.mxu0 0.0
        %1406 = vmatprep.subr.mxu0 0.0
        %1407 = vmatpush2.xpose.msra.mxu0 0.0
        %1408 = vmatprep.subr.mxu0 0.0
        %1409 = vmatpush2.xpose.msra.mxu0 0.0
        %1410 = vmatprep.subr.mxu0 0.0
        %1411 = vmatpush2.xpose.msra.mxu0 0.0
        %1412 = vmatprep.subr.mxu0 0.0
        %1413 = vmatpush2.xpose.msra.mxu0 0.0
        %1414 = vmatprep.subr.mxu0 0.0
        %1415 = vmatpush2.xpose.msra.mxu0 0.0
        %1416 = vmatprep.mubr.f32.mxu0 0.0
        %v1417 = vand.u32 %v884, 4294901760
        %1418 = vmatmul.mubr.f32.gmra.mxu0 %v1417
        %v1419 = vpop.f32.mrf.mxu0
        %v1420 = vadd.f32 %v1339, %v1419
        %v1421 = vpop.f32.mrf.mxu0
        %1422 = vmatprep.mubr.f32.mxu0 0.0
        %v1423 = vand.u32 %v887, 4294901760
        %1424 = vmatmul.mubr.f32.gmra.mxu0 %v1423
        %v1425 = vpop.f32.mrf.mxu0
        %v1426 = vadd.f32 %v1345, %v1425
        %v1427 = vpop.f32.mrf.mxu0
        %1428 = vdwg.mxu0
        %v1429 = vld [vmem:[%s339] sm:$0xff]
        %v1430 = vld [vmem:[%s339 + $0x8] sm:$0xff]
        %v1431 = vld [vmem:[%s339 + $0x10] sm:$0xff]
        %v1432 = vld [vmem:[%s339 + $0x18] sm:$0xff]
        %1433 = vrot.lane.b32.xlu0 %v876, 120
        %v1434 = vpop.permute.xlu0 %1433
        %1435 = vrot.lane.b32.xlu0 %v877, 120
        %v1436 = vpop.permute.xlu0 %1435
        %v1437 = vsel %vm882, %v1434, 0
        %v1439 = vsel %vm882, %v1436, 0
        %v1442 = vsel %vm882, %v1429, 0
        %v1445 = vsel %vm882, %v1430, 0
        %v1448 = vsel %vm882, %v1431, 0
        %v1451 = vsel %vm882, %v1432, 0
        %1453 = vmatprep.subr.mxu0 0.0
        %1454 = vmatpush1.xpose.msra.mxu0 0.0
        %1455 = vmatprep.subr.mxu0 0.0
        %1456 = vmatpush1.xpose.msra.mxu0 0.0
        %1457 = vmatprep.subr.mxu0 0.0
        %1458 = vmatpush1.xpose.msra.mxu0 0.0
        %1459 = vmatprep.subr.mxu0 0.0
        %1460 = vmatpush1.xpose.msra.mxu0 0.0
        %1461 = vmatprep.subr.mxu0 0.0
        %1462 = vmatpush1.xpose.msra.mxu0 0.0
        %1463 = vmatprep.subr.mxu0 0.0
        %1464 = vmatpush1.xpose.msra.mxu0 0.0
        %1465 = vmatprep.subr.mxu0 0.0
        %1466 = vmatpush1.xpose.msra.mxu0 0.0
        %1467 = vmatprep.subr.mxu0 0.0
        %1468 = vmatpush1.xpose.msra.mxu0 0.0
        %1469 = vmatprep.subr.mxu0 0.0
        %1470 = vmatpush1.xpose.msra.mxu0 0.0
        %1471 = vmatprep.subr.mxu0 0.0
        %1472 = vmatpush1.xpose.msra.mxu0 0.0
        %1473 = vmatprep.subr.mxu0 0.0
        %1474 = vmatpush1.xpose.msra.mxu0 0.0
        %1475 = vmatprep.subr.mxu0 0.0
        %1476 = vmatpush1.xpose.msra.mxu0 0.0
        %1477 = vmatprep.subr.mxu0 0.0
        %v1478 = vand.u32 %v1451, 4294901760
        %1479 = vmatpush1.xpose.msra.mxu0 %v1478
        %1480 = vmatprep.subr.mxu0 0.0
        %v1481 = vand.u32 %v1448, 4294901760
        %1482 = vmatpush1.xpose.msra.mxu0 %v1481
        %1483 = vmatprep.subr.mxu0 0.0
        %v1484 = vand.u32 %v1445, 4294901760
        %1485 = vmatpush1.xpose.msra.mxu0 %v1484
        %1486 = vmatprep.subr.mxu0 0.0
        %v1487 = vand.u32 %v1442, 4294901760
        %1488 = vmatpush1.xpose.msra.mxu0 %v1487
        %1489 = vmatprep.subr.mxu0 0.0
        %1490 = vmatpush2.xpose.msra.mxu0 0.0
        %1491 = vmatprep.subr.mxu0 0.0
        %1492 = vmatpush2.xpose.msra.mxu0 0.0
        %1493 = vmatprep.subr.mxu0 0.0
        %1494 = vmatpush2.xpose.msra.mxu0 0.0
        %1495 = vmatprep.subr.mxu0 0.0
        %1496 = vmatpush2.xpose.msra.mxu0 0.0
        %1497 = vmatprep.subr.mxu0 0.0
        %1498 = vmatpush2.xpose.msra.mxu0 0.0
        %1499 = vmatprep.subr.mxu0 0.0
        %1500 = vmatpush2.xpose.msra.mxu0 0.0
        %1501 = vmatprep.subr.mxu0 0.0
        %1502 = vmatpush2.xpose.msra.mxu0 0.0
        %1503 = vmatprep.subr.mxu0 0.0
        %1504 = vmatpush2.xpose.msra.mxu0 0.0
        %1505 = vmatprep.subr.mxu0 0.0
        %1506 = vmatpush2.xpose.msra.mxu0 0.0
        %1507 = vmatprep.subr.mxu0 0.0
        %1508 = vmatpush2.xpose.msra.mxu0 0.0
        %1509 = vmatprep.subr.mxu0 0.0
        %1510 = vmatpush2.xpose.msra.mxu0 0.0
        %1511 = vmatprep.subr.mxu0 0.0
        %1512 = vmatpush2.xpose.msra.mxu0 0.0
        %1513 = vmatprep.subr.mxu0 0.0
        %1514 = vmatpush2.xpose.msra.mxu0 0.0
        %1515 = vmatprep.subr.mxu0 0.0
        %1516 = vmatpush2.xpose.msra.mxu0 0.0
        %1517 = vmatprep.subr.mxu0 0.0
        %1518 = vmatpush2.xpose.msra.mxu0 0.0
        %1519 = vmatprep.subr.mxu0 0.0
        %1520 = vmatpush2.xpose.msra.mxu0 0.0
        %1521 = vmatprep.mubr.f32.mxu0 0.0
        %v1522 = vand.u32 %v1437, 4294901760
        %v1523 = vsub.f32 %v1437, %v1522
        %v1524 = vand.u32 %v1523, 4294901760
        %v1525 = vsub.f32 %v1523, %v1524
        %v1526 = vand.u32 %v1525, 4294901760
        %1527 = vmatmul.mubr.f32.gmra.mxu0 %v1526
        %v1528 = vpop.f32.mrf.mxu0
        %v1529 = vadd.f32 0.0, %v1528
        %v1530 = vpop.f32.mrf.mxu0
        %1531 = vmatprep.mubr.f32.mxu0 0.0
        %v1532 = vand.u32 %v1439, 4294901760
        %v1533 = vsub.f32 %v1439, %v1532
        %v1534 = vand.u32 %v1533, 4294901760
        %v1535 = vsub.f32 %v1533, %v1534
        %v1536 = vand.u32 %v1535, 4294901760
        %1537 = vmatmul.mubr.f32.gmra.mxu0 %v1536
        %v1538 = vpop.f32.mrf.mxu0
        %v1539 = vadd.f32 0.0, %v1538
        %v1540 = vpop.f32.mrf.mxu0
        %1541 = vdwg.mxu0
        %1542 = vmatprep.subr.mxu0 0.0
        %1543 = vmatpush1.xpose.msra.mxu0 0.0
        %1544 = vmatprep.subr.mxu0 0.0
        %1545 = vmatpush1.xpose.msra.mxu0 0.0
        %1546 = vmatprep.subr.mxu0 0.0
        %1547 = vmatpush1.xpose.msra.mxu0 0.0
        %1548 = vmatprep.subr.mxu0 0.0
        %1549 = vmatpush1.xpose.msra.mxu0 0.0
        %1550 = vmatprep.subr.mxu0 0.0
        %1551 = vmatpush1.xpose.msra.mxu0 0.0
        %1552 = vmatprep.subr.mxu0 0.0
        %1553 = vmatpush1.xpose.msra.mxu0 0.0
        %1554 = vmatprep.subr.mxu0 0.0
        %1555 = vmatpush1.xpose.msra.mxu0 0.0
        %1556 = vmatprep.subr.mxu0 0.0
        %1557 = vmatpush1.xpose.msra.mxu0 0.0
        %1558 = vmatprep.subr.mxu0 0.0
        %1559 = vmatpush1.xpose.msra.mxu0 0.0
        %1560 = vmatprep.subr.mxu0 0.0
        %1561 = vmatpush1.xpose.msra.mxu0 0.0
        %1562 = vmatprep.subr.mxu0 0.0
        %1563 = vmatpush1.xpose.msra.mxu0 0.0
        %1564 = vmatprep.subr.mxu0 0.0
        %1565 = vmatpush1.xpose.msra.mxu0 0.0
        %1566 = vmatprep.subr.mxu0 0.0
        %v1567 = vand.u32 %v1451, 4294901760
        %v1568 = vsub.f32 %v1451, %v1567
        %v1569 = vand.u32 %v1568, 4294901760
        %v1570 = vsub.f32 %v1568, %v1569
        %v1571 = vand.u32 %v1570, 4294901760
        %1572 = vmatpush1.xpose.msra.mxu0 %v1571
        %1573 = vmatprep.subr.mxu0 0.0
        %v1574 = vand.u32 %v1448, 4294901760
        %v1575 = vsub.f32 %v1448, %v1574
        %v1576 = vand.u32 %v1575, 4294901760
        %v1577 = vsub.f32 %v1575, %v1576
        %v1578 = vand.u32 %v1577, 4294901760
        %1579 = vmatpush1.xpose.msra.mxu0 %v1578
        %1580 = vmatprep.subr.mxu0 0.0
        %v1581 = vand.u32 %v1445, 4294901760
        %v1582 = vsub.f32 %v1445, %v1581
        %v1583 = vand.u32 %v1582, 4294901760
        %v1584 = vsub.f32 %v1582, %v1583
        %v1585 = vand.u32 %v1584, 4294901760
        %1586 = vmatpush1.xpose.msra.mxu0 %v1585
        %1587 = vmatprep.subr.mxu0 0.0
        %v1588 = vand.u32 %v1442, 4294901760
        %v1589 = vsub.f32 %v1442, %v1588
        %v1590 = vand.u32 %v1589, 4294901760
        %v1591 = vsub.f32 %v1589, %v1590
        %v1592 = vand.u32 %v1591, 4294901760
        %1593 = vmatpush1.xpose.msra.mxu0 %v1592
        %1594 = vmatprep.subr.mxu0 0.0
        %1595 = vmatpush2.xpose.msra.mxu0 0.0
        %1596 = vmatprep.subr.mxu0 0.0
        %1597 = vmatpush2.xpose.msra.mxu0 0.0
        %1598 = vmatprep.subr.mxu0 0.0
        %1599 = vmatpush2.xpose.msra.mxu0 0.0
        %1600 = vmatprep.subr.mxu0 0.0
        %1601 = vmatpush2.xpose.msra.mxu0 0.0
        %1602 = vmatprep.subr.mxu0 0.0
        %1603 = vmatpush2.xpose.msra.mxu0 0.0
        %1604 = vmatprep.subr.mxu0 0.0
        %1605 = vmatpush2.xpose.msra.mxu0 0.0
        %1606 = vmatprep.subr.mxu0 0.0
        %1607 = vmatpush2.xpose.msra.mxu0 0.0
        %1608 = vmatprep.subr.mxu0 0.0
        %1609 = vmatpush2.xpose.msra.mxu0 0.0
        %1610 = vmatprep.subr.mxu0 0.0
        %1611 = vmatpush2.xpose.msra.mxu0 0.0
        %1612 = vmatprep.subr.mxu0 0.0
        %1613 = vmatpush2.xpose.msra.mxu0 0.0
        %1614 = vmatprep.subr.mxu0 0.0
        %1615 = vmatpush2.xpose.msra.mxu0 0.0
        %1616 = vmatprep.subr.mxu0 0.0
        %1617 = vmatpush2.xpose.msra.mxu0 0.0
        %1618 = vmatprep.subr.mxu0 0.0
        %1619 = vmatpush2.xpose.msra.mxu0 0.0
        %1620 = vmatprep.subr.mxu0 0.0
        %1621 = vmatpush2.xpose.msra.mxu0 0.0
        %1622 = vmatprep.subr.mxu0 0.0
        %1623 = vmatpush2.xpose.msra.mxu0 0.0
        %1624 = vmatprep.subr.mxu0 0.0
        %1625 = vmatpush2.xpose.msra.mxu0 0.0
        %1626 = vmatprep.mubr.f32.mxu0 0.0
        %v1627 = vand.u32 %v1437, 4294901760
        %1628 = vmatmul.mubr.f32.gmra.mxu0 %v1627
        %v1629 = vpop.f32.mrf.mxu0
        %v1630 = vadd.f32 %v1529, %v1629
        %v1631 = vpop.f32.mrf.mxu0
        %1632 = vmatprep.mubr.f32.mxu0 0.0
        %v1633 = vand.u32 %v1439, 4294901760
        %1634 = vmatmul.mubr.f32.gmra.mxu0 %v1633
        %v1635 = vpop.f32.mrf.mxu0
        %v1636 = vadd.f32 %v1539, %v1635
        %v1637 = vpop.f32.mrf.mxu0
        %1638 = vdwg.mxu0
        %1639 = vmatprep.subr.mxu0 0.0
        %1640 = vmatpush1.xpose.msra.mxu0 0.0
        %1641 = vmatprep.subr.mxu0 0.0
        %1642 = vmatpush1.xpose.msra.mxu0 0.0
        %1643 = vmatprep.subr.mxu0 0.0
        %1644 = vmatpush1.xpose.msra.mxu0 0.0
        %1645 = vmatprep.subr.mxu0 0.0
        %1646 = vmatpush1.xpose.msra.mxu0 0.0
        %1647 = vmatprep.subr.mxu0 0.0
        %1648 = vmatpush1.xpose.msra.mxu0 0.0
        %1649 = vmatprep.subr.mxu0 0.0
        %1650 = vmatpush1.xpose.msra.mxu0 0.0
        %1651 = vmatprep.subr.mxu0 0.0
        %1652 = vmatpush1.xpose.msra.mxu0 0.0
        %1653 = vmatprep.subr.mxu0 0.0
        %1654 = vmatpush1.xpose.msra.mxu0 0.0
        %1655 = vmatprep.subr.mxu0 0.0
        %1656 = vmatpush1.xpose.msra.mxu0 0.0
        %1657 = vmatprep.subr.mxu0 0.0
        %1658 = vmatpush1.xpose.msra.mxu0 0.0
        %1659 = vmatprep.subr.mxu0 0.0
        %1660 = vmatpush1.xpose.msra.mxu0 0.0
        %1661 = vmatprep.subr.mxu0 0.0
        %1662 = vmatpush1.xpose.msra.mxu0 0.0
        %1663 = vmatprep.subr.mxu0 0.0
        %v1664 = vand.u32 %v1451, 4294901760
        %v1665 = vsub.f32 %v1451, %v1664
        %1666 = vmatpush1.xpose.msra.mxu0 %v1665
        %1667 = vmatprep.subr.mxu0 0.0
        %v1668 = vand.u32 %v1448, 4294901760
        %v1669 = vsub.f32 %v1448, %v1668
        %1670 = vmatpush1.xpose.msra.mxu0 %v1669
        %1671 = vmatprep.subr.mxu0 0.0
        %v1672 = vand.u32 %v1445, 4294901760
        %v1673 = vsub.f32 %v1445, %v1672
        %1674 = vmatpush1.xpose.msra.mxu0 %v1673
        %1675 = vmatprep.subr.mxu0 0.0
        %v1676 = vand.u32 %v1442, 4294901760
        %v1677 = vsub.f32 %v1442, %v1676
        %1678 = vmatpush1.xpose.msra.mxu0 %v1677
        %1679 = vmatprep.subr.mxu0 0.0
        %1680 = vmatpush2.xpose.msra.mxu0 0.0
        %1681 = vmatprep.subr.mxu0 0.0
        %1682 = vmatpush2.xpose.msra.mxu0 0.0
        %1683 = vmatprep.subr.mxu0 0.0
        %1684 = vmatpush2.xpose.msra.mxu0 0.0
        %1685 = vmatprep.subr.mxu0 0.0
        %1686 = vmatpush2.xpose.msra.mxu0 0.0
        %1687 = vmatprep.subr.mxu0 0.0
        %1688 = vmatpush2.xpose.msra.mxu0 0.0
        %1689 = vmatprep.subr.mxu0 0.0
        %1690 = vmatpush2.xpose.msra.mxu0 0.0
        %1691 = vmatprep.subr.mxu0 0.0
        %1692 = vmatpush2.xpose.msra.mxu0 0.0
        %1693 = vmatprep.subr.mxu0 0.0
        %1694 = vmatpush2.xpose.msra.mxu0 0.0
        %1695 = vmatprep.subr.mxu0 0.0
        %1696 = vmatpush2.xpose.msra.mxu0 0.0
        %1697 = vmatprep.subr.mxu0 0.0
        %1698 = vmatpush2.xpose.msra.mxu0 0.0
        %1699 = vmatprep.subr.mxu0 0.0
        %1700 = vmatpush2.xpose.msra.mxu0 0.0
        %1701 = vmatprep.subr.mxu0 0.0
        %1702 = vmatpush2.xpose.msra.mxu0 0.0
        %1703 = vmatprep.subr.mxu0 0.0
        %1704 = vmatpush2.xpose.msra.mxu0 0.0
        %1705 = vmatprep.subr.mxu0 0.0
        %1706 = vmatpush2.xpose.msra.mxu0 0.0
        %1707 = vmatprep.subr.mxu0 0.0
        %1708 = vmatpush2.xpose.msra.mxu0 0.0
        %1709 = vmatprep.subr.mxu0 0.0
        %1710 = vmatpush2.xpose.msra.mxu0 0.0
        %1711 = vmatprep.mubr.f32.mxu0 0.0
        %v1712 = vand.u32 %v1437, 4294901760
        %v1713 = vsub.f32 %v1437, %v1712
        %1714 = vmatmul.mubr.f32.gmra.mxu0 %v1713
        %v1715 = vpop.f32.mrf.mxu0
        %v1716 = vadd.f32 %v1630, %v1715
        %v1717 = vpop.f32.mrf.mxu0
        %1718 = vmatprep.mubr.f32.mxu0 0.0
        %v1719 = vand.u32 %v1439, 4294901760
        %v1720 = vsub.f32 %v1439, %v1719
        %1721 = vmatmul.mubr.f32.gmra.mxu0 %v1720
        %v1722 = vpop.f32.mrf.mxu0
        %v1723 = vadd.f32 %v1636, %v1722
        %v1724 = vpop.f32.mrf.mxu0
        %1725 = vdwg.mxu0
        %1726 = vmatprep.subr.mxu0 0.0
        %1727 = vmatpush1.xpose.msra.mxu0 0.0
        %1728 = vmatprep.subr.mxu0 0.0
        %1729 = vmatpush1.xpose.msra.mxu0 0.0
        %1730 = vmatprep.subr.mxu0 0.0
        %1731 = vmatpush1.xpose.msra.mxu0 0.0
        %1732 = vmatprep.subr.mxu0 0.0
        %1733 = vmatpush1.xpose.msra.mxu0 0.0
        %1734 = vmatprep.subr.mxu0 0.0
        %1735 = vmatpush1.xpose.msra.mxu0 0.0
        %1736 = vmatprep.subr.mxu0 0.0
        %1737 = vmatpush1.xpose.msra.mxu0 0.0
        %1738 = vmatprep.subr.mxu0 0.0
        %1739 = vmatpush1.xpose.msra.mxu0 0.0
        %1740 = vmatprep.subr.mxu0 0.0
        %1741 = vmatpush1.xpose.msra.mxu0 0.0
        %1742 = vmatprep.subr.mxu0 0.0
        %1743 = vmatpush1.xpose.msra.mxu0 0.0
        %1744 = vmatprep.subr.mxu0 0.0
        %1745 = vmatpush1.xpose.msra.mxu0 0.0
        %1746 = vmatprep.subr.mxu0 0.0
        %1747 = vmatpush1.xpose.msra.mxu0 0.0
        %1748 = vmatprep.subr.mxu0 0.0
        %1749 = vmatpush1.xpose.msra.mxu0 0.0
        %1750 = vmatprep.subr.mxu0 0.0
        %v1751 = vand.u32 %v1451, 4294901760
        %1752 = vmatpush1.xpose.msra.mxu0 %v1751
        %1753 = vmatprep.subr.mxu0 0.0
        %v1754 = vand.u32 %v1448, 4294901760
        %1755 = vmatpush1.xpose.msra.mxu0 %v1754
        %1756 = vmatprep.subr.mxu0 0.0
        %v1757 = vand.u32 %v1445, 4294901760
        %1758 = vmatpush1.xpose.msra.mxu0 %v1757
        %1759 = vmatprep.subr.mxu0 0.0
        %v1760 = vand.u32 %v1442, 4294901760
        %1761 = vmatpush1.xpose.msra.mxu0 %v1760
        %1762 = vmatprep.subr.mxu0 0.0
        %1763 = vmatpush2.xpose.msra.mxu0 0.0
        %1764 = vmatprep.subr.mxu0 0.0
        %1765 = vmatpush2.xpose.msra.mxu0 0.0
        %1766 = vmatprep.subr.mxu0 0.0
        %1767 = vmatpush2.xpose.msra.mxu0 0.0
        %1768 = vmatprep.subr.mxu0 0.0
        %1769 = vmatpush2.xpose.msra.mxu0 0.0
        %1770 = vmatprep.subr.mxu0 0.0
        %1771 = vmatpush2.xpose.msra.mxu0 0.0
        %1772 = vmatprep.subr.mxu0 0.0
        %1773 = vmatpush2.xpose.msra.mxu0 0.0
        %1774 = vmatprep.subr.mxu0 0.0
        %1775 = vmatpush2.xpose.msra.mxu0 0.0
        %1776 = vmatprep.subr.mxu0 0.0
        %1777 = vmatpush2.xpose.msra.mxu0 0.0
        %1778 = vmatprep.subr.mxu0 0.0
        %1779 = vmatpush2.xpose.msra.mxu0 0.0
        %1780 = vmatprep.subr.mxu0 0.0
        %1781 = vmatpush2.xpose.msra.mxu0 0.0
        %1782 = vmatprep.subr.mxu0 0.0
        %1783 = vmatpush2.xpose.msra.mxu0 0.0
        %1784 = vmatprep.subr.mxu0 0.0
        %1785 = vmatpush2.xpose.msra.mxu0 0.0
        %1786 = vmatprep.subr.mxu0 0.0
        %1787 = vmatpush2.xpose.msra.mxu0 0.0
        %1788 = vmatprep.subr.mxu0 0.0
        %1789 = vmatpush2.xpose.msra.mxu0 0.0
        %1790 = vmatprep.subr.mxu0 0.0
        %1791 = vmatpush2.xpose.msra.mxu0 0.0
        %1792 = vmatprep.subr.mxu0 0.0
        %1793 = vmatpush2.xpose.msra.mxu0 0.0
        %1794 = vmatprep.mubr.f32.mxu0 0.0
        %v1795 = vand.u32 %v1437, 4294901760
        %v1796 = vsub.f32 %v1437, %v1795
        %v1797 = vand.u32 %v1796, 4294901760
        %1798 = vmatmul.mubr.f32.gmra.mxu0 %v1797
        %v1799 = vpop.f32.mrf.mxu0
        %v1800 = vadd.f32 %v1716, %v1799
        %v1801 = vpop.f32.mrf.mxu0
        %1802 = vmatprep.mubr.f32.mxu0 0.0
        %v1803 = vand.u32 %v1439, 4294901760
        %v1804 = vsub.f32 %v1439, %v1803
        %v1805 = vand.u32 %v1804, 4294901760
        %1806 = vmatmul.mubr.f32.gmra.mxu0 %v1805
        %v1807 = vpop.f32.mrf.mxu0
        %v1808 = vadd.f32 %v1723, %v1807
        %v1809 = vpop.f32.mrf.mxu0
        %1810 = vdwg.mxu0
        %1811 = vmatprep.subr.mxu0 0.0
        %1812 = vmatpush1.xpose.msra.mxu0 0.0
        %1813 = vmatprep.subr.mxu0 0.0
        %1814 = vmatpush1.xpose.msra.mxu0 0.0
        %1815 = vmatprep.subr.mxu0 0.0
        %1816 = vmatpush1.xpose.msra.mxu0 0.0
        %1817 = vmatprep.subr.mxu0 0.0
        %1818 = vmatpush1.xpose.msra.mxu0 0.0
        %1819 = vmatprep.subr.mxu0 0.0
        %1820 = vmatpush1.xpose.msra.mxu0 0.0
        %1821 = vmatprep.subr.mxu0 0.0
        %1822 = vmatpush1.xpose.msra.mxu0 0.0
        %1823 = vmatprep.subr.mxu0 0.0
        %1824 = vmatpush1.xpose.msra.mxu0 0.0
        %1825 = vmatprep.subr.mxu0 0.0
        %1826 = vmatpush1.xpose.msra.mxu0 0.0
        %1827 = vmatprep.subr.mxu0 0.0
        %1828 = vmatpush1.xpose.msra.mxu0 0.0
        %1829 = vmatprep.subr.mxu0 0.0
        %1830 = vmatpush1.xpose.msra.mxu0 0.0
        %1831 = vmatprep.subr.mxu0 0.0
        %1832 = vmatpush1.xpose.msra.mxu0 0.0
        %1833 = vmatprep.subr.mxu0 0.0
        %1834 = vmatpush1.xpose.msra.mxu0 0.0
        %1835 = vmatprep.subr.mxu0 0.0
        %v1836 = vand.u32 %v1451, 4294901760
        %v1837 = vsub.f32 %v1451, %v1836
        %v1838 = vand.u32 %v1837, 4294901760
        %1839 = vmatpush1.xpose.msra.mxu0 %v1838
        %1840 = vmatprep.subr.mxu0 0.0
        %v1841 = vand.u32 %v1448, 4294901760
        %v1842 = vsub.f32 %v1448, %v1841
        %v1843 = vand.u32 %v1842, 4294901760
        %1844 = vmatpush1.xpose.msra.mxu0 %v1843
        %1845 = vmatprep.subr.mxu0 0.0
        %v1846 = vand.u32 %v1445, 4294901760
        %v1847 = vsub.f32 %v1445, %v1846
        %v1848 = vand.u32 %v1847, 4294901760
        %1849 = vmatpush1.xpose.msra.mxu0 %v1848
        %1850 = vmatprep.subr.mxu0 0.0
        %v1851 = vand.u32 %v1442, 4294901760
        %v1852 = vsub.f32 %v1442, %v1851
        %v1853 = vand.u32 %v1852, 4294901760
        %1854 = vmatpush1.xpose.msra.mxu0 %v1853
        %1855 = vmatprep.subr.mxu0 0.0
        %1856 = vmatpush2.xpose.msra.mxu0 0.0
        %1857 = vmatprep.subr.mxu0 0.0
        %1858 = vmatpush2.xpose.msra.mxu0 0.0
        %1859 = vmatprep.subr.mxu0 0.0
        %1860 = vmatpush2.xpose.msra.mxu0 0.0
        %1861 = vmatprep.subr.mxu0 0.0
        %1862 = vmatpush2.xpose.msra.mxu0 0.0
        %1863 = vmatprep.subr.mxu0 0.0
        %1864 = vmatpush2.xpose.msra.mxu0 0.0
        %1865 = vmatprep.subr.mxu0 0.0
        %1866 = vmatpush2.xpose.msra.mxu0 0.0
        %1867 = vmatprep.subr.mxu0 0.0
        %1868 = vmatpush2.xpose.msra.mxu0 0.0
        %1869 = vmatprep.subr.mxu0 0.0
        %1870 = vmatpush2.xpose.msra.mxu0 0.0
        %1871 = vmatprep.subr.mxu0 0.0
        %1872 = vmatpush2.xpose.msra.mxu0 0.0
        %1873 = vmatprep.subr.mxu0 0.0
        %1874 = vmatpush2.xpose.msra.mxu0 0.0
        %1875 = vmatprep.subr.mxu0 0.0
        %1876 = vmatpush2.xpose.msra.mxu0 0.0
        %1877 = vmatprep.subr.mxu0 0.0
        %1878 = vmatpush2.xpose.msra.mxu0 0.0
        %1879 = vmatprep.subr.mxu0 0.0
        %1880 = vmatpush2.xpose.msra.mxu0 0.0
        %1881 = vmatprep.subr.mxu0 0.0
        %1882 = vmatpush2.xpose.msra.mxu0 0.0
        %1883 = vmatprep.subr.mxu0 0.0
        %1884 = vmatpush2.xpose.msra.mxu0 0.0
        %1885 = vmatprep.subr.mxu0 0.0
        %1886 = vmatpush2.xpose.msra.mxu0 0.0
        %1887 = vmatprep.mubr.f32.mxu0 0.0
        %v1888 = vand.u32 %v1437, 4294901760
        %1889 = vmatmul.mubr.f32.gmra.mxu0 %v1888
        %v1890 = vpop.f32.mrf.mxu0
        %v1891 = vadd.f32 %v1800, %v1890
        %v1892 = vpop.f32.mrf.mxu0
        %1893 = vmatprep.mubr.f32.mxu0 0.0
        %v1894 = vand.u32 %v1439, 4294901760
        %1895 = vmatmul.mubr.f32.gmra.mxu0 %v1894
        %v1896 = vpop.f32.mrf.mxu0
        %v1897 = vadd.f32 %v1808, %v1896
        %v1898 = vpop.f32.mrf.mxu0
        %1899 = vdwg.mxu0
        %1900 = vmatprep.subr.mxu0 0.0
        %1901 = vmatpush1.xpose.msra.mxu0 0.0
        %1902 = vmatprep.subr.mxu0 0.0
        %1903 = vmatpush1.xpose.msra.mxu0 0.0
        %1904 = vmatprep.subr.mxu0 0.0
        %1905 = vmatpush1.xpose.msra.mxu0 0.0
        %1906 = vmatprep.subr.mxu0 0.0
        %1907 = vmatpush1.xpose.msra.mxu0 0.0
        %1908 = vmatprep.subr.mxu0 0.0
        %1909 = vmatpush1.xpose.msra.mxu0 0.0
        %1910 = vmatprep.subr.mxu0 0.0
        %1911 = vmatpush1.xpose.msra.mxu0 0.0
        %1912 = vmatprep.subr.mxu0 0.0
        %1913 = vmatpush1.xpose.msra.mxu0 0.0
        %1914 = vmatprep.subr.mxu0 0.0
        %1915 = vmatpush1.xpose.msra.mxu0 0.0
        %1916 = vmatprep.subr.mxu0 0.0
        %1917 = vmatpush1.xpose.msra.mxu0 0.0
        %1918 = vmatprep.subr.mxu0 0.0
        %1919 = vmatpush1.xpose.msra.mxu0 0.0
        %1920 = vmatprep.subr.mxu0 0.0
        %1921 = vmatpush1.xpose.msra.mxu0 0.0
        %1922 = vmatprep.subr.mxu0 0.0
        %1923 = vmatpush1.xpose.msra.mxu0 0.0
        %1924 = vmatprep.subr.mxu0 0.0
        %v1925 = vand.u32 %v1451, 4294901760
        %1926 = vmatpush1.xpose.msra.mxu0 %v1925
        %1927 = vmatprep.subr.mxu0 0.0
        %v1928 = vand.u32 %v1448, 4294901760
        %1929 = vmatpush1.xpose.msra.mxu0 %v1928
        %1930 = vmatprep.subr.mxu0 0.0
        %v1931 = vand.u32 %v1445, 4294901760
        %1932 = vmatpush1.xpose.msra.mxu0 %v1931
        %1933 = vmatprep.subr.mxu0 0.0
        %v1934 = vand.u32 %v1442, 4294901760
        %1935 = vmatpush1.xpose.msra.mxu0 %v1934
        %1936 = vmatprep.subr.mxu0 0.0
        %1937 = vmatpush2.xpose.msra.mxu0 0.0
        %1938 = vmatprep.subr.mxu0 0.0
        %1939 = vmatpush2.xpose.msra.mxu0 0.0
        %1940 = vmatprep.subr.mxu0 0.0
        %1941 = vmatpush2.xpose.msra.mxu0 0.0
        %1942 = vmatprep.subr.mxu0 0.0
        %1943 = vmatpush2.xpose.msra.mxu0 0.0
        %1944 = vmatprep.subr.mxu0 0.0
        %1945 = vmatpush2.xpose.msra.mxu0 0.0
        %1946 = vmatprep.subr.mxu0 0.0
        %1947 = vmatpush2.xpose.msra.mxu0 0.0
        %1948 = vmatprep.subr.mxu0 0.0
        %1949 = vmatpush2.xpose.msra.mxu0 0.0
        %1950 = vmatprep.subr.mxu0 0.0
        %1951 = vmatpush2.xpose.msra.mxu0 0.0
        %1952 = vmatprep.subr.mxu0 0.0
        %1953 = vmatpush2.xpose.msra.mxu0 0.0
        %1954 = vmatprep.subr.mxu0 0.0
        %1955 = vmatpush2.xpose.msra.mxu0 0.0
        %1956 = vmatprep.subr.mxu0 0.0
        %1957 = vmatpush2.xpose.msra.mxu0 0.0
        %1958 = vmatprep.subr.mxu0 0.0
        %1959 = vmatpush2.xpose.msra.mxu0 0.0
        %1960 = vmatprep.subr.mxu0 0.0
        %1961 = vmatpush2.xpose.msra.mxu0 0.0
        %1962 = vmatprep.subr.mxu0 0.0
        %1963 = vmatpush2.xpose.msra.mxu0 0.0
        %1964 = vmatprep.subr.mxu0 0.0
        %1965 = vmatpush2.xpose.msra.mxu0 0.0
        %1966 = vmatprep.subr.mxu0 0.0
        %1967 = vmatpush2.xpose.msra.mxu0 0.0
        %1968 = vmatprep.mubr.f32.mxu0 0.0
        %v1969 = vand.u32 %v1437, 4294901760
        %1970 = vmatmul.mubr.f32.gmra.mxu0 %v1969
        %v1971 = vpop.f32.mrf.mxu0
        %v1972 = vadd.f32 %v1891, %v1971
        %v1973 = vpop.f32.mrf.mxu0
        %1974 = vmatprep.mubr.f32.mxu0 0.0
        %v1975 = vand.u32 %v1439, 4294901760
        %1976 = vmatmul.mubr.f32.gmra.mxu0 %v1975
        %v1977 = vpop.f32.mrf.mxu0
        %v1978 = vadd.f32 %v1897, %v1977
        %v1979 = vpop.f32.mrf.mxu0
        %1980 = vdwg.mxu0
        %v1981 = vld [vmem:[%s1] sm:$0xff]
        %v1982 = vld [vmem:[%s1 + $0x8] sm:$0xff]
        %v1983 = vld [vmem:[%s1 + $0x10] sm:$0xff]
        %v1984 = vld [vmem:[%s1 + $0x18] sm:$0xff]
        %v1985 = vld [vmem:[%s2] sm:$0x1]
        %v1987 = vlaneseq
        %v1988 = vshrl.u32 %v1987, 7
        %v1989 = vsub.s32 0, %v1988
        %v1990 = vrot.slane %v1985, %v1989
        %v1993 = vsel %vm345, %v1981, 0
        %v1996 = vsel %vm345, %v1982, 0
        %v1999 = vsel %vm345, %v1983, 0
        %v2002 = vsel %vm345, %v1984, 0
        %2004 = vmatprep.subr.mxu0 0.0
        %2005 = vmatpush1.xpose.msra.mxu0 0.0
        %2006 = vmatprep.subr.mxu0 0.0
        %2007 = vmatpush1.xpose.msra.mxu0 0.0
        %2008 = vmatprep.subr.mxu0 0.0
        %2009 = vmatpush1.xpose.msra.mxu0 0.0
        %2010 = vmatprep.subr.mxu0 0.0
        %2011 = vmatpush1.xpose.msra.mxu0 0.0
        %2012 = vmatprep.subr.mxu0 0.0
        %2013 = vmatpush1.xpose.msra.mxu0 0.0
        %2014 = vmatprep.subr.mxu0 0.0
        %2015 = vmatpush1.xpose.msra.mxu0 0.0
        %2016 = vmatprep.subr.mxu0 0.0
        %2017 = vmatpush1.xpose.msra.mxu0 0.0
        %2018 = vmatprep.subr.mxu0 0.0
        %2019 = vmatpush1.xpose.msra.mxu0 0.0
        %2020 = vmatprep.subr.mxu0 0.0
        %2021 = vmatpush1.xpose.msra.mxu0 0.0
        %2022 = vmatprep.subr.mxu0 0.0
        %2023 = vmatpush1.xpose.msra.mxu0 0.0
        %2024 = vmatprep.subr.mxu0 0.0
        %2025 = vmatpush1.xpose.msra.mxu0 0.0
        %2026 = vmatprep.subr.mxu0 0.0
        %2027 = vmatpush1.xpose.msra.mxu0 0.0
        %2028 = vmatprep.subr.mxu0 0.0
        %v2029 = vand.u32 %v2002, 4294901760
        %2030 = vmatpush1.xpose.msra.mxu0 %v2029
        %2031 = vmatprep.subr.mxu0 0.0
        %v2032 = vand.u32 %v1999, 4294901760
        %2033 = vmatpush1.xpose.msra.mxu0 %v2032
        %2034 = vmatprep.subr.mxu0 0.0
        %v2035 = vand.u32 %v1996, 4294901760
        %2036 = vmatpush1.xpose.msra.mxu0 %v2035
        %2037 = vmatprep.subr.mxu0 0.0
        %v2038 = vand.u32 %v1993, 4294901760
        %2039 = vmatpush1.xpose.msra.mxu0 %v2038
        %2040 = vmatprep.subr.mxu0 0.0
        %2041 = vmatpush2.xpose.msra.mxu0 0.0
        %2042 = vmatprep.subr.mxu0 0.0
        %2043 = vmatpush2.xpose.msra.mxu0 0.0
        %2044 = vmatprep.subr.mxu0 0.0
        %2045 = vmatpush2.xpose.msra.mxu0 0.0
        %2046 = vmatprep.subr.mxu0 0.0
        %2047 = vmatpush2.xpose.msra.mxu0 0.0
        %2048 = vmatprep.subr.mxu0 0.0
        %2049 = vmatpush2.xpose.msra.mxu0 0.0
        %2050 = vmatprep.subr.mxu0 0.0
        %2051 = vmatpush2.xpose.msra.mxu0 0.0
        %2052 = vmatprep.subr.mxu0 0.0
        %2053 = vmatpush2.xpose.msra.mxu0 0.0
        %2054 = vmatprep.subr.mxu0 0.0
        %2055 = vmatpush2.xpose.msra.mxu0 0.0
        %2056 = vmatprep.subr.mxu0 0.0
        %2057 = vmatpush2.xpose.msra.mxu0 0.0
        %2058 = vmatprep.subr.mxu0 0.0
        %2059 = vmatpush2.xpose.msra.mxu0 0.0
        %2060 = vmatprep.subr.mxu0 0.0
        %2061 = vmatpush2.xpose.msra.mxu0 0.0
        %2062 = vmatprep.subr.mxu0 0.0
        %2063 = vmatpush2.xpose.msra.mxu0 0.0
        %2064 = vmatprep.subr.mxu0 0.0
        %2065 = vmatpush2.xpose.msra.mxu0 0.0
        %2066 = vmatprep.subr.mxu0 0.0
        %2067 = vmatpush2.xpose.msra.mxu0 0.0
        %2068 = vmatprep.subr.mxu0 0.0
        %2069 = vmatpush2.xpose.msra.mxu0 0.0
        %2070 = vmatprep.subr.mxu0 0.0
        %2071 = vmatpush2.xpose.msra.mxu0 0.0
        %2072 = vmatprep.mubr.f32.mxu0 0.0
        %v2073 = vand.u32 %v347, 4294901760
        %v2074 = vsub.f32 %v347, %v2073
        %v2075 = vand.u32 %v2074, 4294901760
        %v2076 = vsub.f32 %v2074, %v2075
        %v2077 = vand.u32 %v2076, 4294901760
        %2078 = vmatmul.mubr.f32.gmra.mxu0 %v2077
        %v2079 = vpop.f32.mrf.mxu0
        %v2080 = vadd.f32 %v1990, %v2079
        %v2081 = vpop.f32.mrf.mxu0
        %2082 = vmatprep.mubr.f32.mxu0 0.0
        %v2083 = vand.u32 %v350, 4294901760
        %v2084 = vsub.f32 %v350, %v2083
        %v2085 = vand.u32 %v2084, 4294901760
        %v2086 = vsub.f32 %v2084, %v2085
        %v2087 = vand.u32 %v2086, 4294901760
        %2088 = vmatmul.mubr.f32.gmra.mxu0 %v2087
        %v2089 = vpop.f32.mrf.mxu0
        %v2090 = vadd.f32 %v1990, %v2089
        %v2091 = vpop.f32.mrf.mxu0
        %2092 = vdwg.mxu0
        %2093 = vmatprep.subr.mxu0 0.0
        %2094 = vmatpush1.xpose.msra.mxu0 0.0
        %2095 = vmatprep.subr.mxu0 0.0
        %2096 = vmatpush1.xpose.msra.mxu0 0.0
        %2097 = vmatprep.subr.mxu0 0.0
        %2098 = vmatpush1.xpose.msra.mxu0 0.0
        %2099 = vmatprep.subr.mxu0 0.0
        %2100 = vmatpush1.xpose.msra.mxu0 0.0
        %2101 = vmatprep.subr.mxu0 0.0
        %2102 = vmatpush1.xpose.msra.mxu0 0.0
        %2103 = vmatprep.subr.mxu0 0.0
        %2104 = vmatpush1.xpose.msra.mxu0 0.0
        %2105 = vmatprep.subr.mxu0 0.0
        %2106 = vmatpush1.xpose.msra.mxu0 0.0
        %2107 = vmatprep.subr.mxu0 0.0
        %2108 = vmatpush1.xpose.msra.mxu0 0.0
        %2109 = vmatprep.subr.mxu0 0.0
        %2110 = vmatpush1.xpose.msra.mxu0 0.0
        %2111 = vmatprep.subr.mxu0 0.0
        %2112 = vmatpush1.xpose.msra.mxu0 0.0
        %2113 = vmatprep.subr.mxu0 0.0
        %2114 = vmatpush1.xpose.msra.mxu0 0.0
        %2115 = vmatprep.subr.mxu0 0.0
        %2116 = vmatpush1.xpose.msra.mxu0 0.0
        %2117 = vmatprep.subr.mxu0 0.0
        %v2118 = vand.u32 %v2002, 4294901760
        %v2119 = vsub.f32 %v2002, %v2118
        %v2120 = vand.u32 %v2119, 4294901760
        %v2121 = vsub.f32 %v2119, %v2120
        %v2122 = vand.u32 %v2121, 4294901760
        %2123 = vmatpush1.xpose.msra.mxu0 %v2122
        %2124 = vmatprep.subr.mxu0 0.0
        %v2125 = vand.u32 %v1999, 4294901760
        %v2126 = vsub.f32 %v1999, %v2125
        %v2127 = vand.u32 %v2126, 4294901760
        %v2128 = vsub.f32 %v2126, %v2127
        %v2129 = vand.u32 %v2128, 4294901760
        %2130 = vmatpush1.xpose.msra.mxu0 %v2129
        %2131 = vmatprep.subr.mxu0 0.0
        %v2132 = vand.u32 %v1996, 4294901760
        %v2133 = vsub.f32 %v1996, %v2132
        %v2134 = vand.u32 %v2133, 4294901760
        %v2135 = vsub.f32 %v2133, %v2134
        %v2136 = vand.u32 %v2135, 4294901760
        %2137 = vmatpush1.xpose.msra.mxu0 %v2136
        %2138 = vmatprep.subr.mxu0 0.0
        %v2139 = vand.u32 %v1993, 4294901760
        %v2140 = vsub.f32 %v1993, %v2139
        %v2141 = vand.u32 %v2140, 4294901760
        %v2142 = vsub.f32 %v2140, %v2141
        %v2143 = vand.u32 %v2142, 4294901760
        %2144 = vmatpush1.xpose.msra.mxu0 %v2143
        %2145 = vmatprep.subr.mxu0 0.0
        %2146 = vmatpush2.xpose.msra.mxu0 0.0
        %2147 = vmatprep.subr.mxu0 0.0
        %2148 = vmatpush2.xpose.msra.mxu0 0.0
        %2149 = vmatprep.subr.mxu0 0.0
        %2150 = vmatpush2.xpose.msra.mxu0 0.0
        %2151 = vmatprep.subr.mxu0 0.0
        %2152 = vmatpush2.xpose.msra.mxu0 0.0
        %2153 = vmatprep.subr.mxu0 0.0
        %2154 = vmatpush2.xpose.msra.mxu0 0.0
        %2155 = vmatprep.subr.mxu0 0.0
        %2156 = vmatpush2.xpose.msra.mxu0 0.0
        %2157 = vmatprep.subr.mxu0 0.0
        %2158 = vmatpush2.xpose.msra.mxu0 0.0
        %2159 = vmatprep.subr.mxu0 0.0
        %2160 = vmatpush2.xpose.msra.mxu0 0.0
        %2161 = vmatprep.subr.mxu0 0.0
        %2162 = vmatpush2.xpose.msra.mxu0 0.0
        %2163 = vmatprep.subr.mxu0 0.0
        %2164 = vmatpush2.xpose.msra.mxu0 0.0
        %2165 = vmatprep.subr.mxu0 0.0
        %2166 = vmatpush2.xpose.msra.mxu0 0.0
        %2167 = vmatprep.subr.mxu0 0.0
        %2168 = vmatpush2.xpose.msra.mxu0 0.0
        %2169 = vmatprep.subr.mxu0 0.0
        %2170 = vmatpush2.xpose.msra.mxu0 0.0
        %2171 = vmatprep.subr.mxu0 0.0
        %2172 = vmatpush2.xpose.msra.mxu0 0.0
        %2173 = vmatprep.subr.mxu0 0.0
        %2174 = vmatpush2.xpose.msra.mxu0 0.0
        %2175 = vmatprep.subr.mxu0 0.0
        %2176 = vmatpush2.xpose.msra.mxu0 0.0
        %2177 = vmatprep.mubr.f32.mxu0 0.0
        %v2178 = vand.u32 %v347, 4294901760
        %2179 = vmatmul.mubr.f32.gmra.mxu0 %v2178
        %v2180 = vpop.f32.mrf.mxu0
        %v2181 = vadd.f32 %v2080, %v2180
        %v2182 = vpop.f32.mrf.mxu0
        %2183 = vmatprep.mubr.f32.mxu0 0.0
        %v2184 = vand.u32 %v350, 4294901760
        %2185 = vmatmul.mubr.f32.gmra.mxu0 %v2184
        %v2186 = vpop.f32.mrf.mxu0
        %v2187 = vadd.f32 %v2090, %v2186
        %v2188 = vpop.f32.mrf.mxu0
        %2189 = vdwg.mxu0
        %2190 = vmatprep.subr.mxu0 0.0
        %2191 = vmatpush1.xpose.msra.mxu0 0.0
        %2192 = vmatprep.subr.mxu0 0.0
        %2193 = vmatpush1.xpose.msra.mxu0 0.0
        %2194 = vmatprep.subr.mxu0 0.0
        %2195 = vmatpush1.xpose.msra.mxu0 0.0
        %2196 = vmatprep.subr.mxu0 0.0
        %2197 = vmatpush1.xpose.msra.mxu0 0.0
        %2198 = vmatprep.subr.mxu0 0.0
        %2199 = vmatpush1.xpose.msra.mxu0 0.0
        %2200 = vmatprep.subr.mxu0 0.0
        %2201 = vmatpush1.xpose.msra.mxu0 0.0
        %2202 = vmatprep.subr.mxu0 0.0
        %2203 = vmatpush1.xpose.msra.mxu0 0.0
        %2204 = vmatprep.subr.mxu0 0.0
        %2205 = vmatpush1.xpose.msra.mxu0 0.0
        %2206 = vmatprep.subr.mxu0 0.0
        %2207 = vmatpush1.xpose.msra.mxu0 0.0
        %2208 = vmatprep.subr.mxu0 0.0
        %2209 = vmatpush1.xpose.msra.mxu0 0.0
        %2210 = vmatprep.subr.mxu0 0.0
        %2211 = vmatpush1.xpose.msra.mxu0 0.0
        %2212 = vmatprep.subr.mxu0 0.0
        %2213 = vmatpush1.xpose.msra.mxu0 0.0
        %2214 = vmatprep.subr.mxu0 0.0
        %v2215 = vand.u32 %v2002, 4294901760
        %v2216 = vsub.f32 %v2002, %v2215
        %2217 = vmatpush1.xpose.msra.mxu0 %v2216
        %2218 = vmatprep.subr.mxu0 0.0
        %v2219 = vand.u32 %v1999, 4294901760
        %v2220 = vsub.f32 %v1999, %v2219
        %2221 = vmatpush1.xpose.msra.mxu0 %v2220
        %2222 = vmatprep.subr.mxu0 0.0
        %v2223 = vand.u32 %v1996, 4294901760
        %v2224 = vsub.f32 %v1996, %v2223
        %2225 = vmatpush1.xpose.msra.mxu0 %v2224
        %2226 = vmatprep.subr.mxu0 0.0
        %v2227 = vand.u32 %v1993, 4294901760
        %v2228 = vsub.f32 %v1993, %v2227
        %2229 = vmatpush1.xpose.msra.mxu0 %v2228
        %2230 = vmatprep.subr.mxu0 0.0
        %2231 = vmatpush2.xpose.msra.mxu0 0.0
        %2232 = vmatprep.subr.mxu0 0.0
        %2233 = vmatpush2.xpose.msra.mxu0 0.0
        %2234 = vmatprep.subr.mxu0 0.0
        %2235 = vmatpush2.xpose.msra.mxu0 0.0
        %2236 = vmatprep.subr.mxu0 0.0
        %2237 = vmatpush2.xpose.msra.mxu0 0.0
        %2238 = vmatprep.subr.mxu0 0.0
        %2239 = vmatpush2.xpose.msra.mxu0 0.0
        %2240 = vmatprep.subr.mxu0 0.0
        %2241 = vmatpush2.xpose.msra.mxu0 0.0
        %2242 = vmatprep.subr.mxu0 0.0
        %2243 = vmatpush2.xpose.msra.mxu0 0.0
        %2244 = vmatprep.subr.mxu0 0.0
        %2245 = vmatpush2.xpose.msra.mxu0 0.0
        %2246 = vmatprep.subr.mxu0 0.0
        %2247 = vmatpush2.xpose.msra.mxu0 0.0
        %2248 = vmatprep.subr.mxu0 0.0
        %2249 = vmatpush2.xpose.msra.mxu0 0.0
        %2250 = vmatprep.subr.mxu0 0.0
        %2251 = vmatpush2.xpose.msra.mxu0 0.0
        %2252 = vmatprep.subr.mxu0 0.0
        %2253 = vmatpush2.xpose.msra.mxu0 0.0
        %2254 = vmatprep.subr.mxu0 0.0
        %2255 = vmatpush2.xpose.msra.mxu0 0.0
        %2256 = vmatprep.subr.mxu0 0.0
        %2257 = vmatpush2.xpose.msra.mxu0 0.0
        %2258 = vmatprep.subr.mxu0 0.0
        %2259 = vmatpush2.xpose.msra.mxu0 0.0
        %2260 = vmatprep.subr.mxu0 0.0
        %2261 = vmatpush2.xpose.msra.mxu0 0.0
        %2262 = vmatprep.mubr.f32.mxu0 0.0
        %v2263 = vand.u32 %v347, 4294901760
        %v2264 = vsub.f32 %v347, %v2263
        %2265 = vmatmul.mubr.f32.gmra.mxu0 %v2264
        %v2266 = vpop.f32.mrf.mxu0
        %v2267 = vadd.f32 %v2181, %v2266
        %v2268 = vpop.f32.mrf.mxu0
        %2269 = vmatprep.mubr.f32.mxu0 0.0
        %v2270 = vand.u32 %v350, 4294901760
        %v2271 = vsub.f32 %v350, %v2270
        %2272 = vmatmul.mubr.f32.gmra.mxu0 %v2271
        %v2273 = vpop.f32.mrf.mxu0
        %v2274 = vadd.f32 %v2187, %v2273
        %v2275 = vpop.f32.mrf.mxu0
        %2276 = vdwg.mxu0
        %2277 = vmatprep.subr.mxu0 0.0
        %2278 = vmatpush1.xpose.msra.mxu0 0.0
        %2279 = vmatprep.subr.mxu0 0.0
        %2280 = vmatpush1.xpose.msra.mxu0 0.0
        %2281 = vmatprep.subr.mxu0 0.0
        %2282 = vmatpush1.xpose.msra.mxu0 0.0
        %2283 = vmatprep.subr.mxu0 0.0
        %2284 = vmatpush1.xpose.msra.mxu0 0.0
        %2285 = vmatprep.subr.mxu0 0.0
        %2286 = vmatpush1.xpose.msra.mxu0 0.0
        %2287 = vmatprep.subr.mxu0 0.0
        %2288 = vmatpush1.xpose.msra.mxu0 0.0
        %2289 = vmatprep.subr.mxu0 0.0
        %2290 = vmatpush1.xpose.msra.mxu0 0.0
        %2291 = vmatprep.subr.mxu0 0.0
        %2292 = vmatpush1.xpose.msra.mxu0 0.0
        %2293 = vmatprep.subr.mxu0 0.0
        %2294 = vmatpush1.xpose.msra.mxu0 0.0
        %2295 = vmatprep.subr.mxu0 0.0
        %2296 = vmatpush1.xpose.msra.mxu0 0.0
        %2297 = vmatprep.subr.mxu0 0.0
        %2298 = vmatpush1.xpose.msra.mxu0 0.0
        %2299 = vmatprep.subr.mxu0 0.0
        %2300 = vmatpush1.xpose.msra.mxu0 0.0
        %2301 = vmatprep.subr.mxu0 0.0
        %v2302 = vand.u32 %v2002, 4294901760
        %2303 = vmatpush1.xpose.msra.mxu0 %v2302
        %2304 = vmatprep.subr.mxu0 0.0
        %v2305 = vand.u32 %v1999, 4294901760
        %2306 = vmatpush1.xpose.msra.mxu0 %v2305
        %2307 = vmatprep.subr.mxu0 0.0
        %v2308 = vand.u32 %v1996, 4294901760
        %2309 = vmatpush1.xpose.msra.mxu0 %v2308
        %2310 = vmatprep.subr.mxu0 0.0
        %v2311 = vand.u32 %v1993, 4294901760
        %2312 = vmatpush1.xpose.msra.mxu0 %v2311
        %2313 = vmatprep.subr.mxu0 0.0
        %2314 = vmatpush2.xpose.msra.mxu0 0.0
        %2315 = vmatprep.subr.mxu0 0.0
        %2316 = vmatpush2.xpose.msra.mxu0 0.0
        %2317 = vmatprep.subr.mxu0 0.0
        %2318 = vmatpush2.xpose.msra.mxu0 0.0
        %2319 = vmatprep.subr.mxu0 0.0
        %2320 = vmatpush2.xpose.msra.mxu0 0.0
        %2321 = vmatprep.subr.mxu0 0.0
        %2322 = vmatpush2.xpose.msra.mxu0 0.0
        %2323 = vmatprep.subr.mxu0 0.0
        %2324 = vmatpush2.xpose.msra.mxu0 0.0
        %2325 = vmatprep.subr.mxu0 0.0
        %2326 = vmatpush2.xpose.msra.mxu0 0.0
        %2327 = vmatprep.subr.mxu0 0.0
        %2328 = vmatpush2.xpose.msra.mxu0 0.0
        %2329 = vmatprep.subr.mxu0 0.0
        %2330 = vmatpush2.xpose.msra.mxu0 0.0
        %2331 = vmatprep.subr.mxu0 0.0
        %2332 = vmatpush2.xpose.msra.mxu0 0.0
        %2333 = vmatprep.subr.mxu0 0.0
        %2334 = vmatpush2.xpose.msra.mxu0 0.0
        %2335 = vmatprep.subr.mxu0 0.0
        %2336 = vmatpush2.xpose.msra.mxu0 0.0
        %2337 = vmatprep.subr.mxu0 0.0
        %2338 = vmatpush2.xpose.msra.mxu0 0.0
        %2339 = vmatprep.subr.mxu0 0.0
        %2340 = vmatpush2.xpose.msra.mxu0 0.0
        %2341 = vmatprep.subr.mxu0 0.0
        %2342 = vmatpush2.xpose.msra.mxu0 0.0
        %2343 = vmatprep.subr.mxu0 0.0
        %2344 = vmatpush2.xpose.msra.mxu0 0.0
        %2345 = vmatprep.mubr.f32.mxu0 0.0
        %v2346 = vand.u32 %v347, 4294901760
        %v2347 = vsub.f32 %v347, %v2346
        %v2348 = vand.u32 %v2347, 4294901760
        %2349 = vmatmul.mubr.f32.gmra.mxu0 %v2348
        %v2350 = vpop.f32.mrf.mxu0
        %v2351 = vadd.f32 %v2267, %v2350
        %v2352 = vpop.f32.mrf.mxu0
        %2353 = vmatprep.mubr.f32.mxu0 0.0
        %v2354 = vand.u32 %v350, 4294901760
        %v2355 = vsub.f32 %v350, %v2354
        %v2356 = vand.u32 %v2355, 4294901760
        %2357 = vmatmul.mubr.f32.gmra.mxu0 %v2356
        %v2358 = vpop.f32.mrf.mxu0
        %v2359 = vadd.f32 %v2274, %v2358
        %v2360 = vpop.f32.mrf.mxu0
        %2361 = vdwg.mxu0
        %2362 = vmatprep.subr.mxu0 0.0
        %2363 = vmatpush1.xpose.msra.mxu0 0.0
        %2364 = vmatprep.subr.mxu0 0.0
        %2365 = vmatpush1.xpose.msra.mxu0 0.0
        %2366 = vmatprep.subr.mxu0 0.0
        %2367 = vmatpush1.xpose.msra.mxu0 0.0
        %2368 = vmatprep.subr.mxu0 0.0
        %2369 = vmatpush1.xpose.msra.mxu0 0.0
        %2370 = vmatprep.subr.mxu0 0.0
        %2371 = vmatpush1.xpose.msra.mxu0 0.0
        %2372 = vmatprep.subr.mxu0 0.0
        %2373 = vmatpush1.xpose.msra.mxu0 0.0
        %2374 = vmatprep.subr.mxu0 0.0
        %2375 = vmatpush1.xpose.msra.mxu0 0.0
        %2376 = vmatprep.subr.mxu0 0.0
        %2377 = vmatpush1.xpose.msra.mxu0 0.0
        %2378 = vmatprep.subr.mxu0 0.0
        %2379 = vmatpush1.xpose.msra.mxu0 0.0
        %2380 = vmatprep.subr.mxu0 0.0
        %2381 = vmatpush1.xpose.msra.mxu0 0.0
        %2382 = vmatprep.subr.mxu0 0.0
        %2383 = vmatpush1.xpose.msra.mxu0 0.0
        %2384 = vmatprep.subr.mxu0 0.0
        %2385 = vmatpush1.xpose.msra.mxu0 0.0
        %2386 = vmatprep.subr.mxu0 0.0
        %v2387 = vand.u32 %v2002, 4294901760
        %v2388 = vsub.f32 %v2002, %v2387
        %v2389 = vand.u32 %v2388, 4294901760
        %2390 = vmatpush1.xpose.msra.mxu0 %v2389
        %2391 = vmatprep.subr.mxu0 0.0
        %v2392 = vand.u32 %v1999, 4294901760
        %v2393 = vsub.f32 %v1999, %v2392
        %v2394 = vand.u32 %v2393, 4294901760
        %2395 = vmatpush1.xpose.msra.mxu0 %v2394
        %2396 = vmatprep.subr.mxu0 0.0
        %v2397 = vand.u32 %v1996, 4294901760
        %v2398 = vsub.f32 %v1996, %v2397
        %v2399 = vand.u32 %v2398, 4294901760
        %2400 = vmatpush1.xpose.msra.mxu0 %v2399
        %2401 = vmatprep.subr.mxu0 0.0
        %v2402 = vand.u32 %v1993, 4294901760
        %v2403 = vsub.f32 %v1993, %v2402
        %v2404 = vand.u32 %v2403, 4294901760
        %2405 = vmatpush1.xpose.msra.mxu0 %v2404
        %2406 = vmatprep.subr.mxu0 0.0
        %2407 = vmatpush2.xpose.msra.mxu0 0.0
        %2408 = vmatprep.subr.mxu0 0.0
        %2409 = vmatpush2.xpose.msra.mxu0 0.0
        %2410 = vmatprep.subr.mxu0 0.0
        %2411 = vmatpush2.xpose.msra.mxu0 0.0
        %2412 = vmatprep.subr.mxu0 0.0
        %2413 = vmatpush2.xpose.msra.mxu0 0.0
        %2414 = vmatprep.subr.mxu0 0.0
        %2415 = vmatpush2.xpose.msra.mxu0 0.0
        %2416 = vmatprep.subr.mxu0 0.0
        %2417 = vmatpush2.xpose.msra.mxu0 0.0
        %2418 = vmatprep.subr.mxu0 0.0
        %2419 = vmatpush2.xpose.msra.mxu0 0.0
        %2420 = vmatprep.subr.mxu0 0.0
        %2421 = vmatpush2.xpose.msra.mxu0 0.0
        %2422 = vmatprep.subr.mxu0 0.0
        %2423 = vmatpush2.xpose.msra.mxu0 0.0
        %2424 = vmatprep.subr.mxu0 0.0
        %2425 = vmatpush2.xpose.msra.mxu0 0.0
        %2426 = vmatprep.subr.mxu0 0.0
        %2427 = vmatpush2.xpose.msra.mxu0 0.0
        %2428 = vmatprep.subr.mxu0 0.0
        %2429 = vmatpush2.xpose.msra.mxu0 0.0
        %2430 = vmatprep.subr.mxu0 0.0
        %2431 = vmatpush2.xpose.msra.mxu0 0.0
        %2432 = vmatprep.subr.mxu0 0.0
        %2433 = vmatpush2.xpose.msra.mxu0 0.0
        %2434 = vmatprep.subr.mxu0 0.0
        %2435 = vmatpush2.xpose.msra.mxu0 0.0
        %2436 = vmatprep.subr.mxu0 0.0
        %2437 = vmatpush2.xpose.msra.mxu0 0.0
        %2438 = vmatprep.mubr.f32.mxu0 0.0
        %v2439 = vand.u32 %v347, 4294901760
        %2440 = vmatmul.mubr.f32.gmra.mxu0 %v2439
        %v2441 = vpop.f32.mrf.mxu0
        %v2442 = vadd.f32 %v2351, %v2441
        %v2443 = vpop.f32.mrf.mxu0
        %2444 = vmatprep.mubr.f32.mxu0 0.0
        %v2445 = vand.u32 %v350, 4294901760
        %2446 = vmatmul.mubr.f32.gmra.mxu0 %v2445
        %v2447 = vpop.f32.mrf.mxu0
        %v2448 = vadd.f32 %v2359, %v2447
        %v2449 = vpop.f32.mrf.mxu0
        %2450 = vdwg.mxu0
        %2451 = vmatprep.subr.mxu0 0.0
        %2452 = vmatpush1.xpose.msra.mxu0 0.0
        %2453 = vmatprep.subr.mxu0 0.0
        %2454 = vmatpush1.xpose.msra.mxu0 0.0
        %2455 = vmatprep.subr.mxu0 0.0
        %2456 = vmatpush1.xpose.msra.mxu0 0.0
        %2457 = vmatprep.subr.mxu0 0.0
        %2458 = vmatpush1.xpose.msra.mxu0 0.0
        %2459 = vmatprep.subr.mxu0 0.0
        %2460 = vmatpush1.xpose.msra.mxu0 0.0
        %2461 = vmatprep.subr.mxu0 0.0
        %2462 = vmatpush1.xpose.msra.mxu0 0.0
        %2463 = vmatprep.subr.mxu0 0.0
        %2464 = vmatpush1.xpose.msra.mxu0 0.0
        %2465 = vmatprep.subr.mxu0 0.0
        %2466 = vmatpush1.xpose.msra.mxu0 0.0
        %2467 = vmatprep.subr.mxu0 0.0
        %2468 = vmatpush1.xpose.msra.mxu0 0.0
        %2469 = vmatprep.subr.mxu0 0.0
        %2470 = vmatpush1.xpose.msra.mxu0 0.0
        %2471 = vmatprep.subr.mxu0 0.0
        %2472 = vmatpush1.xpose.msra.mxu0 0.0
        %2473 = vmatprep.subr.mxu0 0.0
        %2474 = vmatpush1.xpose.msra.mxu0 0.0
        %2475 = vmatprep.subr.mxu0 0.0
        %v2476 = vand.u32 %v2002, 4294901760
        %2477 = vmatpush1.xpose.msra.mxu0 %v2476
        %2478 = vmatprep.subr.mxu0 0.0
        %v2479 = vand.u32 %v1999, 4294901760
        %2480 = vmatpush1.xpose.msra.mxu0 %v2479
        %2481 = vmatprep.subr.mxu0 0.0
        %v2482 = vand.u32 %v1996, 4294901760
        %2483 = vmatpush1.xpose.msra.mxu0 %v2482
        %2484 = vmatprep.subr.mxu0 0.0
        %v2485 = vand.u32 %v1993, 4294901760
        %2486 = vmatpush1.xpose.msra.mxu0 %v2485
        %2487 = vmatprep.subr.mxu0 0.0
        %2488 = vmatpush2.xpose.msra.mxu0 0.0
        %2489 = vmatprep.subr.mxu0 0.0
        %2490 = vmatpush2.xpose.msra.mxu0 0.0
        %2491 = vmatprep.subr.mxu0 0.0
        %2492 = vmatpush2.xpose.msra.mxu0 0.0
        %2493 = vmatprep.subr.mxu0 0.0
        %2494 = vmatpush2.xpose.msra.mxu0 0.0
        %2495 = vmatprep.subr.mxu0 0.0
        %2496 = vmatpush2.xpose.msra.mxu0 0.0
        %2497 = vmatprep.subr.mxu0 0.0
        %2498 = vmatpush2.xpose.msra.mxu0 0.0
        %2499 = vmatprep.subr.mxu0 0.0
        %2500 = vmatpush2.xpose.msra.mxu0 0.0
        %2501 = vmatprep.subr.mxu0 0.0
        %2502 = vmatpush2.xpose.msra.mxu0 0.0
        %2503 = vmatprep.subr.mxu0 0.0
        %2504 = vmatpush2.xpose.msra.mxu0 0.0
        %2505 = vmatprep.subr.mxu0 0.0
        %2506 = vmatpush2.xpose.msra.mxu0 0.0
        %2507 = vmatprep.subr.mxu0 0.0
        %2508 = vmatpush2.xpose.msra.mxu0 0.0
        %2509 = vmatprep.subr.mxu0 0.0
        %2510 = vmatpush2.xpose.msra.mxu0 0.0
        %2511 = vmatprep.subr.mxu0 0.0
        %2512 = vmatpush2.xpose.msra.mxu0 0.0
        %2513 = vmatprep.subr.mxu0 0.0
        %2514 = vmatpush2.xpose.msra.mxu0 0.0
        %2515 = vmatprep.subr.mxu0 0.0
        %2516 = vmatpush2.xpose.msra.mxu0 0.0
        %2517 = vmatprep.subr.mxu0 0.0
        %2518 = vmatpush2.xpose.msra.mxu0 0.0
        %2519 = vmatprep.mubr.f32.mxu0 0.0
        %v2520 = vand.u32 %v347, 4294901760
        %2521 = vmatmul.mubr.f32.gmra.mxu0 %v2520
        %v2522 = vpop.f32.mrf.mxu0
        %v2523 = vadd.f32 %v2442, %v2522
        %v2524 = vpop.f32.mrf.mxu0
        %2525 = vmatprep.mubr.f32.mxu0 0.0
        %v2526 = vand.u32 %v350, 4294901760
        %2527 = vmatmul.mubr.f32.gmra.mxu0 %v2526
        %v2528 = vpop.f32.mrf.mxu0
        %v2529 = vadd.f32 %v2448, %v2528
        %v2530 = vpop.f32.mrf.mxu0
        %2531 = vdwg.mxu0
        %v2532 = vadd.f32 %v2523, %v1420
        %v2533 = vadd.f32 %v2529, %v1426
        %2534 = vst.msk [vmem:[%s314] sm:$0xff] %vm345, %v2532
        %2535 = vst.msk [vmem:[%s314 + $0x8] sm:$0xff] %vm345, %v2533
        %v2536 = vld [vmem:[%s1 + $0x20] sm:$0xff]
        %v2537 = vld [vmem:[%s1 + $0x28] sm:$0xff]
        %v2538 = vld [vmem:[%s1 + $0x30] sm:$0xff]
        %v2539 = vld [vmem:[%s1 + $0x38] sm:$0xff]
        %v2540 = vld [vmem:[%s2] sm:$0x1]
        %v2542 = vlaneseq
        %v2543 = vshrl.u32 %v2542, 7
        %v2544 = vsub.s32 0, %v2543
        %v2545 = vrot.slane %v2540, %v2544
        %2546 = vrot.lane.b32.xlu0 %v2545, 96
        %v2547 = vpop.permute.xlu0 %2546
        %v2550 = vsel %vm345, %v2536, 0
        %v2553 = vsel %vm345, %v2537, 0
        %v2556 = vsel %vm345, %v2538, 0
        %v2559 = vsel %vm345, %v2539, 0
        %2561 = vmatprep.subr.mxu0 0.0
        %2562 = vmatpush1.xpose.msra.mxu0 0.0
        %2563 = vmatprep.subr.mxu0 0.0
        %2564 = vmatpush1.xpose.msra.mxu0 0.0
        %2565 = vmatprep.subr.mxu0 0.0
        %2566 = vmatpush1.xpose.msra.mxu0 0.0
        %2567 = vmatprep.subr.mxu0 0.0
        %2568 = vmatpush1.xpose.msra.mxu0 0.0
        %2569 = vmatprep.subr.mxu0 0.0
        %2570 = vmatpush1.xpose.msra.mxu0 0.0
        %2571 = vmatprep.subr.mxu0 0.0
        %2572 = vmatpush1.xpose.msra.mxu0 0.0
        %2573 = vmatprep.subr.mxu0 0.0
        %2574 = vmatpush1.xpose.msra.mxu0 0.0
        %2575 = vmatprep.subr.mxu0 0.0
        %2576 = vmatpush1.xpose.msra.mxu0 0.0
        %2577 = vmatprep.subr.mxu0 0.0
        %2578 = vmatpush1.xpose.msra.mxu0 0.0
        %2579 = vmatprep.subr.mxu0 0.0
        %2580 = vmatpush1.xpose.msra.mxu0 0.0
        %2581 = vmatprep.subr.mxu0 0.0
        %2582 = vmatpush1.xpose.msra.mxu0 0.0
        %2583 = vmatprep.subr.mxu0 0.0
        %2584 = vmatpush1.xpose.msra.mxu0 0.0
        %2585 = vmatprep.subr.mxu0 0.0
        %v2586 = vand.u32 %v2559, 4294901760
        %2587 = vmatpush1.xpose.msra.mxu0 %v2586
        %2588 = vmatprep.subr.mxu0 0.0
        %v2589 = vand.u32 %v2556, 4294901760
        %2590 = vmatpush1.xpose.msra.mxu0 %v2589
        %2591 = vmatprep.subr.mxu0 0.0
        %v2592 = vand.u32 %v2553, 4294901760
        %2593 = vmatpush1.xpose.msra.mxu0 %v2592
        %2594 = vmatprep.subr.mxu0 0.0
        %v2595 = vand.u32 %v2550, 4294901760
        %2596 = vmatpush1.xpose.msra.mxu0 %v2595
        %2597 = vmatprep.subr.mxu0 0.0
        %2598 = vmatpush2.xpose.msra.mxu0 0.0
        %2599 = vmatprep.subr.mxu0 0.0
        %2600 = vmatpush2.xpose.msra.mxu0 0.0
        %2601 = vmatprep.subr.mxu0 0.0
        %2602 = vmatpush2.xpose.msra.mxu0 0.0
        %2603 = vmatprep.subr.mxu0 0.0
        %2604 = vmatpush2.xpose.msra.mxu0 0.0
        %2605 = vmatprep.subr.mxu0 0.0
        %2606 = vmatpush2.xpose.msra.mxu0 0.0
        %2607 = vmatprep.subr.mxu0 0.0
        %2608 = vmatpush2.xpose.msra.mxu0 0.0
        %2609 = vmatprep.subr.mxu0 0.0
        %2610 = vmatpush2.xpose.msra.mxu0 0.0
        %2611 = vmatprep.subr.mxu0 0.0
        %2612 = vmatpush2.xpose.msra.mxu0 0.0
        %2613 = vmatprep.subr.mxu0 0.0
        %2614 = vmatpush2.xpose.msra.mxu0 0.0
        %2615 = vmatprep.subr.mxu0 0.0
        %2616 = vmatpush2.xpose.msra.mxu0 0.0
        %2617 = vmatprep.subr.mxu0 0.0
        %2618 = vmatpush2.xpose.msra.mxu0 0.0
        %2619 = vmatprep.subr.mxu0 0.0
        %2620 = vmatpush2.xpose.msra.mxu0 0.0
        %2621 = vmatprep.subr.mxu0 0.0
        %2622 = vmatpush2.xpose.msra.mxu0 0.0
        %2623 = vmatprep.subr.mxu0 0.0
        %2624 = vmatpush2.xpose.msra.mxu0 0.0
        %2625 = vmatprep.subr.mxu0 0.0
        %2626 = vmatpush2.xpose.msra.mxu0 0.0
        %2627 = vmatprep.subr.mxu0 0.0
        %2628 = vmatpush2.xpose.msra.mxu0 0.0
        %2629 = vmatprep.mubr.f32.mxu0 0.0
        %v2630 = vand.u32 %v347, 4294901760
        %v2631 = vsub.f32 %v347, %v2630
        %v2632 = vand.u32 %v2631, 4294901760
        %v2633 = vsub.f32 %v2631, %v2632
        %v2634 = vand.u32 %v2633, 4294901760
        %2635 = vmatmul.mubr.f32.gmra.mxu0 %v2634
        %v2636 = vpop.f32.mrf.mxu0
        %v2637 = vadd.f32 %v2547, %v2636
        %v2638 = vpop.f32.mrf.mxu0
        %2639 = vmatprep.mubr.f32.mxu0 0.0
        %v2640 = vand.u32 %v350, 4294901760
        %v2641 = vsub.f32 %v350, %v2640
        %v2642 = vand.u32 %v2641, 4294901760
        %v2643 = vsub.f32 %v2641, %v2642
        %v2644 = vand.u32 %v2643, 4294901760
        %2645 = vmatmul.mubr.f32.gmra.mxu0 %v2644
        %v2646 = vpop.f32.mrf.mxu0
        %v2647 = vadd.f32 %v2547, %v2646
        %v2648 = vpop.f32.mrf.mxu0
        %2649 = vdwg.mxu0
        %2650 = vmatprep.subr.mxu0 0.0
        %2651 = vmatpush1.xpose.msra.mxu0 0.0
        %2652 = vmatprep.subr.mxu0 0.0
        %2653 = vmatpush1.xpose.msra.mxu0 0.0
        %2654 = vmatprep.subr.mxu0 0.0
        %2655 = vmatpush1.xpose.msra.mxu0 0.0
        %2656 = vmatprep.subr.mxu0 0.0
        %2657 = vmatpush1.xpose.msra.mxu0 0.0
        %2658 = vmatprep.subr.mxu0 0.0
        %2659 = vmatpush1.xpose.msra.mxu0 0.0
        %2660 = vmatprep.subr.mxu0 0.0
        %2661 = vmatpush1.xpose.msra.mxu0 0.0
        %2662 = vmatprep.subr.mxu0 0.0
        %2663 = vmatpush1.xpose.msra.mxu0 0.0
        %2664 = vmatprep.subr.mxu0 0.0
        %2665 = vmatpush1.xpose.msra.mxu0 0.0
        %2666 = vmatprep.subr.mxu0 0.0
        %2667 = vmatpush1.xpose.msra.mxu0 0.0
        %2668 = vmatprep.subr.mxu0 0.0
        %2669 = vmatpush1.xpose.msra.mxu0 0.0
        %2670 = vmatprep.subr.mxu0 0.0
        %2671 = vmatpush1.xpose.msra.mxu0 0.0
        %2672 = vmatprep.subr.mxu0 0.0
        %2673 = vmatpush1.xpose.msra.mxu0 0.0
        %2674 = vmatprep.subr.mxu0 0.0
        %v2675 = vand.u32 %v2559, 4294901760
        %v2676 = vsub.f32 %v2559, %v2675
        %v2677 = vand.u32 %v2676, 4294901760
        %v2678 = vsub.f32 %v2676, %v2677
        %v2679 = vand.u32 %v2678, 4294901760
        %2680 = vmatpush1.xpose.msra.mxu0 %v2679
        %2681 = vmatprep.subr.mxu0 0.0
        %v2682 = vand.u32 %v2556, 4294901760
        %v2683 = vsub.f32 %v2556, %v2682
        %v2684 = vand.u32 %v2683, 4294901760
        %v2685 = vsub.f32 %v2683, %v2684
        %v2686 = vand.u32 %v2685, 4294901760
        %2687 = vmatpush1.xpose.msra.mxu0 %v2686
        %2688 = vmatprep.subr.mxu0 0.0
        %v2689 = vand.u32 %v2553, 4294901760
        %v2690 = vsub.f32 %v2553, %v2689
        %v2691 = vand.u32 %v2690, 4294901760
        %v2692 = vsub.f32 %v2690, %v2691
        %v2693 = vand.u32 %v2692, 4294901760
        %2694 = vmatpush1.xpose.msra.mxu0 %v2693
        %2695 = vmatprep.subr.mxu0 0.0
        %v2696 = vand.u32 %v2550, 4294901760
        %v2697 = vsub.f32 %v2550, %v2696
        %v2698 = vand.u32 %v2697, 4294901760
        %v2699 = vsub.f32 %v2697, %v2698
        %v2700 = vand.u32 %v2699, 4294901760
        %2701 = vmatpush1.xpose.msra.mxu0 %v2700
        %2702 = vmatprep.subr.mxu0 0.0
        %2703 = vmatpush2.xpose.msra.mxu0 0.0
        %2704 = vmatprep.subr.mxu0 0.0
        %2705 = vmatpush2.xpose.msra.mxu0 0.0
        %2706 = vmatprep.subr.mxu0 0.0
        %2707 = vmatpush2.xpose.msra.mxu0 0.0
        %2708 = vmatprep.subr.mxu0 0.0
        %2709 = vmatpush2.xpose.msra.mxu0 0.0
        %2710 = vmatprep.subr.mxu0 0.0
        %2711 = vmatpush2.xpose.msra.mxu0 0.0
        %2712 = vmatprep.subr.mxu0 0.0
        %2713 = vmatpush2.xpose.msra.mxu0 0.0
        %2714 = vmatprep.subr.mxu0 0.0
        %2715 = vmatpush2.xpose.msra.mxu0 0.0
        %2716 = vmatprep.subr.mxu0 0.0
        %2717 = vmatpush2.xpose.msra.mxu0 0.0
        %2718 = vmatprep.subr.mxu0 0.0
        %2719 = vmatpush2.xpose.msra.mxu0 0.0
        %2720 = vmatprep.subr.mxu0 0.0
        %2721 = vmatpush2.xpose.msra.mxu0 0.0
        %2722 = vmatprep.subr.mxu0 0.0
        %2723 = vmatpush2.xpose.msra.mxu0 0.0
        %2724 = vmatprep.subr.mxu0 0.0
        %2725 = vmatpush2.xpose.msra.mxu0 0.0
        %2726 = vmatprep.subr.mxu0 0.0
        %2727 = vmatpush2.xpose.msra.mxu0 0.0
        %2728 = vmatprep.subr.mxu0 0.0
        %2729 = vmatpush2.xpose.msra.mxu0 0.0
        %2730 = vmatprep.subr.mxu0 0.0
        %2731 = vmatpush2.xpose.msra.mxu0 0.0
        %2732 = vmatprep.subr.mxu0 0.0
        %2733 = vmatpush2.xpose.msra.mxu0 0.0
        %2734 = vmatprep.mubr.f32.mxu0 0.0
        %v2735 = vand.u32 %v347, 4294901760
        %2736 = vmatmul.mubr.f32.gmra.mxu0 %v2735
        %v2737 = vpop.f32.mrf.mxu0
        %v2738 = vadd.f32 %v2637, %v2737
        %v2739 = vpop.f32.mrf.mxu0
        %2740 = vmatprep.mubr.f32.mxu0 0.0
        %v2741 = vand.u32 %v350, 4294901760
        %2742 = vmatmul.mubr.f32.gmra.mxu0 %v2741
        %v2743 = vpop.f32.mrf.mxu0
        %v2744 = vadd.f32 %v2647, %v2743
        %v2745 = vpop.f32.mrf.mxu0
        %2746 = vdwg.mxu0
        %2747 = vmatprep.subr.mxu0 0.0
        %2748 = vmatpush1.xpose.msra.mxu0 0.0
        %2749 = vmatprep.subr.mxu0 0.0
        %2750 = vmatpush1.xpose.msra.mxu0 0.0
        %2751 = vmatprep.subr.mxu0 0.0
        %2752 = vmatpush1.xpose.msra.mxu0 0.0
        %2753 = vmatprep.subr.mxu0 0.0
        %2754 = vmatpush1.xpose.msra.mxu0 0.0
        %2755 = vmatprep.subr.mxu0 0.0
        %2756 = vmatpush1.xpose.msra.mxu0 0.0
        %2757 = vmatprep.subr.mxu0 0.0
        %2758 = vmatpush1.xpose.msra.mxu0 0.0
        %2759 = vmatprep.subr.mxu0 0.0
        %2760 = vmatpush1.xpose.msra.mxu0 0.0
        %2761 = vmatprep.subr.mxu0 0.0
        %2762 = vmatpush1.xpose.msra.mxu0 0.0
        %2763 = vmatprep.subr.mxu0 0.0
        %2764 = vmatpush1.xpose.msra.mxu0 0.0
        %2765 = vmatprep.subr.mxu0 0.0
        %2766 = vmatpush1.xpose.msra.mxu0 0.0
        %2767 = vmatprep.subr.mxu0 0.0
        %2768 = vmatpush1.xpose.msra.mxu0 0.0
        %2769 = vmatprep.subr.mxu0 0.0
        %2770 = vmatpush1.xpose.msra.mxu0 0.0
        %2771 = vmatprep.subr.mxu0 0.0
        %v2772 = vand.u32 %v2559, 4294901760
        %v2773 = vsub.f32 %v2559, %v2772
        %2774 = vmatpush1.xpose.msra.mxu0 %v2773
        %2775 = vmatprep.subr.mxu0 0.0
        %v2776 = vand.u32 %v2556, 4294901760
        %v2777 = vsub.f32 %v2556, %v2776
        %2778 = vmatpush1.xpose.msra.mxu0 %v2777
        %2779 = vmatprep.subr.mxu0 0.0
        %v2780 = vand.u32 %v2553, 4294901760
        %v2781 = vsub.f32 %v2553, %v2780
        %2782 = vmatpush1.xpose.msra.mxu0 %v2781
        %2783 = vmatprep.subr.mxu0 0.0
        %v2784 = vand.u32 %v2550, 4294901760
        %v2785 = vsub.f32 %v2550, %v2784
        %2786 = vmatpush1.xpose.msra.mxu0 %v2785
        %2787 = vmatprep.subr.mxu0 0.0
        %2788 = vmatpush2.xpose.msra.mxu0 0.0
        %2789 = vmatprep.subr.mxu0 0.0
        %2790 = vmatpush2.xpose.msra.mxu0 0.0
        %2791 = vmatprep.subr.mxu0 0.0
        %2792 = vmatpush2.xpose.msra.mxu0 0.0
        %2793 = vmatprep.subr.mxu0 0.0
        %2794 = vmatpush2.xpose.msra.mxu0 0.0
        %2795 = vmatprep.subr.mxu0 0.0
        %2796 = vmatpush2.xpose.msra.mxu0 0.0
        %2797 = vmatprep.subr.mxu0 0.0
        %2798 = vmatpush2.xpose.msra.mxu0 0.0
        %2799 = vmatprep.subr.mxu0 0.0
        %2800 = vmatpush2.xpose.msra.mxu0 0.0
        %2801 = vmatprep.subr.mxu0 0.0
        %2802 = vmatpush2.xpose.msra.mxu0 0.0
        %2803 = vmatprep.subr.mxu0 0.0
        %2804 = vmatpush2.xpose.msra.mxu0 0.0
        %2805 = vmatprep.subr.mxu0 0.0
        %2806 = vmatpush2.xpose.msra.mxu0 0.0
        %2807 = vmatprep.subr.mxu0 0.0
        %2808 = vmatpush2.xpose.msra.mxu0 0.0
        %2809 = vmatprep.subr.mxu0 0.0
        %2810 = vmatpush2.xpose.msra.mxu0 0.0
        %2811 = vmatprep.subr.mxu0 0.0
        %2812 = vmatpush2.xpose.msra.mxu0 0.0
        %2813 = vmatprep.subr.mxu0 0.0
        %2814 = vmatpush2.xpose.msra.mxu0 0.0
        %2815 = vmatprep.subr.mxu0 0.0
        %2816 = vmatpush2.xpose.msra.mxu0 0.0
        %2817 = vmatprep.subr.mxu0 0.0
        %2818 = vmatpush2.xpose.msra.mxu0 0.0
        %2819 = vmatprep.mubr.f32.mxu0 0.0
        %v2820 = vand.u32 %v347, 4294901760
        %v2821 = vsub.f32 %v347, %v2820
        %2822 = vmatmul.mubr.f32.gmra.mxu0 %v2821
        %v2823 = vpop.f32.mrf.mxu0
        %v2824 = vadd.f32 %v2738, %v2823
        %v2825 = vpop.f32.mrf.mxu0
        %2826 = vmatprep.mubr.f32.mxu0 0.0
        %v2827 = vand.u32 %v350, 4294901760
        %v2828 = vsub.f32 %v350, %v2827
        %2829 = vmatmul.mubr.f32.gmra.mxu0 %v2828
        %v2830 = vpop.f32.mrf.mxu0
        %v2831 = vadd.f32 %v2744, %v2830
        %v2832 = vpop.f32.mrf.mxu0
        %2833 = vdwg.mxu0
        %2834 = vmatprep.subr.mxu0 0.0
        %2835 = vmatpush1.xpose.msra.mxu0 0.0
        %2836 = vmatprep.subr.mxu0 0.0
        %2837 = vmatpush1.xpose.msra.mxu0 0.0
        %2838 = vmatprep.subr.mxu0 0.0
        %2839 = vmatpush1.xpose.msra.mxu0 0.0
        %2840 = vmatprep.subr.mxu0 0.0
        %2841 = vmatpush1.xpose.msra.mxu0 0.0
        %2842 = vmatprep.subr.mxu0 0.0
        %2843 = vmatpush1.xpose.msra.mxu0 0.0
        %2844 = vmatprep.subr.mxu0 0.0
        %2845 = vmatpush1.xpose.msra.mxu0 0.0
        %2846 = vmatprep.subr.mxu0 0.0
        %2847 = vmatpush1.xpose.msra.mxu0 0.0
        %2848 = vmatprep.subr.mxu0 0.0
        %2849 = vmatpush1.xpose.msra.mxu0 0.0
        %2850 = vmatprep.subr.mxu0 0.0
        %2851 = vmatpush1.xpose.msra.mxu0 0.0
        %2852 = vmatprep.subr.mxu0 0.0
        %2853 = vmatpush1.xpose.msra.mxu0 0.0
        %2854 = vmatprep.subr.mxu0 0.0
        %2855 = vmatpush1.xpose.msra.mxu0 0.0
        %2856 = vmatprep.subr.mxu0 0.0
        %2857 = vmatpush1.xpose.msra.mxu0 0.0
        %2858 = vmatprep.subr.mxu0 0.0
        %v2859 = vand.u32 %v2559, 4294901760
        %2860 = vmatpush1.xpose.msra.mxu0 %v2859
        %2861 = vmatprep.subr.mxu0 0.0
        %v2862 = vand.u32 %v2556, 4294901760
        %2863 = vmatpush1.xpose.msra.mxu0 %v2862
        %2864 = vmatprep.subr.mxu0 0.0
        %v2865 = vand.u32 %v2553, 4294901760
        %2866 = vmatpush1.xpose.msra.mxu0 %v2865
        %2867 = vmatprep.subr.mxu0 0.0
        %v2868 = vand.u32 %v2550, 4294901760
        %2869 = vmatpush1.xpose.msra.mxu0 %v2868
        %2870 = vmatprep.subr.mxu0 0.0
        %2871 = vmatpush2.xpose.msra.mxu0 0.0
        %2872 = vmatprep.subr.mxu0 0.0
        %2873 = vmatpush2.xpose.msra.mxu0 0.0
        %2874 = vmatprep.subr.mxu0 0.0
        %2875 = vmatpush2.xpose.msra.mxu0 0.0
        %2876 = vmatprep.subr.mxu0 0.0
        %2877 = vmatpush2.xpose.msra.mxu0 0.0
        %2878 = vmatprep.subr.mxu0 0.0
        %2879 = vmatpush2.xpose.msra.mxu0 0.0
        %2880 = vmatprep.subr.mxu0 0.0
        %2881 = vmatpush2.xpose.msra.mxu0 0.0
        %2882 = vmatprep.subr.mxu0 0.0
        %2883 = vmatpush2.xpose.msra.mxu0 0.0
        %2884 = vmatprep.subr.mxu0 0.0
        %2885 = vmatpush2.xpose.msra.mxu0 0.0
        %2886 = vmatprep.subr.mxu0 0.0
        %2887 = vmatpush2.xpose.msra.mxu0 0.0
        %2888 = vmatprep.subr.mxu0 0.0
        %2889 = vmatpush2.xpose.msra.mxu0 0.0
        %2890 = vmatprep.subr.mxu0 0.0
        %2891 = vmatpush2.xpose.msra.mxu0 0.0
        %2892 = vmatprep.subr.mxu0 0.0
        %2893 = vmatpush2.xpose.msra.mxu0 0.0
        %2894 = vmatprep.subr.mxu0 0.0
        %2895 = vmatpush2.xpose.msra.mxu0 0.0
        %2896 = vmatprep.subr.mxu0 0.0
        %2897 = vmatpush2.xpose.msra.mxu0 0.0
        %2898 = vmatprep.subr.mxu0 0.0
        %2899 = vmatpush2.xpose.msra.mxu0 0.0
        %2900 = vmatprep.subr.mxu0 0.0
        %2901 = vmatpush2.xpose.msra.mxu0 0.0
        %2902 = vmatprep.mubr.f32.mxu0 0.0
        %v2903 = vand.u32 %v347, 4294901760
        %v2904 = vsub.f32 %v347, %v2903
        %v2905 = vand.u32 %v2904, 4294901760
        %2906 = vmatmul.mubr.f32.gmra.mxu0 %v2905
        %v2907 = vpop.f32.mrf.mxu0
        %v2908 = vadd.f32 %v2824, %v2907
        %v2909 = vpop.f32.mrf.mxu0
        %2910 = vmatprep.mubr.f32.mxu0 0.0
        %v2911 = vand.u32 %v350, 4294901760
        %v2912 = vsub.f32 %v350, %v2911
        %v2913 = vand.u32 %v2912, 4294901760
        %2914 = vmatmul.mubr.f32.gmra.mxu0 %v2913
        %v2915 = vpop.f32.mrf.mxu0
        %v2916 = vadd.f32 %v2831, %v2915
        %v2917 = vpop.f32.mrf.mxu0
        %2918 = vdwg.mxu0
        %2919 = vmatprep.subr.mxu0 0.0
        %2920 = vmatpush1.xpose.msra.mxu0 0.0
        %2921 = vmatprep.subr.mxu0 0.0
        %2922 = vmatpush1.xpose.msra.mxu0 0.0
        %2923 = vmatprep.subr.mxu0 0.0
        %2924 = vmatpush1.xpose.msra.mxu0 0.0
        %2925 = vmatprep.subr.mxu0 0.0
        %2926 = vmatpush1.xpose.msra.mxu0 0.0
        %2927 = vmatprep.subr.mxu0 0.0
        %2928 = vmatpush1.xpose.msra.mxu0 0.0
        %2929 = vmatprep.subr.mxu0 0.0
        %2930 = vmatpush1.xpose.msra.mxu0 0.0
        %2931 = vmatprep.subr.mxu0 0.0
        %2932 = vmatpush1.xpose.msra.mxu0 0.0
        %2933 = vmatprep.subr.mxu0 0.0
        %2934 = vmatpush1.xpose.msra.mxu0 0.0
        %2935 = vmatprep.subr.mxu0 0.0
        %2936 = vmatpush1.xpose.msra.mxu0 0.0
        %2937 = vmatprep.subr.mxu0 0.0
        %2938 = vmatpush1.xpose.msra.mxu0 0.0
        %2939 = vmatprep.subr.mxu0 0.0
        %2940 = vmatpush1.xpose.msra.mxu0 0.0
        %2941 = vmatprep.subr.mxu0 0.0
        %2942 = vmatpush1.xpose.msra.mxu0 0.0
        %2943 = vmatprep.subr.mxu0 0.0
        %v2944 = vand.u32 %v2559, 4294901760
        %v2945 = vsub.f32 %v2559, %v2944
        %v2946 = vand.u32 %v2945, 4294901760
        %2947 = vmatpush1.xpose.msra.mxu0 %v2946
        %2948 = vmatprep.subr.mxu0 0.0
        %v2949 = vand.u32 %v2556, 4294901760
        %v2950 = vsub.f32 %v2556, %v2949
        %v2951 = vand.u32 %v2950, 4294901760
        %2952 = vmatpush1.xpose.msra.mxu0 %v2951
        %2953 = vmatprep.subr.mxu0 0.0
        %v2954 = vand.u32 %v2553, 4294901760
        %v2955 = vsub.f32 %v2553, %v2954
        %v2956 = vand.u32 %v2955, 4294901760
        %2957 = vmatpush1.xpose.msra.mxu0 %v2956
        %2958 = vmatprep.subr.mxu0 0.0
        %v2959 = vand.u32 %v2550, 4294901760
        %v2960 = vsub.f32 %v2550, %v2959
        %v2961 = vand.u32 %v2960, 4294901760
        %2962 = vmatpush1.xpose.msra.mxu0 %v2961
        %2963 = vmatprep.subr.mxu0 0.0
        %2964 = vmatpush2.xpose.msra.mxu0 0.0
        %2965 = vmatprep.subr.mxu0 0.0
        %2966 = vmatpush2.xpose.msra.mxu0 0.0
        %2967 = vmatprep.subr.mxu0 0.0
        %2968 = vmatpush2.xpose.msra.mxu0 0.0
        %2969 = vmatprep.subr.mxu0 0.0
        %2970 = vmatpush2.xpose.msra.mxu0 0.0
        %2971 = vmatprep.subr.mxu0 0.0
        %2972 = vmatpush2.xpose.msra.mxu0 0.0
        %2973 = vmatprep.subr.mxu0 0.0
        %2974 = vmatpush2.xpose.msra.mxu0 0.0
        %2975 = vmatprep.subr.mxu0 0.0
        %2976 = vmatpush2.xpose.msra.mxu0 0.0
        %2977 = vmatprep.subr.mxu0 0.0
        %2978 = vmatpush2.xpose.msra.mxu0 0.0
        %2979 = vmatprep.subr.mxu0 0.0
        %2980 = vmatpush2.xpose.msra.mxu0 0.0
        %2981 = vmatprep.subr.mxu0 0.0
        %2982 = vmatpush2.xpose.msra.mxu0 0.0
        %2983 = vmatprep.subr.mxu0 0.0
        %2984 = vmatpush2.xpose.msra.mxu0 0.0
        %2985 = vmatprep.subr.mxu0 0.0
        %2986 = vmatpush2.xpose.msra.mxu0 0.0
        %2987 = vmatprep.subr.mxu0 0.0
        %2988 = vmatpush2.xpose.msra.mxu0 0.0
        %2989 = vmatprep.subr.mxu0 0.0
        %2990 = vmatpush2.xpose.msra.mxu0 0.0
        %2991 = vmatprep.subr.mxu0 0.0
        %2992 = vmatpush2.xpose.msra.mxu0 0.0
        %2993 = vmatprep.subr.mxu0 0.0
        %2994 = vmatpush2.xpose.msra.mxu0 0.0
        %2995 = vmatprep.mubr.f32.mxu0 0.0
        %v2996 = vand.u32 %v347, 4294901760
        %2997 = vmatmul.mubr.f32.gmra.mxu0 %v2996
        %v2998 = vpop.f32.mrf.mxu0
        %v2999 = vadd.f32 %v2908, %v2998
        %v3000 = vpop.f32.mrf.mxu0
        %3001 = vmatprep.mubr.f32.mxu0 0.0
        %v3002 = vand.u32 %v350, 4294901760
        %3003 = vmatmul.mubr.f32.gmra.mxu0 %v3002
        %v3004 = vpop.f32.mrf.mxu0
        %v3005 = vadd.f32 %v2916, %v3004
        %v3006 = vpop.f32.mrf.mxu0
        %3007 = vdwg.mxu0
        %3008 = vmatprep.subr.mxu0 0.0
        %3009 = vmatpush1.xpose.msra.mxu0 0.0
        %3010 = vmatprep.subr.mxu0 0.0
        %3011 = vmatpush1.xpose.msra.mxu0 0.0
        %3012 = vmatprep.subr.mxu0 0.0
        %3013 = vmatpush1.xpose.msra.mxu0 0.0
        %3014 = vmatprep.subr.mxu0 0.0
        %3015 = vmatpush1.xpose.msra.mxu0 0.0
        %3016 = vmatprep.subr.mxu0 0.0
        %3017 = vmatpush1.xpose.msra.mxu0 0.0
        %3018 = vmatprep.subr.mxu0 0.0
        %3019 = vmatpush1.xpose.msra.mxu0 0.0
        %3020 = vmatprep.subr.mxu0 0.0
        %3021 = vmatpush1.xpose.msra.mxu0 0.0
        %3022 = vmatprep.subr.mxu0 0.0
        %3023 = vmatpush1.xpose.msra.mxu0 0.0
        %3024 = vmatprep.subr.mxu0 0.0
        %3025 = vmatpush1.xpose.msra.mxu0 0.0
        %3026 = vmatprep.subr.mxu0 0.0
        %3027 = vmatpush1.xpose.msra.mxu0 0.0
        %3028 = vmatprep.subr.mxu0 0.0
        %3029 = vmatpush1.xpose.msra.mxu0 0.0
        %3030 = vmatprep.subr.mxu0 0.0
        %3031 = vmatpush1.xpose.msra.mxu0 0.0
        %3032 = vmatprep.subr.mxu0 0.0
        %v3033 = vand.u32 %v2559, 4294901760
        %3034 = vmatpush1.xpose.msra.mxu0 %v3033
        %3035 = vmatprep.subr.mxu0 0.0
        %v3036 = vand.u32 %v2556, 4294901760
        %3037 = vmatpush1.xpose.msra.mxu0 %v3036
        %3038 = vmatprep.subr.mxu0 0.0
        %v3039 = vand.u32 %v2553, 4294901760
        %3040 = vmatpush1.xpose.msra.mxu0 %v3039
        %3041 = vmatprep.subr.mxu0 0.0
        %v3042 = vand.u32 %v2550, 4294901760
        %3043 = vmatpush1.xpose.msra.mxu0 %v3042
        %3044 = vmatprep.subr.mxu0 0.0
        %3045 = vmatpush2.xpose.msra.mxu0 0.0
        %3046 = vmatprep.subr.mxu0 0.0
        %3047 = vmatpush2.xpose.msra.mxu0 0.0
        %3048 = vmatprep.subr.mxu0 0.0
        %3049 = vmatpush2.xpose.msra.mxu0 0.0
        %3050 = vmatprep.subr.mxu0 0.0
        %3051 = vmatpush2.xpose.msra.mxu0 0.0
        %3052 = vmatprep.subr.mxu0 0.0
        %3053 = vmatpush2.xpose.msra.mxu0 0.0
        %3054 = vmatprep.subr.mxu0 0.0
        %3055 = vmatpush2.xpose.msra.mxu0 0.0
        %3056 = vmatprep.subr.mxu0 0.0
        %3057 = vmatpush2.xpose.msra.mxu0 0.0
        %3058 = vmatprep.subr.mxu0 0.0
        %3059 = vmatpush2.xpose.msra.mxu0 0.0
        %3060 = vmatprep.subr.mxu0 0.0
        %3061 = vmatpush2.xpose.msra.mxu0 0.0
        %3062 = vmatprep.subr.mxu0 0.0
        %3063 = vmatpush2.xpose.msra.mxu0 0.0
        %3064 = vmatprep.subr.mxu0 0.0
        %3065 = vmatpush2.xpose.msra.mxu0 0.0
        %3066 = vmatprep.subr.mxu0 0.0
        %3067 = vmatpush2.xpose.msra.mxu0 0.0
        %3068 = vmatprep.subr.mxu0 0.0
        %3069 = vmatpush2.xpose.msra.mxu0 0.0
        %3070 = vmatprep.subr.mxu0 0.0
        %3071 = vmatpush2.xpose.msra.mxu0 0.0
        %3072 = vmatprep.subr.mxu0 0.0
        %3073 = vmatpush2.xpose.msra.mxu0 0.0
        %3074 = vmatprep.subr.mxu0 0.0
        %3075 = vmatpush2.xpose.msra.mxu0 0.0
        %3076 = vmatprep.mubr.f32.mxu0 0.0
        %v3077 = vand.u32 %v347, 4294901760
        %3078 = vmatmul.mubr.f32.gmra.mxu0 %v3077
        %v3079 = vpop.f32.mrf.mxu0
        %v3080 = vadd.f32 %v2999, %v3079
        %v3081 = vpop.f32.mrf.mxu0
        %3082 = vmatprep.mubr.f32.mxu0 0.0
        %v3083 = vand.u32 %v350, 4294901760
        %3084 = vmatmul.mubr.f32.gmra.mxu0 %v3083
        %v3085 = vpop.f32.mrf.mxu0
        %v3086 = vadd.f32 %v3005, %v3085
        %v3087 = vpop.f32.mrf.mxu0
        %3088 = vdwg.mxu0
        %3091 = vrot.lane.b32.xlu0 %v3080, 32
        %v3092 = vpop.permute.xlu0 %3091
        %3093 = vrot.lane.b32.xlu0 %v3086, 32
        %v3094 = vpop.permute.xlu0 %3093
        %vm3097 = vcmask 523520
        %3098 = vst.msk [vmem:[%s314] sm:$0xff] %vm3097, %v3092
        %3099 = vst.msk [vmem:[%s314 + $0x8] sm:$0xff] %vm3097, %v3094
        %v3100 = vld [vmem:[%s1 + $0x40] sm:$0xff]
        %v3101 = vld [vmem:[%s1 + $0x48] sm:$0xff]
        %v3102 = vld [vmem:[%s1 + $0x50] sm:$0xff]
        %v3103 = vld [vmem:[%s1 + $0x58] sm:$0xff]
        %v3104 = vld [vmem:[%s2] sm:$0x1]
        %v3106 = vlaneseq
        %v3107 = vshrl.u32 %v3106, 7
        %v3108 = vsub.s32 0, %v3107
        %v3109 = vrot.slane %v3104, %v3108
        %3110 = vrot.lane.b32.xlu0 %v3109, 64
        %v3111 = vpop.permute.xlu0 %3110
        %v3114 = vsel %vm345, %v3100, 0
        %v3117 = vsel %vm345, %v3101, 0
        %v3120 = vsel %vm345, %v3102, 0
        %v3123 = vsel %vm345, %v3103, 0
        %3125 = vmatprep.subr.mxu0 0.0
        %3126 = vmatpush1.xpose.msra.mxu0 0.0
        %3127 = vmatprep.subr.mxu0 0.0
        %3128 = vmatpush1.xpose.msra.mxu0 0.0
        %3129 = vmatprep.subr.mxu0 0.0
        %3130 = vmatpush1.xpose.msra.mxu0 0.0
        %3131 = vmatprep.subr.mxu0 0.0
        %3132 = vmatpush1.xpose.msra.mxu0 0.0
        %3133 = vmatprep.subr.mxu0 0.0
        %3134 = vmatpush1.xpose.msra.mxu0 0.0
        %3135 = vmatprep.subr.mxu0 0.0
        %3136 = vmatpush1.xpose.msra.mxu0 0.0
        %3137 = vmatprep.subr.mxu0 0.0
        %3138 = vmatpush1.xpose.msra.mxu0 0.0
        %3139 = vmatprep.subr.mxu0 0.0
        %3140 = vmatpush1.xpose.msra.mxu0 0.0
        %3141 = vmatprep.subr.mxu0 0.0
        %3142 = vmatpush1.xpose.msra.mxu0 0.0
        %3143 = vmatprep.subr.mxu0 0.0
        %3144 = vmatpush1.xpose.msra.mxu0 0.0
        %3145 = vmatprep.subr.mxu0 0.0
        %3146 = vmatpush1.xpose.msra.mxu0 0.0
        %3147 = vmatprep.subr.mxu0 0.0
        %3148 = vmatpush1.xpose.msra.mxu0 0.0
        %3149 = vmatprep.subr.mxu0 0.0
        %v3150 = vand.u32 %v3123, 4294901760
        %3151 = vmatpush1.xpose.msra.mxu0 %v3150
        %3152 = vmatprep.subr.mxu0 0.0
        %v3153 = vand.u32 %v3120, 4294901760
        %3154 = vmatpush1.xpose.msra.mxu0 %v3153
        %3155 = vmatprep.subr.mxu0 0.0
        %v3156 = vand.u32 %v3117, 4294901760
        %3157 = vmatpush1.xpose.msra.mxu0 %v3156
        %3158 = vmatprep.subr.mxu0 0.0
        %v3159 = vand.u32 %v3114, 4294901760
        %3160 = vmatpush1.xpose.msra.mxu0 %v3159
        %3161 = vmatprep.subr.mxu0 0.0
        %3162 = vmatpush2.xpose.msra.mxu0 0.0
        %3163 = vmatprep.subr.mxu0 0.0
        %3164 = vmatpush2.xpose.msra.mxu0 0.0
        %3165 = vmatprep.subr.mxu0 0.0
        %3166 = vmatpush2.xpose.msra.mxu0 0.0
        %3167 = vmatprep.subr.mxu0 0.0
        %3168 = vmatpush2.xpose.msra.mxu0 0.0
        %3169 = vmatprep.subr.mxu0 0.0
        %3170 = vmatpush2.xpose.msra.mxu0 0.0
        %3171 = vmatprep.subr.mxu0 0.0
        %3172 = vmatpush2.xpose.msra.mxu0 0.0
        %3173 = vmatprep.subr.mxu0 0.0
        %3174 = vmatpush2.xpose.msra.mxu0 0.0
        %3175 = vmatprep.subr.mxu0 0.0
        %3176 = vmatpush2.xpose.msra.mxu0 0.0
        %3177 = vmatprep.subr.mxu0 0.0
        %3178 = vmatpush2.xpose.msra.mxu0 0.0
        %3179 = vmatprep.subr.mxu0 0.0
        %3180 = vmatpush2.xpose.msra.mxu0 0.0
        %3181 = vmatprep.subr.mxu0 0.0
        %3182 = vmatpush2.xpose.msra.mxu0 0.0
        %3183 = vmatprep.subr.mxu0 0.0
        %3184 = vmatpush2.xpose.msra.mxu0 0.0
        %3185 = vmatprep.subr.mxu0 0.0
        %3186 = vmatpush2.xpose.msra.mxu0 0.0
        %3187 = vmatprep.subr.mxu0 0.0
        %3188 = vmatpush2.xpose.msra.mxu0 0.0
        %3189 = vmatprep.subr.mxu0 0.0
        %3190 = vmatpush2.xpose.msra.mxu0 0.0
        %3191 = vmatprep.subr.mxu0 0.0
        %3192 = vmatpush2.xpose.msra.mxu0 0.0
        %3193 = vmatprep.mubr.f32.mxu0 0.0
        %v3194 = vand.u32 %v347, 4294901760
        %v3195 = vsub.f32 %v347, %v3194
        %v3196 = vand.u32 %v3195, 4294901760
        %v3197 = vsub.f32 %v3195, %v3196
        %v3198 = vand.u32 %v3197, 4294901760
        %3199 = vmatmul.mubr.f32.gmra.mxu0 %v3198
        %v3200 = vpop.f32.mrf.mxu0
        %v3201 = vadd.f32 %v3111, %v3200
        %v3202 = vpop.f32.mrf.mxu0
        %3203 = vmatprep.mubr.f32.mxu0 0.0
        %v3204 = vand.u32 %v350, 4294901760
        %v3205 = vsub.f32 %v350, %v3204
        %v3206 = vand.u32 %v3205, 4294901760
        %v3207 = vsub.f32 %v3205, %v3206
        %v3208 = vand.u32 %v3207, 4294901760
        %3209 = vmatmul.mubr.f32.gmra.mxu0 %v3208
        %v3210 = vpop.f32.mrf.mxu0
        %v3211 = vadd.f32 %v3111, %v3210
        %v3212 = vpop.f32.mrf.mxu0
        %3213 = vdwg.mxu0
        %3214 = vmatprep.subr.mxu0 0.0
        %3215 = vmatpush1.xpose.msra.mxu0 0.0
        %3216 = vmatprep.subr.mxu0 0.0
        %3217 = vmatpush1.xpose.msra.mxu0 0.0
        %3218 = vmatprep.subr.mxu0 0.0
        %3219 = vmatpush1.xpose.msra.mxu0 0.0
        %3220 = vmatprep.subr.mxu0 0.0
        %3221 = vmatpush1.xpose.msra.mxu0 0.0
        %3222 = vmatprep.subr.mxu0 0.0
        %3223 = vmatpush1.xpose.msra.mxu0 0.0
        %3224 = vmatprep.subr.mxu0 0.0
        %3225 = vmatpush1.xpose.msra.mxu0 0.0
        %3226 = vmatprep.subr.mxu0 0.0
        %3227 = vmatpush1.xpose.msra.mxu0 0.0
        %3228 = vmatprep.subr.mxu0 0.0
        %3229 = vmatpush1.xpose.msra.mxu0 0.0
        %3230 = vmatprep.subr.mxu0 0.0
        %3231 = vmatpush1.xpose.msra.mxu0 0.0
        %3232 = vmatprep.subr.mxu0 0.0
        %3233 = vmatpush1.xpose.msra.mxu0 0.0
        %3234 = vmatprep.subr.mxu0 0.0
        %3235 = vmatpush1.xpose.msra.mxu0 0.0
        %3236 = vmatprep.subr.mxu0 0.0
        %3237 = vmatpush1.xpose.msra.mxu0 0.0
        %3238 = vmatprep.subr.mxu0 0.0
        %v3239 = vand.u32 %v3123, 4294901760
        %v3240 = vsub.f32 %v3123, %v3239
        %v3241 = vand.u32 %v3240, 4294901760
        %v3242 = vsub.f32 %v3240, %v3241
        %v3243 = vand.u32 %v3242, 4294901760
        %3244 = vmatpush1.xpose.msra.mxu0 %v3243
        %3245 = vmatprep.subr.mxu0 0.0
        %v3246 = vand.u32 %v3120, 4294901760
        %v3247 = vsub.f32 %v3120, %v3246
        %v3248 = vand.u32 %v3247, 4294901760
        %v3249 = vsub.f32 %v3247, %v3248
        %v3250 = vand.u32 %v3249, 4294901760
        %3251 = vmatpush1.xpose.msra.mxu0 %v3250
        %3252 = vmatprep.subr.mxu0 0.0
        %v3253 = vand.u32 %v3117, 4294901760
        %v3254 = vsub.f32 %v3117, %v3253
        %v3255 = vand.u32 %v3254, 4294901760
        %v3256 = vsub.f32 %v3254, %v3255
        %v3257 = vand.u32 %v3256, 4294901760
        %3258 = vmatpush1.xpose.msra.mxu0 %v3257
        %3259 = vmatprep.subr.mxu0 0.0
        %v3260 = vand.u32 %v3114, 4294901760
        %v3261 = vsub.f32 %v3114, %v3260
        %v3262 = vand.u32 %v3261, 4294901760
        %v3263 = vsub.f32 %v3261, %v3262
        %v3264 = vand.u32 %v3263, 4294901760
        %3265 = vmatpush1.xpose.msra.mxu0 %v3264
        %3266 = vmatprep.subr.mxu0 0.0
        %3267 = vmatpush2.xpose.msra.mxu0 0.0
        %3268 = vmatprep.subr.mxu0 0.0
        %3269 = vmatpush2.xpose.msra.mxu0 0.0
        %3270 = vmatprep.subr.mxu0 0.0
        %3271 = vmatpush2.xpose.msra.mxu0 0.0
        %3272 = vmatprep.subr.mxu0 0.0
        %3273 = vmatpush2.xpose.msra.mxu0 0.0
        %3274 = vmatprep.subr.mxu0 0.0
        %3275 = vmatpush2.xpose.msra.mxu0 0.0
        %3276 = vmatprep.subr.mxu0 0.0
        %3277 = vmatpush2.xpose.msra.mxu0 0.0
        %3278 = vmatprep.subr.mxu0 0.0
        %3279 = vmatpush2.xpose.msra.mxu0 0.0
        %3280 = vmatprep.subr.mxu0 0.0
        %3281 = vmatpush2.xpose.msra.mxu0 0.0
        %3282 = vmatprep.subr.mxu0 0.0
        %3283 = vmatpush2.xpose.msra.mxu0 0.0
        %3284 = vmatprep.subr.mxu0 0.0
        %3285 = vmatpush2.xpose.msra.mxu0 0.0
        %3286 = vmatprep.subr.mxu0 0.0
        %3287 = vmatpush2.xpose.msra.mxu0 0.0
        %3288 = vmatprep.subr.mxu0 0.0
        %3289 = vmatpush2.xpose.msra.mxu0 0.0
        %3290 = vmatprep.subr.mxu0 0.0
        %3291 = vmatpush2.xpose.msra.mxu0 0.0
        %3292 = vmatprep.subr.mxu0 0.0
        %3293 = vmatpush2.xpose.msra.mxu0 0.0
        %3294 = vmatprep.subr.mxu0 0.0
        %3295 = vmatpush2.xpose.msra.mxu0 0.0
        %3296 = vmatprep.subr.mxu0 0.0
        %3297 = vmatpush2.xpose.msra.mxu0 0.0
        %3298 = vmatprep.mubr.f32.mxu0 0.0
        %v3299 = vand.u32 %v347, 4294901760
        %3300 = vmatmul.mubr.f32.gmra.mxu0 %v3299
        %v3301 = vpop.f32.mrf.mxu0
        %v3302 = vadd.f32 %v3201, %v3301
        %v3303 = vpop.f32.mrf.mxu0
        %3304 = vmatprep.mubr.f32.mxu0 0.0
        %v3305 = vand.u32 %v350, 4294901760
        %3306 = vmatmul.mubr.f32.gmra.mxu0 %v3305
        %v3307 = vpop.f32.mrf.mxu0
        %v3308 = vadd.f32 %v3211, %v3307
        %v3309 = vpop.f32.mrf.mxu0
        %3310 = vdwg.mxu0
        %3311 = vmatprep.subr.mxu0 0.0
        %3312 = vmatpush1.xpose.msra.mxu0 0.0
        %3313 = vmatprep.subr.mxu0 0.0
        %3314 = vmatpush1.xpose.msra.mxu0 0.0
        %3315 = vmatprep.subr.mxu0 0.0
        %3316 = vmatpush1.xpose.msra.mxu0 0.0
        %3317 = vmatprep.subr.mxu0 0.0
        %3318 = vmatpush1.xpose.msra.mxu0 0.0
        %3319 = vmatprep.subr.mxu0 0.0
        %3320 = vmatpush1.xpose.msra.mxu0 0.0
        %3321 = vmatprep.subr.mxu0 0.0
        %3322 = vmatpush1.xpose.msra.mxu0 0.0
        %3323 = vmatprep.subr.mxu0 0.0
        %3324 = vmatpush1.xpose.msra.mxu0 0.0
        %3325 = vmatprep.subr.mxu0 0.0
        %3326 = vmatpush1.xpose.msra.mxu0 0.0
        %3327 = vmatprep.subr.mxu0 0.0
        %3328 = vmatpush1.xpose.msra.mxu0 0.0
        %3329 = vmatprep.subr.mxu0 0.0
        %3330 = vmatpush1.xpose.msra.mxu0 0.0
        %3331 = vmatprep.subr.mxu0 0.0
        %3332 = vmatpush1.xpose.msra.mxu0 0.0
        %3333 = vmatprep.subr.mxu0 0.0
        %3334 = vmatpush1.xpose.msra.mxu0 0.0
        %3335 = vmatprep.subr.mxu0 0.0
        %v3336 = vand.u32 %v3123, 4294901760
        %v3337 = vsub.f32 %v3123, %v3336
        %3338 = vmatpush1.xpose.msra.mxu0 %v3337
        %3339 = vmatprep.subr.mxu0 0.0
        %v3340 = vand.u32 %v3120, 4294901760
        %v3341 = vsub.f32 %v3120, %v3340
        %3342 = vmatpush1.xpose.msra.mxu0 %v3341
        %3343 = vmatprep.subr.mxu0 0.0
        %v3344 = vand.u32 %v3117, 4294901760
        %v3345 = vsub.f32 %v3117, %v3344
        %3346 = vmatpush1.xpose.msra.mxu0 %v3345
        %3347 = vmatprep.subr.mxu0 0.0
        %v3348 = vand.u32 %v3114, 4294901760
        %v3349 = vsub.f32 %v3114, %v3348
        %3350 = vmatpush1.xpose.msra.mxu0 %v3349
        %3351 = vmatprep.subr.mxu0 0.0
        %3352 = vmatpush2.xpose.msra.mxu0 0.0
        %3353 = vmatprep.subr.mxu0 0.0
        %3354 = vmatpush2.xpose.msra.mxu0 0.0
        %3355 = vmatprep.subr.mxu0 0.0
        %3356 = vmatpush2.xpose.msra.mxu0 0.0
        %3357 = vmatprep.subr.mxu0 0.0
        %3358 = vmatpush2.xpose.msra.mxu0 0.0
        %3359 = vmatprep.subr.mxu0 0.0
        %3360 = vmatpush2.xpose.msra.mxu0 0.0
        %3361 = vmatprep.subr.mxu0 0.0
        %3362 = vmatpush2.xpose.msra.mxu0 0.0
        %3363 = vmatprep.subr.mxu0 0.0
        %3364 = vmatpush2.xpose.msra.mxu0 0.0
        %3365 = vmatprep.subr.mxu0 0.0
        %3366 = vmatpush2.xpose.msra.mxu0 0.0
        %3367 = vmatprep.subr.mxu0 0.0
        %3368 = vmatpush2.xpose.msra.mxu0 0.0
        %3369 = vmatprep.subr.mxu0 0.0
        %3370 = vmatpush2.xpose.msra.mxu0 0.0
        %3371 = vmatprep.subr.mxu0 0.0
        %3372 = vmatpush2.xpose.msra.mxu0 0.0
        %3373 = vmatprep.subr.mxu0 0.0
        %3374 = vmatpush2.xpose.msra.mxu0 0.0
        %3375 = vmatprep.subr.mxu0 0.0
        %3376 = vmatpush2.xpose.msra.mxu0 0.0
        %3377 = vmatprep.subr.mxu0 0.0
        %3378 = vmatpush2.xpose.msra.mxu0 0.0
        %3379 = vmatprep.subr.mxu0 0.0
        %3380 = vmatpush2.xpose.msra.mxu0 0.0
        %3381 = vmatprep.subr.mxu0 0.0
        %3382 = vmatpush2.xpose.msra.mxu0 0.0
        %3383 = vmatprep.mubr.f32.mxu0 0.0
        %v3384 = vand.u32 %v347, 4294901760
        %v3385 = vsub.f32 %v347, %v3384
        %3386 = vmatmul.mubr.f32.gmra.mxu0 %v3385
        %v3387 = vpop.f32.mrf.mxu0
        %v3388 = vadd.f32 %v3302, %v3387
        %v3389 = vpop.f32.mrf.mxu0
        %3390 = vmatprep.mubr.f32.mxu0 0.0
        %v3391 = vand.u32 %v350, 4294901760
        %v3392 = vsub.f32 %v350, %v3391
        %3393 = vmatmul.mubr.f32.gmra.mxu0 %v3392
        %v3394 = vpop.f32.mrf.mxu0
        %v3395 = vadd.f32 %v3308, %v3394
        %v3396 = vpop.f32.mrf.mxu0
        %3397 = vdwg.mxu0
        %3398 = vmatprep.subr.mxu0 0.0
        %3399 = vmatpush1.xpose.msra.mxu0 0.0
        %3400 = vmatprep.subr.mxu0 0.0
        %3401 = vmatpush1.xpose.msra.mxu0 0.0
        %3402 = vmatprep.subr.mxu0 0.0
        %3403 = vmatpush1.xpose.msra.mxu0 0.0
        %3404 = vmatprep.subr.mxu0 0.0
        %3405 = vmatpush1.xpose.msra.mxu0 0.0
        %3406 = vmatprep.subr.mxu0 0.0
        %3407 = vmatpush1.xpose.msra.mxu0 0.0
        %3408 = vmatprep.subr.mxu0 0.0
        %3409 = vmatpush1.xpose.msra.mxu0 0.0
        %3410 = vmatprep.subr.mxu0 0.0
        %3411 = vmatpush1.xpose.msra.mxu0 0.0
        %3412 = vmatprep.subr.mxu0 0.0
        %3413 = vmatpush1.xpose.msra.mxu0 0.0
        %3414 = vmatprep.subr.mxu0 0.0
        %3415 = vmatpush1.xpose.msra.mxu0 0.0
        %3416 = vmatprep.subr.mxu0 0.0
        %3417 = vmatpush1.xpose.msra.mxu0 0.0
        %3418 = vmatprep.subr.mxu0 0.0
        %3419 = vmatpush1.xpose.msra.mxu0 0.0
        %3420 = vmatprep.subr.mxu0 0.0
        %3421 = vmatpush1.xpose.msra.mxu0 0.0
        %3422 = vmatprep.subr.mxu0 0.0
        %v3423 = vand.u32 %v3123, 4294901760
        %3424 = vmatpush1.xpose.msra.mxu0 %v3423
        %3425 = vmatprep.subr.mxu0 0.0
        %v3426 = vand.u32 %v3120, 4294901760
        %3427 = vmatpush1.xpose.msra.mxu0 %v3426
        %3428 = vmatprep.subr.mxu0 0.0
        %v3429 = vand.u32 %v3117, 4294901760
        %3430 = vmatpush1.xpose.msra.mxu0 %v3429
        %3431 = vmatprep.subr.mxu0 0.0
        %v3432 = vand.u32 %v3114, 4294901760
        %3433 = vmatpush1.xpose.msra.mxu0 %v3432
        %3434 = vmatprep.subr.mxu0 0.0
        %3435 = vmatpush2.xpose.msra.mxu0 0.0
        %3436 = vmatprep.subr.mxu0 0.0
        %3437 = vmatpush2.xpose.msra.mxu0 0.0
        %3438 = vmatprep.subr.mxu0 0.0
        %3439 = vmatpush2.xpose.msra.mxu0 0.0
        %3440 = vmatprep.subr.mxu0 0.0
        %3441 = vmatpush2.xpose.msra.mxu0 0.0
        %3442 = vmatprep.subr.mxu0 0.0
        %3443 = vmatpush2.xpose.msra.mxu0 0.0
        %3444 = vmatprep.subr.mxu0 0.0
        %3445 = vmatpush2.xpose.msra.mxu0 0.0
        %3446 = vmatprep.subr.mxu0 0.0
        %3447 = vmatpush2.xpose.msra.mxu0 0.0
        %3448 = vmatprep.subr.mxu0 0.0
        %3449 = vmatpush2.xpose.msra.mxu0 0.0
        %3450 = vmatprep.subr.mxu0 0.0
        %3451 = vmatpush2.xpose.msra.mxu0 0.0
        %3452 = vmatprep.subr.mxu0 0.0
        %3453 = vmatpush2.xpose.msra.mxu0 0.0
        %3454 = vmatprep.subr.mxu0 0.0
        %3455 = vmatpush2.xpose.msra.mxu0 0.0
        %3456 = vmatprep.subr.mxu0 0.0
        %3457 = vmatpush2.xpose.msra.mxu0 0.0
        %3458 = vmatprep.subr.mxu0 0.0
        %3459 = vmatpush2.xpose.msra.mxu0 0.0
        %3460 = vmatprep.subr.mxu0 0.0
        %3461 = vmatpush2.xpose.msra.mxu0 0.0
        %3462 = vmatprep.subr.mxu0 0.0
        %3463 = vmatpush2.xpose.msra.mxu0 0.0
        %3464 = vmatprep.subr.mxu0 0.0
        %3465 = vmatpush2.xpose.msra.mxu0 0.0
        %3466 = vmatprep.mubr.f32.mxu0 0.0
        %v3467 = vand.u32 %v347, 4294901760
        %v3468 = vsub.f32 %v347, %v3467
        %v3469 = vand.u32 %v3468, 4294901760
        %3470 = vmatmul.mubr.f32.gmra.mxu0 %v3469
        %v3471 = vpop.f32.mrf.mxu0
        %v3472 = vadd.f32 %v3388, %v3471
        %v3473 = vpop.f32.mrf.mxu0
        %3474 = vmatprep.mubr.f32.mxu0 0.0
        %v3475 = vand.u32 %v350, 4294901760
        %v3476 = vsub.f32 %v350, %v3475
        %v3477 = vand.u32 %v3476, 4294901760
        %3478 = vmatmul.mubr.f32.gmra.mxu0 %v3477
        %v3479 = vpop.f32.mrf.mxu0
        %v3480 = vadd.f32 %v3395, %v3479
        %v3481 = vpop.f32.mrf.mxu0
        %3482 = vdwg.mxu0
        %3483 = vmatprep.subr.mxu0 0.0
        %3484 = vmatpush1.xpose.msra.mxu0 0.0
        %3485 = vmatprep.subr.mxu0 0.0
        %3486 = vmatpush1.xpose.msra.mxu0 0.0
        %3487 = vmatprep.subr.mxu0 0.0
        %3488 = vmatpush1.xpose.msra.mxu0 0.0
        %3489 = vmatprep.subr.mxu0 0.0
        %3490 = vmatpush1.xpose.msra.mxu0 0.0
        %3491 = vmatprep.subr.mxu0 0.0
        %3492 = vmatpush1.xpose.msra.mxu0 0.0
        %3493 = vmatprep.subr.mxu0 0.0
        %3494 = vmatpush1.xpose.msra.mxu0 0.0
        %3495 = vmatprep.subr.mxu0 0.0
        %3496 = vmatpush1.xpose.msra.mxu0 0.0
        %3497 = vmatprep.subr.mxu0 0.0
        %3498 = vmatpush1.xpose.msra.mxu0 0.0
        %3499 = vmatprep.subr.mxu0 0.0
        %3500 = vmatpush1.xpose.msra.mxu0 0.0
        %3501 = vmatprep.subr.mxu0 0.0
        %3502 = vmatpush1.xpose.msra.mxu0 0.0
        %3503 = vmatprep.subr.mxu0 0.0
        %3504 = vmatpush1.xpose.msra.mxu0 0.0
        %3505 = vmatprep.subr.mxu0 0.0
        %3506 = vmatpush1.xpose.msra.mxu0 0.0
        %3507 = vmatprep.subr.mxu0 0.0
        %v3508 = vand.u32 %v3123, 4294901760
        %v3509 = vsub.f32 %v3123, %v3508
        %v3510 = vand.u32 %v3509, 4294901760
        %3511 = vmatpush1.xpose.msra.mxu0 %v3510
        %3512 = vmatprep.subr.mxu0 0.0
        %v3513 = vand.u32 %v3120, 4294901760
        %v3514 = vsub.f32 %v3120, %v3513
        %v3515 = vand.u32 %v3514, 4294901760
        %3516 = vmatpush1.xpose.msra.mxu0 %v3515
        %3517 = vmatprep.subr.mxu0 0.0
        %v3518 = vand.u32 %v3117, 4294901760
        %v3519 = vsub.f32 %v3117, %v3518
        %v3520 = vand.u32 %v3519, 4294901760
        %3521 = vmatpush1.xpose.msra.mxu0 %v3520
        %3522 = vmatprep.subr.mxu0 0.0
        %v3523 = vand.u32 %v3114, 4294901760
        %v3524 = vsub.f32 %v3114, %v3523
        %v3525 = vand.u32 %v3524, 4294901760
        %3526 = vmatpush1.xpose.msra.mxu0 %v3525
        %3527 = vmatprep.subr.mxu0 0.0
        %3528 = vmatpush2.xpose.msra.mxu0 0.0
        %3529 = vmatprep.subr.mxu0 0.0
        %3530 = vmatpush2.xpose.msra.mxu0 0.0
        %3531 = vmatprep.subr.mxu0 0.0
        %3532 = vmatpush2.xpose.msra.mxu0 0.0
        %3533 = vmatprep.subr.mxu0 0.0
        %3534 = vmatpush2.xpose.msra.mxu0 0.0
        %3535 = vmatprep.subr.mxu0 0.0
        %3536 = vmatpush2.xpose.msra.mxu0 0.0
        %3537 = vmatprep.subr.mxu0 0.0
        %3538 = vmatpush2.xpose.msra.mxu0 0.0
        %3539 = vmatprep.subr.mxu0 0.0
        %3540 = vmatpush2.xpose.msra.mxu0 0.0
        %3541 = vmatprep.subr.mxu0 0.0
        %3542 = vmatpush2.xpose.msra.mxu0 0.0
        %3543 = vmatprep.subr.mxu0 0.0
        %3544 = vmatpush2.xpose.msra.mxu0 0.0
        %3545 = vmatprep.subr.mxu0 0.0
        %3546 = vmatpush2.xpose.msra.mxu0 0.0
        %3547 = vmatprep.subr.mxu0 0.0
        %3548 = vmatpush2.xpose.msra.mxu0 0.0
        %3549 = vmatprep.subr.mxu0 0.0
        %3550 = vmatpush2.xpose.msra.mxu0 0.0
        %3551 = vmatprep.subr.mxu0 0.0
        %3552 = vmatpush2.xpose.msra.mxu0 0.0
        %3553 = vmatprep.subr.mxu0 0.0
        %3554 = vmatpush2.xpose.msra.mxu0 0.0
        %3555 = vmatprep.subr.mxu0 0.0
        %3556 = vmatpush2.xpose.msra.mxu0 0.0
        %3557 = vmatprep.subr.mxu0 0.0
        %3558 = vmatpush2.xpose.msra.mxu0 0.0
        %3559 = vmatprep.mubr.f32.mxu0 0.0
        %v3560 = vand.u32 %v347, 4294901760
        %3561 = vmatmul.mubr.f32.gmra.mxu0 %v3560
        %v3562 = vpop.f32.mrf.mxu0
        %v3563 = vadd.f32 %v3472, %v3562
        %v3564 = vpop.f32.mrf.mxu0
        %3565 = vmatprep.mubr.f32.mxu0 0.0
        %v3566 = vand.u32 %v350, 4294901760
        %3567 = vmatmul.mubr.f32.gmra.mxu0 %v3566
        %v3568 = vpop.f32.mrf.mxu0
        %v3569 = vadd.f32 %v3480, %v3568
        %v3570 = vpop.f32.mrf.mxu0
        %3571 = vdwg.mxu0
        %3572 = vmatprep.subr.mxu0 0.0
        %3573 = vmatpush1.xpose.msra.mxu0 0.0
        %3574 = vmatprep.subr.mxu0 0.0
        %3575 = vmatpush1.xpose.msra.mxu0 0.0
        %3576 = vmatprep.subr.mxu0 0.0
        %3577 = vmatpush1.xpose.msra.mxu0 0.0
        %3578 = vmatprep.subr.mxu0 0.0
        %3579 = vmatpush1.xpose.msra.mxu0 0.0
        %3580 = vmatprep.subr.mxu0 0.0
        %3581 = vmatpush1.xpose.msra.mxu0 0.0
        %3582 = vmatprep.subr.mxu0 0.0
        %3583 = vmatpush1.xpose.msra.mxu0 0.0
        %3584 = vmatprep.subr.mxu0 0.0
        %3585 = vmatpush1.xpose.msra.mxu0 0.0
        %3586 = vmatprep.subr.mxu0 0.0
        %3587 = vmatpush1.xpose.msra.mxu0 0.0
        %3588 = vmatprep.subr.mxu0 0.0
        %3589 = vmatpush1.xpose.msra.mxu0 0.0
        %3590 = vmatprep.subr.mxu0 0.0
        %3591 = vmatpush1.xpose.msra.mxu0 0.0
        %3592 = vmatprep.subr.mxu0 0.0
        %3593 = vmatpush1.xpose.msra.mxu0 0.0
        %3594 = vmatprep.subr.mxu0 0.0
        %3595 = vmatpush1.xpose.msra.mxu0 0.0
        %3596 = vmatprep.subr.mxu0 0.0
        %v3597 = vand.u32 %v3123, 4294901760
        %3598 = vmatpush1.xpose.msra.mxu0 %v3597
        %3599 = vmatprep.subr.mxu0 0.0
        %v3600 = vand.u32 %v3120, 4294901760
        %3601 = vmatpush1.xpose.msra.mxu0 %v3600
        %3602 = vmatprep.subr.mxu0 0.0
        %v3603 = vand.u32 %v3117, 4294901760
        %3604 = vmatpush1.xpose.msra.mxu0 %v3603
        %3605 = vmatprep.subr.mxu0 0.0
        %v3606 = vand.u32 %v3114, 4294901760
        %3607 = vmatpush1.xpose.msra.mxu0 %v3606
        %3608 = vmatprep.subr.mxu0 0.0
        %3609 = vmatpush2.xpose.msra.mxu0 0.0
        %3610 = vmatprep.subr.mxu0 0.0
        %3611 = vmatpush2.xpose.msra.mxu0 0.0
        %3612 = vmatprep.subr.mxu0 0.0
        %3613 = vmatpush2.xpose.msra.mxu0 0.0
        %3614 = vmatprep.subr.mxu0 0.0
        %3615 = vmatpush2.xpose.msra.mxu0 0.0
        %3616 = vmatprep.subr.mxu0 0.0
        %3617 = vmatpush2.xpose.msra.mxu0 0.0
        %3618 = vmatprep.subr.mxu0 0.0
        %3619 = vmatpush2.xpose.msra.mxu0 0.0
        %3620 = vmatprep.subr.mxu0 0.0
        %3621 = vmatpush2.xpose.msra.mxu0 0.0
        %3622 = vmatprep.subr.mxu0 0.0
        %3623 = vmatpush2.xpose.msra.mxu0 0.0
        %3624 = vmatprep.subr.mxu0 0.0
        %3625 = vmatpush2.xpose.msra.mxu0 0.0
        %3626 = vmatprep.subr.mxu0 0.0
        %3627 = vmatpush2.xpose.msra.mxu0 0.0
        %3628 = vmatprep.subr.mxu0 0.0
        %3629 = vmatpush2.xpose.msra.mxu0 0.0
        %3630 = vmatprep.subr.mxu0 0.0
        %3631 = vmatpush2.xpose.msra.mxu0 0.0
        %3632 = vmatprep.subr.mxu0 0.0
        %3633 = vmatpush2.xpose.msra.mxu0 0.0
        %3634 = vmatprep.subr.mxu0 0.0
        %3635 = vmatpush2.xpose.msra.mxu0 0.0
        %3636 = vmatprep.subr.mxu0 0.0
        %3637 = vmatpush2.xpose.msra.mxu0 0.0
        %3638 = vmatprep.subr.mxu0 0.0
        %3639 = vmatpush2.xpose.msra.mxu0 0.0
        %3640 = vmatprep.mubr.f32.mxu0 0.0
        %v3641 = vand.u32 %v347, 4294901760
        %3642 = vmatmul.mubr.f32.gmra.mxu0 %v3641
        %v3643 = vpop.f32.mrf.mxu0
        %v3644 = vadd.f32 %v3563, %v3643
        %v3645 = vpop.f32.mrf.mxu0
        %3646 = vmatprep.mubr.f32.mxu0 0.0
        %v3647 = vand.u32 %v350, 4294901760
        %3648 = vmatmul.mubr.f32.gmra.mxu0 %v3647
        %v3649 = vpop.f32.mrf.mxu0
        %v3650 = vadd.f32 %v3569, %v3649
        %v3651 = vpop.f32.mrf.mxu0
        %3652 = vdwg.mxu0
        %v3653 = vadd.f32 %v3644, %v1972
        %v3654 = vadd.f32 %v3650, %v1978
        %3657 = vrot.lane.b32.xlu0 %v3653, 64
        %v3658 = vpop.permute.xlu0 %3657
        %3659 = vrot.lane.b32.xlu0 %v3654, 64
        %v3660 = vpop.permute.xlu0 %3659
        %vm3663 = vcmask 785920
        %3664 = vst.msk [vmem:[%s314] sm:$0xff] %vm3663, %v3658
        %3665 = vst.msk [vmem:[%s314 + $0x8] sm:$0xff] %vm3663, %v3660
        %s3666 = sand.u32 %s190, 1
        %s3667 = scalar_lea.sflag [#allocation3], %s3666
        %s3668 = sand.u32 %s190, 1
        %s3669 = smul.addr %s3668, 16
        %s3670 = scalar_lea.vmem [#allocation2], %s3669
        // Predicated region
        $region45: #{tpu_custom_call.1} parent=43 // pred_check
          %p3671 = pneg %p200
        $region46: #{tpu_custom_call.1} parent=43 // pred_check_branch
          %3673 = sbr.rel (%p3671) target = $region48
        $region47: #{tpu_custom_call.1} parent=43 // pred_region
          %s3674 = smul.u32 2, %s25
          %s3676 = ssub.s32 256, 256
          %3677 = vsyncadd %s3667, %s3676
          %s3678 = smul.addr %s24, 4
          %s3679 = sadd.s32 %s3674, %s3678
          %s3680 = smul.addr %s3679, 128
          %s3681 = scalar_lea.hbm %s6, %s3680
          %s3682 = sshll.u32 %s3670, 4
          %s3683 = int_to_ptr.vmem [resolvable:$true] %s3682
          %3688 = dma.vmem_to_hbm [thread:$0]  %s3683, 256, %s3681, %s3667, 128, 128, 8
        $region48: #{tpu_custom_call.1} parent=43 // pred_fallthru
          _
      $region44: #{tpu_custom_call.1} parent=5 // pred_fallthru
        _
      %p3689 = scmp.le.s32.totalorder 2, %s15
      // Predicated region
      $region49: #{tpu_custom_call.1} parent=5 // pred_check
        %p3690 = pneg %p3689
      $region50: #{tpu_custom_call.1} parent=5 // pred_check_branch
        %3692 = sbr.rel (%p3690) target = $region52
      $region51: #{tpu_custom_call.1} parent=5 // pred_region
        %s3693 = ssub.s32 %s15, 2
        // Predicated region
        $region53: #{tpu_custom_call.1} parent=51 // pred_check
          %p3694 = pneg %p206
        $region54: #{tpu_custom_call.1} parent=51 // pred_check_branch
          %3696 = sbr.rel (%p3694) target = $region56
        $region55: #{tpu_custom_call.1} parent=51 // pred_region
          %s3697 = sand.u32 %s191, 1
          %s3698 = scalar_lea.sflag [#allocation3], %s3697
          %s3699 = sand.u32 %s191, 1
          %s3700 = smul.addr %s3699, 16
          %s3701 = scalar_lea.vmem [#allocation2], %s3700
          %3702 = dma.done %s3698, 256
        $region56: #{tpu_custom_call.1} parent=51 // pred_fallthru
          _
      $region52: #{tpu_custom_call.1} parent=5 // pred_fallthru
        _
    $region6: #{tpu_custom_call.1} parent=1 // loop_footer
      %s19 = sadd.s32 1, %s15
    $region7: #{tpu_custom_call.1} parent=1 // loop_footer_branch
      %14 = sbr.rel target = $region3
    $region8: #{tpu_custom_call.1} parent=1 // loop_exit
      _
    %3703 = vsyncpa [#allocation3], 1
    %s3704 = scalar_lea.sflag [#allocation3], 1
    %3705 = vsyncpa %s3704, 1

</llo_original>
